<compile_context>
chip_gen: v7x
topology: tpu7x:2x2x1
jax: 0.10.0
libtpu: 0.0.40
codegen_flags: <defaults>
</compile_context>

<pallas_src>
import functools

import jax
import jax.numpy as jnp
from jax.experimental import pallas as pl
from jax.experimental.pallas import tpu as pltpu


_LANE = 128
_VMEM_LIMIT_BYTES = 48 * 1024 * 1024          # < 64 MiB physical on v7x, < 128 MiB on v5e/v6e
_SINGLE_PASS_VMEM_BUDGET = 28 * 1024 * 1024   # whole problem resident -> one grid step


def _round_up(v, m):
    return ((v + m - 1) // m) * m


# ---------------------------------------------------------------------------
# Path 1: single grid-step fused kernel (used for the benchmark shape).
# ---------------------------------------------------------------------------
def _single_pass_kernel(w_ref, x_ref, gamma_ref, beta_ref, o_ref, *, eps, inv_m):
    # (Cout, Cin) @ (Cin, m_pad) on the MXU.  Padded columns of x are exact
    # zeros -> they contribute nothing to sum / sum-of-squares; dividing by the
    # real M keeps the batch statistics exact.
    y = jnp.dot(w_ref[...], x_ref[...], preferred_element_type=jnp.float32)

    s = jnp.sum(y, axis=1, keepdims=True)          # (Cout, 1)
    sq = jnp.sum(y * y, axis=1, keepdims=True)     # (Cout, 1)
    mean = s * inv_m
    # Biased variance (what PyTorch uses to normalize); clamp guards against a
    # tiny negative value from f32 cancellation in E[y^2] - E[y]^2.
    var = jnp.maximum(sq * inv_m - mean * mean, 0.0)
    inv_std = jax.lax.rsqrt(var + eps)
    scale = gamma_ref[...] * inv_std
    shift = beta_ref[...] - mean * scale

    y_norm = y * scale + shift                     # (Cout, m_pad)
    # Output array is unpadded (Cout, M): drop the padded tail before the store
    # (a 0-offset lane slice of a value is free; the store stays lane-dense).
    o_ref[...] = y_norm[:, : o_ref.shape[1]]


def _single_pass_call(w, x_pad, gamma2, beta2, *, eps, m_real):
    Cout, Cin = w.shape
    m_pad = x_pad.shape[1]
    kernel = functools.partial(
        _single_pass_kernel, eps=float(eps), inv_m=1.0 / float(m_real)
    )
    return pl.pallas_call(
        kernel,
        out_shape=jax.ShapeDtypeStruct((Cout, m_real), jnp.float32),
        grid=(1,),
        in_specs=[
            pl.BlockSpec((Cout, Cin), lambda i: (0, 0)),     # W (resident)
            pl.BlockSpec((Cin, m_pad), lambda i: (0, 0)),    # x (zero-padded)
            pl.BlockSpec((Cout, 1), lambda i: (0, 0)),       # gamma
            pl.BlockSpec((Cout, 1), lambda i: (0, 0)),       # beta
        ],
        out_specs=pl.BlockSpec((Cout, m_real), lambda i: (0, 0)),
        compiler_params=pltpu.CompilerParams(
            dimension_semantics=("arbitrary",),
            vmem_limit_bytes=_VMEM_LIMIT_BYTES,
        ),
    )(w, x_pad, gamma2, beta2)


# ---------------------------------------------------------------------------
# Path 2 (fallback for large M): two-phase recompute kernel, single pallas_call.
#   phase 0: accumulate per-channel partial sums (VPU adds into (Cout, 128)
#            scratch), finalize scale/shift on the last tile; y never touches HBM.
#   phase 1: recompute the cheap K=40 matmul and write only the normalized output.
# NOTE: the out_specs index_map (0, i*p) keeps the output block resident (and
# unwritten) through all of phase 0; this relies on the grid being strictly
# sequential -> both grid axes MUST stay "arbitrary".
# ---------------------------------------------------------------------------
def _two_phase_kernel(w_ref, x_ref, gamma_ref, beta_ref, o_ref,
                      sum_ref, sq_ref, scale_ref, shift_ref, *, eps, inv_m):
    phase = pl.program_id(0)             # 0: stats pass, 1: apply pass
    i = pl.program_id(1)                 # tile index along M
    last = pl.num_programs(1) - 1

    @pl.when((phase == 0) & (i == 0))
    def _init():
        sum_ref[...] = jnp.zeros_like(sum_ref)
        sq_ref[...] = jnp.zeros_like(sq_ref)

    # K = Cin = 40 is tiny, so recomputing the matmul in phase 1 is cheaper than
    # round-tripping y through HBM.
    y = jnp.dot(w_ref[...], x_ref[...], preferred_element_type=jnp.float32)

    @pl.when(phase == 0)
    def _stats():
        # Lane-wide partial accumulation: 128-wide, 128-aligned static slices
        # added on the VPU (no per-tile XLU reduction).  Padded columns are
        # zeros -> numerically inert.
        width = y.shape[1]
        psum = y[:, 0:_LANE]
        psq = psum * psum
        for c in range(1, width // _LANE):
            blk = y[:, c * _LANE:(c + 1) * _LANE]
            psum = psum + blk
            psq = psq + blk * blk
        sum_ref[...] += psum
        sq_ref[...] += psq

    @pl.when((phase == 0) & (i == last))
    def _finalize():
        total = jnp.sum(sum_ref[...], axis=1, keepdims=True)     # one XLU reduce
        total_sq = jnp.sum(sq_ref[...], axis=1, keepdims=True)
        mean = total * inv_m
        var = jnp.maximum(total_sq * inv_m - mean * mean, 0.0)
        inv_std = jax.lax.rsqrt(var + eps)
        scale = gamma_ref[...] * inv_std
        scale_ref[...] = scale
        shift_ref[...] = beta_ref[...] - mean * scale

    @pl.when(phase == 1)
    def _apply():
        o_ref[...] = y * scale_ref[...] + shift_ref[...]


def _two_phase_call(w, x_mat, gamma2, beta2, *, eps, m_real, tm):
    Cout, Cin = w.shape
    if tm is None:
        tm = 4096                       # ~9 MiB of double-buffered tiles; fits the
    assert tm % _LANE == 0              # raised scoped-VMEM limit on all generations
    m128 = _round_up(m_real, _LANE)
    tm_eff = min(tm, m128)
    m_pad = _round_up(m_real, tm_eff)
    n_tiles = m_pad // tm_eff

    if m_pad != m_real:
        x_mat = jnp.pad(x_mat, ((0, 0), (0, m_pad - m_real)))   # zeros: stats-inert

    kernel = functools.partial(
        _two_phase_kernel, eps=float(eps), inv_m=1.0 / float(m_real)
    )
    out_t = pl.pallas_call(
        kernel,
        out_shape=jax.ShapeDtypeStruct((Cout, m_pad), jnp.float32),
        grid_spec=pltpu.PrefetchScalarGridSpec(
            num_scalar_prefetch=0,
            grid=(2, n_tiles),
            in_specs=[
                pl.BlockSpec((Cout, Cin), lambda p, i: (0, 0)),     # W (resident)
                pl.BlockSpec((Cin, tm_eff), lambda p, i: (0, i)),   # x tile
                pl.BlockSpec((Cout, 1), lambda p, i: (0, 0)),       # gamma
                pl.BlockSpec((Cout, 1), lambda p, i: (0, 0)),       # beta
            ],
            # Phase 0: stay on block (0, 0), never write -> no HBM writeback.
            # Phase 1: walk the output tiles, each written exactly once.
            out_specs=pl.BlockSpec((Cout, tm_eff), lambda p, i: (0, i * p)),
            scratch_shapes=[
                pltpu.VMEM((Cout, _LANE), jnp.float32),   # partial per-channel sum
                pltpu.VMEM((Cout, _LANE), jnp.float32),   # partial per-channel sum sq
                pltpu.VMEM((Cout, 1), jnp.float32),       # scale = gamma * rsqrt(var+eps)
                pltpu.VMEM((Cout, 1), jnp.float32),       # shift = beta - mean * scale
            ],
        ),
        compiler_params=pltpu.CompilerParams(
            dimension_semantics=("arbitrary", "arbitrary"),
            vmem_limit_bytes=_VMEM_LIMIT_BYTES,
        ),
    )(w, x_mat, gamma2, beta2)
    return out_t[:, :m_real]


# ---------------------------------------------------------------------------
# Public wrapper
# ---------------------------------------------------------------------------
@functools.partial(jax.jit, static_argnames=("eps", "tm", "force_tiled"))
def conv_bn_forward(x_nchw, w_oc_ic, gamma, beta, *, eps=1e-3, tm=None,
                    force_tiled=False):
    """x_nchw: (N, Cin, H, W); w_oc_ic: (Cout, Cin); gamma/beta: (Cout,)."""
    N, Cin, H, W = x_nchw.shape
    Cout = w_oc_ic.shape[0]
    M = N * H * W

    # NCHW -> (Cin, M).  For N == 1 (this module's input) the transpose is over a
    # size-1 axis, i.e. a free reshape.
    # TODO(synk): for N > 1 fold this transpose into the kernel index_map instead.
    x_mat = jnp.transpose(x_nchw, (1, 0, 2, 3)).reshape(Cin, M)
    gamma2 = gamma.reshape(Cout, 1).astype(jnp.float32)
    beta2 = beta.reshape(Cout, 1).astype(jnp.float32)

    m128 = _round_up(M, _LANE)
    # Rough resident footprint of the single-pass kernel: x + out (x2 buffering)
    # + the y intermediate and temporaries.
    est_bytes = 4 * m128 * (2 * Cin + 4 * Cout)
    use_single = (not force_tiled) and est_bytes <= _SINGLE_PASS_VMEM_BUDGET

    if use_single:
        x_in = x_mat if m128 == M else jnp.pad(x_mat, ((0, 0), (0, m128 - M)))
        out_t = _single_pass_call(w_oc_ic, x_in, gamma2, beta2, eps=eps, m_real=M)
    else:
        out_t = _two_phase_call(w_oc_ic, x_mat, gamma2, beta2,
                                eps=eps, m_real=M, tm=tm)

    # (Cout, M) -> (N, Cout, H, W); for N == 1 this is again a pure reshape.
    return jnp.transpose(out_t.reshape(Cout, N, H, W), (1, 0, 2, 3))


def reference_forward(x_nchw, w_oc_ic, gamma, beta, eps=1e-3):
    N, Cin, H, W = x_nchw.shape
    Cout = w_oc_ic.shape[0]
    x_mat = jnp.transpose(x_nchw, (1, 0, 2, 3)).reshape(Cin, -1)   # (Cin, M)
    y = w_oc_ic @ x_mat                                            # (Cout, M)
    mean = jnp.mean(y, axis=1, keepdims=True)
    var = jnp.mean((y - mean) ** 2, axis=1, keepdims=True)
    yn = (y - mean) / jnp.sqrt(var + eps) * gamma[:, None] + beta[:, None]
    return jnp.transpose(yn.reshape(Cout, N, H, W), (1, 0, 2, 3))


if __name__ == "__main__":
    key = jax.random.PRNGKey(0)
    k_x, k_w = jax.random.split(key)

    # Shapes fixed by the module: Conv2d(40 -> 240, 1x1), input (1, 40, 56, 56).
    N, Cin, H, W = 1, 40, 56, 56
    Cout = 240

    x = jax.random.normal(k_x, (N, Cin, H, W), dtype=jnp.float32)
    # PyTorch Conv2d weight is (Cout, Cin, 1, 1); the kernel consumes its
    # (Cout, Cin) view directly.
    w_conv = jax.random.normal(k_w, (Cout, Cin, 1, 1), dtype=jnp.float32) * 0.05
    w_oc_ic = w_conv[:, :, 0, 0]                       # (Cout, Cin)
    gamma = jnp.ones((Cout,), dtype=jnp.float32)       # BatchNorm default init
    beta = jnp.zeros((Cout,), dtype=jnp.float32)

    ref = reference_forward(x, w_oc_ic, gamma, beta, eps=1e-3)

    # Primary path: single grid-step fused kernel (the benchmark shape fits VMEM).
    out = jax.block_until_ready(conv_bn_forward(x, w_oc_ic, gamma, beta, eps=1e-3))
    assert out.shape == (N, Cout, H, W)
    assert jnp.allclose(out, ref, rtol=5e-4, atol=5e-4)

    # Fallback path: tiled two-phase kernel, forced with a small tile so that the
    # multi-tile accumulation and the zero-padded tail are exercised too.
    out2 = jax.block_until_ready(
        conv_bn_forward(x, w_oc_ic, gamma, beta, eps=1e-3, tm=512, force_tiled=True)
    )
    assert jnp.allclose(out2, ref, rtol=5e-4, atol=5e-4)

    print("KERNEL_OK")
</pallas_src>

<mosaic_0001>
module attributes {stable_mosaic.version = 11 : i64} {
  func.func @_single_pass_kernel(%arg0: i32, %arg1: memref<240x40xf32, #tpu.memory_space<vmem>>, %arg2: memref<40x3200xf32, #tpu.memory_space<vmem>>, %arg3: memref<240x1xf32, #tpu.memory_space<vmem>>, %arg4: memref<240x1xf32, #tpu.memory_space<vmem>>, %arg5: memref<240x3136xf32, #tpu.memory_space<vmem>>) attributes {dimension_semantics = [#tpu.dimension_semantics<arbitrary>], iteration_bounds = array<i64: 1>, scalar_prefetch = 0 : i64, scratch_operands = 0 : i64, tpu.core_type = #tpu.core_type<tc>, window_params = [{pipeline_mode = #tpu.pipeline_mode<synchronous>, transform_indices = @transform_0, window_bounds = array<i64: 240, 40>}, {pipeline_mode = #tpu.pipeline_mode<synchronous>, transform_indices = @transform_1, window_bounds = array<i64: 40, 3200>}, {pipeline_mode = #tpu.pipeline_mode<synchronous>, transform_indices = @transform_2, window_bounds = array<i64: 240, 1>}, {pipeline_mode = #tpu.pipeline_mode<synchronous>, transform_indices = @transform_3, window_bounds = array<i64: 240, 1>}, {pipeline_mode = #tpu.pipeline_mode<synchronous>, transform_indices = @transform_4, window_bounds = array<i64: 240, 3136>}]} {
    %c0 = arith.constant 0 : index
    %c0_0 = arith.constant 0 : index
    %0 = vector.load %arg1[%c0, %c0_0] : memref<240x40xf32, #tpu.memory_space<vmem>>, vector<240x40xf32>
    %c0_1 = arith.constant 0 : index
    %c0_2 = arith.constant 0 : index
    %1 = vector.load %arg2[%c0_1, %c0_2] : memref<40x3200xf32, #tpu.memory_space<vmem>>, vector<40x3200xf32>
    %cst = arith.constant dense<0.000000e+00> : vector<240x3200xf32>
    %2 = tpu.matmul %0, %1, %cst {dimension_numbers = #tpu.dot_dimension_numbers<[1], [0], [0], [1], [0, 0, 1, 1], [], []>} : vector<240x40xf32>, vector<40x3200xf32>, vector<240x3200xf32> -> vector<240x3200xf32>
    %cst_3 = arith.constant dense<0.000000e+00> : vector<240xf32>
    %3 = vector.multi_reduction <add>, %2, %cst_3 [1] : vector<240x3200xf32> to vector<240xf32>
    %4 = vector.shape_cast %3 : vector<240xf32> to vector<240x1xf32>
    %5 = arith.mulf %2, %2 : vector<240x3200xf32>
    %cst_4 = arith.constant dense<0.000000e+00> : vector<240xf32>
    %6 = vector.multi_reduction <add>, %5, %cst_4 [1] : vector<240x3200xf32> to vector<240xf32>
    %7 = vector.shape_cast %6 : vector<240xf32> to vector<240x1xf32>
    %cst_5 = arith.constant 3.18877544E-4 : f32
    %8 = vector.broadcast %cst_5 : f32 to vector<240x1xf32>
    %9 = arith.mulf %4, %8 : vector<240x1xf32>
    %cst_6 = arith.constant 3.18877544E-4 : f32
    %10 = vector.broadcast %cst_6 : f32 to vector<240x1xf32>
    %11 = arith.mulf %7, %10 : vector<240x1xf32>
    %12 = arith.mulf %9, %9 : vector<240x1xf32>
    %13 = arith.subf %11, %12 : vector<240x1xf32>
    %cst_7 = arith.constant 0.000000e+00 : f32
    %14 = vector.broadcast %cst_7 : f32 to vector<240x1xf32>
    %15 = arith.maximumf %13, %14 : vector<240x1xf32>
    %cst_8 = arith.constant 1.000000e-03 : f32
    %16 = vector.broadcast %cst_8 : f32 to vector<240x1xf32>
    %17 = arith.addf %15, %16 : vector<240x1xf32>
    %18 = math.rsqrt %17 : vector<240x1xf32>
    %c0_9 = arith.constant 0 : index
    %c0_10 = arith.constant 0 : index
    %19 = vector.load %arg3[%c0_9, %c0_10] : memref<240x1xf32, #tpu.memory_space<vmem>>, vector<240x1xf32>
    %20 = arith.mulf %19, %18 : vector<240x1xf32>
    %c0_11 = arith.constant 0 : index
    %c0_12 = arith.constant 0 : index
    %21 = vector.load %arg4[%c0_11, %c0_12] : memref<240x1xf32, #tpu.memory_space<vmem>>, vector<240x1xf32>
    %22 = arith.mulf %9, %20 : vector<240x1xf32>
    %23 = arith.subf %21, %22 : vector<240x1xf32>
    %24 = vector.broadcast %20 : vector<240x1xf32> to vector<240x3200xf32>
    %25 = arith.mulf %2, %24 : vector<240x3200xf32>
    %26 = vector.broadcast %23 : vector<240x1xf32> to vector<240x3200xf32>
    %27 = arith.addf %25, %26 : vector<240x3200xf32>
    %28 = vector.extract_strided_slice %27 {offsets = [0, 0], sizes = [240, 3136], strides = [1, 1]} : vector<240x3200xf32> to vector<240x3136xf32>
    %c0_13 = arith.constant 0 : index
    %c0_14 = arith.constant 0 : index
    %29 = vector.load %arg5[%c0_13, %c0_14] : memref<240x3136xf32, #tpu.memory_space<vmem>>, vector<240x3136xf32>
    tpu.vector_store %arg5[%c0_13, %c0_14], %28 {strides = array<i32>} : memref<240x3136xf32, #tpu.memory_space<vmem>>, vector<240x3136xf32>,
    return
  }
  func.func @transform_0(%arg0: i32) -> (i32, i32) {
    %c0_i32 = arith.constant 0 : i32
    %c0_i32_0 = arith.constant 0 : i32
    %c0_i32_1 = arith.constant 0 : i32
    return %c0_i32, %c0_i32_0 : i32, i32
  }
  func.func @transform_1(%arg0: i32) -> (i32, i32) {
    %c0_i32 = arith.constant 0 : i32
    %c0_i32_0 = arith.constant 0 : i32
    %c0_i32_1 = arith.constant 0 : i32
    return %c0_i32, %c0_i32_0 : i32, i32
  }
  func.func @transform_2(%arg0: i32) -> (i32, i32) {
    %c0_i32 = arith.constant 0 : i32
    %c0_i32_0 = arith.constant 0 : i32
    %c0_i32_1 = arith.constant 0 : i32
    return %c0_i32, %c0_i32_0 : i32, i32
  }
  func.func @transform_3(%arg0: i32) -> (i32, i32) {
    %c0_i32 = arith.constant 0 : i32
    %c0_i32_0 = arith.constant 0 : i32
    %c0_i32_1 = arith.constant 0 : i32
    return %c0_i32, %c0_i32_0 : i32, i32
  }
  func.func @transform_4(%arg0: i32) -> (i32, i32) {
    %c0_i32 = arith.constant 0 : i32
    %c0_i32_0 = arith.constant 0 : i32
    %c0_i32_1 = arith.constant 0 : i32
    return %c0_i32, %c0_i32_0 : i32, i32
  }
}

</mosaic_0001>

<llo_original>
// kernel: conv_bn_forward.1
$region0: #{conv_bn_forward.1}
  #allocation0 [shape = 'u32[]', space=smem, size = 0x4, offset = 0x4, fixed_abs, tag = 'smem constant byte address 0x4 - core index']
  #allocation1 [shape = 'u32[144,128]{1,0:T(1,128)}', space=vmem, size = 0x12000, scoped, tag = 'internal scratch']
  %s0 = inlined_call_operand.vmem [shape: f32[240,40], index: 0, kind: input, shape index: {}]
  %s1 = inlined_call_operand.vmem [shape: f32[40,3200], index: 1, kind: input, shape index: {}]
  %s2 = inlined_call_operand.vmem [shape: f32[240,1], index: 2, kind: input, shape index: {}]
  %s3 = inlined_call_operand.vmem [shape: f32[240,1], index: 3, kind: input, shape index: {}]
  %s4 = inlined_call_operand.vmem [shape: f32[240,3136], index: 4, kind: output, shape index: {}]
  %s5 = sld [smem:[#allocation0]]
  $region26: #{conv_bn_forward.1} parent=0
    _
  %s7 = ssub.s32 1, %s5
  %s8 = scalar_select 0, %s7, %s5
  // Predicated region
  $region2: #{conv_bn_forward.1} parent=0 // pred_check
    _
  $region3: #{conv_bn_forward.1} parent=0 // pred_check_branch
    %10 = sbr.rel (0) target = $region5
  $region4: #{conv_bn_forward.1} parent=0 // pred_region
    _
  $region5: #{conv_bn_forward.1} parent=0 // pred_fallthru
    _
  // Predicated region
  $region6: #{conv_bn_forward.1} parent=0 // pred_check
    _
  $region7: #{conv_bn_forward.1} parent=0 // pred_check_branch
    %12 = sbr.rel (0) target = $region9
  $region8: #{conv_bn_forward.1} parent=0 // pred_region
    _
  $region9: #{conv_bn_forward.1} parent=0 // pred_fallthru
    _
  // Predicated region
  $region10: #{conv_bn_forward.1} parent=0 // pred_check
    _
  $region11: #{conv_bn_forward.1} parent=0 // pred_check_branch
    %14 = sbr.rel (0) target = $region13
  $region12: #{conv_bn_forward.1} parent=0 // pred_region
    _
  $region13: #{conv_bn_forward.1} parent=0 // pred_fallthru
    _
  // Predicated region
  $region14: #{conv_bn_forward.1} parent=0 // pred_check
    _
  $region15: #{conv_bn_forward.1} parent=0 // pred_check_branch
    %16 = sbr.rel (0) target = $region17
  $region16: #{conv_bn_forward.1} parent=0 // pred_region
    _
  $region17: #{conv_bn_forward.1} parent=0 // pred_fallthru
    _
  %v17 = vld [vmem:[%s0] sm:$0xff]
  %v18 = vld [vmem:[%s0 + $0x8] sm:$0xff]
  %v19 = vld [vmem:[%s0 + $0x10] sm:$0xff]
  %v20 = vld [vmem:[%s0 + $0x18] sm:$0xff]
  %v21 = vld [vmem:[%s0 + $0x20] sm:$0xff]
  %v22 = vld [vmem:[%s0 + $0x28] sm:$0xff]
  %v23 = vld [vmem:[%s0 + $0x30] sm:$0xff]
  %v24 = vld [vmem:[%s0 + $0x38] sm:$0xff]
  %v25 = vld [vmem:[%s0 + $0x40] sm:$0xff]
  %v26 = vld [vmem:[%s0 + $0x48] sm:$0xff]
  %v27 = vld [vmem:[%s0 + $0x50] sm:$0xff]
  %v28 = vld [vmem:[%s0 + $0x58] sm:$0xff]
  %v29 = vld [vmem:[%s0 + $0x60] sm:$0xff]
  %v30 = vld [vmem:[%s0 + $0x68] sm:$0xff]
  %v31 = vld [vmem:[%s0 + $0x70] sm:$0xff]
  %v32 = vld [vmem:[%s0 + $0x78] sm:$0xff]
  %v33 = vld [vmem:[%s0 + $0x80] sm:$0xff]
  %v34 = vld [vmem:[%s0 + $0x88] sm:$0xff]
  %v35 = vld [vmem:[%s0 + $0x90] sm:$0xff]
  %v36 = vld [vmem:[%s0 + $0x98] sm:$0xff]
  %v37 = vld [vmem:[%s0 + $0xa0] sm:$0xff]
  %v38 = vld [vmem:[%s0 + $0xa8] sm:$0xff]
  %v39 = vld [vmem:[%s0 + $0xb0] sm:$0xff]
  %v40 = vld [vmem:[%s0 + $0xb8] sm:$0xff]
  %v41 = vld [vmem:[%s0 + $0xc0] sm:$0xff]
  %v42 = vld [vmem:[%s0 + $0xc8] sm:$0xff]
  %v43 = vld [vmem:[%s0 + $0xd0] sm:$0xff]
  %v44 = vld [vmem:[%s0 + $0xd8] sm:$0xff]
  %v45 = vld [vmem:[%s0 + $0xe0] sm:$0xff]
  %v46 = vld [vmem:[%s0 + $0xe8] sm:$0xff]
  %v47 = vld [vmem:[%s1] sm:$0xff]
  %v48 = vld [vmem:[%s1 + $0x8] sm:$0xff]
  %v49 = vld [vmem:[%s1 + $0x10] sm:$0xff]
  %v50 = vld [vmem:[%s1 + $0x18] sm:$0xff]
  %v51 = vld [vmem:[%s1 + $0x20] sm:$0xff]
  %v52 = vld [vmem:[%s1 + $0x28] sm:$0xff]
  %v53 = vld [vmem:[%s1 + $0x30] sm:$0xff]
  %v54 = vld [vmem:[%s1 + $0x38] sm:$0xff]
  %v55 = vld [vmem:[%s1 + $0x40] sm:$0xff]
  %v56 = vld [vmem:[%s1 + $0x48] sm:$0xff]
  %v57 = vld [vmem:[%s1 + $0x50] sm:$0xff]
  %v58 = vld [vmem:[%s1 + $0x58] sm:$0xff]
  %v59 = vld [vmem:[%s1 + $0x60] sm:$0xff]
  %v60 = vld [vmem:[%s1 + $0x68] sm:$0xff]
  %v61 = vld [vmem:[%s1 + $0x70] sm:$0xff]
  %v62 = vld [vmem:[%s1 + $0x78] sm:$0xff]
  %v63 = vld [vmem:[%s1 + $0x80] sm:$0xff]
  %v64 = vld [vmem:[%s1 + $0x88] sm:$0xff]
  %v65 = vld [vmem:[%s1 + $0x90] sm:$0xff]
  %v66 = vld [vmem:[%s1 + $0x98] sm:$0xff]
  %v67 = vld [vmem:[%s1 + $0xa0] sm:$0xff]
  %v68 = vld [vmem:[%s1 + $0xa8] sm:$0xff]
  %v69 = vld [vmem:[%s1 + $0xb0] sm:$0xff]
  %v70 = vld [vmem:[%s1 + $0xb8] sm:$0xff]
  %v71 = vld [vmem:[%s1 + $0xc0] sm:$0xff]
  %v72 = vld [vmem:[%s1 + $0xc8] sm:$0xff]
  %v73 = vld [vmem:[%s1 + $0xd0] sm:$0xff]
  %v74 = vld [vmem:[%s1 + $0xd8] sm:$0xff]
  %v75 = vld [vmem:[%s1 + $0xe0] sm:$0xff]
  %v76 = vld [vmem:[%s1 + $0xe8] sm:$0xff]
  %v77 = vld [vmem:[%s1 + $0xf0] sm:$0xff]
  %v78 = vld [vmem:[%s1 + $0xf8] sm:$0xff]
  %v79 = vld [vmem:[%s1 + $0x100] sm:$0xff]
  %v80 = vld [vmem:[%s1 + $0x108] sm:$0xff]
  %v81 = vld [vmem:[%s1 + $0x110] sm:$0xff]
  %v82 = vld [vmem:[%s1 + $0x118] sm:$0xff]
  %v83 = vld [vmem:[%s1 + $0x120] sm:$0xff]
  %v84 = vld [vmem:[%s1 + $0x128] sm:$0xff]
  %v85 = vld [vmem:[%s1 + $0x130] sm:$0xff]
  %v86 = vld [vmem:[%s1 + $0x138] sm:$0xff]
  %v87 = vld [vmem:[%s1 + $0x140] sm:$0xff]
  %v88 = vld [vmem:[%s1 + $0x148] sm:$0xff]
  %v89 = vld [vmem:[%s1 + $0x150] sm:$0xff]
  %v90 = vld [vmem:[%s1 + $0x158] sm:$0xff]
  %v91 = vld [vmem:[%s1 + $0x160] sm:$0xff]
  %v92 = vld [vmem:[%s1 + $0x168] sm:$0xff]
  %v93 = vld [vmem:[%s1 + $0x170] sm:$0xff]
  %v94 = vld [vmem:[%s1 + $0x178] sm:$0xff]
  %v95 = vld [vmem:[%s1 + $0x180] sm:$0xff]
  %v96 = vld [vmem:[%s1 + $0x188] sm:$0xff]
  %v97 = vld [vmem:[%s1 + $0x190] sm:$0xff]
  %v98 = vld [vmem:[%s1 + $0x198] sm:$0xff]
  %v99 = vld [vmem:[%s1 + $0x1a0] sm:$0xff]
  %v100 = vld [vmem:[%s1 + $0x1a8] sm:$0xff]
  %v101 = vld [vmem:[%s1 + $0x1b0] sm:$0xff]
  %v102 = vld [vmem:[%s1 + $0x1b8] sm:$0xff]
  %v103 = vld [vmem:[%s1 + $0x1c0] sm:$0xff]
  %v104 = vld [vmem:[%s1 + $0x1c8] sm:$0xff]
  %v105 = vld [vmem:[%s1 + $0x1d0] sm:$0xff]
  %v106 = vld [vmem:[%s1 + $0x1d8] sm:$0xff]
  %v107 = vld [vmem:[%s1 + $0x1e0] sm:$0xff]
  %v108 = vld [vmem:[%s1 + $0x1e8] sm:$0xff]
  %v109 = vld [vmem:[%s1 + $0x1f0] sm:$0xff]
  %v110 = vld [vmem:[%s1 + $0x1f8] sm:$0xff]
  %v111 = vld [vmem:[%s1 + $0x200] sm:$0xff]
  %v112 = vld [vmem:[%s1 + $0x208] sm:$0xff]
  %v113 = vld [vmem:[%s1 + $0x210] sm:$0xff]
  %v114 = vld [vmem:[%s1 + $0x218] sm:$0xff]
  %v115 = vld [vmem:[%s1 + $0x220] sm:$0xff]
  %v116 = vld [vmem:[%s1 + $0x228] sm:$0xff]
  %v117 = vld [vmem:[%s1 + $0x230] sm:$0xff]
  %v118 = vld [vmem:[%s1 + $0x238] sm:$0xff]
  %v119 = vld [vmem:[%s1 + $0x240] sm:$0xff]
  %v120 = vld [vmem:[%s1 + $0x248] sm:$0xff]
  %v121 = vld [vmem:[%s1 + $0x250] sm:$0xff]
  %v122 = vld [vmem:[%s1 + $0x258] sm:$0xff]
  %v123 = vld [vmem:[%s1 + $0x260] sm:$0xff]
  %v124 = vld [vmem:[%s1 + $0x268] sm:$0xff]
  %v125 = vld [vmem:[%s1 + $0x270] sm:$0xff]
  %v126 = vld [vmem:[%s1 + $0x278] sm:$0xff]
  %v127 = vld [vmem:[%s1 + $0x280] sm:$0xff]
  %v128 = vld [vmem:[%s1 + $0x288] sm:$0xff]
  %v129 = vld [vmem:[%s1 + $0x290] sm:$0xff]
  %v130 = vld [vmem:[%s1 + $0x298] sm:$0xff]
  %v131 = vld [vmem:[%s1 + $0x2a0] sm:$0xff]
  %v132 = vld [vmem:[%s1 + $0x2a8] sm:$0xff]
  %v133 = vld [vmem:[%s1 + $0x2b0] sm:$0xff]
  %v134 = vld [vmem:[%s1 + $0x2b8] sm:$0xff]
  %v135 = vld [vmem:[%s1 + $0x2c0] sm:$0xff]
  %v136 = vld [vmem:[%s1 + $0x2c8] sm:$0xff]
  %v137 = vld [vmem:[%s1 + $0x2d0] sm:$0xff]
  %v138 = vld [vmem:[%s1 + $0x2d8] sm:$0xff]
  %v139 = vld [vmem:[%s1 + $0x2e0] sm:$0xff]
  %v140 = vld [vmem:[%s1 + $0x2e8] sm:$0xff]
  %v141 = vld [vmem:[%s1 + $0x2f0] sm:$0xff]
  %v142 = vld [vmem:[%s1 + $0x2f8] sm:$0xff]
  %v143 = vld [vmem:[%s1 + $0x300] sm:$0xff]
  %v144 = vld [vmem:[%s1 + $0x308] sm:$0xff]
  %v145 = vld [vmem:[%s1 + $0x310] sm:$0xff]
  %v146 = vld [vmem:[%s1 + $0x318] sm:$0xff]
  %v147 = vld [vmem:[%s1 + $0x320] sm:$0xff]
  %v148 = vld [vmem:[%s1 + $0x328] sm:$0xff]
  %v149 = vld [vmem:[%s1 + $0x330] sm:$0xff]
  %v150 = vld [vmem:[%s1 + $0x338] sm:$0xff]
  %v151 = vld [vmem:[%s1 + $0x340] sm:$0xff]
  %v152 = vld [vmem:[%s1 + $0x348] sm:$0xff]
  %v153 = vld [vmem:[%s1 + $0x350] sm:$0xff]
  %v154 = vld [vmem:[%s1 + $0x358] sm:$0xff]
  %v155 = vld [vmem:[%s1 + $0x360] sm:$0xff]
  %v156 = vld [vmem:[%s1 + $0x368] sm:$0xff]
  %v157 = vld [vmem:[%s1 + $0x370] sm:$0xff]
  %v158 = vld [vmem:[%s1 + $0x378] sm:$0xff]
  %v159 = vld [vmem:[%s1 + $0x380] sm:$0xff]
  %v160 = vld [vmem:[%s1 + $0x388] sm:$0xff]
  %v161 = vld [vmem:[%s1 + $0x390] sm:$0xff]
  %v162 = vld [vmem:[%s1 + $0x398] sm:$0xff]
  %v163 = vld [vmem:[%s1 + $0x3a0] sm:$0xff]
  %v164 = vld [vmem:[%s1 + $0x3a8] sm:$0xff]
  %v165 = vld [vmem:[%s1 + $0x3b0] sm:$0xff]
  %v166 = vld [vmem:[%s1 + $0x3b8] sm:$0xff]
  %v167 = vld [vmem:[%s1 + $0x3c0] sm:$0xff]
  %v168 = vld [vmem:[%s1 + $0x3c8] sm:$0xff]
  %v169 = vld [vmem:[%s1 + $0x3d0] sm:$0xff]
  %v170 = vld [vmem:[%s1 + $0x3d8] sm:$0xff]
  %v171 = vld [vmem:[%s1 + $0x3e0] sm:$0xff]
  %vm172 = vcmask 326656
  %v174 = vsel %vm172, %v17, 0
  %v177 = vsel %vm172, %v18, 0
  %v180 = vsel %vm172, %v19, 0
  %v183 = vsel %vm172, %v20, 0
  %v186 = vsel %vm172, %v21, 0
  %v189 = vsel %vm172, %v22, 0
  %v192 = vsel %vm172, %v23, 0
  %v195 = vsel %vm172, %v24, 0
  %v198 = vsel %vm172, %v25, 0
  %v201 = vsel %vm172, %v26, 0
  %v204 = vsel %vm172, %v27, 0
  %v207 = vsel %vm172, %v28, 0
  %v210 = vsel %vm172, %v29, 0
  %v213 = vsel %vm172, %v30, 0
  %v216 = vsel %vm172, %v31, 0
  %v219 = vsel %vm172, %v32, 0
  %v222 = vsel %vm172, %v33, 0
  %v225 = vsel %vm172, %v34, 0
  %v228 = vsel %vm172, %v35, 0
  %v231 = vsel %vm172, %v36, 0
  %v234 = vsel %vm172, %v37, 0
  %v237 = vsel %vm172, %v38, 0
  %v240 = vsel %vm172, %v39, 0
  %v243 = vsel %vm172, %v40, 0
  %v246 = vsel %vm172, %v41, 0
  %v249 = vsel %vm172, %v42, 0
  %v252 = vsel %vm172, %v43, 0
  %v255 = vsel %vm172, %v44, 0
  %v258 = vsel %vm172, %v45, 0
  %v261 = vsel %vm172, %v46, 0
  %263 = vmatprep.subr.mxu0 %v48
  %264 = vmatpush1.msra.mxu0 %v47
  %265 = vmatprep.subr.mxu0 %v73
  %266 = vmatpush1.msra.mxu0 %v72
  %267 = vmatprep.subr.mxu0 %v98
  %268 = vmatpush1.msra.mxu0 %v97
  %269 = vmatprep.subr.mxu0 %v123
  %270 = vmatpush1.msra.mxu0 %v122
  %271 = vmatprep.subr.mxu0 %v148
  %272 = vmatpush1.msra.mxu0 %v147
  %273 = vmatprep.subr.mxu0 0.0
  %274 = vmatpush1.msra.mxu0 0.0
  %275 = vmatprep.subr.mxu0 0.0
  %276 = vmatpush1.msra.mxu0 0.0
  %277 = vmatprep.subr.mxu0 0.0
  %278 = vmatpush1.msra.mxu0 0.0
  %279 = vmatprep.subr.mxu0 0.0
  %280 = vmatpush1.msra.mxu0 0.0
  %281 = vmatprep.subr.mxu0 0.0
  %282 = vmatpush1.msra.mxu0 0.0
  %283 = vmatprep.subr.mxu0 0.0
  %284 = vmatpush1.msra.mxu0 0.0
  %285 = vmatprep.subr.mxu0 0.0
  %286 = vmatpush1.msra.mxu0 0.0
  %287 = vmatprep.subr.mxu0 0.0
  %288 = vmatpush1.msra.mxu0 0.0
  %289 = vmatprep.subr.mxu0 0.0
  %290 = vmatpush1.msra.mxu0 0.0
  %291 = vmatprep.subr.mxu0 0.0
  %292 = vmatpush1.msra.mxu0 0.0
  %293 = vmatprep.subr.mxu0 0.0
  %294 = vmatpush1.msra.mxu0 0.0
  %295 = vmatprep.subr.mxu0 0.0
  %296 = vmatpush1.msra.mxu0 0.0
  %297 = vmatprep.subr.mxu0 0.0
  %298 = vmatpush1.msra.mxu0 0.0
  %299 = vmatprep.subr.mxu0 0.0
  %300 = vmatpush1.msra.mxu0 0.0
  %301 = vmatprep.subr.mxu0 0.0
  %302 = vmatpush1.msra.mxu0 0.0
  %303 = vmatprep.subr.mxu0 0.0
  %304 = vmatpush1.msra.mxu0 0.0
  %305 = vmatprep.subr.mxu0 0.0
  %306 = vmatpush1.msra.mxu0 0.0
  %307 = vmatprep.subr.mxu0 0.0
  %308 = vmatpush1.msra.mxu0 0.0
  %309 = vmatprep.subr.mxu0 0.0
  %310 = vmatpush1.msra.mxu0 0.0
  %311 = vmatprep.subr.mxu0 0.0
  %312 = vmatpush1.msra.mxu0 0.0
  %313 = vmatprep.subr.mxu0 0.0
  %314 = vmatpush1.msra.mxu0 0.0
  %315 = vmatprep.subr.mxu0 0.0
  %316 = vmatpush1.msra.mxu0 0.0
  %317 = vmatprep.subr.mxu0 0.0
  %318 = vmatpush1.msra.mxu0 0.0
  %319 = vmatprep.subr.mxu0 0.0
  %320 = vmatpush1.msra.mxu0 0.0
  %321 = vmatprep.subr.mxu0 0.0
  %322 = vmatpush1.msra.mxu0 0.0
  %323 = vmatprep.subr.mxu0 0.0
  %324 = vmatpush1.msra.mxu0 0.0
  %325 = vmatprep.subr.mxu0 0.0
  %326 = vmatpush1.msra.mxu0 0.0
  %327 = vmatprep.mubr.f32.mxu0 0.0
  %328 = vmatmul.mubr.f32.gmra.mrb[0].mxu0 %v174
  %v329 = vpop.f32.mrb[0].mxu0
  %v330 = vadd.f32 0.0, %v329
  %v331 = vpop.f32.mrb[0].mxu0
  %v332 = vadd.f32 0.0, %v331
  %333 = vmatprep.mubr.f32.mxu0 0.0
  %334 = vmatmul.mubr.f32.gmra.mrb[0].mxu0 %v177
  %v335 = vpop.f32.mrb[0].mxu0
  %v336 = vadd.f32 0.0, %v335
  %v337 = vpop.f32.mrb[0].mxu0
  %v338 = vadd.f32 0.0, %v337
  %339 = vmatprep.mubr.f32.mxu0 0.0
  %340 = vmatmul.mubr.f32.gmra.mrb[0].mxu0 %v180
  %v341 = vpop.f32.mrb[0].mxu0
  %v342 = vadd.f32 0.0, %v341
  %v343 = vpop.f32.mrb[0].mxu0
  %v344 = vadd.f32 0.0, %v343
  %345 = vmatprep.mubr.f32.mxu0 0.0
  %346 = vmatmul.mubr.f32.gmra.mrb[0].mxu0 %v183
  %v347 = vpop.f32.mrb[0].mxu0
  %v348 = vadd.f32 0.0, %v347
  %v349 = vpop.f32.mrb[0].mxu0
  %v350 = vadd.f32 0.0, %v349
  %351 = vmatprep.mubr.f32.mxu0 0.0
  %352 = vmatmul.mubr.f32.gmra.mrb[0].mxu0 %v186
  %v353 = vpop.f32.mrb[0].mxu0
  %v354 = vadd.f32 0.0, %v353
  %v355 = vpop.f32.mrb[0].mxu0
  %v356 = vadd.f32 0.0, %v355
  %357 = vmatprep.mubr.f32.mxu0 0.0
  %358 = vmatmul.mubr.f32.gmra.mrb[0].mxu0 %v189
  %v359 = vpop.f32.mrb[0].mxu0
  %v360 = vadd.f32 0.0, %v359
  %v361 = vpop.f32.mrb[0].mxu0
  %v362 = vadd.f32 0.0, %v361
  %363 = vmatprep.mubr.f32.mxu0 0.0
  %364 = vmatmul.mubr.f32.gmra.mrb[0].mxu0 %v192
  %v365 = vpop.f32.mrb[0].mxu0
  %v366 = vadd.f32 0.0, %v365
  %v367 = vpop.f32.mrb[0].mxu0
  %v368 = vadd.f32 0.0, %v367
  %369 = vmatprep.mubr.f32.mxu0 0.0
  %370 = vmatmul.mubr.f32.gmra.mrb[0].mxu0 %v195
  %v371 = vpop.f32.mrb[0].mxu0
  %v372 = vadd.f32 0.0, %v371
  %v373 = vpop.f32.mrb[0].mxu0
  %v374 = vadd.f32 0.0, %v373
  %375 = vmatprep.mubr.f32.mxu0 0.0
  %376 = vmatmul.mubr.f32.gmra.mrb[0].mxu0 %v198
  %v377 = vpop.f32.mrb[0].mxu0
  %v378 = vadd.f32 0.0, %v377
  %v379 = vpop.f32.mrb[0].mxu0
  %v380 = vadd.f32 0.0, %v379
  %381 = vmatprep.mubr.f32.mxu0 0.0
  %382 = vmatmul.mubr.f32.gmra.mrb[0].mxu0 %v201
  %v383 = vpop.f32.mrb[0].mxu0
  %v384 = vadd.f32 0.0, %v383
  %v385 = vpop.f32.mrb[0].mxu0
  %v386 = vadd.f32 0.0, %v385
  %387 = vmatprep.mubr.f32.mxu0 0.0
  %388 = vmatmul.mubr.f32.gmra.mrb[0].mxu0 %v204
  %v389 = vpop.f32.mrb[0].mxu0
  %v390 = vadd.f32 0.0, %v389
  %v391 = vpop.f32.mrb[0].mxu0
  %v392 = vadd.f32 0.0, %v391
  %393 = vmatprep.mubr.f32.mxu0 0.0
  %394 = vmatmul.mubr.f32.gmra.mrb[0].mxu0 %v207
  %v395 = vpop.f32.mrb[0].mxu0
  %v396 = vadd.f32 0.0, %v395
  %v397 = vpop.f32.mrb[0].mxu0
  %v398 = vadd.f32 0.0, %v397
  %399 = vmatprep.mubr.f32.mxu0 0.0
  %400 = vmatmul.mubr.f32.gmra.mrb[0].mxu0 %v210
  %v401 = vpop.f32.mrb[0].mxu0
  %v402 = vadd.f32 0.0, %v401
  %v403 = vpop.f32.mrb[0].mxu0
  %v404 = vadd.f32 0.0, %v403
  %405 = vmatprep.mubr.f32.mxu0 0.0
  %406 = vmatmul.mubr.f32.gmra.mrb[0].mxu0 %v213
  %v407 = vpop.f32.mrb[0].mxu0
  %v408 = vadd.f32 0.0, %v407
  %v409 = vpop.f32.mrb[0].mxu0
  %v410 = vadd.f32 0.0, %v409
  %411 = vmatprep.mubr.f32.mxu0 0.0
  %412 = vmatmul.mubr.f32.gmra.mrb[0].mxu0 %v216
  %v413 = vpop.f32.mrb[0].mxu0
  %v414 = vadd.f32 0.0, %v413
  %v415 = vpop.f32.mrb[0].mxu0
  %v416 = vadd.f32 0.0, %v415
  %417 = vmatprep.mubr.f32.mxu0 0.0
  %418 = vmatmul.mubr.f32.gmra.mrb[0].mxu0 %v219
  %v419 = vpop.f32.mrb[0].mxu0
  %v420 = vadd.f32 0.0, %v419
  %v421 = vpop.f32.mrb[0].mxu0
  %v422 = vadd.f32 0.0, %v421
  %423 = vmatprep.mubr.f32.mxu0 0.0
  %424 = vmatmul.mubr.f32.gmra.mrb[0].mxu0 %v222
  %v425 = vpop.f32.mrb[0].mxu0
  %v426 = vadd.f32 0.0, %v425
  %v427 = vpop.f32.mrb[0].mxu0
  %v428 = vadd.f32 0.0, %v427
  %429 = vmatprep.mubr.f32.mxu0 0.0
  %430 = vmatmul.mubr.f32.gmra.mrb[0].mxu0 %v225
  %v431 = vpop.f32.mrb[0].mxu0
  %v432 = vadd.f32 0.0, %v431
  %v433 = vpop.f32.mrb[0].mxu0
  %v434 = vadd.f32 0.0, %v433
  %435 = vmatprep.mubr.f32.mxu0 0.0
  %436 = vmatmul.mubr.f32.gmra.mrb[0].mxu0 %v228
  %v437 = vpop.f32.mrb[0].mxu0
  %v438 = vadd.f32 0.0, %v437
  %v439 = vpop.f32.mrb[0].mxu0
  %v440 = vadd.f32 0.0, %v439
  %441 = vmatprep.mubr.f32.mxu0 0.0
  %442 = vmatmul.mubr.f32.gmra.mrb[0].mxu0 %v231
  %v443 = vpop.f32.mrb[0].mxu0
  %v444 = vadd.f32 0.0, %v443
  %v445 = vpop.f32.mrb[0].mxu0
  %v446 = vadd.f32 0.0, %v445
  %447 = vmatprep.mubr.f32.mxu0 0.0
  %448 = vmatmul.mubr.f32.gmra.mrb[0].mxu0 %v234
  %v449 = vpop.f32.mrb[0].mxu0
  %v450 = vadd.f32 0.0, %v449
  %v451 = vpop.f32.mrb[0].mxu0
  %v452 = vadd.f32 0.0, %v451
  %453 = vmatprep.mubr.f32.mxu0 0.0
  %454 = vmatmul.mubr.f32.gmra.mrb[0].mxu0 %v237
  %v455 = vpop.f32.mrb[0].mxu0
  %v456 = vadd.f32 0.0, %v455
  %v457 = vpop.f32.mrb[0].mxu0
  %v458 = vadd.f32 0.0, %v457
  %459 = vmatprep.mubr.f32.mxu0 0.0
  %460 = vmatmul.mubr.f32.gmra.mrb[0].mxu0 %v240
  %v461 = vpop.f32.mrb[0].mxu0
  %v462 = vadd.f32 0.0, %v461
  %v463 = vpop.f32.mrb[0].mxu0
  %v464 = vadd.f32 0.0, %v463
  %465 = vmatprep.mubr.f32.mxu0 0.0
  %466 = vmatmul.mubr.f32.gmra.mrb[0].mxu0 %v243
  %v467 = vpop.f32.mrb[0].mxu0
  %v468 = vadd.f32 0.0, %v467
  %v469 = vpop.f32.mrb[0].mxu0
  %v470 = vadd.f32 0.0, %v469
  %471 = vmatprep.mubr.f32.mxu0 0.0
  %472 = vmatmul.mubr.f32.gmra.mrb[0].mxu0 %v246
  %v473 = vpop.f32.mrb[0].mxu0
  %v474 = vadd.f32 0.0, %v473
  %v475 = vpop.f32.mrb[0].mxu0
  %v476 = vadd.f32 0.0, %v475
  %477 = vmatprep.mubr.f32.mxu0 0.0
  %478 = vmatmul.mubr.f32.gmra.mrb[0].mxu0 %v249
  %v479 = vpop.f32.mrb[0].mxu0
  %v480 = vadd.f32 0.0, %v479
  %v481 = vpop.f32.mrb[0].mxu0
  %v482 = vadd.f32 0.0, %v481
  %483 = vmatprep.mubr.f32.mxu0 0.0
  %484 = vmatmul.mubr.f32.gmra.mrb[0].mxu0 %v252
  %v485 = vpop.f32.mrb[0].mxu0
  %v486 = vadd.f32 0.0, %v485
  %v487 = vpop.f32.mrb[0].mxu0
  %v488 = vadd.f32 0.0, %v487
  %489 = vmatprep.mubr.f32.mxu0 0.0
  %490 = vmatmul.mubr.f32.gmra.mrb[0].mxu0 %v255
  %v491 = vpop.f32.mrb[0].mxu0
  %v492 = vadd.f32 0.0, %v491
  %v493 = vpop.f32.mrb[0].mxu0
  %v494 = vadd.f32 0.0, %v493
  %495 = vmatprep.mubr.f32.mxu0 0.0
  %496 = vmatmul.mubr.f32.gmra.mrb[0].mxu0 %v258
  %v497 = vpop.f32.mrb[0].mxu0
  %v498 = vadd.f32 0.0, %v497
  %v499 = vpop.f32.mrb[0].mxu0
  %v500 = vadd.f32 0.0, %v499
  %501 = vmatprep.mubr.f32.mxu0 0.0
  %502 = vmatmul.mubr.f32.gmra.mrb[0].mxu0 %v261
  %v503 = vpop.f32.mrb[0].mxu0
  %v504 = vadd.f32 0.0, %v503
  %v505 = vpop.f32.mrb[0].mxu0
  %v506 = vadd.f32 0.0, %v505
  %507 = vdwg.mxu0
  %508 = vmatprep.subr.mxu0 %v50
  %509 = vmatpush1.msra.mxu0 %v49
  %510 = vmatprep.subr.mxu0 %v75
  %511 = vmatpush1.msra.mxu0 %v74
  %512 = vmatprep.subr.mxu0 %v100
  %513 = vmatpush1.msra.mxu0 %v99
  %514 = vmatprep.subr.mxu0 %v125
  %515 = vmatpush1.msra.mxu0 %v124
  %516 = vmatprep.subr.mxu0 %v150
  %517 = vmatpush1.msra.mxu0 %v149
  %518 = vmatprep.subr.mxu0 0.0
  %519 = vmatpush1.msra.mxu0 0.0
  %520 = vmatprep.subr.mxu0 0.0
  %521 = vmatpush1.msra.mxu0 0.0
  %522 = vmatprep.subr.mxu0 0.0
  %523 = vmatpush1.msra.mxu0 0.0
  %524 = vmatprep.subr.mxu0 0.0
  %525 = vmatpush1.msra.mxu0 0.0
  %526 = vmatprep.subr.mxu0 0.0
  %527 = vmatpush1.msra.mxu0 0.0
  %528 = vmatprep.subr.mxu0 0.0
  %529 = vmatpush1.msra.mxu0 0.0
  %530 = vmatprep.subr.mxu0 0.0
  %531 = vmatpush1.msra.mxu0 0.0
  %532 = vmatprep.subr.mxu0 0.0
  %533 = vmatpush1.msra.mxu0 0.0
  %534 = vmatprep.subr.mxu0 0.0
  %535 = vmatpush1.msra.mxu0 0.0
  %536 = vmatprep.subr.mxu0 0.0
  %537 = vmatpush1.msra.mxu0 0.0
  %538 = vmatprep.subr.mxu0 0.0
  %539 = vmatpush1.msra.mxu0 0.0
  %540 = vmatprep.subr.mxu0 0.0
  %541 = vmatpush1.msra.mxu0 0.0
  %542 = vmatprep.subr.mxu0 0.0
  %543 = vmatpush1.msra.mxu0 0.0
  %544 = vmatprep.subr.mxu0 0.0
  %545 = vmatpush1.msra.mxu0 0.0
  %546 = vmatprep.subr.mxu0 0.0
  %547 = vmatpush1.msra.mxu0 0.0
  %548 = vmatprep.subr.mxu0 0.0
  %549 = vmatpush1.msra.mxu0 0.0
  %550 = vmatprep.subr.mxu0 0.0
  %551 = vmatpush1.msra.mxu0 0.0
  %552 = vmatprep.subr.mxu0 0.0
  %553 = vmatpush1.msra.mxu0 0.0
  %554 = vmatprep.subr.mxu0 0.0
  %555 = vmatpush1.msra.mxu0 0.0
  %556 = vmatprep.subr.mxu0 0.0
  %557 = vmatpush1.msra.mxu0 0.0
  %558 = vmatprep.subr.mxu0 0.0
  %559 = vmatpush1.msra.mxu0 0.0
  %560 = vmatprep.subr.mxu0 0.0
  %561 = vmatpush1.msra.mxu0 0.0
  %562 = vmatprep.subr.mxu0 0.0
  %563 = vmatpush1.msra.mxu0 0.0
  %564 = vmatprep.subr.mxu0 0.0
  %565 = vmatpush1.msra.mxu0 0.0
  %566 = vmatprep.subr.mxu0 0.0
  %567 = vmatpush1.msra.mxu0 0.0
  %568 = vmatprep.subr.mxu0 0.0
  %569 = vmatpush1.msra.mxu0 0.0
  %570 = vmatprep.subr.mxu0 0.0
  %571 = vmatpush1.msra.mxu0 0.0
  %572 = vmatprep.mubr.f32.mxu0 0.0
  %573 = vmatmul.mubr.f32.gmra.mrb[0].mxu0 %v174
  %v574 = vpop.f32.mrb[0].mxu0
  %v575 = vadd.f32 0.0, %v574
  %v576 = vpop.f32.mrb[0].mxu0
  %v577 = vadd.f32 0.0, %v576
  %578 = vmatprep.mubr.f32.mxu0 0.0
  %579 = vmatmul.mubr.f32.gmra.mrb[0].mxu0 %v177
  %v580 = vpop.f32.mrb[0].mxu0
  %v581 = vadd.f32 0.0, %v580
  %v582 = vpop.f32.mrb[0].mxu0
  %v583 = vadd.f32 0.0, %v582
  %584 = vmatprep.mubr.f32.mxu0 0.0
  %585 = vmatmul.mubr.f32.gmra.mrb[0].mxu0 %v180
  %v586 = vpop.f32.mrb[0].mxu0
  %v587 = vadd.f32 0.0, %v586
  %v588 = vpop.f32.mrb[0].mxu0
  %v589 = vadd.f32 0.0, %v588
  %590 = vmatprep.mubr.f32.mxu0 0.0
  %591 = vmatmul.mubr.f32.gmra.mrb[0].mxu0 %v183
  %v592 = vpop.f32.mrb[0].mxu0
  %v593 = vadd.f32 0.0, %v592
  %v594 = vpop.f32.mrb[0].mxu0
  %v595 = vadd.f32 0.0, %v594
  %596 = vmatprep.mubr.f32.mxu0 0.0
  %597 = vmatmul.mubr.f32.gmra.mrb[0].mxu0 %v186
  %v598 = vpop.f32.mrb[0].mxu0
  %v599 = vadd.f32 0.0, %v598
  %v600 = vpop.f32.mrb[0].mxu0
  %v601 = vadd.f32 0.0, %v600
  %602 = vmatprep.mubr.f32.mxu0 0.0
  %603 = vmatmul.mubr.f32.gmra.mrb[0].mxu0 %v189
  %v604 = vpop.f32.mrb[0].mxu0
  %v605 = vadd.f32 0.0, %v604
  %v606 = vpop.f32.mrb[0].mxu0
  %v607 = vadd.f32 0.0, %v606
  %608 = vmatprep.mubr.f32.mxu0 0.0
  %609 = vmatmul.mubr.f32.gmra.mrb[0].mxu0 %v192
  %v610 = vpop.f32.mrb[0].mxu0
  %v611 = vadd.f32 0.0, %v610
  %v612 = vpop.f32.mrb[0].mxu0
  %v613 = vadd.f32 0.0, %v612
  %614 = vmatprep.mubr.f32.mxu0 0.0
  %615 = vmatmul.mubr.f32.gmra.mrb[0].mxu0 %v195
  %v616 = vpop.f32.mrb[0].mxu0
  %v617 = vadd.f32 0.0, %v616
  %v618 = vpop.f32.mrb[0].mxu0
  %v619 = vadd.f32 0.0, %v618
  %620 = vmatprep.mubr.f32.mxu0 0.0
  %621 = vmatmul.mubr.f32.gmra.mrb[0].mxu0 %v198
  %v622 = vpop.f32.mrb[0].mxu0
  %v623 = vadd.f32 0.0, %v622
  %v624 = vpop.f32.mrb[0].mxu0
  %v625 = vadd.f32 0.0, %v624
  %626 = vmatprep.mubr.f32.mxu0 0.0
  %627 = vmatmul.mubr.f32.gmra.mrb[0].mxu0 %v201
  %v628 = vpop.f32.mrb[0].mxu0
  %v629 = vadd.f32 0.0, %v628
  %v630 = vpop.f32.mrb[0].mxu0
  %v631 = vadd.f32 0.0, %v630
  %632 = vmatprep.mubr.f32.mxu0 0.0
  %633 = vmatmul.mubr.f32.gmra.mrb[0].mxu0 %v204
  %v634 = vpop.f32.mrb[0].mxu0
  %v635 = vadd.f32 0.0, %v634
  %v636 = vpop.f32.mrb[0].mxu0
  %v637 = vadd.f32 0.0, %v636
  %638 = vmatprep.mubr.f32.mxu0 0.0
  %639 = vmatmul.mubr.f32.gmra.mrb[0].mxu0 %v207
  %v640 = vpop.f32.mrb[0].mxu0
  %v641 = vadd.f32 0.0, %v640
  %v642 = vpop.f32.mrb[0].mxu0
  %v643 = vadd.f32 0.0, %v642
  %644 = vmatprep.mubr.f32.mxu0 0.0
  %645 = vmatmul.mubr.f32.gmra.mrb[0].mxu0 %v210
  %v646 = vpop.f32.mrb[0].mxu0
  %v647 = vadd.f32 0.0, %v646
  %v648 = vpop.f32.mrb[0].mxu0
  %v649 = vadd.f32 0.0, %v648
  %650 = vmatprep.mubr.f32.mxu0 0.0
  %651 = vmatmul.mubr.f32.gmra.mrb[0].mxu0 %v213
  %v652 = vpop.f32.mrb[0].mxu0
  %v653 = vadd.f32 0.0, %v652
  %v654 = vpop.f32.mrb[0].mxu0
  %v655 = vadd.f32 0.0, %v654
  %656 = vmatprep.mubr.f32.mxu0 0.0
  %657 = vmatmul.mubr.f32.gmra.mrb[0].mxu0 %v216
  %v658 = vpop.f32.mrb[0].mxu0
  %v659 = vadd.f32 0.0, %v658
  %v660 = vpop.f32.mrb[0].mxu0
  %v661 = vadd.f32 0.0, %v660
  %662 = vmatprep.mubr.f32.mxu0 0.0
  %663 = vmatmul.mubr.f32.gmra.mrb[0].mxu0 %v219
  %v664 = vpop.f32.mrb[0].mxu0
  %v665 = vadd.f32 0.0, %v664
  %v666 = vpop.f32.mrb[0].mxu0
  %v667 = vadd.f32 0.0, %v666
  %668 = vmatprep.mubr.f32.mxu0 0.0
  %669 = vmatmul.mubr.f32.gmra.mrb[0].mxu0 %v222
  %v670 = vpop.f32.mrb[0].mxu0
  %v671 = vadd.f32 0.0, %v670
  %v672 = vpop.f32.mrb[0].mxu0
  %v673 = vadd.f32 0.0, %v672
  %674 = vmatprep.mubr.f32.mxu0 0.0
  %675 = vmatmul.mubr.f32.gmra.mrb[0].mxu0 %v225
  %v676 = vpop.f32.mrb[0].mxu0
  %v677 = vadd.f32 0.0, %v676
  %v678 = vpop.f32.mrb[0].mxu0
  %v679 = vadd.f32 0.0, %v678
  %680 = vmatprep.mubr.f32.mxu0 0.0
  %681 = vmatmul.mubr.f32.gmra.mrb[0].mxu0 %v228
  %v682 = vpop.f32.mrb[0].mxu0
  %v683 = vadd.f32 0.0, %v682
  %v684 = vpop.f32.mrb[0].mxu0
  %v685 = vadd.f32 0.0, %v684
  %686 = vmatprep.mubr.f32.mxu0 0.0
  %687 = vmatmul.mubr.f32.gmra.mrb[0].mxu0 %v231
  %v688 = vpop.f32.mrb[0].mxu0
  %v689 = vadd.f32 0.0, %v688
  %v690 = vpop.f32.mrb[0].mxu0
  %v691 = vadd.f32 0.0, %v690
  %692 = vmatprep.mubr.f32.mxu0 0.0
  %693 = vmatmul.mubr.f32.gmra.mrb[0].mxu0 %v234
  %v694 = vpop.f32.mrb[0].mxu0
  %v695 = vadd.f32 0.0, %v694
  %v696 = vpop.f32.mrb[0].mxu0
  %v697 = vadd.f32 0.0, %v696
  %698 = vmatprep.mubr.f32.mxu0 0.0
  %699 = vmatmul.mubr.f32.gmra.mrb[0].mxu0 %v237
  %v700 = vpop.f32.mrb[0].mxu0
  %v701 = vadd.f32 0.0, %v700
  %v702 = vpop.f32.mrb[0].mxu0
  %v703 = vadd.f32 0.0, %v702
  %704 = vmatprep.mubr.f32.mxu0 0.0
  %705 = vmatmul.mubr.f32.gmra.mrb[0].mxu0 %v240
  %v706 = vpop.f32.mrb[0].mxu0
  %v707 = vadd.f32 0.0, %v706
  %v708 = vpop.f32.mrb[0].mxu0
  %v709 = vadd.f32 0.0, %v708
  %710 = vmatprep.mubr.f32.mxu0 0.0
  %711 = vmatmul.mubr.f32.gmra.mrb[0].mxu0 %v243
  %v712 = vpop.f32.mrb[0].mxu0
  %v713 = vadd.f32 0.0, %v712
  %v714 = vpop.f32.mrb[0].mxu0
  %v715 = vadd.f32 0.0, %v714
  %716 = vmatprep.mubr.f32.mxu0 0.0
  %717 = vmatmul.mubr.f32.gmra.mrb[0].mxu0 %v246
  %v718 = vpop.f32.mrb[0].mxu0
  %v719 = vadd.f32 0.0, %v718
  %v720 = vpop.f32.mrb[0].mxu0
  %v721 = vadd.f32 0.0, %v720
  %722 = vmatprep.mubr.f32.mxu0 0.0
  %723 = vmatmul.mubr.f32.gmra.mrb[0].mxu0 %v249
  %v724 = vpop.f32.mrb[0].mxu0
  %v725 = vadd.f32 0.0, %v724
  %v726 = vpop.f32.mrb[0].mxu0
  %v727 = vadd.f32 0.0, %v726
  %728 = vmatprep.mubr.f32.mxu0 0.0
  %729 = vmatmul.mubr.f32.gmra.mrb[0].mxu0 %v252
  %v730 = vpop.f32.mrb[0].mxu0
  %v731 = vadd.f32 0.0, %v730
  %v732 = vpop.f32.mrb[0].mxu0
  %v733 = vadd.f32 0.0, %v732
  %734 = vmatprep.mubr.f32.mxu0 0.0
  %735 = vmatmul.mubr.f32.gmra.mrb[0].mxu0 %v255
  %v736 = vpop.f32.mrb[0].mxu0
  %v737 = vadd.f32 0.0, %v736
  %v738 = vpop.f32.mrb[0].mxu0
  %v739 = vadd.f32 0.0, %v738
  %740 = vmatprep.mubr.f32.mxu0 0.0
  %741 = vmatmul.mubr.f32.gmra.mrb[0].mxu0 %v258
  %v742 = vpop.f32.mrb[0].mxu0
  %v743 = vadd.f32 0.0, %v742
  %v744 = vpop.f32.mrb[0].mxu0
  %v745 = vadd.f32 0.0, %v744
  %746 = vmatprep.mubr.f32.mxu0 0.0
  %747 = vmatmul.mubr.f32.gmra.mrb[0].mxu0 %v261
  %v748 = vpop.f32.mrb[0].mxu0
  %v749 = vadd.f32 0.0, %v748
  %v750 = vpop.f32.mrb[0].mxu0
  %v751 = vadd.f32 0.0, %v750
  %752 = vdwg.mxu0
  %753 = vmatprep.subr.mxu0 %v52
  %754 = vmatpush1.msra.mxu0 %v51
  %755 = vmatprep.subr.mxu0 %v77
  %756 = vmatpush1.msra.mxu0 %v76
  %757 = vmatprep.subr.mxu0 %v102
  %758 = vmatpush1.msra.mxu0 %v101
  %759 = vmatprep.subr.mxu0 %v127
  %760 = vmatpush1.msra.mxu0 %v126
  %761 = vmatprep.subr.mxu0 %v152
  %762 = vmatpush1.msra.mxu0 %v151
  %763 = vmatprep.subr.mxu0 0.0
  %764 = vmatpush1.msra.mxu0 0.0
  %765 = vmatprep.subr.mxu0 0.0
  %766 = vmatpush1.msra.mxu0 0.0
  %767 = vmatprep.subr.mxu0 0.0
  %768 = vmatpush1.msra.mxu0 0.0
  %769 = vmatprep.subr.mxu0 0.0
  %770 = vmatpush1.msra.mxu0 0.0
  %771 = vmatprep.subr.mxu0 0.0
  %772 = vmatpush1.msra.mxu0 0.0
  %773 = vmatprep.subr.mxu0 0.0
  %774 = vmatpush1.msra.mxu0 0.0
  %775 = vmatprep.subr.mxu0 0.0
  %776 = vmatpush1.msra.mxu0 0.0
  %777 = vmatprep.subr.mxu0 0.0
  %778 = vmatpush1.msra.mxu0 0.0
  %779 = vmatprep.subr.mxu0 0.0
  %780 = vmatpush1.msra.mxu0 0.0
  %781 = vmatprep.subr.mxu0 0.0
  %782 = vmatpush1.msra.mxu0 0.0
  %783 = vmatprep.subr.mxu0 0.0
  %784 = vmatpush1.msra.mxu0 0.0
  %785 = vmatprep.subr.mxu0 0.0
  %786 = vmatpush1.msra.mxu0 0.0
  %787 = vmatprep.subr.mxu0 0.0
  %788 = vmatpush1.msra.mxu0 0.0
  %789 = vmatprep.subr.mxu0 0.0
  %790 = vmatpush1.msra.mxu0 0.0
  %791 = vmatprep.subr.mxu0 0.0
  %792 = vmatpush1.msra.mxu0 0.0
  %793 = vmatprep.subr.mxu0 0.0
  %794 = vmatpush1.msra.mxu0 0.0
  %795 = vmatprep.subr.mxu0 0.0
  %796 = vmatpush1.msra.mxu0 0.0
  %797 = vmatprep.subr.mxu0 0.0
  %798 = vmatpush1.msra.mxu0 0.0
  %799 = vmatprep.subr.mxu0 0.0
  %800 = vmatpush1.msra.mxu0 0.0
  %801 = vmatprep.subr.mxu0 0.0
  %802 = vmatpush1.msra.mxu0 0.0
  %803 = vmatprep.subr.mxu0 0.0
  %804 = vmatpush1.msra.mxu0 0.0
  %805 = vmatprep.subr.mxu0 0.0
  %806 = vmatpush1.msra.mxu0 0.0
  %807 = vmatprep.subr.mxu0 0.0
  %808 = vmatpush1.msra.mxu0 0.0
  %809 = vmatprep.subr.mxu0 0.0
  %810 = vmatpush1.msra.mxu0 0.0
  %811 = vmatprep.subr.mxu0 0.0
  %812 = vmatpush1.msra.mxu0 0.0
  %813 = vmatprep.subr.mxu0 0.0
  %814 = vmatpush1.msra.mxu0 0.0
  %815 = vmatprep.subr.mxu0 0.0
  %816 = vmatpush1.msra.mxu0 0.0
  %817 = vmatprep.mubr.f32.mxu0 0.0
  %818 = vmatmul.mubr.f32.gmra.mrb[0].mxu0 %v174
  %v819 = vpop.f32.mrb[0].mxu0
  %v820 = vadd.f32 0.0, %v819
  %v821 = vpop.f32.mrb[0].mxu0
  %v822 = vadd.f32 0.0, %v821
  %823 = vmatprep.mubr.f32.mxu0 0.0
  %824 = vmatmul.mubr.f32.gmra.mrb[0].mxu0 %v177
  %v825 = vpop.f32.mrb[0].mxu0
  %v826 = vadd.f32 0.0, %v825
  %v827 = vpop.f32.mrb[0].mxu0
  %v828 = vadd.f32 0.0, %v827
  %829 = vmatprep.mubr.f32.mxu0 0.0
  %830 = vmatmul.mubr.f32.gmra.mrb[0].mxu0 %v180
  %v831 = vpop.f32.mrb[0].mxu0
  %v832 = vadd.f32 0.0, %v831
  %v833 = vpop.f32.mrb[0].mxu0
  %v834 = vadd.f32 0.0, %v833
  %835 = vmatprep.mubr.f32.mxu0 0.0
  %836 = vmatmul.mubr.f32.gmra.mrb[0].mxu0 %v183
  %v837 = vpop.f32.mrb[0].mxu0
  %v838 = vadd.f32 0.0, %v837
  %v839 = vpop.f32.mrb[0].mxu0
  %v840 = vadd.f32 0.0, %v839
  %841 = vmatprep.mubr.f32.mxu0 0.0
  %842 = vmatmul.mubr.f32.gmra.mrb[0].mxu0 %v186
  %v843 = vpop.f32.mrb[0].mxu0
  %v844 = vadd.f32 0.0, %v843
  %v845 = vpop.f32.mrb[0].mxu0
  %v846 = vadd.f32 0.0, %v845
  %847 = vmatprep.mubr.f32.mxu0 0.0
  %848 = vmatmul.mubr.f32.gmra.mrb[0].mxu0 %v189
  %v849 = vpop.f32.mrb[0].mxu0
  %v850 = vadd.f32 0.0, %v849
  %v851 = vpop.f32.mrb[0].mxu0
  %v852 = vadd.f32 0.0, %v851
  %853 = vmatprep.mubr.f32.mxu0 0.0
  %854 = vmatmul.mubr.f32.gmra.mrb[0].mxu0 %v192
  %v855 = vpop.f32.mrb[0].mxu0
  %v856 = vadd.f32 0.0, %v855
  %v857 = vpop.f32.mrb[0].mxu0
  %v858 = vadd.f32 0.0, %v857
  %859 = vmatprep.mubr.f32.mxu0 0.0
  %860 = vmatmul.mubr.f32.gmra.mrb[0].mxu0 %v195
  %v861 = vpop.f32.mrb[0].mxu0
  %v862 = vadd.f32 0.0, %v861
  %v863 = vpop.f32.mrb[0].mxu0
  %v864 = vadd.f32 0.0, %v863
  %865 = vmatprep.mubr.f32.mxu0 0.0
  %866 = vmatmul.mubr.f32.gmra.mrb[0].mxu0 %v198
  %v867 = vpop.f32.mrb[0].mxu0
  %v868 = vadd.f32 0.0, %v867
  %v869 = vpop.f32.mrb[0].mxu0
  %v870 = vadd.f32 0.0, %v869
  %871 = vmatprep.mubr.f32.mxu0 0.0
  %872 = vmatmul.mubr.f32.gmra.mrb[0].mxu0 %v201
  %v873 = vpop.f32.mrb[0].mxu0
  %v874 = vadd.f32 0.0, %v873
  %v875 = vpop.f32.mrb[0].mxu0
  %v876 = vadd.f32 0.0, %v875
  %877 = vmatprep.mubr.f32.mxu0 0.0
  %878 = vmatmul.mubr.f32.gmra.mrb[0].mxu0 %v204
  %v879 = vpop.f32.mrb[0].mxu0
  %v880 = vadd.f32 0.0, %v879
  %v881 = vpop.f32.mrb[0].mxu0
  %v882 = vadd.f32 0.0, %v881
  %883 = vmatprep.mubr.f32.mxu0 0.0
  %884 = vmatmul.mubr.f32.gmra.mrb[0].mxu0 %v207
  %v885 = vpop.f32.mrb[0].mxu0
  %v886 = vadd.f32 0.0, %v885
  %v887 = vpop.f32.mrb[0].mxu0
  %v888 = vadd.f32 0.0, %v887
  %889 = vmatprep.mubr.f32.mxu0 0.0
  %890 = vmatmul.mubr.f32.gmra.mrb[0].mxu0 %v210
  %v891 = vpop.f32.mrb[0].mxu0
  %v892 = vadd.f32 0.0, %v891
  %v893 = vpop.f32.mrb[0].mxu0
  %v894 = vadd.f32 0.0, %v893
  %895 = vmatprep.mubr.f32.mxu0 0.0
  %896 = vmatmul.mubr.f32.gmra.mrb[0].mxu0 %v213
  %v897 = vpop.f32.mrb[0].mxu0
  %v898 = vadd.f32 0.0, %v897
  %v899 = vpop.f32.mrb[0].mxu0
  %v900 = vadd.f32 0.0, %v899
  %901 = vmatprep.mubr.f32.mxu0 0.0
  %902 = vmatmul.mubr.f32.gmra.mrb[0].mxu0 %v216
  %v903 = vpop.f32.mrb[0].mxu0
  %v904 = vadd.f32 0.0, %v903
  %v905 = vpop.f32.mrb[0].mxu0
  %v906 = vadd.f32 0.0, %v905
  %907 = vmatprep.mubr.f32.mxu0 0.0
  %908 = vmatmul.mubr.f32.gmra.mrb[0].mxu0 %v219
  %v909 = vpop.f32.mrb[0].mxu0
  %v910 = vadd.f32 0.0, %v909
  %v911 = vpop.f32.mrb[0].mxu0
  %v912 = vadd.f32 0.0, %v911
  %913 = vmatprep.mubr.f32.mxu0 0.0
  %914 = vmatmul.mubr.f32.gmra.mrb[0].mxu0 %v222
  %v915 = vpop.f32.mrb[0].mxu0
  %v916 = vadd.f32 0.0, %v915
  %v917 = vpop.f32.mrb[0].mxu0
  %v918 = vadd.f32 0.0, %v917
  %919 = vmatprep.mubr.f32.mxu0 0.0
  %920 = vmatmul.mubr.f32.gmra.mrb[0].mxu0 %v225
  %v921 = vpop.f32.mrb[0].mxu0
  %v922 = vadd.f32 0.0, %v921
  %v923 = vpop.f32.mrb[0].mxu0
  %v924 = vadd.f32 0.0, %v923
  %925 = vmatprep.mubr.f32.mxu0 0.0
  %926 = vmatmul.mubr.f32.gmra.mrb[0].mxu0 %v228
  %v927 = vpop.f32.mrb[0].mxu0
  %v928 = vadd.f32 0.0, %v927
  %v929 = vpop.f32.mrb[0].mxu0
  %v930 = vadd.f32 0.0, %v929
  %931 = vmatprep.mubr.f32.mxu0 0.0
  %932 = vmatmul.mubr.f32.gmra.mrb[0].mxu0 %v231
  %v933 = vpop.f32.mrb[0].mxu0
  %v934 = vadd.f32 0.0, %v933
  %v935 = vpop.f32.mrb[0].mxu0
  %v936 = vadd.f32 0.0, %v935
  %937 = vmatprep.mubr.f32.mxu0 0.0
  %938 = vmatmul.mubr.f32.gmra.mrb[0].mxu0 %v234
  %v939 = vpop.f32.mrb[0].mxu0
  %v940 = vadd.f32 0.0, %v939
  %v941 = vpop.f32.mrb[0].mxu0
  %v942 = vadd.f32 0.0, %v941
  %943 = vmatprep.mubr.f32.mxu0 0.0
  %944 = vmatmul.mubr.f32.gmra.mrb[0].mxu0 %v237
  %v945 = vpop.f32.mrb[0].mxu0
  %v946 = vadd.f32 0.0, %v945
  %v947 = vpop.f32.mrb[0].mxu0
  %v948 = vadd.f32 0.0, %v947
  %949 = vmatprep.mubr.f32.mxu0 0.0
  %950 = vmatmul.mubr.f32.gmra.mrb[0].mxu0 %v240
  %v951 = vpop.f32.mrb[0].mxu0
  %v952 = vadd.f32 0.0, %v951
  %v953 = vpop.f32.mrb[0].mxu0
  %v954 = vadd.f32 0.0, %v953
  %955 = vmatprep.mubr.f32.mxu0 0.0
  %956 = vmatmul.mubr.f32.gmra.mrb[0].mxu0 %v243
  %v957 = vpop.f32.mrb[0].mxu0
  %v958 = vadd.f32 0.0, %v957
  %v959 = vpop.f32.mrb[0].mxu0
  %v960 = vadd.f32 0.0, %v959
  %961 = vmatprep.mubr.f32.mxu0 0.0
  %962 = vmatmul.mubr.f32.gmra.mrb[0].mxu0 %v246
  %v963 = vpop.f32.mrb[0].mxu0
  %v964 = vadd.f32 0.0, %v963
  %v965 = vpop.f32.mrb[0].mxu0
  %v966 = vadd.f32 0.0, %v965
  %967 = vmatprep.mubr.f32.mxu0 0.0
  %968 = vmatmul.mubr.f32.gmra.mrb[0].mxu0 %v249
  %v969 = vpop.f32.mrb[0].mxu0
  %v970 = vadd.f32 0.0, %v969
  %v971 = vpop.f32.mrb[0].mxu0
  %v972 = vadd.f32 0.0, %v971
  %973 = vmatprep.mubr.f32.mxu0 0.0
  %974 = vmatmul.mubr.f32.gmra.mrb[0].mxu0 %v252
  %v975 = vpop.f32.mrb[0].mxu0
  %v976 = vadd.f32 0.0, %v975
  %v977 = vpop.f32.mrb[0].mxu0
  %v978 = vadd.f32 0.0, %v977
  %979 = vmatprep.mubr.f32.mxu0 0.0
  %980 = vmatmul.mubr.f32.gmra.mrb[0].mxu0 %v255
  %v981 = vpop.f32.mrb[0].mxu0
  %v982 = vadd.f32 0.0, %v981
  %v983 = vpop.f32.mrb[0].mxu0
  %v984 = vadd.f32 0.0, %v983
  %985 = vmatprep.mubr.f32.mxu0 0.0
  %986 = vmatmul.mubr.f32.gmra.mrb[0].mxu0 %v258
  %v987 = vpop.f32.mrb[0].mxu0
  %v988 = vadd.f32 0.0, %v987
  %v989 = vpop.f32.mrb[0].mxu0
  %v990 = vadd.f32 0.0, %v989
  %991 = vmatprep.mubr.f32.mxu0 0.0
  %992 = vmatmul.mubr.f32.gmra.mrb[0].mxu0 %v261
  %v993 = vpop.f32.mrb[0].mxu0
  %v994 = vadd.f32 0.0, %v993
  %v995 = vpop.f32.mrb[0].mxu0
  %v996 = vadd.f32 0.0, %v995
  %997 = vdwg.mxu0
  %998 = vmatprep.subr.mxu0 %v54
  %999 = vmatpush1.msra.mxu0 %v53
  %1000 = vmatprep.subr.mxu0 %v79
  %1001 = vmatpush1.msra.mxu0 %v78
  %1002 = vmatprep.subr.mxu0 %v104
  %1003 = vmatpush1.msra.mxu0 %v103
  %1004 = vmatprep.subr.mxu0 %v129
  %1005 = vmatpush1.msra.mxu0 %v128
  %1006 = vmatprep.subr.mxu0 %v154
  %1007 = vmatpush1.msra.mxu0 %v153
  %1008 = vmatprep.subr.mxu0 0.0
  %1009 = vmatpush1.msra.mxu0 0.0
  %1010 = vmatprep.subr.mxu0 0.0
  %1011 = vmatpush1.msra.mxu0 0.0
  %1012 = vmatprep.subr.mxu0 0.0
  %1013 = vmatpush1.msra.mxu0 0.0
  %1014 = vmatprep.subr.mxu0 0.0
  %1015 = vmatpush1.msra.mxu0 0.0
  %1016 = vmatprep.subr.mxu0 0.0
  %1017 = vmatpush1.msra.mxu0 0.0
  %1018 = vmatprep.subr.mxu0 0.0
  %1019 = vmatpush1.msra.mxu0 0.0
  %1020 = vmatprep.subr.mxu0 0.0
  %1021 = vmatpush1.msra.mxu0 0.0
  %1022 = vmatprep.subr.mxu0 0.0
  %1023 = vmatpush1.msra.mxu0 0.0
  %1024 = vmatprep.subr.mxu0 0.0
  %1025 = vmatpush1.msra.mxu0 0.0
  %1026 = vmatprep.subr.mxu0 0.0
  %1027 = vmatpush1.msra.mxu0 0.0
  %1028 = vmatprep.subr.mxu0 0.0
  %1029 = vmatpush1.msra.mxu0 0.0
  %1030 = vmatprep.subr.mxu0 0.0
  %1031 = vmatpush1.msra.mxu0 0.0
  %1032 = vmatprep.subr.mxu0 0.0
  %1033 = vmatpush1.msra.mxu0 0.0
  %1034 = vmatprep.subr.mxu0 0.0
  %1035 = vmatpush1.msra.mxu0 0.0
  %1036 = vmatprep.subr.mxu0 0.0
  %1037 = vmatpush1.msra.mxu0 0.0
  %1038 = vmatprep.subr.mxu0 0.0
  %1039 = vmatpush1.msra.mxu0 0.0
  %1040 = vmatprep.subr.mxu0 0.0
  %1041 = vmatpush1.msra.mxu0 0.0
  %1042 = vmatprep.subr.mxu0 0.0
  %1043 = vmatpush1.msra.mxu0 0.0
  %1044 = vmatprep.subr.mxu0 0.0
  %1045 = vmatpush1.msra.mxu0 0.0
  %1046 = vmatprep.subr.mxu0 0.0
  %1047 = vmatpush1.msra.mxu0 0.0
  %1048 = vmatprep.subr.mxu0 0.0
  %1049 = vmatpush1.msra.mxu0 0.0
  %1050 = vmatprep.subr.mxu0 0.0
  %1051 = vmatpush1.msra.mxu0 0.0
  %1052 = vmatprep.subr.mxu0 0.0
  %1053 = vmatpush1.msra.mxu0 0.0
  %1054 = vmatprep.subr.mxu0 0.0
  %1055 = vmatpush1.msra.mxu0 0.0
  %1056 = vmatprep.subr.mxu0 0.0
  %1057 = vmatpush1.msra.mxu0 0.0
  %1058 = vmatprep.subr.mxu0 0.0
  %1059 = vmatpush1.msra.mxu0 0.0
  %1060 = vmatprep.subr.mxu0 0.0
  %1061 = vmatpush1.msra.mxu0 0.0
  %1062 = vmatprep.mubr.f32.mxu0 0.0
  %1063 = vmatmul.mubr.f32.gmra.mrb[0].mxu0 %v174
  %v1064 = vpop.f32.mrb[0].mxu0
  %v1065 = vadd.f32 0.0, %v1064
  %v1066 = vpop.f32.mrb[0].mxu0
  %v1067 = vadd.f32 0.0, %v1066
  %1068 = vmatprep.mubr.f32.mxu0 0.0
  %1069 = vmatmul.mubr.f32.gmra.mrb[0].mxu0 %v177
  %v1070 = vpop.f32.mrb[0].mxu0
  %v1071 = vadd.f32 0.0, %v1070
  %v1072 = vpop.f32.mrb[0].mxu0
  %v1073 = vadd.f32 0.0, %v1072
  %1074 = vmatprep.mubr.f32.mxu0 0.0
  %1075 = vmatmul.mubr.f32.gmra.mrb[0].mxu0 %v180
  %v1076 = vpop.f32.mrb[0].mxu0
  %v1077 = vadd.f32 0.0, %v1076
  %v1078 = vpop.f32.mrb[0].mxu0
  %v1079 = vadd.f32 0.0, %v1078
  %1080 = vmatprep.mubr.f32.mxu0 0.0
  %1081 = vmatmul.mubr.f32.gmra.mrb[0].mxu0 %v183
  %v1082 = vpop.f32.mrb[0].mxu0
  %v1083 = vadd.f32 0.0, %v1082
  %v1084 = vpop.f32.mrb[0].mxu0
  %v1085 = vadd.f32 0.0, %v1084
  %1086 = vmatprep.mubr.f32.mxu0 0.0
  %1087 = vmatmul.mubr.f32.gmra.mrb[0].mxu0 %v186
  %v1088 = vpop.f32.mrb[0].mxu0
  %v1089 = vadd.f32 0.0, %v1088
  %v1090 = vpop.f32.mrb[0].mxu0
  %v1091 = vadd.f32 0.0, %v1090
  %1092 = vmatprep.mubr.f32.mxu0 0.0
  %1093 = vmatmul.mubr.f32.gmra.mrb[0].mxu0 %v189
  %v1094 = vpop.f32.mrb[0].mxu0
  %v1095 = vadd.f32 0.0, %v1094
  %v1096 = vpop.f32.mrb[0].mxu0
  %v1097 = vadd.f32 0.0, %v1096
  %1098 = vmatprep.mubr.f32.mxu0 0.0
  %1099 = vmatmul.mubr.f32.gmra.mrb[0].mxu0 %v192
  %v1100 = vpop.f32.mrb[0].mxu0
  %v1101 = vadd.f32 0.0, %v1100
  %v1102 = vpop.f32.mrb[0].mxu0
  %v1103 = vadd.f32 0.0, %v1102
  %1104 = vmatprep.mubr.f32.mxu0 0.0
  %1105 = vmatmul.mubr.f32.gmra.mrb[0].mxu0 %v195
  %v1106 = vpop.f32.mrb[0].mxu0
  %v1107 = vadd.f32 0.0, %v1106
  %v1108 = vpop.f32.mrb[0].mxu0
  %v1109 = vadd.f32 0.0, %v1108
  %1110 = vmatprep.mubr.f32.mxu0 0.0
  %1111 = vmatmul.mubr.f32.gmra.mrb[0].mxu0 %v198
  %v1112 = vpop.f32.mrb[0].mxu0
  %v1113 = vadd.f32 0.0, %v1112
  %v1114 = vpop.f32.mrb[0].mxu0
  %v1115 = vadd.f32 0.0, %v1114
  %1116 = vmatprep.mubr.f32.mxu0 0.0
  %1117 = vmatmul.mubr.f32.gmra.mrb[0].mxu0 %v201
  %v1118 = vpop.f32.mrb[0].mxu0
  %v1119 = vadd.f32 0.0, %v1118
  %v1120 = vpop.f32.mrb[0].mxu0
  %v1121 = vadd.f32 0.0, %v1120
  %1122 = vmatprep.mubr.f32.mxu0 0.0
  %1123 = vmatmul.mubr.f32.gmra.mrb[0].mxu0 %v204
  %v1124 = vpop.f32.mrb[0].mxu0
  %v1125 = vadd.f32 0.0, %v1124
  %v1126 = vpop.f32.mrb[0].mxu0
  %v1127 = vadd.f32 0.0, %v1126
  %1128 = vmatprep.mubr.f32.mxu0 0.0
  %1129 = vmatmul.mubr.f32.gmra.mrb[0].mxu0 %v207
  %v1130 = vpop.f32.mrb[0].mxu0
  %v1131 = vadd.f32 0.0, %v1130
  %v1132 = vpop.f32.mrb[0].mxu0
  %v1133 = vadd.f32 0.0, %v1132
  %1134 = vmatprep.mubr.f32.mxu0 0.0
  %1135 = vmatmul.mubr.f32.gmra.mrb[0].mxu0 %v210
  %v1136 = vpop.f32.mrb[0].mxu0
  %v1137 = vadd.f32 0.0, %v1136
  %v1138 = vpop.f32.mrb[0].mxu0
  %v1139 = vadd.f32 0.0, %v1138
  %1140 = vmatprep.mubr.f32.mxu0 0.0
  %1141 = vmatmul.mubr.f32.gmra.mrb[0].mxu0 %v213
  %v1142 = vpop.f32.mrb[0].mxu0
  %v1143 = vadd.f32 0.0, %v1142
  %v1144 = vpop.f32.mrb[0].mxu0
  %v1145 = vadd.f32 0.0, %v1144
  %1146 = vmatprep.mubr.f32.mxu0 0.0
  %1147 = vmatmul.mubr.f32.gmra.mrb[0].mxu0 %v216
  %v1148 = vpop.f32.mrb[0].mxu0
  %v1149 = vadd.f32 0.0, %v1148
  %v1150 = vpop.f32.mrb[0].mxu0
  %v1151 = vadd.f32 0.0, %v1150
  %1152 = vmatprep.mubr.f32.mxu0 0.0
  %1153 = vmatmul.mubr.f32.gmra.mrb[0].mxu0 %v219
  %v1154 = vpop.f32.mrb[0].mxu0
  %v1155 = vadd.f32 0.0, %v1154
  %v1156 = vpop.f32.mrb[0].mxu0
  %v1157 = vadd.f32 0.0, %v1156
  %1158 = vmatprep.mubr.f32.mxu0 0.0
  %1159 = vmatmul.mubr.f32.gmra.mrb[0].mxu0 %v222
  %v1160 = vpop.f32.mrb[0].mxu0
  %v1161 = vadd.f32 0.0, %v1160
  %v1162 = vpop.f32.mrb[0].mxu0
  %v1163 = vadd.f32 0.0, %v1162
  %1164 = vmatprep.mubr.f32.mxu0 0.0
  %1165 = vmatmul.mubr.f32.gmra.mrb[0].mxu0 %v225
  %v1166 = vpop.f32.mrb[0].mxu0
  %v1167 = vadd.f32 0.0, %v1166
  %v1168 = vpop.f32.mrb[0].mxu0
  %v1169 = vadd.f32 0.0, %v1168
  %1170 = vmatprep.mubr.f32.mxu0 0.0
  %1171 = vmatmul.mubr.f32.gmra.mrb[0].mxu0 %v228
  %v1172 = vpop.f32.mrb[0].mxu0
  %v1173 = vadd.f32 0.0, %v1172
  %v1174 = vpop.f32.mrb[0].mxu0
  %v1175 = vadd.f32 0.0, %v1174
  %1176 = vmatprep.mubr.f32.mxu0 0.0
  %1177 = vmatmul.mubr.f32.gmra.mrb[0].mxu0 %v231
  %v1178 = vpop.f32.mrb[0].mxu0
  %v1179 = vadd.f32 0.0, %v1178
  %v1180 = vpop.f32.mrb[0].mxu0
  %v1181 = vadd.f32 0.0, %v1180
  %1182 = vmatprep.mubr.f32.mxu0 0.0
  %1183 = vmatmul.mubr.f32.gmra.mrb[0].mxu0 %v234
  %v1184 = vpop.f32.mrb[0].mxu0
  %v1185 = vadd.f32 0.0, %v1184
  %v1186 = vpop.f32.mrb[0].mxu0
  %v1187 = vadd.f32 0.0, %v1186
  %1188 = vmatprep.mubr.f32.mxu0 0.0
  %1189 = vmatmul.mubr.f32.gmra.mrb[0].mxu0 %v237
  %v1190 = vpop.f32.mrb[0].mxu0
  %v1191 = vadd.f32 0.0, %v1190
  %v1192 = vpop.f32.mrb[0].mxu0
  %v1193 = vadd.f32 0.0, %v1192
  %1194 = vmatprep.mubr.f32.mxu0 0.0
  %1195 = vmatmul.mubr.f32.gmra.mrb[0].mxu0 %v240
  %v1196 = vpop.f32.mrb[0].mxu0
  %v1197 = vadd.f32 0.0, %v1196
  %v1198 = vpop.f32.mrb[0].mxu0
  %v1199 = vadd.f32 0.0, %v1198
  %1200 = vmatprep.mubr.f32.mxu0 0.0
  %1201 = vmatmul.mubr.f32.gmra.mrb[0].mxu0 %v243
  %v1202 = vpop.f32.mrb[0].mxu0
  %v1203 = vadd.f32 0.0, %v1202
  %v1204 = vpop.f32.mrb[0].mxu0
  %v1205 = vadd.f32 0.0, %v1204
  %1206 = vmatprep.mubr.f32.mxu0 0.0
  %1207 = vmatmul.mubr.f32.gmra.mrb[0].mxu0 %v246
  %v1208 = vpop.f32.mrb[0].mxu0
  %v1209 = vadd.f32 0.0, %v1208
  %v1210 = vpop.f32.mrb[0].mxu0
  %v1211 = vadd.f32 0.0, %v1210
  %1212 = vmatprep.mubr.f32.mxu0 0.0
  %1213 = vmatmul.mubr.f32.gmra.mrb[0].mxu0 %v249
  %v1214 = vpop.f32.mrb[0].mxu0
  %v1215 = vadd.f32 0.0, %v1214
  %v1216 = vpop.f32.mrb[0].mxu0
  %v1217 = vadd.f32 0.0, %v1216
  %1218 = vmatprep.mubr.f32.mxu0 0.0
  %1219 = vmatmul.mubr.f32.gmra.mrb[0].mxu0 %v252
  %v1220 = vpop.f32.mrb[0].mxu0
  %v1221 = vadd.f32 0.0, %v1220
  %v1222 = vpop.f32.mrb[0].mxu0
  %v1223 = vadd.f32 0.0, %v1222
  %1224 = vmatprep.mubr.f32.mxu0 0.0
  %1225 = vmatmul.mubr.f32.gmra.mrb[0].mxu0 %v255
  %v1226 = vpop.f32.mrb[0].mxu0
  %v1227 = vadd.f32 0.0, %v1226
  %v1228 = vpop.f32.mrb[0].mxu0
  %v1229 = vadd.f32 0.0, %v1228
  %1230 = vmatprep.mubr.f32.mxu0 0.0
  %1231 = vmatmul.mubr.f32.gmra.mrb[0].mxu0 %v258
  %v1232 = vpop.f32.mrb[0].mxu0
  %v1233 = vadd.f32 0.0, %v1232
  %v1234 = vpop.f32.mrb[0].mxu0
  %v1235 = vadd.f32 0.0, %v1234
  %1236 = vmatprep.mubr.f32.mxu0 0.0
  %1237 = vmatmul.mubr.f32.gmra.mrb[0].mxu0 %v261
  %v1238 = vpop.f32.mrb[0].mxu0
  %v1239 = vadd.f32 0.0, %v1238
  %v1240 = vpop.f32.mrb[0].mxu0
  %v1241 = vadd.f32 0.0, %v1240
  %1242 = vdwg.mxu0
  %1243 = vmatprep.subr.mxu0 %v56
  %1244 = vmatpush1.msra.mxu0 %v55
  %1245 = vmatprep.subr.mxu0 %v81
  %1246 = vmatpush1.msra.mxu0 %v80
  %1247 = vmatprep.subr.mxu0 %v106
  %1248 = vmatpush1.msra.mxu0 %v105
  %1249 = vmatprep.subr.mxu0 %v131
  %1250 = vmatpush1.msra.mxu0 %v130
  %1251 = vmatprep.subr.mxu0 %v156
  %1252 = vmatpush1.msra.mxu0 %v155
  %1253 = vmatprep.subr.mxu0 0.0
  %1254 = vmatpush1.msra.mxu0 0.0
  %1255 = vmatprep.subr.mxu0 0.0
  %1256 = vmatpush1.msra.mxu0 0.0
  %1257 = vmatprep.subr.mxu0 0.0
  %1258 = vmatpush1.msra.mxu0 0.0
  %1259 = vmatprep.subr.mxu0 0.0
  %1260 = vmatpush1.msra.mxu0 0.0
  %1261 = vmatprep.subr.mxu0 0.0
  %1262 = vmatpush1.msra.mxu0 0.0
  %1263 = vmatprep.subr.mxu0 0.0
  %1264 = vmatpush1.msra.mxu0 0.0
  %1265 = vmatprep.subr.mxu0 0.0
  %1266 = vmatpush1.msra.mxu0 0.0
  %1267 = vmatprep.subr.mxu0 0.0
  %1268 = vmatpush1.msra.mxu0 0.0
  %1269 = vmatprep.subr.mxu0 0.0
  %1270 = vmatpush1.msra.mxu0 0.0
  %1271 = vmatprep.subr.mxu0 0.0
  %1272 = vmatpush1.msra.mxu0 0.0
  %1273 = vmatprep.subr.mxu0 0.0
  %1274 = vmatpush1.msra.mxu0 0.0
  %1275 = vmatprep.subr.mxu0 0.0
  %1276 = vmatpush1.msra.mxu0 0.0
  %1277 = vmatprep.subr.mxu0 0.0
  %1278 = vmatpush1.msra.mxu0 0.0
  %1279 = vmatprep.subr.mxu0 0.0
  %1280 = vmatpush1.msra.mxu0 0.0
  %1281 = vmatprep.subr.mxu0 0.0
  %1282 = vmatpush1.msra.mxu0 0.0
  %1283 = vmatprep.subr.mxu0 0.0
  %1284 = vmatpush1.msra.mxu0 0.0
  %1285 = vmatprep.subr.mxu0 0.0
  %1286 = vmatpush1.msra.mxu0 0.0
  %1287 = vmatprep.subr.mxu0 0.0
  %1288 = vmatpush1.msra.mxu0 0.0
  %1289 = vmatprep.subr.mxu0 0.0
  %1290 = vmatpush1.msra.mxu0 0.0
  %1291 = vmatprep.subr.mxu0 0.0
  %1292 = vmatpush1.msra.mxu0 0.0
  %1293 = vmatprep.subr.mxu0 0.0
  %1294 = vmatpush1.msra.mxu0 0.0
  %1295 = vmatprep.subr.mxu0 0.0
  %1296 = vmatpush1.msra.mxu0 0.0
  %1297 = vmatprep.subr.mxu0 0.0
  %1298 = vmatpush1.msra.mxu0 0.0
  %1299 = vmatprep.subr.mxu0 0.0
  %1300 = vmatpush1.msra.mxu0 0.0
  %1301 = vmatprep.subr.mxu0 0.0
  %1302 = vmatpush1.msra.mxu0 0.0
  %1303 = vmatprep.subr.mxu0 0.0
  %1304 = vmatpush1.msra.mxu0 0.0
  %1305 = vmatprep.subr.mxu0 0.0
  %1306 = vmatpush1.msra.mxu0 0.0
  %1307 = vmatprep.mubr.f32.mxu0 0.0
  %1308 = vmatmul.mubr.f32.gmra.mrb[0].mxu0 %v174
  %v1309 = vpop.f32.mrb[0].mxu0
  %v1310 = vadd.f32 0.0, %v1309
  %v1311 = vpop.f32.mrb[0].mxu0
  %v1312 = vadd.f32 0.0, %v1311
  %1313 = vmatprep.mubr.f32.mxu0 0.0
  %1314 = vmatmul.mubr.f32.gmra.mrb[0].mxu0 %v177
  %v1315 = vpop.f32.mrb[0].mxu0
  %v1316 = vadd.f32 0.0, %v1315
  %v1317 = vpop.f32.mrb[0].mxu0
  %v1318 = vadd.f32 0.0, %v1317
  %1319 = vmatprep.mubr.f32.mxu0 0.0
  %1320 = vmatmul.mubr.f32.gmra.mrb[0].mxu0 %v180
  %v1321 = vpop.f32.mrb[0].mxu0
  %v1322 = vadd.f32 0.0, %v1321
  %v1323 = vpop.f32.mrb[0].mxu0
  %v1324 = vadd.f32 0.0, %v1323
  %1325 = vmatprep.mubr.f32.mxu0 0.0
  %1326 = vmatmul.mubr.f32.gmra.mrb[0].mxu0 %v183
  %v1327 = vpop.f32.mrb[0].mxu0
  %v1328 = vadd.f32 0.0, %v1327
  %v1329 = vpop.f32.mrb[0].mxu0
  %v1330 = vadd.f32 0.0, %v1329
  %1331 = vmatprep.mubr.f32.mxu0 0.0
  %1332 = vmatmul.mubr.f32.gmra.mrb[0].mxu0 %v186
  %v1333 = vpop.f32.mrb[0].mxu0
  %v1334 = vadd.f32 0.0, %v1333
  %v1335 = vpop.f32.mrb[0].mxu0
  %v1336 = vadd.f32 0.0, %v1335
  %1337 = vmatprep.mubr.f32.mxu0 0.0
  %1338 = vmatmul.mubr.f32.gmra.mrb[0].mxu0 %v189
  %v1339 = vpop.f32.mrb[0].mxu0
  %v1340 = vadd.f32 0.0, %v1339
  %v1341 = vpop.f32.mrb[0].mxu0
  %v1342 = vadd.f32 0.0, %v1341
  %1343 = vmatprep.mubr.f32.mxu0 0.0
  %1344 = vmatmul.mubr.f32.gmra.mrb[0].mxu0 %v192
  %v1345 = vpop.f32.mrb[0].mxu0
  %v1346 = vadd.f32 0.0, %v1345
  %v1347 = vpop.f32.mrb[0].mxu0
  %v1348 = vadd.f32 0.0, %v1347
  %1349 = vmatprep.mubr.f32.mxu0 0.0
  %1350 = vmatmul.mubr.f32.gmra.mrb[0].mxu0 %v195
  %v1351 = vpop.f32.mrb[0].mxu0
  %v1352 = vadd.f32 0.0, %v1351
  %v1353 = vpop.f32.mrb[0].mxu0
  %v1354 = vadd.f32 0.0, %v1353
  %1355 = vmatprep.mubr.f32.mxu0 0.0
  %1356 = vmatmul.mubr.f32.gmra.mrb[0].mxu0 %v198
  %v1357 = vpop.f32.mrb[0].mxu0
  %v1358 = vadd.f32 0.0, %v1357
  %v1359 = vpop.f32.mrb[0].mxu0
  %v1360 = vadd.f32 0.0, %v1359
  %1361 = vmatprep.mubr.f32.mxu0 0.0
  %1362 = vmatmul.mubr.f32.gmra.mrb[0].mxu0 %v201
  %v1363 = vpop.f32.mrb[0].mxu0
  %v1364 = vadd.f32 0.0, %v1363
  %v1365 = vpop.f32.mrb[0].mxu0
  %v1366 = vadd.f32 0.0, %v1365
  %1367 = vmatprep.mubr.f32.mxu0 0.0
  %1368 = vmatmul.mubr.f32.gmra.mrb[0].mxu0 %v204
  %v1369 = vpop.f32.mrb[0].mxu0
  %v1370 = vadd.f32 0.0, %v1369
  %v1371 = vpop.f32.mrb[0].mxu0
  %v1372 = vadd.f32 0.0, %v1371
  %1373 = vmatprep.mubr.f32.mxu0 0.0
  %1374 = vmatmul.mubr.f32.gmra.mrb[0].mxu0 %v207
  %v1375 = vpop.f32.mrb[0].mxu0
  %v1376 = vadd.f32 0.0, %v1375
  %v1377 = vpop.f32.mrb[0].mxu0
  %v1378 = vadd.f32 0.0, %v1377
  %1379 = vmatprep.mubr.f32.mxu0 0.0
  %1380 = vmatmul.mubr.f32.gmra.mrb[0].mxu0 %v210
  %v1381 = vpop.f32.mrb[0].mxu0
  %v1382 = vadd.f32 0.0, %v1381
  %v1383 = vpop.f32.mrb[0].mxu0
  %v1384 = vadd.f32 0.0, %v1383
  %1385 = vmatprep.mubr.f32.mxu0 0.0
  %1386 = vmatmul.mubr.f32.gmra.mrb[0].mxu0 %v213
  %v1387 = vpop.f32.mrb[0].mxu0
  %v1388 = vadd.f32 0.0, %v1387
  %v1389 = vpop.f32.mrb[0].mxu0
  %v1390 = vadd.f32 0.0, %v1389
  %1391 = vmatprep.mubr.f32.mxu0 0.0
  %1392 = vmatmul.mubr.f32.gmra.mrb[0].mxu0 %v216
  %v1393 = vpop.f32.mrb[0].mxu0
  %v1394 = vadd.f32 0.0, %v1393
  %v1395 = vpop.f32.mrb[0].mxu0
  %v1396 = vadd.f32 0.0, %v1395
  %1397 = vmatprep.mubr.f32.mxu0 0.0
  %1398 = vmatmul.mubr.f32.gmra.mrb[0].mxu0 %v219
  %v1399 = vpop.f32.mrb[0].mxu0
  %v1400 = vadd.f32 0.0, %v1399
  %v1401 = vpop.f32.mrb[0].mxu0
  %v1402 = vadd.f32 0.0, %v1401
  %1403 = vmatprep.mubr.f32.mxu0 0.0
  %1404 = vmatmul.mubr.f32.gmra.mrb[0].mxu0 %v222
  %v1405 = vpop.f32.mrb[0].mxu0
  %v1406 = vadd.f32 0.0, %v1405
  %v1407 = vpop.f32.mrb[0].mxu0
  %v1408 = vadd.f32 0.0, %v1407
  %1409 = vmatprep.mubr.f32.mxu0 0.0
  %1410 = vmatmul.mubr.f32.gmra.mrb[0].mxu0 %v225
  %v1411 = vpop.f32.mrb[0].mxu0
  %v1412 = vadd.f32 0.0, %v1411
  %v1413 = vpop.f32.mrb[0].mxu0
  %v1414 = vadd.f32 0.0, %v1413
  %1415 = vmatprep.mubr.f32.mxu0 0.0
  %1416 = vmatmul.mubr.f32.gmra.mrb[0].mxu0 %v228
  %v1417 = vpop.f32.mrb[0].mxu0
  %v1418 = vadd.f32 0.0, %v1417
  %v1419 = vpop.f32.mrb[0].mxu0
  %v1420 = vadd.f32 0.0, %v1419
  %1421 = vmatprep.mubr.f32.mxu0 0.0
  %1422 = vmatmul.mubr.f32.gmra.mrb[0].mxu0 %v231
  %v1423 = vpop.f32.mrb[0].mxu0
  %v1424 = vadd.f32 0.0, %v1423
  %v1425 = vpop.f32.mrb[0].mxu0
  %v1426 = vadd.f32 0.0, %v1425
  %1427 = vmatprep.mubr.f32.mxu0 0.0
  %1428 = vmatmul.mubr.f32.gmra.mrb[0].mxu0 %v234
  %v1429 = vpop.f32.mrb[0].mxu0
  %v1430 = vadd.f32 0.0, %v1429
  %v1431 = vpop.f32.mrb[0].mxu0
  %v1432 = vadd.f32 0.0, %v1431
  %1433 = vmatprep.mubr.f32.mxu0 0.0
  %1434 = vmatmul.mubr.f32.gmra.mrb[0].mxu0 %v237
  %v1435 = vpop.f32.mrb[0].mxu0
  %v1436 = vadd.f32 0.0, %v1435
  %v1437 = vpop.f32.mrb[0].mxu0
  %v1438 = vadd.f32 0.0, %v1437
  %1439 = vmatprep.mubr.f32.mxu0 0.0
  %1440 = vmatmul.mubr.f32.gmra.mrb[0].mxu0 %v240
  %v1441 = vpop.f32.mrb[0].mxu0
  %v1442 = vadd.f32 0.0, %v1441
  %v1443 = vpop.f32.mrb[0].mxu0
  %v1444 = vadd.f32 0.0, %v1443
  %1445 = vmatprep.mubr.f32.mxu0 0.0
  %1446 = vmatmul.mubr.f32.gmra.mrb[0].mxu0 %v243
  %v1447 = vpop.f32.mrb[0].mxu0
  %v1448 = vadd.f32 0.0, %v1447
  %v1449 = vpop.f32.mrb[0].mxu0
  %v1450 = vadd.f32 0.0, %v1449
  %1451 = vmatprep.mubr.f32.mxu0 0.0
  %1452 = vmatmul.mubr.f32.gmra.mrb[0].mxu0 %v246
  %v1453 = vpop.f32.mrb[0].mxu0
  %v1454 = vadd.f32 0.0, %v1453
  %v1455 = vpop.f32.mrb[0].mxu0
  %v1456 = vadd.f32 0.0, %v1455
  %1457 = vmatprep.mubr.f32.mxu0 0.0
  %1458 = vmatmul.mubr.f32.gmra.mrb[0].mxu0 %v249
  %v1459 = vpop.f32.mrb[0].mxu0
  %v1460 = vadd.f32 0.0, %v1459
  %v1461 = vpop.f32.mrb[0].mxu0
  %v1462 = vadd.f32 0.0, %v1461
  %1463 = vmatprep.mubr.f32.mxu0 0.0
  %1464 = vmatmul.mubr.f32.gmra.mrb[0].mxu0 %v252
  %v1465 = vpop.f32.mrb[0].mxu0
  %v1466 = vadd.f32 0.0, %v1465
  %v1467 = vpop.f32.mrb[0].mxu0
  %v1468 = vadd.f32 0.0, %v1467
  %1469 = vmatprep.mubr.f32.mxu0 0.0
  %1470 = vmatmul.mubr.f32.gmra.mrb[0].mxu0 %v255
  %v1471 = vpop.f32.mrb[0].mxu0
  %v1472 = vadd.f32 0.0, %v1471
  %v1473 = vpop.f32.mrb[0].mxu0
  %v1474 = vadd.f32 0.0, %v1473
  %1475 = vmatprep.mubr.f32.mxu0 0.0
  %1476 = vmatmul.mubr.f32.gmra.mrb[0].mxu0 %v258
  %v1477 = vpop.f32.mrb[0].mxu0
  %v1478 = vadd.f32 0.0, %v1477
  %v1479 = vpop.f32.mrb[0].mxu0
  %v1480 = vadd.f32 0.0, %v1479
  %1481 = vmatprep.mubr.f32.mxu0 0.0
  %1482 = vmatmul.mubr.f32.gmra.mrb[0].mxu0 %v261
  %v1483 = vpop.f32.mrb[0].mxu0
  %v1484 = vadd.f32 0.0, %v1483
  %v1485 = vpop.f32.mrb[0].mxu0
  %v1486 = vadd.f32 0.0, %v1485
  %1487 = vdwg.mxu0
  %1488 = vmatprep.subr.mxu0 %v58
  %1489 = vmatpush1.msra.mxu0 %v57
  %1490 = vmatprep.subr.mxu0 %v83
  %1491 = vmatpush1.msra.mxu0 %v82
  %1492 = vmatprep.subr.mxu0 %v108
  %1493 = vmatpush1.msra.mxu0 %v107
  %1494 = vmatprep.subr.mxu0 %v133
  %1495 = vmatpush1.msra.mxu0 %v132
  %1496 = vmatprep.subr.mxu0 %v158
  %1497 = vmatpush1.msra.mxu0 %v157
  %1498 = vmatprep.subr.mxu0 0.0
  %1499 = vmatpush1.msra.mxu0 0.0
  %1500 = vmatprep.subr.mxu0 0.0
  %1501 = vmatpush1.msra.mxu0 0.0
  %1502 = vmatprep.subr.mxu0 0.0
  %1503 = vmatpush1.msra.mxu0 0.0
  %1504 = vmatprep.subr.mxu0 0.0
  %1505 = vmatpush1.msra.mxu0 0.0
  %1506 = vmatprep.subr.mxu0 0.0
  %1507 = vmatpush1.msra.mxu0 0.0
  %1508 = vmatprep.subr.mxu0 0.0
  %1509 = vmatpush1.msra.mxu0 0.0
  %1510 = vmatprep.subr.mxu0 0.0
  %1511 = vmatpush1.msra.mxu0 0.0
  %1512 = vmatprep.subr.mxu0 0.0
  %1513 = vmatpush1.msra.mxu0 0.0
  %1514 = vmatprep.subr.mxu0 0.0
  %1515 = vmatpush1.msra.mxu0 0.0
  %1516 = vmatprep.subr.mxu0 0.0
  %1517 = vmatpush1.msra.mxu0 0.0
  %1518 = vmatprep.subr.mxu0 0.0
  %1519 = vmatpush1.msra.mxu0 0.0
  %1520 = vmatprep.subr.mxu0 0.0
  %1521 = vmatpush1.msra.mxu0 0.0
  %1522 = vmatprep.subr.mxu0 0.0
  %1523 = vmatpush1.msra.mxu0 0.0
  %1524 = vmatprep.subr.mxu0 0.0
  %1525 = vmatpush1.msra.mxu0 0.0
  %1526 = vmatprep.subr.mxu0 0.0
  %1527 = vmatpush1.msra.mxu0 0.0
  %1528 = vmatprep.subr.mxu0 0.0
  %1529 = vmatpush1.msra.mxu0 0.0
  %1530 = vmatprep.subr.mxu0 0.0
  %1531 = vmatpush1.msra.mxu0 0.0
  %1532 = vmatprep.subr.mxu0 0.0
  %1533 = vmatpush1.msra.mxu0 0.0
  %1534 = vmatprep.subr.mxu0 0.0
  %1535 = vmatpush1.msra.mxu0 0.0
  %1536 = vmatprep.subr.mxu0 0.0
  %1537 = vmatpush1.msra.mxu0 0.0
  %1538 = vmatprep.subr.mxu0 0.0
  %1539 = vmatpush1.msra.mxu0 0.0
  %1540 = vmatprep.subr.mxu0 0.0
  %1541 = vmatpush1.msra.mxu0 0.0
  %1542 = vmatprep.subr.mxu0 0.0
  %1543 = vmatpush1.msra.mxu0 0.0
  %1544 = vmatprep.subr.mxu0 0.0
  %1545 = vmatpush1.msra.mxu0 0.0
  %1546 = vmatprep.subr.mxu0 0.0
  %1547 = vmatpush1.msra.mxu0 0.0
  %1548 = vmatprep.subr.mxu0 0.0
  %1549 = vmatpush1.msra.mxu0 0.0
  %1550 = vmatprep.subr.mxu0 0.0
  %1551 = vmatpush1.msra.mxu0 0.0
  %1552 = vmatprep.mubr.f32.mxu0 0.0
  %1553 = vmatmul.mubr.f32.gmra.mrb[0].mxu0 %v174
  %v1554 = vpop.f32.mrb[0].mxu0
  %v1555 = vadd.f32 0.0, %v1554
  %v1556 = vpop.f32.mrb[0].mxu0
  %v1557 = vadd.f32 0.0, %v1556
  %1558 = vmatprep.mubr.f32.mxu0 0.0
  %1559 = vmatmul.mubr.f32.gmra.mrb[0].mxu0 %v177
  %v1560 = vpop.f32.mrb[0].mxu0
  %v1561 = vadd.f32 0.0, %v1560
  %v1562 = vpop.f32.mrb[0].mxu0
  %v1563 = vadd.f32 0.0, %v1562
  %1564 = vmatprep.mubr.f32.mxu0 0.0
  %1565 = vmatmul.mubr.f32.gmra.mrb[0].mxu0 %v180
  %v1566 = vpop.f32.mrb[0].mxu0
  %v1567 = vadd.f32 0.0, %v1566
  %v1568 = vpop.f32.mrb[0].mxu0
  %v1569 = vadd.f32 0.0, %v1568
  %1570 = vmatprep.mubr.f32.mxu0 0.0
  %1571 = vmatmul.mubr.f32.gmra.mrb[0].mxu0 %v183
  %v1572 = vpop.f32.mrb[0].mxu0
  %v1573 = vadd.f32 0.0, %v1572
  %v1574 = vpop.f32.mrb[0].mxu0
  %v1575 = vadd.f32 0.0, %v1574
  %1576 = vmatprep.mubr.f32.mxu0 0.0
  %1577 = vmatmul.mubr.f32.gmra.mrb[0].mxu0 %v186
  %v1578 = vpop.f32.mrb[0].mxu0
  %v1579 = vadd.f32 0.0, %v1578
  %v1580 = vpop.f32.mrb[0].mxu0
  %v1581 = vadd.f32 0.0, %v1580
  %1582 = vmatprep.mubr.f32.mxu0 0.0
  %1583 = vmatmul.mubr.f32.gmra.mrb[0].mxu0 %v189
  %v1584 = vpop.f32.mrb[0].mxu0
  %v1585 = vadd.f32 0.0, %v1584
  %v1586 = vpop.f32.mrb[0].mxu0
  %v1587 = vadd.f32 0.0, %v1586
  %1588 = vmatprep.mubr.f32.mxu0 0.0
  %1589 = vmatmul.mubr.f32.gmra.mrb[0].mxu0 %v192
  %v1590 = vpop.f32.mrb[0].mxu0
  %v1591 = vadd.f32 0.0, %v1590
  %v1592 = vpop.f32.mrb[0].mxu0
  %v1593 = vadd.f32 0.0, %v1592
  %1594 = vmatprep.mubr.f32.mxu0 0.0
  %1595 = vmatmul.mubr.f32.gmra.mrb[0].mxu0 %v195
  %v1596 = vpop.f32.mrb[0].mxu0
  %v1597 = vadd.f32 0.0, %v1596
  %v1598 = vpop.f32.mrb[0].mxu0
  %v1599 = vadd.f32 0.0, %v1598
  %1600 = vmatprep.mubr.f32.mxu0 0.0
  %1601 = vmatmul.mubr.f32.gmra.mrb[0].mxu0 %v198
  %v1602 = vpop.f32.mrb[0].mxu0
  %v1603 = vadd.f32 0.0, %v1602
  %v1604 = vpop.f32.mrb[0].mxu0
  %v1605 = vadd.f32 0.0, %v1604
  %1606 = vmatprep.mubr.f32.mxu0 0.0
  %1607 = vmatmul.mubr.f32.gmra.mrb[0].mxu0 %v201
  %v1608 = vpop.f32.mrb[0].mxu0
  %v1609 = vadd.f32 0.0, %v1608
  %v1610 = vpop.f32.mrb[0].mxu0
  %v1611 = vadd.f32 0.0, %v1610
  %1612 = vmatprep.mubr.f32.mxu0 0.0
  %1613 = vmatmul.mubr.f32.gmra.mrb[0].mxu0 %v204
  %v1614 = vpop.f32.mrb[0].mxu0
  %v1615 = vadd.f32 0.0, %v1614
  %v1616 = vpop.f32.mrb[0].mxu0
  %v1617 = vadd.f32 0.0, %v1616
  %1618 = vmatprep.mubr.f32.mxu0 0.0
  %1619 = vmatmul.mubr.f32.gmra.mrb[0].mxu0 %v207
  %v1620 = vpop.f32.mrb[0].mxu0
  %v1621 = vadd.f32 0.0, %v1620
  %v1622 = vpop.f32.mrb[0].mxu0
  %v1623 = vadd.f32 0.0, %v1622
  %1624 = vmatprep.mubr.f32.mxu0 0.0
  %1625 = vmatmul.mubr.f32.gmra.mrb[0].mxu0 %v210
  %v1626 = vpop.f32.mrb[0].mxu0
  %v1627 = vadd.f32 0.0, %v1626
  %v1628 = vpop.f32.mrb[0].mxu0
  %v1629 = vadd.f32 0.0, %v1628
  %1630 = vmatprep.mubr.f32.mxu0 0.0
  %1631 = vmatmul.mubr.f32.gmra.mrb[0].mxu0 %v213
  %v1632 = vpop.f32.mrb[0].mxu0
  %v1633 = vadd.f32 0.0, %v1632
  %v1634 = vpop.f32.mrb[0].mxu0
  %v1635 = vadd.f32 0.0, %v1634
  %1636 = vmatprep.mubr.f32.mxu0 0.0
  %1637 = vmatmul.mubr.f32.gmra.mrb[0].mxu0 %v216
  %v1638 = vpop.f32.mrb[0].mxu0
  %v1639 = vadd.f32 0.0, %v1638
  %v1640 = vpop.f32.mrb[0].mxu0
  %v1641 = vadd.f32 0.0, %v1640
  %1642 = vmatprep.mubr.f32.mxu0 0.0
  %1643 = vmatmul.mubr.f32.gmra.mrb[0].mxu0 %v219
  %v1644 = vpop.f32.mrb[0].mxu0
  %v1645 = vadd.f32 0.0, %v1644
  %v1646 = vpop.f32.mrb[0].mxu0
  %v1647 = vadd.f32 0.0, %v1646
  %1648 = vmatprep.mubr.f32.mxu0 0.0
  %1649 = vmatmul.mubr.f32.gmra.mrb[0].mxu0 %v222
  %v1650 = vpop.f32.mrb[0].mxu0
  %v1651 = vadd.f32 0.0, %v1650
  %v1652 = vpop.f32.mrb[0].mxu0
  %v1653 = vadd.f32 0.0, %v1652
  %1654 = vmatprep.mubr.f32.mxu0 0.0
  %1655 = vmatmul.mubr.f32.gmra.mrb[0].mxu0 %v225
  %v1656 = vpop.f32.mrb[0].mxu0
  %v1657 = vadd.f32 0.0, %v1656
  %v1658 = vpop.f32.mrb[0].mxu0
  %v1659 = vadd.f32 0.0, %v1658
  %1660 = vmatprep.mubr.f32.mxu0 0.0
  %1661 = vmatmul.mubr.f32.gmra.mrb[0].mxu0 %v228
  %v1662 = vpop.f32.mrb[0].mxu0
  %v1663 = vadd.f32 0.0, %v1662
  %v1664 = vpop.f32.mrb[0].mxu0
  %v1665 = vadd.f32 0.0, %v1664
  %1666 = vmatprep.mubr.f32.mxu0 0.0
  %1667 = vmatmul.mubr.f32.gmra.mrb[0].mxu0 %v231
  %v1668 = vpop.f32.mrb[0].mxu0
  %v1669 = vadd.f32 0.0, %v1668
  %v1670 = vpop.f32.mrb[0].mxu0
  %v1671 = vadd.f32 0.0, %v1670
  %1672 = vmatprep.mubr.f32.mxu0 0.0
  %1673 = vmatmul.mubr.f32.gmra.mrb[0].mxu0 %v234
  %v1674 = vpop.f32.mrb[0].mxu0
  %v1675 = vadd.f32 0.0, %v1674
  %v1676 = vpop.f32.mrb[0].mxu0
  %v1677 = vadd.f32 0.0, %v1676
  %1678 = vmatprep.mubr.f32.mxu0 0.0
  %1679 = vmatmul.mubr.f32.gmra.mrb[0].mxu0 %v237
  %v1680 = vpop.f32.mrb[0].mxu0
  %v1681 = vadd.f32 0.0, %v1680
  %v1682 = vpop.f32.mrb[0].mxu0
  %v1683 = vadd.f32 0.0, %v1682
  %1684 = vmatprep.mubr.f32.mxu0 0.0
  %1685 = vmatmul.mubr.f32.gmra.mrb[0].mxu0 %v240
  %v1686 = vpop.f32.mrb[0].mxu0
  %v1687 = vadd.f32 0.0, %v1686
  %v1688 = vpop.f32.mrb[0].mxu0
  %v1689 = vadd.f32 0.0, %v1688
  %1690 = vmatprep.mubr.f32.mxu0 0.0
  %1691 = vmatmul.mubr.f32.gmra.mrb[0].mxu0 %v243
  %v1692 = vpop.f32.mrb[0].mxu0
  %v1693 = vadd.f32 0.0, %v1692
  %v1694 = vpop.f32.mrb[0].mxu0
  %v1695 = vadd.f32 0.0, %v1694
  %1696 = vmatprep.mubr.f32.mxu0 0.0
  %1697 = vmatmul.mubr.f32.gmra.mrb[0].mxu0 %v246
  %v1698 = vpop.f32.mrb[0].mxu0
  %v1699 = vadd.f32 0.0, %v1698
  %v1700 = vpop.f32.mrb[0].mxu0
  %v1701 = vadd.f32 0.0, %v1700
  %1702 = vmatprep.mubr.f32.mxu0 0.0
  %1703 = vmatmul.mubr.f32.gmra.mrb[0].mxu0 %v249
  %v1704 = vpop.f32.mrb[0].mxu0
  %v1705 = vadd.f32 0.0, %v1704
  %v1706 = vpop.f32.mrb[0].mxu0
  %v1707 = vadd.f32 0.0, %v1706
  %1708 = vmatprep.mubr.f32.mxu0 0.0
  %1709 = vmatmul.mubr.f32.gmra.mrb[0].mxu0 %v252
  %v1710 = vpop.f32.mrb[0].mxu0
  %v1711 = vadd.f32 0.0, %v1710
  %v1712 = vpop.f32.mrb[0].mxu0
  %v1713 = vadd.f32 0.0, %v1712
  %1714 = vmatprep.mubr.f32.mxu0 0.0
  %1715 = vmatmul.mubr.f32.gmra.mrb[0].mxu0 %v255
  %v1716 = vpop.f32.mrb[0].mxu0
  %v1717 = vadd.f32 0.0, %v1716
  %v1718 = vpop.f32.mrb[0].mxu0
  %v1719 = vadd.f32 0.0, %v1718
  %1720 = vmatprep.mubr.f32.mxu0 0.0
  %1721 = vmatmul.mubr.f32.gmra.mrb[0].mxu0 %v258
  %v1722 = vpop.f32.mrb[0].mxu0
  %v1723 = vadd.f32 0.0, %v1722
  %v1724 = vpop.f32.mrb[0].mxu0
  %v1725 = vadd.f32 0.0, %v1724
  %1726 = vmatprep.mubr.f32.mxu0 0.0
  %1727 = vmatmul.mubr.f32.gmra.mrb[0].mxu0 %v261
  %v1728 = vpop.f32.mrb[0].mxu0
  %v1729 = vadd.f32 0.0, %v1728
  %v1730 = vpop.f32.mrb[0].mxu0
  %v1731 = vadd.f32 0.0, %v1730
  %1732 = vdwg.mxu0
  %1733 = vmatprep.subr.mxu0 %v60
  %1734 = vmatpush1.msra.mxu0 %v59
  %1735 = vmatprep.subr.mxu0 %v85
  %1736 = vmatpush1.msra.mxu0 %v84
  %1737 = vmatprep.subr.mxu0 %v110
  %1738 = vmatpush1.msra.mxu0 %v109
  %1739 = vmatprep.subr.mxu0 %v135
  %1740 = vmatpush1.msra.mxu0 %v134
  %1741 = vmatprep.subr.mxu0 %v160
  %1742 = vmatpush1.msra.mxu0 %v159
  %1743 = vmatprep.subr.mxu0 0.0
  %1744 = vmatpush1.msra.mxu0 0.0
  %1745 = vmatprep.subr.mxu0 0.0
  %1746 = vmatpush1.msra.mxu0 0.0
  %1747 = vmatprep.subr.mxu0 0.0
  %1748 = vmatpush1.msra.mxu0 0.0
  %1749 = vmatprep.subr.mxu0 0.0
  %1750 = vmatpush1.msra.mxu0 0.0
  %1751 = vmatprep.subr.mxu0 0.0
  %1752 = vmatpush1.msra.mxu0 0.0
  %1753 = vmatprep.subr.mxu0 0.0
  %1754 = vmatpush1.msra.mxu0 0.0
  %1755 = vmatprep.subr.mxu0 0.0
  %1756 = vmatpush1.msra.mxu0 0.0
  %1757 = vmatprep.subr.mxu0 0.0
  %1758 = vmatpush1.msra.mxu0 0.0
  %1759 = vmatprep.subr.mxu0 0.0
  %1760 = vmatpush1.msra.mxu0 0.0
  %1761 = vmatprep.subr.mxu0 0.0
  %1762 = vmatpush1.msra.mxu0 0.0
  %1763 = vmatprep.subr.mxu0 0.0
  %1764 = vmatpush1.msra.mxu0 0.0
  %1765 = vmatprep.subr.mxu0 0.0
  %1766 = vmatpush1.msra.mxu0 0.0
  %1767 = vmatprep.subr.mxu0 0.0
  %1768 = vmatpush1.msra.mxu0 0.0
  %1769 = vmatprep.subr.mxu0 0.0
  %1770 = vmatpush1.msra.mxu0 0.0
  %1771 = vmatprep.subr.mxu0 0.0
  %1772 = vmatpush1.msra.mxu0 0.0
  %1773 = vmatprep.subr.mxu0 0.0
  %1774 = vmatpush1.msra.mxu0 0.0
  %1775 = vmatprep.subr.mxu0 0.0
  %1776 = vmatpush1.msra.mxu0 0.0
  %1777 = vmatprep.subr.mxu0 0.0
  %1778 = vmatpush1.msra.mxu0 0.0
  %1779 = vmatprep.subr.mxu0 0.0
  %1780 = vmatpush1.msra.mxu0 0.0
  %1781 = vmatprep.subr.mxu0 0.0
  %1782 = vmatpush1.msra.mxu0 0.0
  %1783 = vmatprep.subr.mxu0 0.0
  %1784 = vmatpush1.msra.mxu0 0.0
  %1785 = vmatprep.subr.mxu0 0.0
  %1786 = vmatpush1.msra.mxu0 0.0
  %1787 = vmatprep.subr.mxu0 0.0
  %1788 = vmatpush1.msra.mxu0 0.0
  %1789 = vmatprep.subr.mxu0 0.0
  %1790 = vmatpush1.msra.mxu0 0.0
  %1791 = vmatprep.subr.mxu0 0.0
  %1792 = vmatpush1.msra.mxu0 0.0
  %1793 = vmatprep.subr.mxu0 0.0
  %1794 = vmatpush1.msra.mxu0 0.0
  %1795 = vmatprep.subr.mxu0 0.0
  %1796 = vmatpush1.msra.mxu0 0.0
  %1797 = vmatprep.mubr.f32.mxu0 0.0
  %1798 = vmatmul.mubr.f32.gmra.mrb[0].mxu0 %v174
  %v1799 = vpop.f32.mrb[0].mxu0
  %v1800 = vadd.f32 0.0, %v1799
  %v1801 = vpop.f32.mrb[0].mxu0
  %v1802 = vadd.f32 0.0, %v1801
  %1803 = vmatprep.mubr.f32.mxu0 0.0
  %1804 = vmatmul.mubr.f32.gmra.mrb[0].mxu0 %v177
  %v1805 = vpop.f32.mrb[0].mxu0
  %v1806 = vadd.f32 0.0, %v1805
  %v1807 = vpop.f32.mrb[0].mxu0
  %v1808 = vadd.f32 0.0, %v1807
  %1809 = vmatprep.mubr.f32.mxu0 0.0
  %1810 = vmatmul.mubr.f32.gmra.mrb[0].mxu0 %v180
  %v1811 = vpop.f32.mrb[0].mxu0
  %v1812 = vadd.f32 0.0, %v1811
  %v1813 = vpop.f32.mrb[0].mxu0
  %v1814 = vadd.f32 0.0, %v1813
  %1815 = vmatprep.mubr.f32.mxu0 0.0
  %1816 = vmatmul.mubr.f32.gmra.mrb[0].mxu0 %v183
  %v1817 = vpop.f32.mrb[0].mxu0
  %v1818 = vadd.f32 0.0, %v1817
  %v1819 = vpop.f32.mrb[0].mxu0
  %v1820 = vadd.f32 0.0, %v1819
  %1821 = vmatprep.mubr.f32.mxu0 0.0
  %1822 = vmatmul.mubr.f32.gmra.mrb[0].mxu0 %v186
  %v1823 = vpop.f32.mrb[0].mxu0
  %v1824 = vadd.f32 0.0, %v1823
  %v1825 = vpop.f32.mrb[0].mxu0
  %v1826 = vadd.f32 0.0, %v1825
  %1827 = vmatprep.mubr.f32.mxu0 0.0
  %1828 = vmatmul.mubr.f32.gmra.mrb[0].mxu0 %v189
  %v1829 = vpop.f32.mrb[0].mxu0
  %v1830 = vadd.f32 0.0, %v1829
  %v1831 = vpop.f32.mrb[0].mxu0
  %v1832 = vadd.f32 0.0, %v1831
  %1833 = vmatprep.mubr.f32.mxu0 0.0
  %1834 = vmatmul.mubr.f32.gmra.mrb[0].mxu0 %v192
  %v1835 = vpop.f32.mrb[0].mxu0
  %v1836 = vadd.f32 0.0, %v1835
  %v1837 = vpop.f32.mrb[0].mxu0
  %v1838 = vadd.f32 0.0, %v1837
  %1839 = vmatprep.mubr.f32.mxu0 0.0
  %1840 = vmatmul.mubr.f32.gmra.mrb[0].mxu0 %v195
  %v1841 = vpop.f32.mrb[0].mxu0
  %v1842 = vadd.f32 0.0, %v1841
  %v1843 = vpop.f32.mrb[0].mxu0
  %v1844 = vadd.f32 0.0, %v1843
  %1845 = vmatprep.mubr.f32.mxu0 0.0
  %1846 = vmatmul.mubr.f32.gmra.mrb[0].mxu0 %v198
  %v1847 = vpop.f32.mrb[0].mxu0
  %v1848 = vadd.f32 0.0, %v1847
  %v1849 = vpop.f32.mrb[0].mxu0
  %v1850 = vadd.f32 0.0, %v1849
  %1851 = vmatprep.mubr.f32.mxu0 0.0
  %1852 = vmatmul.mubr.f32.gmra.mrb[0].mxu0 %v201
  %v1853 = vpop.f32.mrb[0].mxu0
  %v1854 = vadd.f32 0.0, %v1853
  %v1855 = vpop.f32.mrb[0].mxu0
  %v1856 = vadd.f32 0.0, %v1855
  %1857 = vmatprep.mubr.f32.mxu0 0.0
  %1858 = vmatmul.mubr.f32.gmra.mrb[0].mxu0 %v204
  %v1859 = vpop.f32.mrb[0].mxu0
  %v1860 = vadd.f32 0.0, %v1859
  %v1861 = vpop.f32.mrb[0].mxu0
  %v1862 = vadd.f32 0.0, %v1861
  %1863 = vmatprep.mubr.f32.mxu0 0.0
  %1864 = vmatmul.mubr.f32.gmra.mrb[0].mxu0 %v207
  %v1865 = vpop.f32.mrb[0].mxu0
  %v1866 = vadd.f32 0.0, %v1865
  %v1867 = vpop.f32.mrb[0].mxu0
  %v1868 = vadd.f32 0.0, %v1867
  %1869 = vmatprep.mubr.f32.mxu0 0.0
  %1870 = vmatmul.mubr.f32.gmra.mrb[0].mxu0 %v210
  %v1871 = vpop.f32.mrb[0].mxu0
  %v1872 = vadd.f32 0.0, %v1871
  %v1873 = vpop.f32.mrb[0].mxu0
  %v1874 = vadd.f32 0.0, %v1873
  %1875 = vmatprep.mubr.f32.mxu0 0.0
  %1876 = vmatmul.mubr.f32.gmra.mrb[0].mxu0 %v213
  %v1877 = vpop.f32.mrb[0].mxu0
  %v1878 = vadd.f32 0.0, %v1877
  %v1879 = vpop.f32.mrb[0].mxu0
  %v1880 = vadd.f32 0.0, %v1879
  %1881 = vmatprep.mubr.f32.mxu0 0.0
  %1882 = vmatmul.mubr.f32.gmra.mrb[0].mxu0 %v216
  %v1883 = vpop.f32.mrb[0].mxu0
  %v1884 = vadd.f32 0.0, %v1883
  %v1885 = vpop.f32.mrb[0].mxu0
  %v1886 = vadd.f32 0.0, %v1885
  %1887 = vmatprep.mubr.f32.mxu0 0.0
  %1888 = vmatmul.mubr.f32.gmra.mrb[0].mxu0 %v219
  %v1889 = vpop.f32.mrb[0].mxu0
  %v1890 = vadd.f32 0.0, %v1889
  %v1891 = vpop.f32.mrb[0].mxu0
  %v1892 = vadd.f32 0.0, %v1891
  %1893 = vmatprep.mubr.f32.mxu0 0.0
  %1894 = vmatmul.mubr.f32.gmra.mrb[0].mxu0 %v222
  %v1895 = vpop.f32.mrb[0].mxu0
  %v1896 = vadd.f32 0.0, %v1895
  %v1897 = vpop.f32.mrb[0].mxu0
  %v1898 = vadd.f32 0.0, %v1897
  %1899 = vmatprep.mubr.f32.mxu0 0.0
  %1900 = vmatmul.mubr.f32.gmra.mrb[0].mxu0 %v225
  %v1901 = vpop.f32.mrb[0].mxu0
  %v1902 = vadd.f32 0.0, %v1901
  %v1903 = vpop.f32.mrb[0].mxu0
  %v1904 = vadd.f32 0.0, %v1903
  %1905 = vmatprep.mubr.f32.mxu0 0.0
  %1906 = vmatmul.mubr.f32.gmra.mrb[0].mxu0 %v228
  %v1907 = vpop.f32.mrb[0].mxu0
  %v1908 = vadd.f32 0.0, %v1907
  %v1909 = vpop.f32.mrb[0].mxu0
  %v1910 = vadd.f32 0.0, %v1909
  %1911 = vmatprep.mubr.f32.mxu0 0.0
  %1912 = vmatmul.mubr.f32.gmra.mrb[0].mxu0 %v231
  %v1913 = vpop.f32.mrb[0].mxu0
  %v1914 = vadd.f32 0.0, %v1913
  %v1915 = vpop.f32.mrb[0].mxu0
  %v1916 = vadd.f32 0.0, %v1915
  %1917 = vmatprep.mubr.f32.mxu0 0.0
  %1918 = vmatmul.mubr.f32.gmra.mrb[0].mxu0 %v234
  %v1919 = vpop.f32.mrb[0].mxu0
  %v1920 = vadd.f32 0.0, %v1919
  %v1921 = vpop.f32.mrb[0].mxu0
  %v1922 = vadd.f32 0.0, %v1921
  %1923 = vmatprep.mubr.f32.mxu0 0.0
  %1924 = vmatmul.mubr.f32.gmra.mrb[0].mxu0 %v237
  %v1925 = vpop.f32.mrb[0].mxu0
  %v1926 = vadd.f32 0.0, %v1925
  %v1927 = vpop.f32.mrb[0].mxu0
  %v1928 = vadd.f32 0.0, %v1927
  %1929 = vmatprep.mubr.f32.mxu0 0.0
  %1930 = vmatmul.mubr.f32.gmra.mrb[0].mxu0 %v240
  %v1931 = vpop.f32.mrb[0].mxu0
  %v1932 = vadd.f32 0.0, %v1931
  %v1933 = vpop.f32.mrb[0].mxu0
  %v1934 = vadd.f32 0.0, %v1933
  %1935 = vmatprep.mubr.f32.mxu0 0.0
  %1936 = vmatmul.mubr.f32.gmra.mrb[0].mxu0 %v243
  %v1937 = vpop.f32.mrb[0].mxu0
  %v1938 = vadd.f32 0.0, %v1937
  %v1939 = vpop.f32.mrb[0].mxu0
  %v1940 = vadd.f32 0.0, %v1939
  %1941 = vmatprep.mubr.f32.mxu0 0.0
  %1942 = vmatmul.mubr.f32.gmra.mrb[0].mxu0 %v246
  %v1943 = vpop.f32.mrb[0].mxu0
  %v1944 = vadd.f32 0.0, %v1943
  %v1945 = vpop.f32.mrb[0].mxu0
  %v1946 = vadd.f32 0.0, %v1945
  %1947 = vmatprep.mubr.f32.mxu0 0.0
  %1948 = vmatmul.mubr.f32.gmra.mrb[0].mxu0 %v249
  %v1949 = vpop.f32.mrb[0].mxu0
  %v1950 = vadd.f32 0.0, %v1949
  %v1951 = vpop.f32.mrb[0].mxu0
  %v1952 = vadd.f32 0.0, %v1951
  %1953 = vmatprep.mubr.f32.mxu0 0.0
  %1954 = vmatmul.mubr.f32.gmra.mrb[0].mxu0 %v252
  %v1955 = vpop.f32.mrb[0].mxu0
  %v1956 = vadd.f32 0.0, %v1955
  %v1957 = vpop.f32.mrb[0].mxu0
  %v1958 = vadd.f32 0.0, %v1957
  %1959 = vmatprep.mubr.f32.mxu0 0.0
  %1960 = vmatmul.mubr.f32.gmra.mrb[0].mxu0 %v255
  %v1961 = vpop.f32.mrb[0].mxu0
  %v1962 = vadd.f32 0.0, %v1961
  %v1963 = vpop.f32.mrb[0].mxu0
  %v1964 = vadd.f32 0.0, %v1963
  %1965 = vmatprep.mubr.f32.mxu0 0.0
  %1966 = vmatmul.mubr.f32.gmra.mrb[0].mxu0 %v258
  %v1967 = vpop.f32.mrb[0].mxu0
  %v1968 = vadd.f32 0.0, %v1967
  %v1969 = vpop.f32.mrb[0].mxu0
  %v1970 = vadd.f32 0.0, %v1969
  %1971 = vmatprep.mubr.f32.mxu0 0.0
  %1972 = vmatmul.mubr.f32.gmra.mrb[0].mxu0 %v261
  %v1973 = vpop.f32.mrb[0].mxu0
  %v1974 = vadd.f32 0.0, %v1973
  %v1975 = vpop.f32.mrb[0].mxu0
  %v1976 = vadd.f32 0.0, %v1975
  %1977 = vdwg.mxu0
  %1978 = vmatprep.subr.mxu0 %v62
  %1979 = vmatpush1.msra.mxu0 %v61
  %1980 = vmatprep.subr.mxu0 %v87
  %1981 = vmatpush1.msra.mxu0 %v86
  %1982 = vmatprep.subr.mxu0 %v112
  %1983 = vmatpush1.msra.mxu0 %v111
  %1984 = vmatprep.subr.mxu0 %v137
  %1985 = vmatpush1.msra.mxu0 %v136
  %1986 = vmatprep.subr.mxu0 %v162
  %1987 = vmatpush1.msra.mxu0 %v161
  %1988 = vmatprep.subr.mxu0 0.0
  %1989 = vmatpush1.msra.mxu0 0.0
  %1990 = vmatprep.subr.mxu0 0.0
  %1991 = vmatpush1.msra.mxu0 0.0
  %1992 = vmatprep.subr.mxu0 0.0
  %1993 = vmatpush1.msra.mxu0 0.0
  %1994 = vmatprep.subr.mxu0 0.0
  %1995 = vmatpush1.msra.mxu0 0.0
  %1996 = vmatprep.subr.mxu0 0.0
  %1997 = vmatpush1.msra.mxu0 0.0
  %1998 = vmatprep.subr.mxu0 0.0
  %1999 = vmatpush1.msra.mxu0 0.0
  %2000 = vmatprep.subr.mxu0 0.0
  %2001 = vmatpush1.msra.mxu0 0.0
  %2002 = vmatprep.subr.mxu0 0.0
  %2003 = vmatpush1.msra.mxu0 0.0
  %2004 = vmatprep.subr.mxu0 0.0
  %2005 = vmatpush1.msra.mxu0 0.0
  %2006 = vmatprep.subr.mxu0 0.0
  %2007 = vmatpush1.msra.mxu0 0.0
  %2008 = vmatprep.subr.mxu0 0.0
  %2009 = vmatpush1.msra.mxu0 0.0
  %2010 = vmatprep.subr.mxu0 0.0
  %2011 = vmatpush1.msra.mxu0 0.0
  %2012 = vmatprep.subr.mxu0 0.0
  %2013 = vmatpush1.msra.mxu0 0.0
  %2014 = vmatprep.subr.mxu0 0.0
  %2015 = vmatpush1.msra.mxu0 0.0
  %2016 = vmatprep.subr.mxu0 0.0
  %2017 = vmatpush1.msra.mxu0 0.0
  %2018 = vmatprep.subr.mxu0 0.0
  %2019 = vmatpush1.msra.mxu0 0.0
  %2020 = vmatprep.subr.mxu0 0.0
  %2021 = vmatpush1.msra.mxu0 0.0
  %2022 = vmatprep.subr.mxu0 0.0
  %2023 = vmatpush1.msra.mxu0 0.0
  %2024 = vmatprep.subr.mxu0 0.0
  %2025 = vmatpush1.msra.mxu0 0.0
  %2026 = vmatprep.subr.mxu0 0.0
  %2027 = vmatpush1.msra.mxu0 0.0
  %2028 = vmatprep.subr.mxu0 0.0
  %2029 = vmatpush1.msra.mxu0 0.0
  %2030 = vmatprep.subr.mxu0 0.0
  %2031 = vmatpush1.msra.mxu0 0.0
  %2032 = vmatprep.subr.mxu0 0.0
  %2033 = vmatpush1.msra.mxu0 0.0
  %2034 = vmatprep.subr.mxu0 0.0
  %2035 = vmatpush1.msra.mxu0 0.0
  %2036 = vmatprep.subr.mxu0 0.0
  %2037 = vmatpush1.msra.mxu0 0.0
  %2038 = vmatprep.subr.mxu0 0.0
  %2039 = vmatpush1.msra.mxu0 0.0
  %2040 = vmatprep.subr.mxu0 0.0
  %2041 = vmatpush1.msra.mxu0 0.0
  %2042 = vmatprep.mubr.f32.mxu0 0.0
  %2043 = vmatmul.mubr.f32.gmra.mrb[0].mxu0 %v174
  %v2044 = vpop.f32.mrb[0].mxu0
  %v2045 = vadd.f32 0.0, %v2044
  %v2046 = vpop.f32.mrb[0].mxu0
  %v2047 = vadd.f32 0.0, %v2046
  %2048 = vmatprep.mubr.f32.mxu0 0.0
  %2049 = vmatmul.mubr.f32.gmra.mrb[0].mxu0 %v177
  %v2050 = vpop.f32.mrb[0].mxu0
  %v2051 = vadd.f32 0.0, %v2050
  %v2052 = vpop.f32.mrb[0].mxu0
  %v2053 = vadd.f32 0.0, %v2052
  %2054 = vmatprep.mubr.f32.mxu0 0.0
  %2055 = vmatmul.mubr.f32.gmra.mrb[0].mxu0 %v180
  %v2056 = vpop.f32.mrb[0].mxu0
  %v2057 = vadd.f32 0.0, %v2056
  %v2058 = vpop.f32.mrb[0].mxu0
  %v2059 = vadd.f32 0.0, %v2058
  %2060 = vmatprep.mubr.f32.mxu0 0.0
  %2061 = vmatmul.mubr.f32.gmra.mrb[0].mxu0 %v183
  %v2062 = vpop.f32.mrb[0].mxu0
  %v2063 = vadd.f32 0.0, %v2062
  %v2064 = vpop.f32.mrb[0].mxu0
  %v2065 = vadd.f32 0.0, %v2064
  %2066 = vmatprep.mubr.f32.mxu0 0.0
  %2067 = vmatmul.mubr.f32.gmra.mrb[0].mxu0 %v186
  %v2068 = vpop.f32.mrb[0].mxu0
  %v2069 = vadd.f32 0.0, %v2068
  %v2070 = vpop.f32.mrb[0].mxu0
  %v2071 = vadd.f32 0.0, %v2070
  %2072 = vmatprep.mubr.f32.mxu0 0.0
  %2073 = vmatmul.mubr.f32.gmra.mrb[0].mxu0 %v189
  %v2074 = vpop.f32.mrb[0].mxu0
  %v2075 = vadd.f32 0.0, %v2074
  %v2076 = vpop.f32.mrb[0].mxu0
  %v2077 = vadd.f32 0.0, %v2076
  %2078 = vmatprep.mubr.f32.mxu0 0.0
  %2079 = vmatmul.mubr.f32.gmra.mrb[0].mxu0 %v192
  %v2080 = vpop.f32.mrb[0].mxu0
  %v2081 = vadd.f32 0.0, %v2080
  %v2082 = vpop.f32.mrb[0].mxu0
  %v2083 = vadd.f32 0.0, %v2082
  %2084 = vmatprep.mubr.f32.mxu0 0.0
  %2085 = vmatmul.mubr.f32.gmra.mrb[0].mxu0 %v195
  %v2086 = vpop.f32.mrb[0].mxu0
  %v2087 = vadd.f32 0.0, %v2086
  %v2088 = vpop.f32.mrb[0].mxu0
  %v2089 = vadd.f32 0.0, %v2088
  %2090 = vmatprep.mubr.f32.mxu0 0.0
  %2091 = vmatmul.mubr.f32.gmra.mrb[0].mxu0 %v198
  %v2092 = vpop.f32.mrb[0].mxu0
  %v2093 = vadd.f32 0.0, %v2092
  %v2094 = vpop.f32.mrb[0].mxu0
  %v2095 = vadd.f32 0.0, %v2094
  %2096 = vmatprep.mubr.f32.mxu0 0.0
  %2097 = vmatmul.mubr.f32.gmra.mrb[0].mxu0 %v201
  %v2098 = vpop.f32.mrb[0].mxu0
  %v2099 = vadd.f32 0.0, %v2098
  %v2100 = vpop.f32.mrb[0].mxu0
  %v2101 = vadd.f32 0.0, %v2100
  %2102 = vmatprep.mubr.f32.mxu0 0.0
  %2103 = vmatmul.mubr.f32.gmra.mrb[0].mxu0 %v204
  %v2104 = vpop.f32.mrb[0].mxu0
  %v2105 = vadd.f32 0.0, %v2104
  %v2106 = vpop.f32.mrb[0].mxu0
  %v2107 = vadd.f32 0.0, %v2106
  %2108 = vmatprep.mubr.f32.mxu0 0.0
  %2109 = vmatmul.mubr.f32.gmra.mrb[0].mxu0 %v207
  %v2110 = vpop.f32.mrb[0].mxu0
  %v2111 = vadd.f32 0.0, %v2110
  %v2112 = vpop.f32.mrb[0].mxu0
  %v2113 = vadd.f32 0.0, %v2112
  %2114 = vmatprep.mubr.f32.mxu0 0.0
  %2115 = vmatmul.mubr.f32.gmra.mrb[0].mxu0 %v210
  %v2116 = vpop.f32.mrb[0].mxu0
  %v2117 = vadd.f32 0.0, %v2116
  %v2118 = vpop.f32.mrb[0].mxu0
  %v2119 = vadd.f32 0.0, %v2118
  %2120 = vmatprep.mubr.f32.mxu0 0.0
  %2121 = vmatmul.mubr.f32.gmra.mrb[0].mxu0 %v213
  %v2122 = vpop.f32.mrb[0].mxu0
  %v2123 = vadd.f32 0.0, %v2122
  %v2124 = vpop.f32.mrb[0].mxu0
  %v2125 = vadd.f32 0.0, %v2124
  %2126 = vmatprep.mubr.f32.mxu0 0.0
  %2127 = vmatmul.mubr.f32.gmra.mrb[0].mxu0 %v216
  %v2128 = vpop.f32.mrb[0].mxu0
  %v2129 = vadd.f32 0.0, %v2128
  %v2130 = vpop.f32.mrb[0].mxu0
  %v2131 = vadd.f32 0.0, %v2130
  %2132 = vmatprep.mubr.f32.mxu0 0.0
  %2133 = vmatmul.mubr.f32.gmra.mrb[0].mxu0 %v219
  %v2134 = vpop.f32.mrb[0].mxu0
  %v2135 = vadd.f32 0.0, %v2134
  %v2136 = vpop.f32.mrb[0].mxu0
  %v2137 = vadd.f32 0.0, %v2136
  %2138 = vmatprep.mubr.f32.mxu0 0.0
  %2139 = vmatmul.mubr.f32.gmra.mrb[0].mxu0 %v222
  %v2140 = vpop.f32.mrb[0].mxu0
  %v2141 = vadd.f32 0.0, %v2140
  %v2142 = vpop.f32.mrb[0].mxu0
  %v2143 = vadd.f32 0.0, %v2142
  %2144 = vmatprep.mubr.f32.mxu0 0.0
  %2145 = vmatmul.mubr.f32.gmra.mrb[0].mxu0 %v225
  %v2146 = vpop.f32.mrb[0].mxu0
  %v2147 = vadd.f32 0.0, %v2146
  %v2148 = vpop.f32.mrb[0].mxu0
  %v2149 = vadd.f32 0.0, %v2148
  %2150 = vmatprep.mubr.f32.mxu0 0.0
  %2151 = vmatmul.mubr.f32.gmra.mrb[0].mxu0 %v228
  %v2152 = vpop.f32.mrb[0].mxu0
  %v2153 = vadd.f32 0.0, %v2152
  %v2154 = vpop.f32.mrb[0].mxu0
  %v2155 = vadd.f32 0.0, %v2154
  %2156 = vmatprep.mubr.f32.mxu0 0.0
  %2157 = vmatmul.mubr.f32.gmra.mrb[0].mxu0 %v231
  %v2158 = vpop.f32.mrb[0].mxu0
  %v2159 = vadd.f32 0.0, %v2158
  %v2160 = vpop.f32.mrb[0].mxu0
  %v2161 = vadd.f32 0.0, %v2160
  %2162 = vmatprep.mubr.f32.mxu0 0.0
  %2163 = vmatmul.mubr.f32.gmra.mrb[0].mxu0 %v234
  %v2164 = vpop.f32.mrb[0].mxu0
  %v2165 = vadd.f32 0.0, %v2164
  %v2166 = vpop.f32.mrb[0].mxu0
  %v2167 = vadd.f32 0.0, %v2166
  %2168 = vmatprep.mubr.f32.mxu0 0.0
  %2169 = vmatmul.mubr.f32.gmra.mrb[0].mxu0 %v237
  %v2170 = vpop.f32.mrb[0].mxu0
  %v2171 = vadd.f32 0.0, %v2170
  %v2172 = vpop.f32.mrb[0].mxu0
  %v2173 = vadd.f32 0.0, %v2172
  %2174 = vmatprep.mubr.f32.mxu0 0.0
  %2175 = vmatmul.mubr.f32.gmra.mrb[0].mxu0 %v240
  %v2176 = vpop.f32.mrb[0].mxu0
  %v2177 = vadd.f32 0.0, %v2176
  %v2178 = vpop.f32.mrb[0].mxu0
  %v2179 = vadd.f32 0.0, %v2178
  %2180 = vmatprep.mubr.f32.mxu0 0.0
  %2181 = vmatmul.mubr.f32.gmra.mrb[0].mxu0 %v243
  %v2182 = vpop.f32.mrb[0].mxu0
  %v2183 = vadd.f32 0.0, %v2182
  %v2184 = vpop.f32.mrb[0].mxu0
  %v2185 = vadd.f32 0.0, %v2184
  %2186 = vmatprep.mubr.f32.mxu0 0.0
  %2187 = vmatmul.mubr.f32.gmra.mrb[0].mxu0 %v246
  %v2188 = vpop.f32.mrb[0].mxu0
  %v2189 = vadd.f32 0.0, %v2188
  %v2190 = vpop.f32.mrb[0].mxu0
  %v2191 = vadd.f32 0.0, %v2190
  %2192 = vmatprep.mubr.f32.mxu0 0.0
  %2193 = vmatmul.mubr.f32.gmra.mrb[0].mxu0 %v249
  %v2194 = vpop.f32.mrb[0].mxu0
  %v2195 = vadd.f32 0.0, %v2194
  %v2196 = vpop.f32.mrb[0].mxu0
  %v2197 = vadd.f32 0.0, %v2196
  %2198 = vmatprep.mubr.f32.mxu0 0.0
  %2199 = vmatmul.mubr.f32.gmra.mrb[0].mxu0 %v252
  %v2200 = vpop.f32.mrb[0].mxu0
  %v2201 = vadd.f32 0.0, %v2200
  %v2202 = vpop.f32.mrb[0].mxu0
  %v2203 = vadd.f32 0.0, %v2202
  %2204 = vmatprep.mubr.f32.mxu0 0.0
  %2205 = vmatmul.mubr.f32.gmra.mrb[0].mxu0 %v255
  %v2206 = vpop.f32.mrb[0].mxu0
  %v2207 = vadd.f32 0.0, %v2206
  %v2208 = vpop.f32.mrb[0].mxu0
  %v2209 = vadd.f32 0.0, %v2208
  %2210 = vmatprep.mubr.f32.mxu0 0.0
  %2211 = vmatmul.mubr.f32.gmra.mrb[0].mxu0 %v258
  %v2212 = vpop.f32.mrb[0].mxu0
  %v2213 = vadd.f32 0.0, %v2212
  %v2214 = vpop.f32.mrb[0].mxu0
  %v2215 = vadd.f32 0.0, %v2214
  %2216 = vmatprep.mubr.f32.mxu0 0.0
  %2217 = vmatmul.mubr.f32.gmra.mrb[0].mxu0 %v261
  %v2218 = vpop.f32.mrb[0].mxu0
  %v2219 = vadd.f32 0.0, %v2218
  %v2220 = vpop.f32.mrb[0].mxu0
  %v2221 = vadd.f32 0.0, %v2220
  %2222 = vdwg.mxu0
  %2223 = vmatprep.subr.mxu0 %v64
  %2224 = vmatpush1.msra.mxu0 %v63
  %2225 = vmatprep.subr.mxu0 %v89
  %2226 = vmatpush1.msra.mxu0 %v88
  %2227 = vmatprep.subr.mxu0 %v114
  %2228 = vmatpush1.msra.mxu0 %v113
  %2229 = vmatprep.subr.mxu0 %v139
  %2230 = vmatpush1.msra.mxu0 %v138
  %2231 = vmatprep.subr.mxu0 %v164
  %2232 = vmatpush1.msra.mxu0 %v163
  %2233 = vmatprep.subr.mxu0 0.0
  %2234 = vmatpush1.msra.mxu0 0.0
  %2235 = vmatprep.subr.mxu0 0.0
  %2236 = vmatpush1.msra.mxu0 0.0
  %2237 = vmatprep.subr.mxu0 0.0
  %2238 = vmatpush1.msra.mxu0 0.0
  %2239 = vmatprep.subr.mxu0 0.0
  %2240 = vmatpush1.msra.mxu0 0.0
  %2241 = vmatprep.subr.mxu0 0.0
  %2242 = vmatpush1.msra.mxu0 0.0
  %2243 = vmatprep.subr.mxu0 0.0
  %2244 = vmatpush1.msra.mxu0 0.0
  %2245 = vmatprep.subr.mxu0 0.0
  %2246 = vmatpush1.msra.mxu0 0.0
  %2247 = vmatprep.subr.mxu0 0.0
  %2248 = vmatpush1.msra.mxu0 0.0
  %2249 = vmatprep.subr.mxu0 0.0
  %2250 = vmatpush1.msra.mxu0 0.0
  %2251 = vmatprep.subr.mxu0 0.0
  %2252 = vmatpush1.msra.mxu0 0.0
  %2253 = vmatprep.subr.mxu0 0.0
  %2254 = vmatpush1.msra.mxu0 0.0
  %2255 = vmatprep.subr.mxu0 0.0
  %2256 = vmatpush1.msra.mxu0 0.0
  %2257 = vmatprep.subr.mxu0 0.0
  %2258 = vmatpush1.msra.mxu0 0.0
  %2259 = vmatprep.subr.mxu0 0.0
  %2260 = vmatpush1.msra.mxu0 0.0
  %2261 = vmatprep.subr.mxu0 0.0
  %2262 = vmatpush1.msra.mxu0 0.0
  %2263 = vmatprep.subr.mxu0 0.0
  %2264 = vmatpush1.msra.mxu0 0.0
  %2265 = vmatprep.subr.mxu0 0.0
  %2266 = vmatpush1.msra.mxu0 0.0
  %2267 = vmatprep.subr.mxu0 0.0
  %2268 = vmatpush1.msra.mxu0 0.0
  %2269 = vmatprep.subr.mxu0 0.0
  %2270 = vmatpush1.msra.mxu0 0.0
  %2271 = vmatprep.subr.mxu0 0.0
  %2272 = vmatpush1.msra.mxu0 0.0
  %2273 = vmatprep.subr.mxu0 0.0
  %2274 = vmatpush1.msra.mxu0 0.0
  %2275 = vmatprep.subr.mxu0 0.0
  %2276 = vmatpush1.msra.mxu0 0.0
  %2277 = vmatprep.subr.mxu0 0.0
  %2278 = vmatpush1.msra.mxu0 0.0
  %2279 = vmatprep.subr.mxu0 0.0
  %2280 = vmatpush1.msra.mxu0 0.0
  %2281 = vmatprep.subr.mxu0 0.0
  %2282 = vmatpush1.msra.mxu0 0.0
  %2283 = vmatprep.subr.mxu0 0.0
  %2284 = vmatpush1.msra.mxu0 0.0
  %2285 = vmatprep.subr.mxu0 0.0
  %2286 = vmatpush1.msra.mxu0 0.0
  %2287 = vmatprep.mubr.f32.mxu0 0.0
  %2288 = vmatmul.mubr.f32.gmra.mrb[0].mxu0 %v174
  %v2289 = vpop.f32.mrb[0].mxu0
  %v2290 = vadd.f32 0.0, %v2289
  %v2291 = vpop.f32.mrb[0].mxu0
  %v2292 = vadd.f32 0.0, %v2291
  %2293 = vmatprep.mubr.f32.mxu0 0.0
  %2294 = vmatmul.mubr.f32.gmra.mrb[0].mxu0 %v177
  %v2295 = vpop.f32.mrb[0].mxu0
  %v2296 = vadd.f32 0.0, %v2295
  %v2297 = vpop.f32.mrb[0].mxu0
  %v2298 = vadd.f32 0.0, %v2297
  %2299 = vmatprep.mubr.f32.mxu0 0.0
  %2300 = vmatmul.mubr.f32.gmra.mrb[0].mxu0 %v180
  %v2301 = vpop.f32.mrb[0].mxu0
  %v2302 = vadd.f32 0.0, %v2301
  %v2303 = vpop.f32.mrb[0].mxu0
  %v2304 = vadd.f32 0.0, %v2303
  %2305 = vmatprep.mubr.f32.mxu0 0.0
  %2306 = vmatmul.mubr.f32.gmra.mrb[0].mxu0 %v183
  %v2307 = vpop.f32.mrb[0].mxu0
  %v2308 = vadd.f32 0.0, %v2307
  %v2309 = vpop.f32.mrb[0].mxu0
  %v2310 = vadd.f32 0.0, %v2309
  %2311 = vmatprep.mubr.f32.mxu0 0.0
  %2312 = vmatmul.mubr.f32.gmra.mrb[0].mxu0 %v186
  %v2313 = vpop.f32.mrb[0].mxu0
  %v2314 = vadd.f32 0.0, %v2313
  %v2315 = vpop.f32.mrb[0].mxu0
  %v2316 = vadd.f32 0.0, %v2315
  %2317 = vmatprep.mubr.f32.mxu0 0.0
  %2318 = vmatmul.mubr.f32.gmra.mrb[0].mxu0 %v189
  %v2319 = vpop.f32.mrb[0].mxu0
  %v2320 = vadd.f32 0.0, %v2319
  %v2321 = vpop.f32.mrb[0].mxu0
  %v2322 = vadd.f32 0.0, %v2321
  %2323 = vmatprep.mubr.f32.mxu0 0.0
  %2324 = vmatmul.mubr.f32.gmra.mrb[0].mxu0 %v192
  %v2325 = vpop.f32.mrb[0].mxu0
  %v2326 = vadd.f32 0.0, %v2325
  %v2327 = vpop.f32.mrb[0].mxu0
  %v2328 = vadd.f32 0.0, %v2327
  %2329 = vmatprep.mubr.f32.mxu0 0.0
  %2330 = vmatmul.mubr.f32.gmra.mrb[0].mxu0 %v195
  %v2331 = vpop.f32.mrb[0].mxu0
  %v2332 = vadd.f32 0.0, %v2331
  %v2333 = vpop.f32.mrb[0].mxu0
  %v2334 = vadd.f32 0.0, %v2333
  %2335 = vmatprep.mubr.f32.mxu0 0.0
  %2336 = vmatmul.mubr.f32.gmra.mrb[0].mxu0 %v198
  %v2337 = vpop.f32.mrb[0].mxu0
  %v2338 = vadd.f32 0.0, %v2337
  %v2339 = vpop.f32.mrb[0].mxu0
  %v2340 = vadd.f32 0.0, %v2339
  %2341 = vmatprep.mubr.f32.mxu0 0.0
  %2342 = vmatmul.mubr.f32.gmra.mrb[0].mxu0 %v201
  %v2343 = vpop.f32.mrb[0].mxu0
  %v2344 = vadd.f32 0.0, %v2343
  %v2345 = vpop.f32.mrb[0].mxu0
  %v2346 = vadd.f32 0.0, %v2345
  %2347 = vmatprep.mubr.f32.mxu0 0.0
  %2348 = vmatmul.mubr.f32.gmra.mrb[0].mxu0 %v204
  %v2349 = vpop.f32.mrb[0].mxu0
  %v2350 = vadd.f32 0.0, %v2349
  %v2351 = vpop.f32.mrb[0].mxu0
  %v2352 = vadd.f32 0.0, %v2351
  %2353 = vmatprep.mubr.f32.mxu0 0.0
  %2354 = vmatmul.mubr.f32.gmra.mrb[0].mxu0 %v207
  %v2355 = vpop.f32.mrb[0].mxu0
  %v2356 = vadd.f32 0.0, %v2355
  %v2357 = vpop.f32.mrb[0].mxu0
  %v2358 = vadd.f32 0.0, %v2357
  %2359 = vmatprep.mubr.f32.mxu0 0.0
  %2360 = vmatmul.mubr.f32.gmra.mrb[0].mxu0 %v210
  %v2361 = vpop.f32.mrb[0].mxu0
  %v2362 = vadd.f32 0.0, %v2361
  %v2363 = vpop.f32.mrb[0].mxu0
  %v2364 = vadd.f32 0.0, %v2363
  %2365 = vmatprep.mubr.f32.mxu0 0.0
  %2366 = vmatmul.mubr.f32.gmra.mrb[0].mxu0 %v213
  %v2367 = vpop.f32.mrb[0].mxu0
  %v2368 = vadd.f32 0.0, %v2367
  %v2369 = vpop.f32.mrb[0].mxu0
  %v2370 = vadd.f32 0.0, %v2369
  %2371 = vmatprep.mubr.f32.mxu0 0.0
  %2372 = vmatmul.mubr.f32.gmra.mrb[0].mxu0 %v216
  %v2373 = vpop.f32.mrb[0].mxu0
  %v2374 = vadd.f32 0.0, %v2373
  %v2375 = vpop.f32.mrb[0].mxu0
  %v2376 = vadd.f32 0.0, %v2375
  %2377 = vmatprep.mubr.f32.mxu0 0.0
  %2378 = vmatmul.mubr.f32.gmra.mrb[0].mxu0 %v219
  %v2379 = vpop.f32.mrb[0].mxu0
  %v2380 = vadd.f32 0.0, %v2379
  %v2381 = vpop.f32.mrb[0].mxu0
  %v2382 = vadd.f32 0.0, %v2381
  %2383 = vmatprep.mubr.f32.mxu0 0.0
  %2384 = vmatmul.mubr.f32.gmra.mrb[0].mxu0 %v222
  %v2385 = vpop.f32.mrb[0].mxu0
  %v2386 = vadd.f32 0.0, %v2385
  %v2387 = vpop.f32.mrb[0].mxu0
  %v2388 = vadd.f32 0.0, %v2387
  %2389 = vmatprep.mubr.f32.mxu0 0.0
  %2390 = vmatmul.mubr.f32.gmra.mrb[0].mxu0 %v225
  %v2391 = vpop.f32.mrb[0].mxu0
  %v2392 = vadd.f32 0.0, %v2391
  %v2393 = vpop.f32.mrb[0].mxu0
  %v2394 = vadd.f32 0.0, %v2393
  %2395 = vmatprep.mubr.f32.mxu0 0.0
  %2396 = vmatmul.mubr.f32.gmra.mrb[0].mxu0 %v228
  %v2397 = vpop.f32.mrb[0].mxu0
  %v2398 = vadd.f32 0.0, %v2397
  %v2399 = vpop.f32.mrb[0].mxu0
  %v2400 = vadd.f32 0.0, %v2399
  %2401 = vmatprep.mubr.f32.mxu0 0.0
  %2402 = vmatmul.mubr.f32.gmra.mrb[0].mxu0 %v231
  %v2403 = vpop.f32.mrb[0].mxu0
  %v2404 = vadd.f32 0.0, %v2403
  %v2405 = vpop.f32.mrb[0].mxu0
  %v2406 = vadd.f32 0.0, %v2405
  %2407 = vmatprep.mubr.f32.mxu0 0.0
  %2408 = vmatmul.mubr.f32.gmra.mrb[0].mxu0 %v234
  %v2409 = vpop.f32.mrb[0].mxu0
  %v2410 = vadd.f32 0.0, %v2409
  %v2411 = vpop.f32.mrb[0].mxu0
  %v2412 = vadd.f32 0.0, %v2411
  %2413 = vmatprep.mubr.f32.mxu0 0.0
  %2414 = vmatmul.mubr.f32.gmra.mrb[0].mxu0 %v237
  %v2415 = vpop.f32.mrb[0].mxu0
  %v2416 = vadd.f32 0.0, %v2415
  %v2417 = vpop.f32.mrb[0].mxu0
  %v2418 = vadd.f32 0.0, %v2417
  %2419 = vmatprep.mubr.f32.mxu0 0.0
  %2420 = vmatmul.mubr.f32.gmra.mrb[0].mxu0 %v240
  %v2421 = vpop.f32.mrb[0].mxu0
  %v2422 = vadd.f32 0.0, %v2421
  %v2423 = vpop.f32.mrb[0].mxu0
  %v2424 = vadd.f32 0.0, %v2423
  %2425 = vmatprep.mubr.f32.mxu0 0.0
  %2426 = vmatmul.mubr.f32.gmra.mrb[0].mxu0 %v243
  %v2427 = vpop.f32.mrb[0].mxu0
  %v2428 = vadd.f32 0.0, %v2427
  %v2429 = vpop.f32.mrb[0].mxu0
  %v2430 = vadd.f32 0.0, %v2429
  %2431 = vmatprep.mubr.f32.mxu0 0.0
  %2432 = vmatmul.mubr.f32.gmra.mrb[0].mxu0 %v246
  %v2433 = vpop.f32.mrb[0].mxu0
  %v2434 = vadd.f32 0.0, %v2433
  %v2435 = vpop.f32.mrb[0].mxu0
  %v2436 = vadd.f32 0.0, %v2435
  %2437 = vmatprep.mubr.f32.mxu0 0.0
  %2438 = vmatmul.mubr.f32.gmra.mrb[0].mxu0 %v249
  %v2439 = vpop.f32.mrb[0].mxu0
  %v2440 = vadd.f32 0.0, %v2439
  %v2441 = vpop.f32.mrb[0].mxu0
  %v2442 = vadd.f32 0.0, %v2441
  %2443 = vmatprep.mubr.f32.mxu0 0.0
  %2444 = vmatmul.mubr.f32.gmra.mrb[0].mxu0 %v252
  %v2445 = vpop.f32.mrb[0].mxu0
  %v2446 = vadd.f32 0.0, %v2445
  %v2447 = vpop.f32.mrb[0].mxu0
  %v2448 = vadd.f32 0.0, %v2447
  %2449 = vmatprep.mubr.f32.mxu0 0.0
  %2450 = vmatmul.mubr.f32.gmra.mrb[0].mxu0 %v255
  %v2451 = vpop.f32.mrb[0].mxu0
  %v2452 = vadd.f32 0.0, %v2451
  %v2453 = vpop.f32.mrb[0].mxu0
  %v2454 = vadd.f32 0.0, %v2453
  %2455 = vmatprep.mubr.f32.mxu0 0.0
  %2456 = vmatmul.mubr.f32.gmra.mrb[0].mxu0 %v258
  %v2457 = vpop.f32.mrb[0].mxu0
  %v2458 = vadd.f32 0.0, %v2457
  %v2459 = vpop.f32.mrb[0].mxu0
  %v2460 = vadd.f32 0.0, %v2459
  %2461 = vmatprep.mubr.f32.mxu0 0.0
  %2462 = vmatmul.mubr.f32.gmra.mrb[0].mxu0 %v261
  %v2463 = vpop.f32.mrb[0].mxu0
  %v2464 = vadd.f32 0.0, %v2463
  %v2465 = vpop.f32.mrb[0].mxu0
  %v2466 = vadd.f32 0.0, %v2465
  %2467 = vdwg.mxu0
  %2468 = vmatprep.subr.mxu0 %v66
  %2469 = vmatpush1.msra.mxu0 %v65
  %2470 = vmatprep.subr.mxu0 %v91
  %2471 = vmatpush1.msra.mxu0 %v90
  %2472 = vmatprep.subr.mxu0 %v116
  %2473 = vmatpush1.msra.mxu0 %v115
  %2474 = vmatprep.subr.mxu0 %v141
  %2475 = vmatpush1.msra.mxu0 %v140
  %2476 = vmatprep.subr.mxu0 %v166
  %2477 = vmatpush1.msra.mxu0 %v165
  %2478 = vmatprep.subr.mxu0 0.0
  %2479 = vmatpush1.msra.mxu0 0.0
  %2480 = vmatprep.subr.mxu0 0.0
  %2481 = vmatpush1.msra.mxu0 0.0
  %2482 = vmatprep.subr.mxu0 0.0
  %2483 = vmatpush1.msra.mxu0 0.0
  %2484 = vmatprep.subr.mxu0 0.0
  %2485 = vmatpush1.msra.mxu0 0.0
  %2486 = vmatprep.subr.mxu0 0.0
  %2487 = vmatpush1.msra.mxu0 0.0
  %2488 = vmatprep.subr.mxu0 0.0
  %2489 = vmatpush1.msra.mxu0 0.0
  %2490 = vmatprep.subr.mxu0 0.0
  %2491 = vmatpush1.msra.mxu0 0.0
  %2492 = vmatprep.subr.mxu0 0.0
  %2493 = vmatpush1.msra.mxu0 0.0
  %2494 = vmatprep.subr.mxu0 0.0
  %2495 = vmatpush1.msra.mxu0 0.0
  %2496 = vmatprep.subr.mxu0 0.0
  %2497 = vmatpush1.msra.mxu0 0.0
  %2498 = vmatprep.subr.mxu0 0.0
  %2499 = vmatpush1.msra.mxu0 0.0
  %2500 = vmatprep.subr.mxu0 0.0
  %2501 = vmatpush1.msra.mxu0 0.0
  %2502 = vmatprep.subr.mxu0 0.0
  %2503 = vmatpush1.msra.mxu0 0.0
  %2504 = vmatprep.subr.mxu0 0.0
  %2505 = vmatpush1.msra.mxu0 0.0
  %2506 = vmatprep.subr.mxu0 0.0
  %2507 = vmatpush1.msra.mxu0 0.0
  %2508 = vmatprep.subr.mxu0 0.0
  %2509 = vmatpush1.msra.mxu0 0.0
  %2510 = vmatprep.subr.mxu0 0.0
  %2511 = vmatpush1.msra.mxu0 0.0
  %2512 = vmatprep.subr.mxu0 0.0
  %2513 = vmatpush1.msra.mxu0 0.0
  %2514 = vmatprep.subr.mxu0 0.0
  %2515 = vmatpush1.msra.mxu0 0.0
  %2516 = vmatprep.subr.mxu0 0.0
  %2517 = vmatpush1.msra.mxu0 0.0
  %2518 = vmatprep.subr.mxu0 0.0
  %2519 = vmatpush1.msra.mxu0 0.0
  %2520 = vmatprep.subr.mxu0 0.0
  %2521 = vmatpush1.msra.mxu0 0.0
  %2522 = vmatprep.subr.mxu0 0.0
  %2523 = vmatpush1.msra.mxu0 0.0
  %2524 = vmatprep.subr.mxu0 0.0
  %2525 = vmatpush1.msra.mxu0 0.0
  %2526 = vmatprep.subr.mxu0 0.0
  %2527 = vmatpush1.msra.mxu0 0.0
  %2528 = vmatprep.subr.mxu0 0.0
  %2529 = vmatpush1.msra.mxu0 0.0
  %2530 = vmatprep.subr.mxu0 0.0
  %2531 = vmatpush1.msra.mxu0 0.0
  %2532 = vmatprep.mubr.f32.mxu0 0.0
  %2533 = vmatmul.mubr.f32.gmra.mrb[0].mxu0 %v174
  %v2534 = vpop.f32.mrb[0].mxu0
  %v2535 = vadd.f32 0.0, %v2534
  %v2536 = vpop.f32.mrb[0].mxu0
  %v2537 = vadd.f32 0.0, %v2536
  %2538 = vmatprep.mubr.f32.mxu0 0.0
  %2539 = vmatmul.mubr.f32.gmra.mrb[0].mxu0 %v177
  %v2540 = vpop.f32.mrb[0].mxu0
  %v2541 = vadd.f32 0.0, %v2540
  %v2542 = vpop.f32.mrb[0].mxu0
  %v2543 = vadd.f32 0.0, %v2542
  %2544 = vmatprep.mubr.f32.mxu0 0.0
  %2545 = vmatmul.mubr.f32.gmra.mrb[0].mxu0 %v180
  %v2546 = vpop.f32.mrb[0].mxu0
  %v2547 = vadd.f32 0.0, %v2546
  %v2548 = vpop.f32.mrb[0].mxu0
  %v2549 = vadd.f32 0.0, %v2548
  %2550 = vmatprep.mubr.f32.mxu0 0.0
  %2551 = vmatmul.mubr.f32.gmra.mrb[0].mxu0 %v183
  %v2552 = vpop.f32.mrb[0].mxu0
  %v2553 = vadd.f32 0.0, %v2552
  %v2554 = vpop.f32.mrb[0].mxu0
  %v2555 = vadd.f32 0.0, %v2554
  %2556 = vmatprep.mubr.f32.mxu0 0.0
  %2557 = vmatmul.mubr.f32.gmra.mrb[0].mxu0 %v186
  %v2558 = vpop.f32.mrb[0].mxu0
  %v2559 = vadd.f32 0.0, %v2558
  %v2560 = vpop.f32.mrb[0].mxu0
  %v2561 = vadd.f32 0.0, %v2560
  %2562 = vmatprep.mubr.f32.mxu0 0.0
  %2563 = vmatmul.mubr.f32.gmra.mrb[0].mxu0 %v189
  %v2564 = vpop.f32.mrb[0].mxu0
  %v2565 = vadd.f32 0.0, %v2564
  %v2566 = vpop.f32.mrb[0].mxu0
  %v2567 = vadd.f32 0.0, %v2566
  %2568 = vmatprep.mubr.f32.mxu0 0.0
  %2569 = vmatmul.mubr.f32.gmra.mrb[0].mxu0 %v192
  %v2570 = vpop.f32.mrb[0].mxu0
  %v2571 = vadd.f32 0.0, %v2570
  %v2572 = vpop.f32.mrb[0].mxu0
  %v2573 = vadd.f32 0.0, %v2572
  %2574 = vmatprep.mubr.f32.mxu0 0.0
  %2575 = vmatmul.mubr.f32.gmra.mrb[0].mxu0 %v195
  %v2576 = vpop.f32.mrb[0].mxu0
  %v2577 = vadd.f32 0.0, %v2576
  %v2578 = vpop.f32.mrb[0].mxu0
  %v2579 = vadd.f32 0.0, %v2578
  %2580 = vmatprep.mubr.f32.mxu0 0.0
  %2581 = vmatmul.mubr.f32.gmra.mrb[0].mxu0 %v198
  %v2582 = vpop.f32.mrb[0].mxu0
  %v2583 = vadd.f32 0.0, %v2582
  %v2584 = vpop.f32.mrb[0].mxu0
  %v2585 = vadd.f32 0.0, %v2584
  %2586 = vmatprep.mubr.f32.mxu0 0.0
  %2587 = vmatmul.mubr.f32.gmra.mrb[0].mxu0 %v201
  %v2588 = vpop.f32.mrb[0].mxu0
  %v2589 = vadd.f32 0.0, %v2588
  %v2590 = vpop.f32.mrb[0].mxu0
  %v2591 = vadd.f32 0.0, %v2590
  %2592 = vmatprep.mubr.f32.mxu0 0.0
  %2593 = vmatmul.mubr.f32.gmra.mrb[0].mxu0 %v204
  %v2594 = vpop.f32.mrb[0].mxu0
  %v2595 = vadd.f32 0.0, %v2594
  %v2596 = vpop.f32.mrb[0].mxu0
  %v2597 = vadd.f32 0.0, %v2596
  %2598 = vmatprep.mubr.f32.mxu0 0.0
  %2599 = vmatmul.mubr.f32.gmra.mrb[0].mxu0 %v207
  %v2600 = vpop.f32.mrb[0].mxu0
  %v2601 = vadd.f32 0.0, %v2600
  %v2602 = vpop.f32.mrb[0].mxu0
  %v2603 = vadd.f32 0.0, %v2602
  %2604 = vmatprep.mubr.f32.mxu0 0.0
  %2605 = vmatmul.mubr.f32.gmra.mrb[0].mxu0 %v210
  %v2606 = vpop.f32.mrb[0].mxu0
  %v2607 = vadd.f32 0.0, %v2606
  %v2608 = vpop.f32.mrb[0].mxu0
  %v2609 = vadd.f32 0.0, %v2608
  %2610 = vmatprep.mubr.f32.mxu0 0.0
  %2611 = vmatmul.mubr.f32.gmra.mrb[0].mxu0 %v213
  %v2612 = vpop.f32.mrb[0].mxu0
  %v2613 = vadd.f32 0.0, %v2612
  %v2614 = vpop.f32.mrb[0].mxu0
  %v2615 = vadd.f32 0.0, %v2614
  %2616 = vmatprep.mubr.f32.mxu0 0.0
  %2617 = vmatmul.mubr.f32.gmra.mrb[0].mxu0 %v216
  %v2618 = vpop.f32.mrb[0].mxu0
  %v2619 = vadd.f32 0.0, %v2618
  %v2620 = vpop.f32.mrb[0].mxu0
  %v2621 = vadd.f32 0.0, %v2620
  %2622 = vmatprep.mubr.f32.mxu0 0.0
  %2623 = vmatmul.mubr.f32.gmra.mrb[0].mxu0 %v219
  %v2624 = vpop.f32.mrb[0].mxu0
  %v2625 = vadd.f32 0.0, %v2624
  %v2626 = vpop.f32.mrb[0].mxu0
  %v2627 = vadd.f32 0.0, %v2626
  %2628 = vmatprep.mubr.f32.mxu0 0.0
  %2629 = vmatmul.mubr.f32.gmra.mrb[0].mxu0 %v222
  %v2630 = vpop.f32.mrb[0].mxu0
  %v2631 = vadd.f32 0.0, %v2630
  %v2632 = vpop.f32.mrb[0].mxu0
  %v2633 = vadd.f32 0.0, %v2632
  %2634 = vmatprep.mubr.f32.mxu0 0.0
  %2635 = vmatmul.mubr.f32.gmra.mrb[0].mxu0 %v225
  %v2636 = vpop.f32.mrb[0].mxu0
  %v2637 = vadd.f32 0.0, %v2636
  %v2638 = vpop.f32.mrb[0].mxu0
  %v2639 = vadd.f32 0.0, %v2638
  %2640 = vmatprep.mubr.f32.mxu0 0.0
  %2641 = vmatmul.mubr.f32.gmra.mrb[0].mxu0 %v228
  %v2642 = vpop.f32.mrb[0].mxu0
  %v2643 = vadd.f32 0.0, %v2642
  %v2644 = vpop.f32.mrb[0].mxu0
  %v2645 = vadd.f32 0.0, %v2644
  %2646 = vmatprep.mubr.f32.mxu0 0.0
  %2647 = vmatmul.mubr.f32.gmra.mrb[0].mxu0 %v231
  %v2648 = vpop.f32.mrb[0].mxu0
  %v2649 = vadd.f32 0.0, %v2648
  %v2650 = vpop.f32.mrb[0].mxu0
  %v2651 = vadd.f32 0.0, %v2650
  %2652 = vmatprep.mubr.f32.mxu0 0.0
  %2653 = vmatmul.mubr.f32.gmra.mrb[0].mxu0 %v234
  %v2654 = vpop.f32.mrb[0].mxu0
  %v2655 = vadd.f32 0.0, %v2654
  %v2656 = vpop.f32.mrb[0].mxu0
  %v2657 = vadd.f32 0.0, %v2656
  %2658 = vmatprep.mubr.f32.mxu0 0.0
  %2659 = vmatmul.mubr.f32.gmra.mrb[0].mxu0 %v237
  %v2660 = vpop.f32.mrb[0].mxu0
  %v2661 = vadd.f32 0.0, %v2660
  %v2662 = vpop.f32.mrb[0].mxu0
  %v2663 = vadd.f32 0.0, %v2662
  %2664 = vmatprep.mubr.f32.mxu0 0.0
  %2665 = vmatmul.mubr.f32.gmra.mrb[0].mxu0 %v240
  %v2666 = vpop.f32.mrb[0].mxu0
  %v2667 = vadd.f32 0.0, %v2666
  %v2668 = vpop.f32.mrb[0].mxu0
  %v2669 = vadd.f32 0.0, %v2668
  %2670 = vmatprep.mubr.f32.mxu0 0.0
  %2671 = vmatmul.mubr.f32.gmra.mrb[0].mxu0 %v243
  %v2672 = vpop.f32.mrb[0].mxu0
  %v2673 = vadd.f32 0.0, %v2672
  %v2674 = vpop.f32.mrb[0].mxu0
  %v2675 = vadd.f32 0.0, %v2674
  %2676 = vmatprep.mubr.f32.mxu0 0.0
  %2677 = vmatmul.mubr.f32.gmra.mrb[0].mxu0 %v246
  %v2678 = vpop.f32.mrb[0].mxu0
  %v2679 = vadd.f32 0.0, %v2678
  %v2680 = vpop.f32.mrb[0].mxu0
  %v2681 = vadd.f32 0.0, %v2680
  %2682 = vmatprep.mubr.f32.mxu0 0.0
  %2683 = vmatmul.mubr.f32.gmra.mrb[0].mxu0 %v249
  %v2684 = vpop.f32.mrb[0].mxu0
  %v2685 = vadd.f32 0.0, %v2684
  %v2686 = vpop.f32.mrb[0].mxu0
  %v2687 = vadd.f32 0.0, %v2686
  %2688 = vmatprep.mubr.f32.mxu0 0.0
  %2689 = vmatmul.mubr.f32.gmra.mrb[0].mxu0 %v252
  %v2690 = vpop.f32.mrb[0].mxu0
  %v2691 = vadd.f32 0.0, %v2690
  %v2692 = vpop.f32.mrb[0].mxu0
  %v2693 = vadd.f32 0.0, %v2692
  %2694 = vmatprep.mubr.f32.mxu0 0.0
  %2695 = vmatmul.mubr.f32.gmra.mrb[0].mxu0 %v255
  %v2696 = vpop.f32.mrb[0].mxu0
  %v2697 = vadd.f32 0.0, %v2696
  %v2698 = vpop.f32.mrb[0].mxu0
  %v2699 = vadd.f32 0.0, %v2698
  %2700 = vmatprep.mubr.f32.mxu0 0.0
  %2701 = vmatmul.mubr.f32.gmra.mrb[0].mxu0 %v258
  %v2702 = vpop.f32.mrb[0].mxu0
  %v2703 = vadd.f32 0.0, %v2702
  %v2704 = vpop.f32.mrb[0].mxu0
  %v2705 = vadd.f32 0.0, %v2704
  %2706 = vmatprep.mubr.f32.mxu0 0.0
  %2707 = vmatmul.mubr.f32.gmra.mrb[0].mxu0 %v261
  %v2708 = vpop.f32.mrb[0].mxu0
  %v2709 = vadd.f32 0.0, %v2708
  %v2710 = vpop.f32.mrb[0].mxu0
  %v2711 = vadd.f32 0.0, %v2710
  %2712 = vdwg.mxu0
  %2713 = vmatprep.subr.mxu0 %v68
  %2714 = vmatpush1.msra.mxu0 %v67
  %2715 = vmatprep.subr.mxu0 %v93
  %2716 = vmatpush1.msra.mxu0 %v92
  %2717 = vmatprep.subr.mxu0 %v118
  %2718 = vmatpush1.msra.mxu0 %v117
  %2719 = vmatprep.subr.mxu0 %v143
  %2720 = vmatpush1.msra.mxu0 %v142
  %2721 = vmatprep.subr.mxu0 %v168
  %2722 = vmatpush1.msra.mxu0 %v167
  %2723 = vmatprep.subr.mxu0 0.0
  %2724 = vmatpush1.msra.mxu0 0.0
  %2725 = vmatprep.subr.mxu0 0.0
  %2726 = vmatpush1.msra.mxu0 0.0
  %2727 = vmatprep.subr.mxu0 0.0
  %2728 = vmatpush1.msra.mxu0 0.0
  %2729 = vmatprep.subr.mxu0 0.0
  %2730 = vmatpush1.msra.mxu0 0.0
  %2731 = vmatprep.subr.mxu0 0.0
  %2732 = vmatpush1.msra.mxu0 0.0
  %2733 = vmatprep.subr.mxu0 0.0
  %2734 = vmatpush1.msra.mxu0 0.0
  %2735 = vmatprep.subr.mxu0 0.0
  %2736 = vmatpush1.msra.mxu0 0.0
  %2737 = vmatprep.subr.mxu0 0.0
  %2738 = vmatpush1.msra.mxu0 0.0
  %2739 = vmatprep.subr.mxu0 0.0
  %2740 = vmatpush1.msra.mxu0 0.0
  %2741 = vmatprep.subr.mxu0 0.0
  %2742 = vmatpush1.msra.mxu0 0.0
  %2743 = vmatprep.subr.mxu0 0.0
  %2744 = vmatpush1.msra.mxu0 0.0
  %2745 = vmatprep.subr.mxu0 0.0
  %2746 = vmatpush1.msra.mxu0 0.0
  %2747 = vmatprep.subr.mxu0 0.0
  %2748 = vmatpush1.msra.mxu0 0.0
  %2749 = vmatprep.subr.mxu0 0.0
  %2750 = vmatpush1.msra.mxu0 0.0
  %2751 = vmatprep.subr.mxu0 0.0
  %2752 = vmatpush1.msra.mxu0 0.0
  %2753 = vmatprep.subr.mxu0 0.0
  %2754 = vmatpush1.msra.mxu0 0.0
  %2755 = vmatprep.subr.mxu0 0.0
  %2756 = vmatpush1.msra.mxu0 0.0
  %2757 = vmatprep.subr.mxu0 0.0
  %2758 = vmatpush1.msra.mxu0 0.0
  %2759 = vmatprep.subr.mxu0 0.0
  %2760 = vmatpush1.msra.mxu0 0.0
  %2761 = vmatprep.subr.mxu0 0.0
  %2762 = vmatpush1.msra.mxu0 0.0
  %2763 = vmatprep.subr.mxu0 0.0
  %2764 = vmatpush1.msra.mxu0 0.0
  %2765 = vmatprep.subr.mxu0 0.0
  %2766 = vmatpush1.msra.mxu0 0.0
  %2767 = vmatprep.subr.mxu0 0.0
  %2768 = vmatpush1.msra.mxu0 0.0
  %2769 = vmatprep.subr.mxu0 0.0
  %2770 = vmatpush1.msra.mxu0 0.0
  %2771 = vmatprep.subr.mxu0 0.0
  %2772 = vmatpush1.msra.mxu0 0.0
  %2773 = vmatprep.subr.mxu0 0.0
  %2774 = vmatpush1.msra.mxu0 0.0
  %2775 = vmatprep.subr.mxu0 0.0
  %2776 = vmatpush1.msra.mxu0 0.0
  %2777 = vmatprep.mubr.f32.mxu0 0.0
  %2778 = vmatmul.mubr.f32.gmra.mrb[0].mxu0 %v174
  %v2779 = vpop.f32.mrb[0].mxu0
  %v2780 = vadd.f32 0.0, %v2779
  %v2781 = vpop.f32.mrb[0].mxu0
  %v2782 = vadd.f32 0.0, %v2781
  %2783 = vmatprep.mubr.f32.mxu0 0.0
  %2784 = vmatmul.mubr.f32.gmra.mrb[0].mxu0 %v177
  %v2785 = vpop.f32.mrb[0].mxu0
  %v2786 = vadd.f32 0.0, %v2785
  %v2787 = vpop.f32.mrb[0].mxu0
  %v2788 = vadd.f32 0.0, %v2787
  %2789 = vmatprep.mubr.f32.mxu0 0.0
  %2790 = vmatmul.mubr.f32.gmra.mrb[0].mxu0 %v180
  %v2791 = vpop.f32.mrb[0].mxu0
  %v2792 = vadd.f32 0.0, %v2791
  %v2793 = vpop.f32.mrb[0].mxu0
  %v2794 = vadd.f32 0.0, %v2793
  %2795 = vmatprep.mubr.f32.mxu0 0.0
  %2796 = vmatmul.mubr.f32.gmra.mrb[0].mxu0 %v183
  %v2797 = vpop.f32.mrb[0].mxu0
  %v2798 = vadd.f32 0.0, %v2797
  %v2799 = vpop.f32.mrb[0].mxu0
  %v2800 = vadd.f32 0.0, %v2799
  %2801 = vmatprep.mubr.f32.mxu0 0.0
  %2802 = vmatmul.mubr.f32.gmra.mrb[0].mxu0 %v186
  %v2803 = vpop.f32.mrb[0].mxu0
  %v2804 = vadd.f32 0.0, %v2803
  %v2805 = vpop.f32.mrb[0].mxu0
  %v2806 = vadd.f32 0.0, %v2805
  %2807 = vmatprep.mubr.f32.mxu0 0.0
  %2808 = vmatmul.mubr.f32.gmra.mrb[0].mxu0 %v189
  %v2809 = vpop.f32.mrb[0].mxu0
  %v2810 = vadd.f32 0.0, %v2809
  %v2811 = vpop.f32.mrb[0].mxu0
  %v2812 = vadd.f32 0.0, %v2811
  %2813 = vmatprep.mubr.f32.mxu0 0.0
  %2814 = vmatmul.mubr.f32.gmra.mrb[0].mxu0 %v192
  %v2815 = vpop.f32.mrb[0].mxu0
  %v2816 = vadd.f32 0.0, %v2815
  %v2817 = vpop.f32.mrb[0].mxu0
  %v2818 = vadd.f32 0.0, %v2817
  %2819 = vmatprep.mubr.f32.mxu0 0.0
  %2820 = vmatmul.mubr.f32.gmra.mrb[0].mxu0 %v195
  %v2821 = vpop.f32.mrb[0].mxu0
  %v2822 = vadd.f32 0.0, %v2821
  %v2823 = vpop.f32.mrb[0].mxu0
  %v2824 = vadd.f32 0.0, %v2823
  %2825 = vmatprep.mubr.f32.mxu0 0.0
  %2826 = vmatmul.mubr.f32.gmra.mrb[0].mxu0 %v198
  %v2827 = vpop.f32.mrb[0].mxu0
  %v2828 = vadd.f32 0.0, %v2827
  %v2829 = vpop.f32.mrb[0].mxu0
  %v2830 = vadd.f32 0.0, %v2829
  %2831 = vmatprep.mubr.f32.mxu0 0.0
  %2832 = vmatmul.mubr.f32.gmra.mrb[0].mxu0 %v201
  %v2833 = vpop.f32.mrb[0].mxu0
  %v2834 = vadd.f32 0.0, %v2833
  %v2835 = vpop.f32.mrb[0].mxu0
  %v2836 = vadd.f32 0.0, %v2835
  %2837 = vmatprep.mubr.f32.mxu0 0.0
  %2838 = vmatmul.mubr.f32.gmra.mrb[0].mxu0 %v204
  %v2839 = vpop.f32.mrb[0].mxu0
  %v2840 = vadd.f32 0.0, %v2839
  %v2841 = vpop.f32.mrb[0].mxu0
  %v2842 = vadd.f32 0.0, %v2841
  %2843 = vmatprep.mubr.f32.mxu0 0.0
  %2844 = vmatmul.mubr.f32.gmra.mrb[0].mxu0 %v207
  %v2845 = vpop.f32.mrb[0].mxu0
  %v2846 = vadd.f32 0.0, %v2845
  %v2847 = vpop.f32.mrb[0].mxu0
  %v2848 = vadd.f32 0.0, %v2847
  %2849 = vmatprep.mubr.f32.mxu0 0.0
  %2850 = vmatmul.mubr.f32.gmra.mrb[0].mxu0 %v210
  %v2851 = vpop.f32.mrb[0].mxu0
  %v2852 = vadd.f32 0.0, %v2851
  %v2853 = vpop.f32.mrb[0].mxu0
  %v2854 = vadd.f32 0.0, %v2853
  %2855 = vmatprep.mubr.f32.mxu0 0.0
  %2856 = vmatmul.mubr.f32.gmra.mrb[0].mxu0 %v213
  %v2857 = vpop.f32.mrb[0].mxu0
  %v2858 = vadd.f32 0.0, %v2857
  %v2859 = vpop.f32.mrb[0].mxu0
  %v2860 = vadd.f32 0.0, %v2859
  %2861 = vmatprep.mubr.f32.mxu0 0.0
  %2862 = vmatmul.mubr.f32.gmra.mrb[0].mxu0 %v216
  %v2863 = vpop.f32.mrb[0].mxu0
  %v2864 = vadd.f32 0.0, %v2863
  %v2865 = vpop.f32.mrb[0].mxu0
  %v2866 = vadd.f32 0.0, %v2865
  %2867 = vmatprep.mubr.f32.mxu0 0.0
  %2868 = vmatmul.mubr.f32.gmra.mrb[0].mxu0 %v219
  %v2869 = vpop.f32.mrb[0].mxu0
  %v2870 = vadd.f32 0.0, %v2869
  %v2871 = vpop.f32.mrb[0].mxu0
  %v2872 = vadd.f32 0.0, %v2871
  %2873 = vmatprep.mubr.f32.mxu0 0.0
  %2874 = vmatmul.mubr.f32.gmra.mrb[0].mxu0 %v222
  %v2875 = vpop.f32.mrb[0].mxu0
  %v2876 = vadd.f32 0.0, %v2875
  %v2877 = vpop.f32.mrb[0].mxu0
  %v2878 = vadd.f32 0.0, %v2877
  %2879 = vmatprep.mubr.f32.mxu0 0.0
  %2880 = vmatmul.mubr.f32.gmra.mrb[0].mxu0 %v225
  %v2881 = vpop.f32.mrb[0].mxu0
  %v2882 = vadd.f32 0.0, %v2881
  %v2883 = vpop.f32.mrb[0].mxu0
  %v2884 = vadd.f32 0.0, %v2883
  %2885 = vmatprep.mubr.f32.mxu0 0.0
  %2886 = vmatmul.mubr.f32.gmra.mrb[0].mxu0 %v228
  %v2887 = vpop.f32.mrb[0].mxu0
  %v2888 = vadd.f32 0.0, %v2887
  %v2889 = vpop.f32.mrb[0].mxu0
  %v2890 = vadd.f32 0.0, %v2889
  %2891 = vmatprep.mubr.f32.mxu0 0.0
  %2892 = vmatmul.mubr.f32.gmra.mrb[0].mxu0 %v231
  %v2893 = vpop.f32.mrb[0].mxu0
  %v2894 = vadd.f32 0.0, %v2893
  %v2895 = vpop.f32.mrb[0].mxu0
  %v2896 = vadd.f32 0.0, %v2895
  %2897 = vmatprep.mubr.f32.mxu0 0.0
  %2898 = vmatmul.mubr.f32.gmra.mrb[0].mxu0 %v234
  %v2899 = vpop.f32.mrb[0].mxu0
  %v2900 = vadd.f32 0.0, %v2899
  %v2901 = vpop.f32.mrb[0].mxu0
  %v2902 = vadd.f32 0.0, %v2901
  %2903 = vmatprep.mubr.f32.mxu0 0.0
  %2904 = vmatmul.mubr.f32.gmra.mrb[0].mxu0 %v237
  %v2905 = vpop.f32.mrb[0].mxu0
  %v2906 = vadd.f32 0.0, %v2905
  %v2907 = vpop.f32.mrb[0].mxu0
  %v2908 = vadd.f32 0.0, %v2907
  %2909 = vmatprep.mubr.f32.mxu0 0.0
  %2910 = vmatmul.mubr.f32.gmra.mrb[0].mxu0 %v240
  %v2911 = vpop.f32.mrb[0].mxu0
  %v2912 = vadd.f32 0.0, %v2911
  %v2913 = vpop.f32.mrb[0].mxu0
  %v2914 = vadd.f32 0.0, %v2913
  %2915 = vmatprep.mubr.f32.mxu0 0.0
  %2916 = vmatmul.mubr.f32.gmra.mrb[0].mxu0 %v243
  %v2917 = vpop.f32.mrb[0].mxu0
  %v2918 = vadd.f32 0.0, %v2917
  %v2919 = vpop.f32.mrb[0].mxu0
  %v2920 = vadd.f32 0.0, %v2919
  %2921 = vmatprep.mubr.f32.mxu0 0.0
  %2922 = vmatmul.mubr.f32.gmra.mrb[0].mxu0 %v246
  %v2923 = vpop.f32.mrb[0].mxu0
  %v2924 = vadd.f32 0.0, %v2923
  %v2925 = vpop.f32.mrb[0].mxu0
  %v2926 = vadd.f32 0.0, %v2925
  %2927 = vmatprep.mubr.f32.mxu0 0.0
  %2928 = vmatmul.mubr.f32.gmra.mrb[0].mxu0 %v249
  %v2929 = vpop.f32.mrb[0].mxu0
  %v2930 = vadd.f32 0.0, %v2929
  %v2931 = vpop.f32.mrb[0].mxu0
  %v2932 = vadd.f32 0.0, %v2931
  %2933 = vmatprep.mubr.f32.mxu0 0.0
  %2934 = vmatmul.mubr.f32.gmra.mrb[0].mxu0 %v252
  %v2935 = vpop.f32.mrb[0].mxu0
  %v2936 = vadd.f32 0.0, %v2935
  %v2937 = vpop.f32.mrb[0].mxu0
  %v2938 = vadd.f32 0.0, %v2937
  %2939 = vmatprep.mubr.f32.mxu0 0.0
  %2940 = vmatmul.mubr.f32.gmra.mrb[0].mxu0 %v255
  %v2941 = vpop.f32.mrb[0].mxu0
  %v2942 = vadd.f32 0.0, %v2941
  %v2943 = vpop.f32.mrb[0].mxu0
  %v2944 = vadd.f32 0.0, %v2943
  %2945 = vmatprep.mubr.f32.mxu0 0.0
  %2946 = vmatmul.mubr.f32.gmra.mrb[0].mxu0 %v258
  %v2947 = vpop.f32.mrb[0].mxu0
  %v2948 = vadd.f32 0.0, %v2947
  %v2949 = vpop.f32.mrb[0].mxu0
  %v2950 = vadd.f32 0.0, %v2949
  %2951 = vmatprep.mubr.f32.mxu0 0.0
  %2952 = vmatmul.mubr.f32.gmra.mrb[0].mxu0 %v261
  %v2953 = vpop.f32.mrb[0].mxu0
  %v2954 = vadd.f32 0.0, %v2953
  %v2955 = vpop.f32.mrb[0].mxu0
  %v2956 = vadd.f32 0.0, %v2955
  %2957 = vdwg.mxu0
  %2958 = vmatprep.subr.mxu0 %v70
  %2959 = vmatpush1.msra.mxu0 %v69
  %2960 = vmatprep.subr.mxu0 %v95
  %2961 = vmatpush1.msra.mxu0 %v94
  %2962 = vmatprep.subr.mxu0 %v120
  %2963 = vmatpush1.msra.mxu0 %v119
  %2964 = vmatprep.subr.mxu0 %v145
  %2965 = vmatpush1.msra.mxu0 %v144
  %2966 = vmatprep.subr.mxu0 %v170
  %2967 = vmatpush1.msra.mxu0 %v169
  %2968 = vmatprep.subr.mxu0 0.0
  %2969 = vmatpush1.msra.mxu0 0.0
  %2970 = vmatprep.subr.mxu0 0.0
  %2971 = vmatpush1.msra.mxu0 0.0
  %2972 = vmatprep.subr.mxu0 0.0
  %2973 = vmatpush1.msra.mxu0 0.0
  %2974 = vmatprep.subr.mxu0 0.0
  %2975 = vmatpush1.msra.mxu0 0.0
  %2976 = vmatprep.subr.mxu0 0.0
  %2977 = vmatpush1.msra.mxu0 0.0
  %2978 = vmatprep.subr.mxu0 0.0
  %2979 = vmatpush1.msra.mxu0 0.0
  %2980 = vmatprep.subr.mxu0 0.0
  %2981 = vmatpush1.msra.mxu0 0.0
  %2982 = vmatprep.subr.mxu0 0.0
  %2983 = vmatpush1.msra.mxu0 0.0
  %2984 = vmatprep.subr.mxu0 0.0
  %2985 = vmatpush1.msra.mxu0 0.0
  %2986 = vmatprep.subr.mxu0 0.0
  %2987 = vmatpush1.msra.mxu0 0.0
  %2988 = vmatprep.subr.mxu0 0.0
  %2989 = vmatpush1.msra.mxu0 0.0
  %2990 = vmatprep.subr.mxu0 0.0
  %2991 = vmatpush1.msra.mxu0 0.0
  %2992 = vmatprep.subr.mxu0 0.0
  %2993 = vmatpush1.msra.mxu0 0.0
  %2994 = vmatprep.subr.mxu0 0.0
  %2995 = vmatpush1.msra.mxu0 0.0
  %2996 = vmatprep.subr.mxu0 0.0
  %2997 = vmatpush1.msra.mxu0 0.0
  %2998 = vmatprep.subr.mxu0 0.0
  %2999 = vmatpush1.msra.mxu0 0.0
  %3000 = vmatprep.subr.mxu0 0.0
  %3001 = vmatpush1.msra.mxu0 0.0
  %3002 = vmatprep.subr.mxu0 0.0
  %3003 = vmatpush1.msra.mxu0 0.0
  %3004 = vmatprep.subr.mxu0 0.0
  %3005 = vmatpush1.msra.mxu0 0.0
  %3006 = vmatprep.subr.mxu0 0.0
  %3007 = vmatpush1.msra.mxu0 0.0
  %3008 = vmatprep.subr.mxu0 0.0
  %3009 = vmatpush1.msra.mxu0 0.0
  %3010 = vmatprep.subr.mxu0 0.0
  %3011 = vmatpush1.msra.mxu0 0.0
  %3012 = vmatprep.subr.mxu0 0.0
  %3013 = vmatpush1.msra.mxu0 0.0
  %3014 = vmatprep.subr.mxu0 0.0
  %3015 = vmatpush1.msra.mxu0 0.0
  %3016 = vmatprep.subr.mxu0 0.0
  %3017 = vmatpush1.msra.mxu0 0.0
  %3018 = vmatprep.subr.mxu0 0.0
  %3019 = vmatpush1.msra.mxu0 0.0
  %3020 = vmatprep.subr.mxu0 0.0
  %3021 = vmatpush1.msra.mxu0 0.0
  %3022 = vmatprep.mubr.f32.mxu0 0.0
  %3023 = vmatmul.mubr.f32.gmra.mrb[0].mxu0 %v174
  %v3024 = vpop.f32.mrb[0].mxu0
  %v3025 = vadd.f32 0.0, %v3024
  %v3026 = vpop.f32.mrb[0].mxu0
  %v3027 = vadd.f32 0.0, %v3026
  %3028 = vmatprep.mubr.f32.mxu0 0.0
  %3029 = vmatmul.mubr.f32.gmra.mrb[0].mxu0 %v177
  %v3030 = vpop.f32.mrb[0].mxu0
  %v3031 = vadd.f32 0.0, %v3030
  %v3032 = vpop.f32.mrb[0].mxu0
  %v3033 = vadd.f32 0.0, %v3032
  %3034 = vmatprep.mubr.f32.mxu0 0.0
  %3035 = vmatmul.mubr.f32.gmra.mrb[0].mxu0 %v180
  %v3036 = vpop.f32.mrb[0].mxu0
  %v3037 = vadd.f32 0.0, %v3036
  %v3038 = vpop.f32.mrb[0].mxu0
  %v3039 = vadd.f32 0.0, %v3038
  %3040 = vmatprep.mubr.f32.mxu0 0.0
  %3041 = vmatmul.mubr.f32.gmra.mrb[0].mxu0 %v183
  %v3042 = vpop.f32.mrb[0].mxu0
  %v3043 = vadd.f32 0.0, %v3042
  %v3044 = vpop.f32.mrb[0].mxu0
  %v3045 = vadd.f32 0.0, %v3044
  %3046 = vmatprep.mubr.f32.mxu0 0.0
  %3047 = vmatmul.mubr.f32.gmra.mrb[0].mxu0 %v186
  %v3048 = vpop.f32.mrb[0].mxu0
  %v3049 = vadd.f32 0.0, %v3048
  %v3050 = vpop.f32.mrb[0].mxu0
  %v3051 = vadd.f32 0.0, %v3050
  %3052 = vmatprep.mubr.f32.mxu0 0.0
  %3053 = vmatmul.mubr.f32.gmra.mrb[0].mxu0 %v189
  %v3054 = vpop.f32.mrb[0].mxu0
  %v3055 = vadd.f32 0.0, %v3054
  %v3056 = vpop.f32.mrb[0].mxu0
  %v3057 = vadd.f32 0.0, %v3056
  %3058 = vmatprep.mubr.f32.mxu0 0.0
  %3059 = vmatmul.mubr.f32.gmra.mrb[0].mxu0 %v192
  %v3060 = vpop.f32.mrb[0].mxu0
  %v3061 = vadd.f32 0.0, %v3060
  %v3062 = vpop.f32.mrb[0].mxu0
  %v3063 = vadd.f32 0.0, %v3062
  %3064 = vmatprep.mubr.f32.mxu0 0.0
  %3065 = vmatmul.mubr.f32.gmra.mrb[0].mxu0 %v195
  %v3066 = vpop.f32.mrb[0].mxu0
  %v3067 = vadd.f32 0.0, %v3066
  %v3068 = vpop.f32.mrb[0].mxu0
  %v3069 = vadd.f32 0.0, %v3068
  %3070 = vmatprep.mubr.f32.mxu0 0.0
  %3071 = vmatmul.mubr.f32.gmra.mrb[0].mxu0 %v198
  %v3072 = vpop.f32.mrb[0].mxu0
  %v3073 = vadd.f32 0.0, %v3072
  %v3074 = vpop.f32.mrb[0].mxu0
  %v3075 = vadd.f32 0.0, %v3074
  %3076 = vmatprep.mubr.f32.mxu0 0.0
  %3077 = vmatmul.mubr.f32.gmra.mrb[0].mxu0 %v201
  %v3078 = vpop.f32.mrb[0].mxu0
  %v3079 = vadd.f32 0.0, %v3078
  %v3080 = vpop.f32.mrb[0].mxu0
  %v3081 = vadd.f32 0.0, %v3080
  %3082 = vmatprep.mubr.f32.mxu0 0.0
  %3083 = vmatmul.mubr.f32.gmra.mrb[0].mxu0 %v204
  %v3084 = vpop.f32.mrb[0].mxu0
  %v3085 = vadd.f32 0.0, %v3084
  %v3086 = vpop.f32.mrb[0].mxu0
  %v3087 = vadd.f32 0.0, %v3086
  %3088 = vmatprep.mubr.f32.mxu0 0.0
  %3089 = vmatmul.mubr.f32.gmra.mrb[0].mxu0 %v207
  %v3090 = vpop.f32.mrb[0].mxu0
  %v3091 = vadd.f32 0.0, %v3090
  %v3092 = vpop.f32.mrb[0].mxu0
  %v3093 = vadd.f32 0.0, %v3092
  %3094 = vmatprep.mubr.f32.mxu0 0.0
  %3095 = vmatmul.mubr.f32.gmra.mrb[0].mxu0 %v210
  %v3096 = vpop.f32.mrb[0].mxu0
  %v3097 = vadd.f32 0.0, %v3096
  %v3098 = vpop.f32.mrb[0].mxu0
  %v3099 = vadd.f32 0.0, %v3098
  %3100 = vmatprep.mubr.f32.mxu0 0.0
  %3101 = vmatmul.mubr.f32.gmra.mrb[0].mxu0 %v213
  %v3102 = vpop.f32.mrb[0].mxu0
  %v3103 = vadd.f32 0.0, %v3102
  %v3104 = vpop.f32.mrb[0].mxu0
  %v3105 = vadd.f32 0.0, %v3104
  %3106 = vmatprep.mubr.f32.mxu0 0.0
  %3107 = vmatmul.mubr.f32.gmra.mrb[0].mxu0 %v216
  %v3108 = vpop.f32.mrb[0].mxu0
  %v3109 = vadd.f32 0.0, %v3108
  %v3110 = vpop.f32.mrb[0].mxu0
  %v3111 = vadd.f32 0.0, %v3110
  %3112 = vmatprep.mubr.f32.mxu0 0.0
  %3113 = vmatmul.mubr.f32.gmra.mrb[0].mxu0 %v219
  %v3114 = vpop.f32.mrb[0].mxu0
  %v3115 = vadd.f32 0.0, %v3114
  %v3116 = vpop.f32.mrb[0].mxu0
  %v3117 = vadd.f32 0.0, %v3116
  %3118 = vmatprep.mubr.f32.mxu0 0.0
  %3119 = vmatmul.mubr.f32.gmra.mrb[0].mxu0 %v222
  %v3120 = vpop.f32.mrb[0].mxu0
  %v3121 = vadd.f32 0.0, %v3120
  %v3122 = vpop.f32.mrb[0].mxu0
  %v3123 = vadd.f32 0.0, %v3122
  %3124 = vmatprep.mubr.f32.mxu0 0.0
  %3125 = vmatmul.mubr.f32.gmra.mrb[0].mxu0 %v225
  %v3126 = vpop.f32.mrb[0].mxu0
  %v3127 = vadd.f32 0.0, %v3126
  %v3128 = vpop.f32.mrb[0].mxu0
  %v3129 = vadd.f32 0.0, %v3128
  %3130 = vmatprep.mubr.f32.mxu0 0.0
  %3131 = vmatmul.mubr.f32.gmra.mrb[0].mxu0 %v228
  %v3132 = vpop.f32.mrb[0].mxu0
  %v3133 = vadd.f32 0.0, %v3132
  %v3134 = vpop.f32.mrb[0].mxu0
  %v3135 = vadd.f32 0.0, %v3134
  %3136 = vmatprep.mubr.f32.mxu0 0.0
  %3137 = vmatmul.mubr.f32.gmra.mrb[0].mxu0 %v231
  %v3138 = vpop.f32.mrb[0].mxu0
  %v3139 = vadd.f32 0.0, %v3138
  %v3140 = vpop.f32.mrb[0].mxu0
  %v3141 = vadd.f32 0.0, %v3140
  %3142 = vmatprep.mubr.f32.mxu0 0.0
  %3143 = vmatmul.mubr.f32.gmra.mrb[0].mxu0 %v234
  %v3144 = vpop.f32.mrb[0].mxu0
  %v3145 = vadd.f32 0.0, %v3144
  %v3146 = vpop.f32.mrb[0].mxu0
  %v3147 = vadd.f32 0.0, %v3146
  %3148 = vmatprep.mubr.f32.mxu0 0.0
  %3149 = vmatmul.mubr.f32.gmra.mrb[0].mxu0 %v237
  %v3150 = vpop.f32.mrb[0].mxu0
  %v3151 = vadd.f32 0.0, %v3150
  %v3152 = vpop.f32.mrb[0].mxu0
  %v3153 = vadd.f32 0.0, %v3152
  %3154 = vmatprep.mubr.f32.mxu0 0.0
  %3155 = vmatmul.mubr.f32.gmra.mrb[0].mxu0 %v240
  %v3156 = vpop.f32.mrb[0].mxu0
  %v3157 = vadd.f32 0.0, %v3156
  %v3158 = vpop.f32.mrb[0].mxu0
  %v3159 = vadd.f32 0.0, %v3158
  %3160 = vmatprep.mubr.f32.mxu0 0.0
  %3161 = vmatmul.mubr.f32.gmra.mrb[0].mxu0 %v243
  %v3162 = vpop.f32.mrb[0].mxu0
  %v3163 = vadd.f32 0.0, %v3162
  %v3164 = vpop.f32.mrb[0].mxu0
  %v3165 = vadd.f32 0.0, %v3164
  %3166 = vmatprep.mubr.f32.mxu0 0.0
  %3167 = vmatmul.mubr.f32.gmra.mrb[0].mxu0 %v246
  %v3168 = vpop.f32.mrb[0].mxu0
  %v3169 = vadd.f32 0.0, %v3168
  %v3170 = vpop.f32.mrb[0].mxu0
  %v3171 = vadd.f32 0.0, %v3170
  %3172 = vmatprep.mubr.f32.mxu0 0.0
  %3173 = vmatmul.mubr.f32.gmra.mrb[0].mxu0 %v249
  %v3174 = vpop.f32.mrb[0].mxu0
  %v3175 = vadd.f32 0.0, %v3174
  %v3176 = vpop.f32.mrb[0].mxu0
  %v3177 = vadd.f32 0.0, %v3176
  %3178 = vmatprep.mubr.f32.mxu0 0.0
  %3179 = vmatmul.mubr.f32.gmra.mrb[0].mxu0 %v252
  %v3180 = vpop.f32.mrb[0].mxu0
  %v3181 = vadd.f32 0.0, %v3180
  %v3182 = vpop.f32.mrb[0].mxu0
  %v3183 = vadd.f32 0.0, %v3182
  %3184 = vmatprep.mubr.f32.mxu0 0.0
  %3185 = vmatmul.mubr.f32.gmra.mrb[0].mxu0 %v255
  %v3186 = vpop.f32.mrb[0].mxu0
  %v3187 = vadd.f32 0.0, %v3186
  %v3188 = vpop.f32.mrb[0].mxu0
  %v3189 = vadd.f32 0.0, %v3188
  %3190 = vmatprep.mubr.f32.mxu0 0.0
  %3191 = vmatmul.mubr.f32.gmra.mrb[0].mxu0 %v258
  %v3192 = vpop.f32.mrb[0].mxu0
  %v3193 = vadd.f32 0.0, %v3192
  %v3194 = vpop.f32.mrb[0].mxu0
  %v3195 = vadd.f32 0.0, %v3194
  %3196 = vmatprep.mubr.f32.mxu0 0.0
  %3197 = vmatmul.mubr.f32.gmra.mrb[0].mxu0 %v261
  %v3198 = vpop.f32.mrb[0].mxu0
  %v3199 = vadd.f32 0.0, %v3198
  %v3200 = vpop.f32.mrb[0].mxu0
  %v3201 = vadd.f32 0.0, %v3200
  %3202 = vdwg.mxu0
  %3203 = vmatprep.subr.mxu0 0.0
  %3204 = vmatpush1.msra.mxu0 %v71
  %3205 = vmatprep.subr.mxu0 0.0
  %3206 = vmatpush1.msra.mxu0 %v96
  %3207 = vmatprep.subr.mxu0 0.0
  %3208 = vmatpush1.msra.mxu0 %v121
  %3209 = vmatprep.subr.mxu0 0.0
  %3210 = vmatpush1.msra.mxu0 %v146
  %3211 = vmatprep.subr.mxu0 0.0
  %3212 = vmatpush1.msra.mxu0 %v171
  %3213 = vmatprep.subr.mxu0 0.0
  %3214 = vmatpush1.msra.mxu0 0.0
  %3215 = vmatprep.subr.mxu0 0.0
  %3216 = vmatpush1.msra.mxu0 0.0
  %3217 = vmatprep.subr.mxu0 0.0
  %3218 = vmatpush1.msra.mxu0 0.0
  %3219 = vmatprep.subr.mxu0 0.0
  %3220 = vmatpush1.msra.mxu0 0.0
  %3221 = vmatprep.subr.mxu0 0.0
  %3222 = vmatpush1.msra.mxu0 0.0
  %3223 = vmatprep.subr.mxu0 0.0
  %3224 = vmatpush1.msra.mxu0 0.0
  %3225 = vmatprep.subr.mxu0 0.0
  %3226 = vmatpush1.msra.mxu0 0.0
  %3227 = vmatprep.subr.mxu0 0.0
  %3228 = vmatpush1.msra.mxu0 0.0
  %3229 = vmatprep.subr.mxu0 0.0
  %3230 = vmatpush1.msra.mxu0 0.0
  %3231 = vmatprep.subr.mxu0 0.0
  %3232 = vmatpush1.msra.mxu0 0.0
  %3233 = vmatprep.subr.mxu0 0.0
  %3234 = vmatpush1.msra.mxu0 0.0
  %3235 = vmatprep.subr.mxu0 0.0
  %3236 = vmatpush1.msra.mxu0 0.0
  %3237 = vmatprep.subr.mxu0 0.0
  %3238 = vmatpush1.msra.mxu0 0.0
  %3239 = vmatprep.subr.mxu0 0.0
  %3240 = vmatpush1.msra.mxu0 0.0
  %3241 = vmatprep.subr.mxu0 0.0
  %3242 = vmatpush1.msra.mxu0 0.0
  %3243 = vmatprep.subr.mxu0 0.0
  %3244 = vmatpush1.msra.mxu0 0.0
  %3245 = vmatprep.subr.mxu0 0.0
  %3246 = vmatpush1.msra.mxu0 0.0
  %3247 = vmatprep.subr.mxu0 0.0
  %3248 = vmatpush1.msra.mxu0 0.0
  %3249 = vmatprep.subr.mxu0 0.0
  %3250 = vmatpush1.msra.mxu0 0.0
  %3251 = vmatprep.subr.mxu0 0.0
  %3252 = vmatpush1.msra.mxu0 0.0
  %3253 = vmatprep.subr.mxu0 0.0
  %3254 = vmatpush1.msra.mxu0 0.0
  %3255 = vmatprep.subr.mxu0 0.0
  %3256 = vmatpush1.msra.mxu0 0.0
  %3257 = vmatprep.subr.mxu0 0.0
  %3258 = vmatpush1.msra.mxu0 0.0
  %3259 = vmatprep.subr.mxu0 0.0
  %3260 = vmatpush1.msra.mxu0 0.0
  %3261 = vmatprep.subr.mxu0 0.0
  %3262 = vmatpush1.msra.mxu0 0.0
  %3263 = vmatprep.subr.mxu0 0.0
  %3264 = vmatpush1.msra.mxu0 0.0
  %3265 = vmatprep.subr.mxu0 0.0
  %3266 = vmatpush1.msra.mxu0 0.0
  %3267 = vmatprep.mubr.f32.mxu0 0.0
  %3268 = vmatmul.mubr.f32.gmra.mrb[0].mxu0 %v174
  %v3269 = vpop.f32.mrb[0].mxu0
  %v3270 = vadd.f32 0.0, %v3269
  %v3271 = vpop.f32.mrb[0].mxu0
  %3272 = vmatprep.mubr.f32.mxu0 0.0
  %3273 = vmatmul.mubr.f32.gmra.mrb[0].mxu0 %v177
  %v3274 = vpop.f32.mrb[0].mxu0
  %v3275 = vadd.f32 0.0, %v3274
  %v3276 = vpop.f32.mrb[0].mxu0
  %3277 = vmatprep.mubr.f32.mxu0 0.0
  %3278 = vmatmul.mubr.f32.gmra.mrb[0].mxu0 %v180
  %v3279 = vpop.f32.mrb[0].mxu0
  %v3280 = vadd.f32 0.0, %v3279
  %v3281 = vpop.f32.mrb[0].mxu0
  %3282 = vmatprep.mubr.f32.mxu0 0.0
  %3283 = vmatmul.mubr.f32.gmra.mrb[0].mxu0 %v183
  %v3284 = vpop.f32.mrb[0].mxu0
  %v3285 = vadd.f32 0.0, %v3284
  %v3286 = vpop.f32.mrb[0].mxu0
  %3287 = vmatprep.mubr.f32.mxu0 0.0
  %3288 = vmatmul.mubr.f32.gmra.mrb[0].mxu0 %v186
  %v3289 = vpop.f32.mrb[0].mxu0
  %v3290 = vadd.f32 0.0, %v3289
  %v3291 = vpop.f32.mrb[0].mxu0
  %3292 = vmatprep.mubr.f32.mxu0 0.0
  %3293 = vmatmul.mubr.f32.gmra.mrb[0].mxu0 %v189
  %v3294 = vpop.f32.mrb[0].mxu0
  %v3295 = vadd.f32 0.0, %v3294
  %v3296 = vpop.f32.mrb[0].mxu0
  %3297 = vmatprep.mubr.f32.mxu0 0.0
  %3298 = vmatmul.mubr.f32.gmra.mrb[0].mxu0 %v192
  %v3299 = vpop.f32.mrb[0].mxu0
  %v3300 = vadd.f32 0.0, %v3299
  %v3301 = vpop.f32.mrb[0].mxu0
  %3302 = vmatprep.mubr.f32.mxu0 0.0
  %3303 = vmatmul.mubr.f32.gmra.mrb[0].mxu0 %v195
  %v3304 = vpop.f32.mrb[0].mxu0
  %v3305 = vadd.f32 0.0, %v3304
  %v3306 = vpop.f32.mrb[0].mxu0
  %3307 = vmatprep.mubr.f32.mxu0 0.0
  %3308 = vmatmul.mubr.f32.gmra.mrb[0].mxu0 %v198
  %v3309 = vpop.f32.mrb[0].mxu0
  %v3310 = vadd.f32 0.0, %v3309
  %v3311 = vpop.f32.mrb[0].mxu0
  %3312 = vmatprep.mubr.f32.mxu0 0.0
  %3313 = vmatmul.mubr.f32.gmra.mrb[0].mxu0 %v201
  %v3314 = vpop.f32.mrb[0].mxu0
  %v3315 = vadd.f32 0.0, %v3314
  %v3316 = vpop.f32.mrb[0].mxu0
  %3317 = vmatprep.mubr.f32.mxu0 0.0
  %3318 = vmatmul.mubr.f32.gmra.mrb[0].mxu0 %v204
  %v3319 = vpop.f32.mrb[0].mxu0
  %v3320 = vadd.f32 0.0, %v3319
  %v3321 = vpop.f32.mrb[0].mxu0
  %3322 = vmatprep.mubr.f32.mxu0 0.0
  %3323 = vmatmul.mubr.f32.gmra.mrb[0].mxu0 %v207
  %v3324 = vpop.f32.mrb[0].mxu0
  %v3325 = vadd.f32 0.0, %v3324
  %v3326 = vpop.f32.mrb[0].mxu0
  %3327 = vmatprep.mubr.f32.mxu0 0.0
  %3328 = vmatmul.mubr.f32.gmra.mrb[0].mxu0 %v210
  %v3329 = vpop.f32.mrb[0].mxu0
  %v3330 = vadd.f32 0.0, %v3329
  %v3331 = vpop.f32.mrb[0].mxu0
  %3332 = vmatprep.mubr.f32.mxu0 0.0
  %3333 = vmatmul.mubr.f32.gmra.mrb[0].mxu0 %v213
  %v3334 = vpop.f32.mrb[0].mxu0
  %v3335 = vadd.f32 0.0, %v3334
  %v3336 = vpop.f32.mrb[0].mxu0
  %3337 = vmatprep.mubr.f32.mxu0 0.0
  %3338 = vmatmul.mubr.f32.gmra.mrb[0].mxu0 %v216
  %v3339 = vpop.f32.mrb[0].mxu0
  %v3340 = vadd.f32 0.0, %v3339
  %v3341 = vpop.f32.mrb[0].mxu0
  %3342 = vmatprep.mubr.f32.mxu0 0.0
  %3343 = vmatmul.mubr.f32.gmra.mrb[0].mxu0 %v219
  %v3344 = vpop.f32.mrb[0].mxu0
  %v3345 = vadd.f32 0.0, %v3344
  %v3346 = vpop.f32.mrb[0].mxu0
  %3347 = vmatprep.mubr.f32.mxu0 0.0
  %3348 = vmatmul.mubr.f32.gmra.mrb[0].mxu0 %v222
  %v3349 = vpop.f32.mrb[0].mxu0
  %v3350 = vadd.f32 0.0, %v3349
  %v3351 = vpop.f32.mrb[0].mxu0
  %3352 = vmatprep.mubr.f32.mxu0 0.0
  %3353 = vmatmul.mubr.f32.gmra.mrb[0].mxu0 %v225
  %v3354 = vpop.f32.mrb[0].mxu0
  %v3355 = vadd.f32 0.0, %v3354
  %v3356 = vpop.f32.mrb[0].mxu0
  %3357 = vmatprep.mubr.f32.mxu0 0.0
  %3358 = vmatmul.mubr.f32.gmra.mrb[0].mxu0 %v228
  %v3359 = vpop.f32.mrb[0].mxu0
  %v3360 = vadd.f32 0.0, %v3359
  %v3361 = vpop.f32.mrb[0].mxu0
  %3362 = vmatprep.mubr.f32.mxu0 0.0
  %3363 = vmatmul.mubr.f32.gmra.mrb[0].mxu0 %v231
  %v3364 = vpop.f32.mrb[0].mxu0
  %v3365 = vadd.f32 0.0, %v3364
  %v3366 = vpop.f32.mrb[0].mxu0
  %3367 = vmatprep.mubr.f32.mxu0 0.0
  %3368 = vmatmul.mubr.f32.gmra.mrb[0].mxu0 %v234
  %v3369 = vpop.f32.mrb[0].mxu0
  %v3370 = vadd.f32 0.0, %v3369
  %v3371 = vpop.f32.mrb[0].mxu0
  %3372 = vmatprep.mubr.f32.mxu0 0.0
  %3373 = vmatmul.mubr.f32.gmra.mrb[0].mxu0 %v237
  %v3374 = vpop.f32.mrb[0].mxu0
  %v3375 = vadd.f32 0.0, %v3374
  %v3376 = vpop.f32.mrb[0].mxu0
  %3377 = vmatprep.mubr.f32.mxu0 0.0
  %3378 = vmatmul.mubr.f32.gmra.mrb[0].mxu0 %v240
  %v3379 = vpop.f32.mrb[0].mxu0
  %v3380 = vadd.f32 0.0, %v3379
  %v3381 = vpop.f32.mrb[0].mxu0
  %3382 = vmatprep.mubr.f32.mxu0 0.0
  %3383 = vmatmul.mubr.f32.gmra.mrb[0].mxu0 %v243
  %v3384 = vpop.f32.mrb[0].mxu0
  %v3385 = vadd.f32 0.0, %v3384
  %v3386 = vpop.f32.mrb[0].mxu0
  %3387 = vmatprep.mubr.f32.mxu0 0.0
  %3388 = vmatmul.mubr.f32.gmra.mrb[0].mxu0 %v246
  %v3389 = vpop.f32.mrb[0].mxu0
  %v3390 = vadd.f32 0.0, %v3389
  %v3391 = vpop.f32.mrb[0].mxu0
  %3392 = vmatprep.mubr.f32.mxu0 0.0
  %3393 = vmatmul.mubr.f32.gmra.mrb[0].mxu0 %v249
  %v3394 = vpop.f32.mrb[0].mxu0
  %v3395 = vadd.f32 0.0, %v3394
  %v3396 = vpop.f32.mrb[0].mxu0
  %3397 = vmatprep.mubr.f32.mxu0 0.0
  %3398 = vmatmul.mubr.f32.gmra.mrb[0].mxu0 %v252
  %v3399 = vpop.f32.mrb[0].mxu0
  %v3400 = vadd.f32 0.0, %v3399
  %v3401 = vpop.f32.mrb[0].mxu0
  %3402 = vmatprep.mubr.f32.mxu0 0.0
  %3403 = vmatmul.mubr.f32.gmra.mrb[0].mxu0 %v255
  %v3404 = vpop.f32.mrb[0].mxu0
  %v3405 = vadd.f32 0.0, %v3404
  %v3406 = vpop.f32.mrb[0].mxu0
  %3407 = vmatprep.mubr.f32.mxu0 0.0
  %3408 = vmatmul.mubr.f32.gmra.mrb[0].mxu0 %v258
  %v3409 = vpop.f32.mrb[0].mxu0
  %v3410 = vadd.f32 0.0, %v3409
  %v3411 = vpop.f32.mrb[0].mxu0
  %3412 = vmatprep.mubr.f32.mxu0 0.0
  %3413 = vmatmul.mubr.f32.gmra.mrb[0].mxu0 %v261
  %v3414 = vpop.f32.mrb[0].mxu0
  %v3415 = vadd.f32 0.0, %v3414
  %v3416 = vpop.f32.mrb[0].mxu0
  %3417 = vdwg.mxu0
  %v3418 = vadd.f32 %v330, %v332
  %v3419 = vadd.f32 %v3418, %v575
  %v3420 = vadd.f32 %v3419, %v577
  %v3421 = vadd.f32 %v3420, %v820
  %v3422 = vadd.f32 %v3421, %v822
  %v3423 = vadd.f32 %v3422, %v1065
  %v3424 = vadd.f32 %v3423, %v1067
  %v3425 = vadd.f32 %v3424, %v1310
  %v3426 = vadd.f32 %v3425, %v1312
  %v3427 = vadd.f32 %v3426, %v1555
  %v3428 = vadd.f32 %v3427, %v1557
  %v3429 = vadd.f32 %v3428, %v1800
  %v3430 = vadd.f32 %v3429, %v1802
  %v3431 = vadd.f32 %v3430, %v2045
  %v3432 = vadd.f32 %v3431, %v2047
  %v3433 = vadd.f32 %v3432, %v2290
  %v3434 = vadd.f32 %v3433, %v2292
  %v3435 = vadd.f32 %v3434, %v2535
  %v3436 = vadd.f32 %v3435, %v2537
  %v3437 = vadd.f32 %v3436, %v2780
  %v3438 = vadd.f32 %v3437, %v2782
  %v3439 = vadd.f32 %v3438, %v3025
  %v3440 = vadd.f32 %v3439, %v3027
  %v3441 = vadd.f32 %v3440, %v3270
  %3442 = vadd.xlane.f32.xlu0 %v3441
  %v3443 = vpop.xlane.xlu0 %3442
  %v3444 = vadd.f32 %v336, %v338
  %v3445 = vadd.f32 %v3444, %v581
  %v3446 = vadd.f32 %v3445, %v583
  %v3447 = vadd.f32 %v3446, %v826
  %v3448 = vadd.f32 %v3447, %v828
  %v3449 = vadd.f32 %v3448, %v1071
  %v3450 = vadd.f32 %v3449, %v1073
  %v3451 = vadd.f32 %v3450, %v1316
  %v3452 = vadd.f32 %v3451, %v1318
  %v3453 = vadd.f32 %v3452, %v1561
  %v3454 = vadd.f32 %v3453, %v1563
  %v3455 = vadd.f32 %v3454, %v1806
  %v3456 = vadd.f32 %v3455, %v1808
  %v3457 = vadd.f32 %v3456, %v2051
  %v3458 = vadd.f32 %v3457, %v2053
  %v3459 = vadd.f32 %v3458, %v2296
  %v3460 = vadd.f32 %v3459, %v2298
  %v3461 = vadd.f32 %v3460, %v2541
  %v3462 = vadd.f32 %v3461, %v2543
  %v3463 = vadd.f32 %v3462, %v2786
  %v3464 = vadd.f32 %v3463, %v2788
  %v3465 = vadd.f32 %v3464, %v3031
  %v3466 = vadd.f32 %v3465, %v3033
  %v3467 = vadd.f32 %v3466, %v3275
  %3468 = vadd.xlane.f32.xlu0 %v3467
  %v3469 = vpop.xlane.xlu0 %3468
  %v3470 = vadd.f32 %v342, %v344
  %v3471 = vadd.f32 %v3470, %v587
  %v3472 = vadd.f32 %v3471, %v589
  %v3473 = vadd.f32 %v3472, %v832
  %v3474 = vadd.f32 %v3473, %v834
  %v3475 = vadd.f32 %v3474, %v1077
  %v3476 = vadd.f32 %v3475, %v1079
  %v3477 = vadd.f32 %v3476, %v1322
  %v3478 = vadd.f32 %v3477, %v1324
  %v3479 = vadd.f32 %v3478, %v1567
  %v3480 = vadd.f32 %v3479, %v1569
  %v3481 = vadd.f32 %v3480, %v1812
  %v3482 = vadd.f32 %v3481, %v1814
  %v3483 = vadd.f32 %v3482, %v2057
  %v3484 = vadd.f32 %v3483, %v2059
  %v3485 = vadd.f32 %v3484, %v2302
  %v3486 = vadd.f32 %v3485, %v2304
  %v3487 = vadd.f32 %v3486, %v2547
  %v3488 = vadd.f32 %v3487, %v2549
  %v3489 = vadd.f32 %v3488, %v2792
  %v3490 = vadd.f32 %v3489, %v2794
  %v3491 = vadd.f32 %v3490, %v3037
  %v3492 = vadd.f32 %v3491, %v3039
  %v3493 = vadd.f32 %v3492, %v3280
  %3494 = vadd.xlane.f32.xlu0 %v3493
  %v3495 = vpop.xlane.xlu0 %3494
  %v3496 = vadd.f32 %v348, %v350
  %v3497 = vadd.f32 %v3496, %v593
  %v3498 = vadd.f32 %v3497, %v595
  %v3499 = vadd.f32 %v3498, %v838
  %v3500 = vadd.f32 %v3499, %v840
  %v3501 = vadd.f32 %v3500, %v1083
  %v3502 = vadd.f32 %v3501, %v1085
  %v3503 = vadd.f32 %v3502, %v1328
  %v3504 = vadd.f32 %v3503, %v1330
  %v3505 = vadd.f32 %v3504, %v1573
  %v3506 = vadd.f32 %v3505, %v1575
  %v3507 = vadd.f32 %v3506, %v1818
  %v3508 = vadd.f32 %v3507, %v1820
  %v3509 = vadd.f32 %v3508, %v2063
  %v3510 = vadd.f32 %v3509, %v2065
  %v3511 = vadd.f32 %v3510, %v2308
  %v3512 = vadd.f32 %v3511, %v2310
  %v3513 = vadd.f32 %v3512, %v2553
  %v3514 = vadd.f32 %v3513, %v2555
  %v3515 = vadd.f32 %v3514, %v2798
  %v3516 = vadd.f32 %v3515, %v2800
  %v3517 = vadd.f32 %v3516, %v3043
  %v3518 = vadd.f32 %v3517, %v3045
  %v3519 = vadd.f32 %v3518, %v3285
  %3520 = vadd.xlane.f32.xlu0 %v3519
  %v3521 = vpop.xlane.xlu0 %3520
  %v3522 = vadd.f32 %v354, %v356
  %v3523 = vadd.f32 %v3522, %v599
  %v3524 = vadd.f32 %v3523, %v601
  %v3525 = vadd.f32 %v3524, %v844
  %v3526 = vadd.f32 %v3525, %v846
  %v3527 = vadd.f32 %v3526, %v1089
  %v3528 = vadd.f32 %v3527, %v1091
  %v3529 = vadd.f32 %v3528, %v1334
  %v3530 = vadd.f32 %v3529, %v1336
  %v3531 = vadd.f32 %v3530, %v1579
  %v3532 = vadd.f32 %v3531, %v1581
  %v3533 = vadd.f32 %v3532, %v1824
  %v3534 = vadd.f32 %v3533, %v1826
  %v3535 = vadd.f32 %v3534, %v2069
  %v3536 = vadd.f32 %v3535, %v2071
  %v3537 = vadd.f32 %v3536, %v2314
  %v3538 = vadd.f32 %v3537, %v2316
  %v3539 = vadd.f32 %v3538, %v2559
  %v3540 = vadd.f32 %v3539, %v2561
  %v3541 = vadd.f32 %v3540, %v2804
  %v3542 = vadd.f32 %v3541, %v2806
  %v3543 = vadd.f32 %v3542, %v3049
  %v3544 = vadd.f32 %v3543, %v3051
  %v3545 = vadd.f32 %v3544, %v3290
  %3546 = vadd.xlane.f32.xlu0 %v3545
  %v3547 = vpop.xlane.xlu0 %3546
  %v3548 = vadd.f32 %v360, %v362
  %v3549 = vadd.f32 %v3548, %v605
  %v3550 = vadd.f32 %v3549, %v607
  %v3551 = vadd.f32 %v3550, %v850
  %v3552 = vadd.f32 %v3551, %v852
  %v3553 = vadd.f32 %v3552, %v1095
  %v3554 = vadd.f32 %v3553, %v1097
  %v3555 = vadd.f32 %v3554, %v1340
  %v3556 = vadd.f32 %v3555, %v1342
  %v3557 = vadd.f32 %v3556, %v1585
  %v3558 = vadd.f32 %v3557, %v1587
  %v3559 = vadd.f32 %v3558, %v1830
  %v3560 = vadd.f32 %v3559, %v1832
  %v3561 = vadd.f32 %v3560, %v2075
  %v3562 = vadd.f32 %v3561, %v2077
  %v3563 = vadd.f32 %v3562, %v2320
  %v3564 = vadd.f32 %v3563, %v2322
  %v3565 = vadd.f32 %v3564, %v2565
  %v3566 = vadd.f32 %v3565, %v2567
  %v3567 = vadd.f32 %v3566, %v2810
  %v3568 = vadd.f32 %v3567, %v2812
  %v3569 = vadd.f32 %v3568, %v3055
  %v3570 = vadd.f32 %v3569, %v3057
  %v3571 = vadd.f32 %v3570, %v3295
  %3572 = vadd.xlane.f32.xlu0 %v3571
  %v3573 = vpop.xlane.xlu0 %3572
  %v3574 = vadd.f32 %v366, %v368
  %v3575 = vadd.f32 %v3574, %v611
  %v3576 = vadd.f32 %v3575, %v613
  %v3577 = vadd.f32 %v3576, %v856
  %v3578 = vadd.f32 %v3577, %v858
  %v3579 = vadd.f32 %v3578, %v1101
  %v3580 = vadd.f32 %v3579, %v1103
  %v3581 = vadd.f32 %v3580, %v1346
  %v3582 = vadd.f32 %v3581, %v1348
  %v3583 = vadd.f32 %v3582, %v1591
  %v3584 = vadd.f32 %v3583, %v1593
  %v3585 = vadd.f32 %v3584, %v1836
  %v3586 = vadd.f32 %v3585, %v1838
  %v3587 = vadd.f32 %v3586, %v2081
  %v3588 = vadd.f32 %v3587, %v2083
  %v3589 = vadd.f32 %v3588, %v2326
  %v3590 = vadd.f32 %v3589, %v2328
  %v3591 = vadd.f32 %v3590, %v2571
  %v3592 = vadd.f32 %v3591, %v2573
  %v3593 = vadd.f32 %v3592, %v2816
  %v3594 = vadd.f32 %v3593, %v2818
  %v3595 = vadd.f32 %v3594, %v3061
  %v3596 = vadd.f32 %v3595, %v3063
  %v3597 = vadd.f32 %v3596, %v3300
  %3598 = vadd.xlane.f32.xlu0 %v3597
  %v3599 = vpop.xlane.xlu0 %3598
  %v3600 = vadd.f32 %v372, %v374
  %v3601 = vadd.f32 %v3600, %v617
  %v3602 = vadd.f32 %v3601, %v619
  %v3603 = vadd.f32 %v3602, %v862
  %v3604 = vadd.f32 %v3603, %v864
  %v3605 = vadd.f32 %v3604, %v1107
  %v3606 = vadd.f32 %v3605, %v1109
  %v3607 = vadd.f32 %v3606, %v1352
  %v3608 = vadd.f32 %v3607, %v1354
  %v3609 = vadd.f32 %v3608, %v1597
  %v3610 = vadd.f32 %v3609, %v1599
  %v3611 = vadd.f32 %v3610, %v1842
  %v3612 = vadd.f32 %v3611, %v1844
  %v3613 = vadd.f32 %v3612, %v2087
  %v3614 = vadd.f32 %v3613, %v2089
  %v3615 = vadd.f32 %v3614, %v2332
  %v3616 = vadd.f32 %v3615, %v2334
  %v3617 = vadd.f32 %v3616, %v2577
  %v3618 = vadd.f32 %v3617, %v2579
  %v3619 = vadd.f32 %v3618, %v2822
  %v3620 = vadd.f32 %v3619, %v2824
  %v3621 = vadd.f32 %v3620, %v3067
  %v3622 = vadd.f32 %v3621, %v3069
  %v3623 = vadd.f32 %v3622, %v3305
  %3624 = vadd.xlane.f32.xlu0 %v3623
  %v3625 = vpop.xlane.xlu0 %3624
  %v3626 = vadd.f32 %v378, %v380
  %v3627 = vadd.f32 %v3626, %v623
  %v3628 = vadd.f32 %v3627, %v625
  %v3629 = vadd.f32 %v3628, %v868
  %v3630 = vadd.f32 %v3629, %v870
  %v3631 = vadd.f32 %v3630, %v1113
  %v3632 = vadd.f32 %v3631, %v1115
  %v3633 = vadd.f32 %v3632, %v1358
  %v3634 = vadd.f32 %v3633, %v1360
  %v3635 = vadd.f32 %v3634, %v1603
  %v3636 = vadd.f32 %v3635, %v1605
  %v3637 = vadd.f32 %v3636, %v1848
  %v3638 = vadd.f32 %v3637, %v1850
  %v3639 = vadd.f32 %v3638, %v2093
  %v3640 = vadd.f32 %v3639, %v2095
  %v3641 = vadd.f32 %v3640, %v2338
  %v3642 = vadd.f32 %v3641, %v2340
  %v3643 = vadd.f32 %v3642, %v2583
  %v3644 = vadd.f32 %v3643, %v2585
  %v3645 = vadd.f32 %v3644, %v2828
  %v3646 = vadd.f32 %v3645, %v2830
  %v3647 = vadd.f32 %v3646, %v3073
  %v3648 = vadd.f32 %v3647, %v3075
  %v3649 = vadd.f32 %v3648, %v3310
  %3650 = vadd.xlane.f32.xlu0 %v3649
  %v3651 = vpop.xlane.xlu0 %3650
  %v3652 = vadd.f32 %v384, %v386
  %v3653 = vadd.f32 %v3652, %v629
  %v3654 = vadd.f32 %v3653, %v631
  %v3655 = vadd.f32 %v3654, %v874
  %v3656 = vadd.f32 %v3655, %v876
  %v3657 = vadd.f32 %v3656, %v1119
  %v3658 = vadd.f32 %v3657, %v1121
  %v3659 = vadd.f32 %v3658, %v1364
  %v3660 = vadd.f32 %v3659, %v1366
  %v3661 = vadd.f32 %v3660, %v1609
  %v3662 = vadd.f32 %v3661, %v1611
  %v3663 = vadd.f32 %v3662, %v1854
  %v3664 = vadd.f32 %v3663, %v1856
  %v3665 = vadd.f32 %v3664, %v2099
  %v3666 = vadd.f32 %v3665, %v2101
  %v3667 = vadd.f32 %v3666, %v2344
  %v3668 = vadd.f32 %v3667, %v2346
  %v3669 = vadd.f32 %v3668, %v2589
  %v3670 = vadd.f32 %v3669, %v2591
  %v3671 = vadd.f32 %v3670, %v2834
  %v3672 = vadd.f32 %v3671, %v2836
  %v3673 = vadd.f32 %v3672, %v3079
  %v3674 = vadd.f32 %v3673, %v3081
  %v3675 = vadd.f32 %v3674, %v3315
  %3676 = vadd.xlane.f32.xlu0 %v3675
  %v3677 = vpop.xlane.xlu0 %3676
  %v3678 = vadd.f32 %v390, %v392
  %v3679 = vadd.f32 %v3678, %v635
  %v3680 = vadd.f32 %v3679, %v637
  %v3681 = vadd.f32 %v3680, %v880
  %v3682 = vadd.f32 %v3681, %v882
  %v3683 = vadd.f32 %v3682, %v1125
  %v3684 = vadd.f32 %v3683, %v1127
  %v3685 = vadd.f32 %v3684, %v1370
  %v3686 = vadd.f32 %v3685, %v1372
  %v3687 = vadd.f32 %v3686, %v1615
  %v3688 = vadd.f32 %v3687, %v1617
  %v3689 = vadd.f32 %v3688, %v1860
  %v3690 = vadd.f32 %v3689, %v1862
  %v3691 = vadd.f32 %v3690, %v2105
  %v3692 = vadd.f32 %v3691, %v2107
  %v3693 = vadd.f32 %v3692, %v2350
  %v3694 = vadd.f32 %v3693, %v2352
  %v3695 = vadd.f32 %v3694, %v2595
  %v3696 = vadd.f32 %v3695, %v2597
  %v3697 = vadd.f32 %v3696, %v2840
  %v3698 = vadd.f32 %v3697, %v2842
  %v3699 = vadd.f32 %v3698, %v3085
  %v3700 = vadd.f32 %v3699, %v3087
  %v3701 = vadd.f32 %v3700, %v3320
  %3702 = vadd.xlane.f32.xlu0 %v3701
  %v3703 = vpop.xlane.xlu0 %3702
  %v3704 = vadd.f32 %v396, %v398
  %v3705 = vadd.f32 %v3704, %v641
  %v3706 = vadd.f32 %v3705, %v643
  %v3707 = vadd.f32 %v3706, %v886
  %v3708 = vadd.f32 %v3707, %v888
  %v3709 = vadd.f32 %v3708, %v1131
  %v3710 = vadd.f32 %v3709, %v1133
  %v3711 = vadd.f32 %v3710, %v1376
  %v3712 = vadd.f32 %v3711, %v1378
  %v3713 = vadd.f32 %v3712, %v1621
  %v3714 = vadd.f32 %v3713, %v1623
  %v3715 = vadd.f32 %v3714, %v1866
  %v3716 = vadd.f32 %v3715, %v1868
  %v3717 = vadd.f32 %v3716, %v2111
  %v3718 = vadd.f32 %v3717, %v2113
  %v3719 = vadd.f32 %v3718, %v2356
  %v3720 = vadd.f32 %v3719, %v2358
  %v3721 = vadd.f32 %v3720, %v2601
  %v3722 = vadd.f32 %v3721, %v2603
  %v3723 = vadd.f32 %v3722, %v2846
  %v3724 = vadd.f32 %v3723, %v2848
  %v3725 = vadd.f32 %v3724, %v3091
  %v3726 = vadd.f32 %v3725, %v3093
  %v3727 = vadd.f32 %v3726, %v3325
  %3728 = vadd.xlane.f32.xlu0 %v3727
  %v3729 = vpop.xlane.xlu0 %3728
  %v3730 = vadd.f32 %v402, %v404
  %v3731 = vadd.f32 %v3730, %v647
  %v3732 = vadd.f32 %v3731, %v649
  %v3733 = vadd.f32 %v3732, %v892
  %v3734 = vadd.f32 %v3733, %v894
  %v3735 = vadd.f32 %v3734, %v1137
  %v3736 = vadd.f32 %v3735, %v1139
  %v3737 = vadd.f32 %v3736, %v1382
  %v3738 = vadd.f32 %v3737, %v1384
  %v3739 = vadd.f32 %v3738, %v1627
  %v3740 = vadd.f32 %v3739, %v1629
  %v3741 = vadd.f32 %v3740, %v1872
  %v3742 = vadd.f32 %v3741, %v1874
  %v3743 = vadd.f32 %v3742, %v2117
  %v3744 = vadd.f32 %v3743, %v2119
  %v3745 = vadd.f32 %v3744, %v2362
  %v3746 = vadd.f32 %v3745, %v2364
  %v3747 = vadd.f32 %v3746, %v2607
  %v3748 = vadd.f32 %v3747, %v2609
  %v3749 = vadd.f32 %v3748, %v2852
  %v3750 = vadd.f32 %v3749, %v2854
  %v3751 = vadd.f32 %v3750, %v3097
  %v3752 = vadd.f32 %v3751, %v3099
  %v3753 = vadd.f32 %v3752, %v3330
  %3754 = vadd.xlane.f32.xlu0 %v3753
  %v3755 = vpop.xlane.xlu0 %3754
  %v3756 = vadd.f32 %v408, %v410
  %v3757 = vadd.f32 %v3756, %v653
  %v3758 = vadd.f32 %v3757, %v655
  %v3759 = vadd.f32 %v3758, %v898
  %v3760 = vadd.f32 %v3759, %v900
  %v3761 = vadd.f32 %v3760, %v1143
  %v3762 = vadd.f32 %v3761, %v1145
  %v3763 = vadd.f32 %v3762, %v1388
  %v3764 = vadd.f32 %v3763, %v1390
  %v3765 = vadd.f32 %v3764, %v1633
  %v3766 = vadd.f32 %v3765, %v1635
  %v3767 = vadd.f32 %v3766, %v1878
  %v3768 = vadd.f32 %v3767, %v1880
  %v3769 = vadd.f32 %v3768, %v2123
  %v3770 = vadd.f32 %v3769, %v2125
  %v3771 = vadd.f32 %v3770, %v2368
  %v3772 = vadd.f32 %v3771, %v2370
  %v3773 = vadd.f32 %v3772, %v2613
  %v3774 = vadd.f32 %v3773, %v2615
  %v3775 = vadd.f32 %v3774, %v2858
  %v3776 = vadd.f32 %v3775, %v2860
  %v3777 = vadd.f32 %v3776, %v3103
  %v3778 = vadd.f32 %v3777, %v3105
  %v3779 = vadd.f32 %v3778, %v3335
  %3780 = vadd.xlane.f32.xlu0 %v3779
  %v3781 = vpop.xlane.xlu0 %3780
  %v3782 = vadd.f32 %v414, %v416
  %v3783 = vadd.f32 %v3782, %v659
  %v3784 = vadd.f32 %v3783, %v661
  %v3785 = vadd.f32 %v3784, %v904
  %v3786 = vadd.f32 %v3785, %v906
  %v3787 = vadd.f32 %v3786, %v1149
  %v3788 = vadd.f32 %v3787, %v1151
  %v3789 = vadd.f32 %v3788, %v1394
  %v3790 = vadd.f32 %v3789, %v1396
  %v3791 = vadd.f32 %v3790, %v1639
  %v3792 = vadd.f32 %v3791, %v1641
  %v3793 = vadd.f32 %v3792, %v1884
  %v3794 = vadd.f32 %v3793, %v1886
  %v3795 = vadd.f32 %v3794, %v2129
  %v3796 = vadd.f32 %v3795, %v2131
  %v3797 = vadd.f32 %v3796, %v2374
  %v3798 = vadd.f32 %v3797, %v2376
  %v3799 = vadd.f32 %v3798, %v2619
  %v3800 = vadd.f32 %v3799, %v2621
  %v3801 = vadd.f32 %v3800, %v2864
  %v3802 = vadd.f32 %v3801, %v2866
  %v3803 = vadd.f32 %v3802, %v3109
  %v3804 = vadd.f32 %v3803, %v3111
  %v3805 = vadd.f32 %v3804, %v3340
  %3806 = vadd.xlane.f32.xlu0 %v3805
  %v3807 = vpop.xlane.xlu0 %3806
  %v3808 = vadd.f32 %v420, %v422
  %v3809 = vadd.f32 %v3808, %v665
  %v3810 = vadd.f32 %v3809, %v667
  %v3811 = vadd.f32 %v3810, %v910
  %v3812 = vadd.f32 %v3811, %v912
  %v3813 = vadd.f32 %v3812, %v1155
  %v3814 = vadd.f32 %v3813, %v1157
  %v3815 = vadd.f32 %v3814, %v1400
  %v3816 = vadd.f32 %v3815, %v1402
  %v3817 = vadd.f32 %v3816, %v1645
  %v3818 = vadd.f32 %v3817, %v1647
  %v3819 = vadd.f32 %v3818, %v1890
  %v3820 = vadd.f32 %v3819, %v1892
  %v3821 = vadd.f32 %v3820, %v2135
  %v3822 = vadd.f32 %v3821, %v2137
  %v3823 = vadd.f32 %v3822, %v2380
  %v3824 = vadd.f32 %v3823, %v2382
  %v3825 = vadd.f32 %v3824, %v2625
  %v3826 = vadd.f32 %v3825, %v2627
  %v3827 = vadd.f32 %v3826, %v2870
  %v3828 = vadd.f32 %v3827, %v2872
  %v3829 = vadd.f32 %v3828, %v3115
  %v3830 = vadd.f32 %v3829, %v3117
  %v3831 = vadd.f32 %v3830, %v3345
  %3832 = vadd.xlane.f32.xlu0 %v3831
  %v3833 = vpop.xlane.xlu0 %3832
  %v3834 = vadd.f32 %v426, %v428
  %v3835 = vadd.f32 %v3834, %v671
  %v3836 = vadd.f32 %v3835, %v673
  %v3837 = vadd.f32 %v3836, %v916
  %v3838 = vadd.f32 %v3837, %v918
  %v3839 = vadd.f32 %v3838, %v1161
  %v3840 = vadd.f32 %v3839, %v1163
  %v3841 = vadd.f32 %v3840, %v1406
  %v3842 = vadd.f32 %v3841, %v1408
  %v3843 = vadd.f32 %v3842, %v1651
  %v3844 = vadd.f32 %v3843, %v1653
  %v3845 = vadd.f32 %v3844, %v1896
  %v3846 = vadd.f32 %v3845, %v1898
  %v3847 = vadd.f32 %v3846, %v2141
  %v3848 = vadd.f32 %v3847, %v2143
  %v3849 = vadd.f32 %v3848, %v2386
  %v3850 = vadd.f32 %v3849, %v2388
  %v3851 = vadd.f32 %v3850, %v2631
  %v3852 = vadd.f32 %v3851, %v2633
  %v3853 = vadd.f32 %v3852, %v2876
  %v3854 = vadd.f32 %v3853, %v2878
  %v3855 = vadd.f32 %v3854, %v3121
  %v3856 = vadd.f32 %v3855, %v3123
  %v3857 = vadd.f32 %v3856, %v3350
  %3858 = vadd.xlane.f32.xlu0 %v3857
  %v3859 = vpop.xlane.xlu0 %3858
  %v3860 = vadd.f32 %v432, %v434
  %v3861 = vadd.f32 %v3860, %v677
  %v3862 = vadd.f32 %v3861, %v679
  %v3863 = vadd.f32 %v3862, %v922
  %v3864 = vadd.f32 %v3863, %v924
  %v3865 = vadd.f32 %v3864, %v1167
  %v3866 = vadd.f32 %v3865, %v1169
  %v3867 = vadd.f32 %v3866, %v1412
  %v3868 = vadd.f32 %v3867, %v1414
  %v3869 = vadd.f32 %v3868, %v1657
  %v3870 = vadd.f32 %v3869, %v1659
  %v3871 = vadd.f32 %v3870, %v1902
  %v3872 = vadd.f32 %v3871, %v1904
  %v3873 = vadd.f32 %v3872, %v2147
  %v3874 = vadd.f32 %v3873, %v2149
  %v3875 = vadd.f32 %v3874, %v2392
  %v3876 = vadd.f32 %v3875, %v2394
  %v3877 = vadd.f32 %v3876, %v2637
  %v3878 = vadd.f32 %v3877, %v2639
  %v3879 = vadd.f32 %v3878, %v2882
  %v3880 = vadd.f32 %v3879, %v2884
  %v3881 = vadd.f32 %v3880, %v3127
  %v3882 = vadd.f32 %v3881, %v3129
  %v3883 = vadd.f32 %v3882, %v3355
  %3884 = vadd.xlane.f32.xlu0 %v3883
  %v3885 = vpop.xlane.xlu0 %3884
  %v3886 = vadd.f32 %v438, %v440
  %v3887 = vadd.f32 %v3886, %v683
  %v3888 = vadd.f32 %v3887, %v685
  %v3889 = vadd.f32 %v3888, %v928
  %v3890 = vadd.f32 %v3889, %v930
  %v3891 = vadd.f32 %v3890, %v1173
  %v3892 = vadd.f32 %v3891, %v1175
  %v3893 = vadd.f32 %v3892, %v1418
  %v3894 = vadd.f32 %v3893, %v1420
  %v3895 = vadd.f32 %v3894, %v1663
  %v3896 = vadd.f32 %v3895, %v1665
  %v3897 = vadd.f32 %v3896, %v1908
  %v3898 = vadd.f32 %v3897, %v1910
  %v3899 = vadd.f32 %v3898, %v2153
  %v3900 = vadd.f32 %v3899, %v2155
  %v3901 = vadd.f32 %v3900, %v2398
  %v3902 = vadd.f32 %v3901, %v2400
  %v3903 = vadd.f32 %v3902, %v2643
  %v3904 = vadd.f32 %v3903, %v2645
  %v3905 = vadd.f32 %v3904, %v2888
  %v3906 = vadd.f32 %v3905, %v2890
  %v3907 = vadd.f32 %v3906, %v3133
  %v3908 = vadd.f32 %v3907, %v3135
  %v3909 = vadd.f32 %v3908, %v3360
  %3910 = vadd.xlane.f32.xlu0 %v3909
  %v3911 = vpop.xlane.xlu0 %3910
  %v3912 = vadd.f32 %v444, %v446
  %v3913 = vadd.f32 %v3912, %v689
  %v3914 = vadd.f32 %v3913, %v691
  %v3915 = vadd.f32 %v3914, %v934
  %v3916 = vadd.f32 %v3915, %v936
  %v3917 = vadd.f32 %v3916, %v1179
  %v3918 = vadd.f32 %v3917, %v1181
  %v3919 = vadd.f32 %v3918, %v1424
  %v3920 = vadd.f32 %v3919, %v1426
  %v3921 = vadd.f32 %v3920, %v1669
  %v3922 = vadd.f32 %v3921, %v1671
  %v3923 = vadd.f32 %v3922, %v1914
  %v3924 = vadd.f32 %v3923, %v1916
  %v3925 = vadd.f32 %v3924, %v2159
  %v3926 = vadd.f32 %v3925, %v2161
  %v3927 = vadd.f32 %v3926, %v2404
  %v3928 = vadd.f32 %v3927, %v2406
  %v3929 = vadd.f32 %v3928, %v2649
  %v3930 = vadd.f32 %v3929, %v2651
  %v3931 = vadd.f32 %v3930, %v2894
  %v3932 = vadd.f32 %v3931, %v2896
  %v3933 = vadd.f32 %v3932, %v3139
  %v3934 = vadd.f32 %v3933, %v3141
  %v3935 = vadd.f32 %v3934, %v3365
  %3936 = vadd.xlane.f32.xlu0 %v3935
  %v3937 = vpop.xlane.xlu0 %3936
  %v3938 = vadd.f32 %v450, %v452
  %v3939 = vadd.f32 %v3938, %v695
  %v3940 = vadd.f32 %v3939, %v697
  %v3941 = vadd.f32 %v3940, %v940
  %v3942 = vadd.f32 %v3941, %v942
  %v3943 = vadd.f32 %v3942, %v1185
  %v3944 = vadd.f32 %v3943, %v1187
  %v3945 = vadd.f32 %v3944, %v1430
  %v3946 = vadd.f32 %v3945, %v1432
  %v3947 = vadd.f32 %v3946, %v1675
  %v3948 = vadd.f32 %v3947, %v1677
  %v3949 = vadd.f32 %v3948, %v1920
  %v3950 = vadd.f32 %v3949, %v1922
  %v3951 = vadd.f32 %v3950, %v2165
  %v3952 = vadd.f32 %v3951, %v2167
  %v3953 = vadd.f32 %v3952, %v2410
  %v3954 = vadd.f32 %v3953, %v2412
  %v3955 = vadd.f32 %v3954, %v2655
  %v3956 = vadd.f32 %v3955, %v2657
  %v3957 = vadd.f32 %v3956, %v2900
  %v3958 = vadd.f32 %v3957, %v2902
  %v3959 = vadd.f32 %v3958, %v3145
  %v3960 = vadd.f32 %v3959, %v3147
  %v3961 = vadd.f32 %v3960, %v3370
  %3962 = vadd.xlane.f32.xlu0 %v3961
  %v3963 = vpop.xlane.xlu0 %3962
  %v3964 = vadd.f32 %v456, %v458
  %v3965 = vadd.f32 %v3964, %v701
  %v3966 = vadd.f32 %v3965, %v703
  %v3967 = vadd.f32 %v3966, %v946
  %v3968 = vadd.f32 %v3967, %v948
  %v3969 = vadd.f32 %v3968, %v1191
  %v3970 = vadd.f32 %v3969, %v1193
  %v3971 = vadd.f32 %v3970, %v1436
  %v3972 = vadd.f32 %v3971, %v1438
  %v3973 = vadd.f32 %v3972, %v1681
  %v3974 = vadd.f32 %v3973, %v1683
  %v3975 = vadd.f32 %v3974, %v1926
  %v3976 = vadd.f32 %v3975, %v1928
  %v3977 = vadd.f32 %v3976, %v2171
  %v3978 = vadd.f32 %v3977, %v2173
  %v3979 = vadd.f32 %v3978, %v2416
  %v3980 = vadd.f32 %v3979, %v2418
  %v3981 = vadd.f32 %v3980, %v2661
  %v3982 = vadd.f32 %v3981, %v2663
  %v3983 = vadd.f32 %v3982, %v2906
  %v3984 = vadd.f32 %v3983, %v2908
  %v3985 = vadd.f32 %v3984, %v3151
  %v3986 = vadd.f32 %v3985, %v3153
  %v3987 = vadd.f32 %v3986, %v3375
  %3988 = vadd.xlane.f32.xlu0 %v3987
  %v3989 = vpop.xlane.xlu0 %3988
  %v3990 = vadd.f32 %v462, %v464
  %v3991 = vadd.f32 %v3990, %v707
  %v3992 = vadd.f32 %v3991, %v709
  %v3993 = vadd.f32 %v3992, %v952
  %v3994 = vadd.f32 %v3993, %v954
  %v3995 = vadd.f32 %v3994, %v1197
  %v3996 = vadd.f32 %v3995, %v1199
  %v3997 = vadd.f32 %v3996, %v1442
  %v3998 = vadd.f32 %v3997, %v1444
  %v3999 = vadd.f32 %v3998, %v1687
  %v4000 = vadd.f32 %v3999, %v1689
  %v4001 = vadd.f32 %v4000, %v1932
  %v4002 = vadd.f32 %v4001, %v1934
  %v4003 = vadd.f32 %v4002, %v2177
  %v4004 = vadd.f32 %v4003, %v2179
  %v4005 = vadd.f32 %v4004, %v2422
  %v4006 = vadd.f32 %v4005, %v2424
  %v4007 = vadd.f32 %v4006, %v2667
  %v4008 = vadd.f32 %v4007, %v2669
  %v4009 = vadd.f32 %v4008, %v2912
  %v4010 = vadd.f32 %v4009, %v2914
  %v4011 = vadd.f32 %v4010, %v3157
  %v4012 = vadd.f32 %v4011, %v3159
  %v4013 = vadd.f32 %v4012, %v3380
  %4014 = vadd.xlane.f32.xlu0 %v4013
  %v4015 = vpop.xlane.xlu0 %4014
  %v4016 = vadd.f32 %v468, %v470
  %v4017 = vadd.f32 %v4016, %v713
  %v4018 = vadd.f32 %v4017, %v715
  %v4019 = vadd.f32 %v4018, %v958
  %v4020 = vadd.f32 %v4019, %v960
  %v4021 = vadd.f32 %v4020, %v1203
  %v4022 = vadd.f32 %v4021, %v1205
  %v4023 = vadd.f32 %v4022, %v1448
  %v4024 = vadd.f32 %v4023, %v1450
  %v4025 = vadd.f32 %v4024, %v1693
  %v4026 = vadd.f32 %v4025, %v1695
  %v4027 = vadd.f32 %v4026, %v1938
  %v4028 = vadd.f32 %v4027, %v1940
  %v4029 = vadd.f32 %v4028, %v2183
  %v4030 = vadd.f32 %v4029, %v2185
  %v4031 = vadd.f32 %v4030, %v2428
  %v4032 = vadd.f32 %v4031, %v2430
  %v4033 = vadd.f32 %v4032, %v2673
  %v4034 = vadd.f32 %v4033, %v2675
  %v4035 = vadd.f32 %v4034, %v2918
  %v4036 = vadd.f32 %v4035, %v2920
  %v4037 = vadd.f32 %v4036, %v3163
  %v4038 = vadd.f32 %v4037, %v3165
  %v4039 = vadd.f32 %v4038, %v3385
  %4040 = vadd.xlane.f32.xlu0 %v4039
  %v4041 = vpop.xlane.xlu0 %4040
  %v4042 = vadd.f32 %v474, %v476
  %v4043 = vadd.f32 %v4042, %v719
  %v4044 = vadd.f32 %v4043, %v721
  %v4045 = vadd.f32 %v4044, %v964
  %v4046 = vadd.f32 %v4045, %v966
  %v4047 = vadd.f32 %v4046, %v1209
  %v4048 = vadd.f32 %v4047, %v1211
  %v4049 = vadd.f32 %v4048, %v1454
  %v4050 = vadd.f32 %v4049, %v1456
  %v4051 = vadd.f32 %v4050, %v1699
  %v4052 = vadd.f32 %v4051, %v1701
  %v4053 = vadd.f32 %v4052, %v1944
  %v4054 = vadd.f32 %v4053, %v1946
  %v4055 = vadd.f32 %v4054, %v2189
  %v4056 = vadd.f32 %v4055, %v2191
  %v4057 = vadd.f32 %v4056, %v2434
  %v4058 = vadd.f32 %v4057, %v2436
  %v4059 = vadd.f32 %v4058, %v2679
  %v4060 = vadd.f32 %v4059, %v2681
  %v4061 = vadd.f32 %v4060, %v2924
  %v4062 = vadd.f32 %v4061, %v2926
  %v4063 = vadd.f32 %v4062, %v3169
  %v4064 = vadd.f32 %v4063, %v3171
  %v4065 = vadd.f32 %v4064, %v3390
  %4066 = vadd.xlane.f32.xlu0 %v4065
  %v4067 = vpop.xlane.xlu0 %4066
  %v4068 = vadd.f32 %v480, %v482
  %v4069 = vadd.f32 %v4068, %v725
  %v4070 = vadd.f32 %v4069, %v727
  %v4071 = vadd.f32 %v4070, %v970
  %v4072 = vadd.f32 %v4071, %v972
  %v4073 = vadd.f32 %v4072, %v1215
  %v4074 = vadd.f32 %v4073, %v1217
  %v4075 = vadd.f32 %v4074, %v1460
  %v4076 = vadd.f32 %v4075, %v1462
  %v4077 = vadd.f32 %v4076, %v1705
  %v4078 = vadd.f32 %v4077, %v1707
  %v4079 = vadd.f32 %v4078, %v1950
  %v4080 = vadd.f32 %v4079, %v1952
  %v4081 = vadd.f32 %v4080, %v2195
  %v4082 = vadd.f32 %v4081, %v2197
  %v4083 = vadd.f32 %v4082, %v2440
  %v4084 = vadd.f32 %v4083, %v2442
  %v4085 = vadd.f32 %v4084, %v2685
  %v4086 = vadd.f32 %v4085, %v2687
  %v4087 = vadd.f32 %v4086, %v2930
  %v4088 = vadd.f32 %v4087, %v2932
  %v4089 = vadd.f32 %v4088, %v3175
  %v4090 = vadd.f32 %v4089, %v3177
  %v4091 = vadd.f32 %v4090, %v3395
  %4092 = vadd.xlane.f32.xlu0 %v4091
  %v4093 = vpop.xlane.xlu0 %4092
  %v4094 = vadd.f32 %v486, %v488
  %v4095 = vadd.f32 %v4094, %v731
  %v4096 = vadd.f32 %v4095, %v733
  %v4097 = vadd.f32 %v4096, %v976
  %v4098 = vadd.f32 %v4097, %v978
  %v4099 = vadd.f32 %v4098, %v1221
  %v4100 = vadd.f32 %v4099, %v1223
  %v4101 = vadd.f32 %v4100, %v1466
  %v4102 = vadd.f32 %v4101, %v1468
  %v4103 = vadd.f32 %v4102, %v1711
  %v4104 = vadd.f32 %v4103, %v1713
  %v4105 = vadd.f32 %v4104, %v1956
  %v4106 = vadd.f32 %v4105, %v1958
  %v4107 = vadd.f32 %v4106, %v2201
  %v4108 = vadd.f32 %v4107, %v2203
  %v4109 = vadd.f32 %v4108, %v2446
  %v4110 = vadd.f32 %v4109, %v2448
  %v4111 = vadd.f32 %v4110, %v2691
  %v4112 = vadd.f32 %v4111, %v2693
  %v4113 = vadd.f32 %v4112, %v2936
  %v4114 = vadd.f32 %v4113, %v2938
  %v4115 = vadd.f32 %v4114, %v3181
  %v4116 = vadd.f32 %v4115, %v3183
  %v4117 = vadd.f32 %v4116, %v3400
  %4118 = vadd.xlane.f32.xlu0 %v4117
  %v4119 = vpop.xlane.xlu0 %4118
  %v4120 = vadd.f32 %v492, %v494
  %v4121 = vadd.f32 %v4120, %v737
  %v4122 = vadd.f32 %v4121, %v739
  %v4123 = vadd.f32 %v4122, %v982
  %v4124 = vadd.f32 %v4123, %v984
  %v4125 = vadd.f32 %v4124, %v1227
  %v4126 = vadd.f32 %v4125, %v1229
  %v4127 = vadd.f32 %v4126, %v1472
  %v4128 = vadd.f32 %v4127, %v1474
  %v4129 = vadd.f32 %v4128, %v1717
  %v4130 = vadd.f32 %v4129, %v1719
  %v4131 = vadd.f32 %v4130, %v1962
  %v4132 = vadd.f32 %v4131, %v1964
  %v4133 = vadd.f32 %v4132, %v2207
  %v4134 = vadd.f32 %v4133, %v2209
  %v4135 = vadd.f32 %v4134, %v2452
  %v4136 = vadd.f32 %v4135, %v2454
  %v4137 = vadd.f32 %v4136, %v2697
  %v4138 = vadd.f32 %v4137, %v2699
  %v4139 = vadd.f32 %v4138, %v2942
  %v4140 = vadd.f32 %v4139, %v2944
  %v4141 = vadd.f32 %v4140, %v3187
  %v4142 = vadd.f32 %v4141, %v3189
  %v4143 = vadd.f32 %v4142, %v3405
  %4144 = vadd.xlane.f32.xlu0 %v4143
  %v4145 = vpop.xlane.xlu0 %4144
  %v4146 = vadd.f32 %v498, %v500
  %v4147 = vadd.f32 %v4146, %v743
  %v4148 = vadd.f32 %v4147, %v745
  %v4149 = vadd.f32 %v4148, %v988
  %v4150 = vadd.f32 %v4149, %v990
  %v4151 = vadd.f32 %v4150, %v1233
  %v4152 = vadd.f32 %v4151, %v1235
  %v4153 = vadd.f32 %v4152, %v1478
  %v4154 = vadd.f32 %v4153, %v1480
  %v4155 = vadd.f32 %v4154, %v1723
  %v4156 = vadd.f32 %v4155, %v1725
  %v4157 = vadd.f32 %v4156, %v1968
  %v4158 = vadd.f32 %v4157, %v1970
  %v4159 = vadd.f32 %v4158, %v2213
  %v4160 = vadd.f32 %v4159, %v2215
  %v4161 = vadd.f32 %v4160, %v2458
  %v4162 = vadd.f32 %v4161, %v2460
  %v4163 = vadd.f32 %v4162, %v2703
  %v4164 = vadd.f32 %v4163, %v2705
  %v4165 = vadd.f32 %v4164, %v2948
  %v4166 = vadd.f32 %v4165, %v2950
  %v4167 = vadd.f32 %v4166, %v3193
  %v4168 = vadd.f32 %v4167, %v3195
  %v4169 = vadd.f32 %v4168, %v3410
  %4170 = vadd.xlane.f32.xlu0 %v4169
  %v4171 = vpop.xlane.xlu0 %4170
  %v4172 = vadd.f32 %v504, %v506
  %v4173 = vadd.f32 %v4172, %v749
  %v4174 = vadd.f32 %v4173, %v751
  %v4175 = vadd.f32 %v4174, %v994
  %v4176 = vadd.f32 %v4175, %v996
  %v4177 = vadd.f32 %v4176, %v1239
  %v4178 = vadd.f32 %v4177, %v1241
  %v4179 = vadd.f32 %v4178, %v1484
  %v4180 = vadd.f32 %v4179, %v1486
  %v4181 = vadd.f32 %v4180, %v1729
  %v4182 = vadd.f32 %v4181, %v1731
  %v4183 = vadd.f32 %v4182, %v1974
  %v4184 = vadd.f32 %v4183, %v1976
  %v4185 = vadd.f32 %v4184, %v2219
  %v4186 = vadd.f32 %v4185, %v2221
  %v4187 = vadd.f32 %v4186, %v2464
  %v4188 = vadd.f32 %v4187, %v2466
  %v4189 = vadd.f32 %v4188, %v2709
  %v4190 = vadd.f32 %v4189, %v2711
  %v4191 = vadd.f32 %v4190, %v2954
  %v4192 = vadd.f32 %v4191, %v2956
  %v4193 = vadd.f32 %v4192, %v3199
  %v4194 = vadd.f32 %v4193, %v3201
  %v4195 = vadd.f32 %v4194, %v3415
  %4196 = vadd.xlane.f32.xlu0 %v4195
  %v4197 = vpop.xlane.xlu0 %4196
  %v4198 = vmul.f32 %v330, %v330
  %v4199 = vmul.f32 %v332, %v332
  %v4200 = vmul.f32 %v575, %v575
  %v4201 = vmul.f32 %v577, %v577
  %v4202 = vmul.f32 %v820, %v820
  %v4203 = vmul.f32 %v822, %v822
  %v4204 = vmul.f32 %v1065, %v1065
  %v4205 = vmul.f32 %v1067, %v1067
  %v4206 = vmul.f32 %v1310, %v1310
  %v4207 = vmul.f32 %v1312, %v1312
  %v4208 = vmul.f32 %v1555, %v1555
  %v4209 = vmul.f32 %v1557, %v1557
  %v4210 = vmul.f32 %v1800, %v1800
  %v4211 = vmul.f32 %v1802, %v1802
  %v4212 = vmul.f32 %v2045, %v2045
  %v4213 = vmul.f32 %v2047, %v2047
  %v4214 = vmul.f32 %v2290, %v2290
  %v4215 = vmul.f32 %v2292, %v2292
  %v4216 = vmul.f32 %v2535, %v2535
  %v4217 = vmul.f32 %v2537, %v2537
  %v4218 = vmul.f32 %v2780, %v2780
  %v4219 = vmul.f32 %v2782, %v2782
  %v4220 = vmul.f32 %v3025, %v3025
  %v4221 = vmul.f32 %v3027, %v3027
  %v4222 = vmul.f32 %v3270, %v3270
  %v4223 = vmul.f32 %v336, %v336
  %v4224 = vmul.f32 %v338, %v338
  %v4225 = vmul.f32 %v581, %v581
  %v4226 = vmul.f32 %v583, %v583
  %v4227 = vmul.f32 %v826, %v826
  %v4228 = vmul.f32 %v828, %v828
  %v4229 = vmul.f32 %v1071, %v1071
  %v4230 = vmul.f32 %v1073, %v1073
  %v4231 = vmul.f32 %v1316, %v1316
  %v4232 = vmul.f32 %v1318, %v1318
  %v4233 = vmul.f32 %v1561, %v1561
  %v4234 = vmul.f32 %v1563, %v1563
  %v4235 = vmul.f32 %v1806, %v1806
  %v4236 = vmul.f32 %v1808, %v1808
  %v4237 = vmul.f32 %v2051, %v2051
  %v4238 = vmul.f32 %v2053, %v2053
  %v4239 = vmul.f32 %v2296, %v2296
  %v4240 = vmul.f32 %v2298, %v2298
  %v4241 = vmul.f32 %v2541, %v2541
  %v4242 = vmul.f32 %v2543, %v2543
  %v4243 = vmul.f32 %v2786, %v2786
  %v4244 = vmul.f32 %v2788, %v2788
  %v4245 = vmul.f32 %v3031, %v3031
  %v4246 = vmul.f32 %v3033, %v3033
  %v4247 = vmul.f32 %v3275, %v3275
  %v4248 = vmul.f32 %v342, %v342
  %v4249 = vmul.f32 %v344, %v344
  %v4250 = vmul.f32 %v587, %v587
  %v4251 = vmul.f32 %v589, %v589
  %v4252 = vmul.f32 %v832, %v832
  %v4253 = vmul.f32 %v834, %v834
  %v4254 = vmul.f32 %v1077, %v1077
  %v4255 = vmul.f32 %v1079, %v1079
  %v4256 = vmul.f32 %v1322, %v1322
  %v4257 = vmul.f32 %v1324, %v1324
  %v4258 = vmul.f32 %v1567, %v1567
  %v4259 = vmul.f32 %v1569, %v1569
  %v4260 = vmul.f32 %v1812, %v1812
  %v4261 = vmul.f32 %v1814, %v1814
  %v4262 = vmul.f32 %v2057, %v2057
  %v4263 = vmul.f32 %v2059, %v2059
  %v4264 = vmul.f32 %v2302, %v2302
  %v4265 = vmul.f32 %v2304, %v2304
  %v4266 = vmul.f32 %v2547, %v2547
  %v4267 = vmul.f32 %v2549, %v2549
  %v4268 = vmul.f32 %v2792, %v2792
  %v4269 = vmul.f32 %v2794, %v2794
  %v4270 = vmul.f32 %v3037, %v3037
  %v4271 = vmul.f32 %v3039, %v3039
  %v4272 = vmul.f32 %v3280, %v3280
  %v4273 = vmul.f32 %v348, %v348
  %v4274 = vmul.f32 %v350, %v350
  %v4275 = vmul.f32 %v593, %v593
  %v4276 = vmul.f32 %v595, %v595
  %v4277 = vmul.f32 %v838, %v838
  %v4278 = vmul.f32 %v840, %v840
  %v4279 = vmul.f32 %v1083, %v1083
  %v4280 = vmul.f32 %v1085, %v1085
  %v4281 = vmul.f32 %v1328, %v1328
  %v4282 = vmul.f32 %v1330, %v1330
  %v4283 = vmul.f32 %v1573, %v1573
  %v4284 = vmul.f32 %v1575, %v1575
  %v4285 = vmul.f32 %v1818, %v1818
  %v4286 = vmul.f32 %v1820, %v1820
  %v4287 = vmul.f32 %v2063, %v2063
  %v4288 = vmul.f32 %v2065, %v2065
  %v4289 = vmul.f32 %v2308, %v2308
  %v4290 = vmul.f32 %v2310, %v2310
  %v4291 = vmul.f32 %v2553, %v2553
  %v4292 = vmul.f32 %v2555, %v2555
  %v4293 = vmul.f32 %v2798, %v2798
  %v4294 = vmul.f32 %v2800, %v2800
  %v4295 = vmul.f32 %v3043, %v3043
  %v4296 = vmul.f32 %v3045, %v3045
  %v4297 = vmul.f32 %v3285, %v3285
  %v4298 = vmul.f32 %v354, %v354
  %v4299 = vmul.f32 %v356, %v356
  %v4300 = vmul.f32 %v599, %v599
  %v4301 = vmul.f32 %v601, %v601
  %v4302 = vmul.f32 %v844, %v844
  %v4303 = vmul.f32 %v846, %v846
  %v4304 = vmul.f32 %v1089, %v1089
  %v4305 = vmul.f32 %v1091, %v1091
  %v4306 = vmul.f32 %v1334, %v1334
  %v4307 = vmul.f32 %v1336, %v1336
  %v4308 = vmul.f32 %v1579, %v1579
  %v4309 = vmul.f32 %v1581, %v1581
  %v4310 = vmul.f32 %v1824, %v1824
  %v4311 = vmul.f32 %v1826, %v1826
  %v4312 = vmul.f32 %v2069, %v2069
  %v4313 = vmul.f32 %v2071, %v2071
  %v4314 = vmul.f32 %v2314, %v2314
  %v4315 = vmul.f32 %v2316, %v2316
  %v4316 = vmul.f32 %v2559, %v2559
  %v4317 = vmul.f32 %v2561, %v2561
  %v4318 = vmul.f32 %v2804, %v2804
  %v4319 = vmul.f32 %v2806, %v2806
  %v4320 = vmul.f32 %v3049, %v3049
  %v4321 = vmul.f32 %v3051, %v3051
  %v4322 = vmul.f32 %v3290, %v3290
  %v4323 = vmul.f32 %v360, %v360
  %v4324 = vmul.f32 %v362, %v362
  %v4325 = vmul.f32 %v605, %v605
  %v4326 = vmul.f32 %v607, %v607
  %v4327 = vmul.f32 %v850, %v850
  %v4328 = vmul.f32 %v852, %v852
  %v4329 = vmul.f32 %v1095, %v1095
  %v4330 = vmul.f32 %v1097, %v1097
  %v4331 = vmul.f32 %v1340, %v1340
  %v4332 = vmul.f32 %v1342, %v1342
  %v4333 = vmul.f32 %v1585, %v1585
  %v4334 = vmul.f32 %v1587, %v1587
  %v4335 = vmul.f32 %v1830, %v1830
  %v4336 = vmul.f32 %v1832, %v1832
  %v4337 = vmul.f32 %v2075, %v2075
  %v4338 = vmul.f32 %v2077, %v2077
  %v4339 = vmul.f32 %v2320, %v2320
  %v4340 = vmul.f32 %v2322, %v2322
  %v4341 = vmul.f32 %v2565, %v2565
  %v4342 = vmul.f32 %v2567, %v2567
  %v4343 = vmul.f32 %v2810, %v2810
  %v4344 = vmul.f32 %v2812, %v2812
  %v4345 = vmul.f32 %v3055, %v3055
  %v4346 = vmul.f32 %v3057, %v3057
  %v4347 = vmul.f32 %v3295, %v3295
  %v4348 = vmul.f32 %v366, %v366
  %v4349 = vmul.f32 %v368, %v368
  %v4350 = vmul.f32 %v611, %v611
  %v4351 = vmul.f32 %v613, %v613
  %v4352 = vmul.f32 %v856, %v856
  %v4353 = vmul.f32 %v858, %v858
  %v4354 = vmul.f32 %v1101, %v1101
  %v4355 = vmul.f32 %v1103, %v1103
  %v4356 = vmul.f32 %v1346, %v1346
  %v4357 = vmul.f32 %v1348, %v1348
  %v4358 = vmul.f32 %v1591, %v1591
  %v4359 = vmul.f32 %v1593, %v1593
  %v4360 = vmul.f32 %v1836, %v1836
  %v4361 = vmul.f32 %v1838, %v1838
  %v4362 = vmul.f32 %v2081, %v2081
  %v4363 = vmul.f32 %v2083, %v2083
  %v4364 = vmul.f32 %v2326, %v2326
  %v4365 = vmul.f32 %v2328, %v2328
  %v4366 = vmul.f32 %v2571, %v2571
  %v4367 = vmul.f32 %v2573, %v2573
  %v4368 = vmul.f32 %v2816, %v2816
  %v4369 = vmul.f32 %v2818, %v2818
  %v4370 = vmul.f32 %v3061, %v3061
  %v4371 = vmul.f32 %v3063, %v3063
  %v4372 = vmul.f32 %v3300, %v3300
  %v4373 = vmul.f32 %v372, %v372
  %v4374 = vmul.f32 %v374, %v374
  %v4375 = vmul.f32 %v617, %v617
  %v4376 = vmul.f32 %v619, %v619
  %v4377 = vmul.f32 %v862, %v862
  %v4378 = vmul.f32 %v864, %v864
  %v4379 = vmul.f32 %v1107, %v1107
  %v4380 = vmul.f32 %v1109, %v1109
  %v4381 = vmul.f32 %v1352, %v1352
  %v4382 = vmul.f32 %v1354, %v1354
  %v4383 = vmul.f32 %v1597, %v1597
  %v4384 = vmul.f32 %v1599, %v1599
  %v4385 = vmul.f32 %v1842, %v1842
  %v4386 = vmul.f32 %v1844, %v1844
  %v4387 = vmul.f32 %v2087, %v2087
  %v4388 = vmul.f32 %v2089, %v2089
  %v4389 = vmul.f32 %v2332, %v2332
  %v4390 = vmul.f32 %v2334, %v2334
  %v4391 = vmul.f32 %v2577, %v2577
  %v4392 = vmul.f32 %v2579, %v2579
  %v4393 = vmul.f32 %v2822, %v2822
  %v4394 = vmul.f32 %v2824, %v2824
  %v4395 = vmul.f32 %v3067, %v3067
  %v4396 = vmul.f32 %v3069, %v3069
  %v4397 = vmul.f32 %v3305, %v3305
  %v4398 = vmul.f32 %v378, %v378
  %v4399 = vmul.f32 %v380, %v380
  %v4400 = vmul.f32 %v623, %v623
  %v4401 = vmul.f32 %v625, %v625
  %v4402 = vmul.f32 %v868, %v868
  %v4403 = vmul.f32 %v870, %v870
  %v4404 = vmul.f32 %v1113, %v1113
  %v4405 = vmul.f32 %v1115, %v1115
  %v4406 = vmul.f32 %v1358, %v1358
  %v4407 = vmul.f32 %v1360, %v1360
  %v4408 = vmul.f32 %v1603, %v1603
  %v4409 = vmul.f32 %v1605, %v1605
  %v4410 = vmul.f32 %v1848, %v1848
  %v4411 = vmul.f32 %v1850, %v1850
  %v4412 = vmul.f32 %v2093, %v2093
  %v4413 = vmul.f32 %v2095, %v2095
  %v4414 = vmul.f32 %v2338, %v2338
  %v4415 = vmul.f32 %v2340, %v2340
  %v4416 = vmul.f32 %v2583, %v2583
  %v4417 = vmul.f32 %v2585, %v2585
  %v4418 = vmul.f32 %v2828, %v2828
  %v4419 = vmul.f32 %v2830, %v2830
  %v4420 = vmul.f32 %v3073, %v3073
  %v4421 = vmul.f32 %v3075, %v3075
  %v4422 = vmul.f32 %v3310, %v3310
  %v4423 = vmul.f32 %v384, %v384
  %v4424 = vmul.f32 %v386, %v386
  %v4425 = vmul.f32 %v629, %v629
  %v4426 = vmul.f32 %v631, %v631
  %v4427 = vmul.f32 %v874, %v874
  %v4428 = vmul.f32 %v876, %v876
  %v4429 = vmul.f32 %v1119, %v1119
  %v4430 = vmul.f32 %v1121, %v1121
  %v4431 = vmul.f32 %v1364, %v1364
  %v4432 = vmul.f32 %v1366, %v1366
  %v4433 = vmul.f32 %v1609, %v1609
  %v4434 = vmul.f32 %v1611, %v1611
  %v4435 = vmul.f32 %v1854, %v1854
  %v4436 = vmul.f32 %v1856, %v1856
  %v4437 = vmul.f32 %v2099, %v2099
  %v4438 = vmul.f32 %v2101, %v2101
  %v4439 = vmul.f32 %v2344, %v2344
  %v4440 = vmul.f32 %v2346, %v2346
  %v4441 = vmul.f32 %v2589, %v2589
  %v4442 = vmul.f32 %v2591, %v2591
  %v4443 = vmul.f32 %v2834, %v2834
  %v4444 = vmul.f32 %v2836, %v2836
  %v4445 = vmul.f32 %v3079, %v3079
  %v4446 = vmul.f32 %v3081, %v3081
  %v4447 = vmul.f32 %v3315, %v3315
  %v4448 = vmul.f32 %v390, %v390
  %v4449 = vmul.f32 %v392, %v392
  %v4450 = vmul.f32 %v635, %v635
  %v4451 = vmul.f32 %v637, %v637
  %v4452 = vmul.f32 %v880, %v880
  %v4453 = vmul.f32 %v882, %v882
  %v4454 = vmul.f32 %v1125, %v1125
  %v4455 = vmul.f32 %v1127, %v1127
  %v4456 = vmul.f32 %v1370, %v1370
  %v4457 = vmul.f32 %v1372, %v1372
  %v4458 = vmul.f32 %v1615, %v1615
  %v4459 = vmul.f32 %v1617, %v1617
  %v4460 = vmul.f32 %v1860, %v1860
  %v4461 = vmul.f32 %v1862, %v1862
  %v4462 = vmul.f32 %v2105, %v2105
  %v4463 = vmul.f32 %v2107, %v2107
  %v4464 = vmul.f32 %v2350, %v2350
  %v4465 = vmul.f32 %v2352, %v2352
  %v4466 = vmul.f32 %v2595, %v2595
  %v4467 = vmul.f32 %v2597, %v2597
  %v4468 = vmul.f32 %v2840, %v2840
  %v4469 = vmul.f32 %v2842, %v2842
  %v4470 = vmul.f32 %v3085, %v3085
  %v4471 = vmul.f32 %v3087, %v3087
  %v4472 = vmul.f32 %v3320, %v3320
  %v4473 = vmul.f32 %v396, %v396
  %v4474 = vmul.f32 %v398, %v398
  %v4475 = vmul.f32 %v641, %v641
  %v4476 = vmul.f32 %v643, %v643
  %v4477 = vmul.f32 %v886, %v886
  %v4478 = vmul.f32 %v888, %v888
  %v4479 = vmul.f32 %v1131, %v1131
  %v4480 = vmul.f32 %v1133, %v1133
  %v4481 = vmul.f32 %v1376, %v1376
  %v4482 = vmul.f32 %v1378, %v1378
  %v4483 = vmul.f32 %v1621, %v1621
  %v4484 = vmul.f32 %v1623, %v1623
  %v4485 = vmul.f32 %v1866, %v1866
  %v4486 = vmul.f32 %v1868, %v1868
  %v4487 = vmul.f32 %v2111, %v2111
  %v4488 = vmul.f32 %v2113, %v2113
  %v4489 = vmul.f32 %v2356, %v2356
  %v4490 = vmul.f32 %v2358, %v2358
  %v4491 = vmul.f32 %v2601, %v2601
  %v4492 = vmul.f32 %v2603, %v2603
  %v4493 = vmul.f32 %v2846, %v2846
  %v4494 = vmul.f32 %v2848, %v2848
  %v4495 = vmul.f32 %v3091, %v3091
  %v4496 = vmul.f32 %v3093, %v3093
  %v4497 = vmul.f32 %v3325, %v3325
  %v4498 = vmul.f32 %v402, %v402
  %v4499 = vmul.f32 %v404, %v404
  %v4500 = vmul.f32 %v647, %v647
  %v4501 = vmul.f32 %v649, %v649
  %v4502 = vmul.f32 %v892, %v892
  %v4503 = vmul.f32 %v894, %v894
  %v4504 = vmul.f32 %v1137, %v1137
  %v4505 = vmul.f32 %v1139, %v1139
  %v4506 = vmul.f32 %v1382, %v1382
  %v4507 = vmul.f32 %v1384, %v1384
  %v4508 = vmul.f32 %v1627, %v1627
  %v4509 = vmul.f32 %v1629, %v1629
  %v4510 = vmul.f32 %v1872, %v1872
  %v4511 = vmul.f32 %v1874, %v1874
  %v4512 = vmul.f32 %v2117, %v2117
  %v4513 = vmul.f32 %v2119, %v2119
  %v4514 = vmul.f32 %v2362, %v2362
  %v4515 = vmul.f32 %v2364, %v2364
  %v4516 = vmul.f32 %v2607, %v2607
  %v4517 = vmul.f32 %v2609, %v2609
  %v4518 = vmul.f32 %v2852, %v2852
  %v4519 = vmul.f32 %v2854, %v2854
  %v4520 = vmul.f32 %v3097, %v3097
  %v4521 = vmul.f32 %v3099, %v3099
  %v4522 = vmul.f32 %v3330, %v3330
  %v4523 = vmul.f32 %v408, %v408
  %v4524 = vmul.f32 %v410, %v410
  %v4525 = vmul.f32 %v653, %v653
  %v4526 = vmul.f32 %v655, %v655
  %v4527 = vmul.f32 %v898, %v898
  %v4528 = vmul.f32 %v900, %v900
  %v4529 = vmul.f32 %v1143, %v1143
  %v4530 = vmul.f32 %v1145, %v1145
  %v4531 = vmul.f32 %v1388, %v1388
  %v4532 = vmul.f32 %v1390, %v1390
  %v4533 = vmul.f32 %v1633, %v1633
  %v4534 = vmul.f32 %v1635, %v1635
  %v4535 = vmul.f32 %v1878, %v1878
  %v4536 = vmul.f32 %v1880, %v1880
  %v4537 = vmul.f32 %v2123, %v2123
  %v4538 = vmul.f32 %v2125, %v2125
  %v4539 = vmul.f32 %v2368, %v2368
  %v4540 = vmul.f32 %v2370, %v2370
  %v4541 = vmul.f32 %v2613, %v2613
  %v4542 = vmul.f32 %v2615, %v2615
  %v4543 = vmul.f32 %v2858, %v2858
  %v4544 = vmul.f32 %v2860, %v2860
  %v4545 = vmul.f32 %v3103, %v3103
  %v4546 = vmul.f32 %v3105, %v3105
  %v4547 = vmul.f32 %v3335, %v3335
  %v4548 = vmul.f32 %v414, %v414
  %v4549 = vmul.f32 %v416, %v416
  %v4550 = vmul.f32 %v659, %v659
  %v4551 = vmul.f32 %v661, %v661
  %v4552 = vmul.f32 %v904, %v904
  %v4553 = vmul.f32 %v906, %v906
  %v4554 = vmul.f32 %v1149, %v1149
  %v4555 = vmul.f32 %v1151, %v1151
  %v4556 = vmul.f32 %v1394, %v1394
  %v4557 = vmul.f32 %v1396, %v1396
  %v4558 = vmul.f32 %v1639, %v1639
  %v4559 = vmul.f32 %v1641, %v1641
  %v4560 = vmul.f32 %v1884, %v1884
  %v4561 = vmul.f32 %v1886, %v1886
  %v4562 = vmul.f32 %v2129, %v2129
  %v4563 = vmul.f32 %v2131, %v2131
  %v4564 = vmul.f32 %v2374, %v2374
  %v4565 = vmul.f32 %v2376, %v2376
  %v4566 = vmul.f32 %v2619, %v2619
  %v4567 = vmul.f32 %v2621, %v2621
  %v4568 = vmul.f32 %v2864, %v2864
  %v4569 = vmul.f32 %v2866, %v2866
  %v4570 = vmul.f32 %v3109, %v3109
  %v4571 = vmul.f32 %v3111, %v3111
  %v4572 = vmul.f32 %v3340, %v3340
  %v4573 = vmul.f32 %v420, %v420
  %v4574 = vmul.f32 %v422, %v422
  %v4575 = vmul.f32 %v665, %v665
  %v4576 = vmul.f32 %v667, %v667
  %v4577 = vmul.f32 %v910, %v910
  %v4578 = vmul.f32 %v912, %v912
  %v4579 = vmul.f32 %v1155, %v1155
  %v4580 = vmul.f32 %v1157, %v1157
  %v4581 = vmul.f32 %v1400, %v1400
  %v4582 = vmul.f32 %v1402, %v1402
  %v4583 = vmul.f32 %v1645, %v1645
  %v4584 = vmul.f32 %v1647, %v1647
  %v4585 = vmul.f32 %v1890, %v1890
  %v4586 = vmul.f32 %v1892, %v1892
  %v4587 = vmul.f32 %v2135, %v2135
  %v4588 = vmul.f32 %v2137, %v2137
  %v4589 = vmul.f32 %v2380, %v2380
  %v4590 = vmul.f32 %v2382, %v2382
  %v4591 = vmul.f32 %v2625, %v2625
  %v4592 = vmul.f32 %v2627, %v2627
  %v4593 = vmul.f32 %v2870, %v2870
  %v4594 = vmul.f32 %v2872, %v2872
  %v4595 = vmul.f32 %v3115, %v3115
  %v4596 = vmul.f32 %v3117, %v3117
  %v4597 = vmul.f32 %v3345, %v3345
  %v4598 = vmul.f32 %v426, %v426
  %v4599 = vmul.f32 %v428, %v428
  %v4600 = vmul.f32 %v671, %v671
  %v4601 = vmul.f32 %v673, %v673
  %v4602 = vmul.f32 %v916, %v916
  %v4603 = vmul.f32 %v918, %v918
  %v4604 = vmul.f32 %v1161, %v1161
  %v4605 = vmul.f32 %v1163, %v1163
  %v4606 = vmul.f32 %v1406, %v1406
  %v4607 = vmul.f32 %v1408, %v1408
  %v4608 = vmul.f32 %v1651, %v1651
  %v4609 = vmul.f32 %v1653, %v1653
  %v4610 = vmul.f32 %v1896, %v1896
  %v4611 = vmul.f32 %v1898, %v1898
  %v4612 = vmul.f32 %v2141, %v2141
  %v4613 = vmul.f32 %v2143, %v2143
  %v4614 = vmul.f32 %v2386, %v2386
  %v4615 = vmul.f32 %v2388, %v2388
  %v4616 = vmul.f32 %v2631, %v2631
  %v4617 = vmul.f32 %v2633, %v2633
  %v4618 = vmul.f32 %v2876, %v2876
  %v4619 = vmul.f32 %v2878, %v2878
  %v4620 = vmul.f32 %v3121, %v3121
  %v4621 = vmul.f32 %v3123, %v3123
  %v4622 = vmul.f32 %v3350, %v3350
  %v4623 = vmul.f32 %v432, %v432
  %v4624 = vmul.f32 %v434, %v434
  %v4625 = vmul.f32 %v677, %v677
  %v4626 = vmul.f32 %v679, %v679
  %v4627 = vmul.f32 %v922, %v922
  %v4628 = vmul.f32 %v924, %v924
  %v4629 = vmul.f32 %v1167, %v1167
  %v4630 = vmul.f32 %v1169, %v1169
  %v4631 = vmul.f32 %v1412, %v1412
  %v4632 = vmul.f32 %v1414, %v1414
  %v4633 = vmul.f32 %v1657, %v1657
  %v4634 = vmul.f32 %v1659, %v1659
  %v4635 = vmul.f32 %v1902, %v1902
  %v4636 = vmul.f32 %v1904, %v1904
  %v4637 = vmul.f32 %v2147, %v2147
  %v4638 = vmul.f32 %v2149, %v2149
  %v4639 = vmul.f32 %v2392, %v2392
  %v4640 = vmul.f32 %v2394, %v2394
  %v4641 = vmul.f32 %v2637, %v2637
  %v4642 = vmul.f32 %v2639, %v2639
  %v4643 = vmul.f32 %v2882, %v2882
  %v4644 = vmul.f32 %v2884, %v2884
  %v4645 = vmul.f32 %v3127, %v3127
  %v4646 = vmul.f32 %v3129, %v3129
  %v4647 = vmul.f32 %v3355, %v3355
  %v4648 = vmul.f32 %v438, %v438
  %v4649 = vmul.f32 %v440, %v440
  %v4650 = vmul.f32 %v683, %v683
  %v4651 = vmul.f32 %v685, %v685
  %v4652 = vmul.f32 %v928, %v928
  %v4653 = vmul.f32 %v930, %v930
  %v4654 = vmul.f32 %v1173, %v1173
  %v4655 = vmul.f32 %v1175, %v1175
  %v4656 = vmul.f32 %v1418, %v1418
  %v4657 = vmul.f32 %v1420, %v1420
  %v4658 = vmul.f32 %v1663, %v1663
  %v4659 = vmul.f32 %v1665, %v1665
  %v4660 = vmul.f32 %v1908, %v1908
  %v4661 = vmul.f32 %v1910, %v1910
  %v4662 = vmul.f32 %v2153, %v2153
  %v4663 = vmul.f32 %v2155, %v2155
  %v4664 = vmul.f32 %v2398, %v2398
  %v4665 = vmul.f32 %v2400, %v2400
  %v4666 = vmul.f32 %v2643, %v2643
  %v4667 = vmul.f32 %v2645, %v2645
  %v4668 = vmul.f32 %v2888, %v2888
  %v4669 = vmul.f32 %v2890, %v2890
  %v4670 = vmul.f32 %v3133, %v3133
  %v4671 = vmul.f32 %v3135, %v3135
  %v4672 = vmul.f32 %v3360, %v3360
  %v4673 = vmul.f32 %v444, %v444
  %v4674 = vmul.f32 %v446, %v446
  %v4675 = vmul.f32 %v689, %v689
  %v4676 = vmul.f32 %v691, %v691
  %v4677 = vmul.f32 %v934, %v934
  %v4678 = vmul.f32 %v936, %v936
  %v4679 = vmul.f32 %v1179, %v1179
  %v4680 = vmul.f32 %v1181, %v1181
  %v4681 = vmul.f32 %v1424, %v1424
  %v4682 = vmul.f32 %v1426, %v1426
  %v4683 = vmul.f32 %v1669, %v1669
  %v4684 = vmul.f32 %v1671, %v1671
  %v4685 = vmul.f32 %v1914, %v1914
  %v4686 = vmul.f32 %v1916, %v1916
  %v4687 = vmul.f32 %v2159, %v2159
  %v4688 = vmul.f32 %v2161, %v2161
  %v4689 = vmul.f32 %v2404, %v2404
  %v4690 = vmul.f32 %v2406, %v2406
  %v4691 = vmul.f32 %v2649, %v2649
  %v4692 = vmul.f32 %v2651, %v2651
  %v4693 = vmul.f32 %v2894, %v2894
  %v4694 = vmul.f32 %v2896, %v2896
  %v4695 = vmul.f32 %v3139, %v3139
  %v4696 = vmul.f32 %v3141, %v3141
  %v4697 = vmul.f32 %v3365, %v3365
  %v4698 = vmul.f32 %v450, %v450
  %v4699 = vmul.f32 %v452, %v452
  %v4700 = vmul.f32 %v695, %v695
  %v4701 = vmul.f32 %v697, %v697
  %v4702 = vmul.f32 %v940, %v940
  %v4703 = vmul.f32 %v942, %v942
  %v4704 = vmul.f32 %v1185, %v1185
  %v4705 = vmul.f32 %v1187, %v1187
  %v4706 = vmul.f32 %v1430, %v1430
  %v4707 = vmul.f32 %v1432, %v1432
  %v4708 = vmul.f32 %v1675, %v1675
  %v4709 = vmul.f32 %v1677, %v1677
  %v4710 = vmul.f32 %v1920, %v1920
  %v4711 = vmul.f32 %v1922, %v1922
  %v4712 = vmul.f32 %v2165, %v2165
  %v4713 = vmul.f32 %v2167, %v2167
  %v4714 = vmul.f32 %v2410, %v2410
  %v4715 = vmul.f32 %v2412, %v2412
  %v4716 = vmul.f32 %v2655, %v2655
  %v4717 = vmul.f32 %v2657, %v2657
  %v4718 = vmul.f32 %v2900, %v2900
  %v4719 = vmul.f32 %v2902, %v2902
  %v4720 = vmul.f32 %v3145, %v3145
  %v4721 = vmul.f32 %v3147, %v3147
  %v4722 = vmul.f32 %v3370, %v3370
  %v4723 = vmul.f32 %v456, %v456
  %v4724 = vmul.f32 %v458, %v458
  %v4725 = vmul.f32 %v701, %v701
  %v4726 = vmul.f32 %v703, %v703
  %v4727 = vmul.f32 %v946, %v946
  %v4728 = vmul.f32 %v948, %v948
  %v4729 = vmul.f32 %v1191, %v1191
  %v4730 = vmul.f32 %v1193, %v1193
  %v4731 = vmul.f32 %v1436, %v1436
  %v4732 = vmul.f32 %v1438, %v1438
  %v4733 = vmul.f32 %v1681, %v1681
  %v4734 = vmul.f32 %v1683, %v1683
  %v4735 = vmul.f32 %v1926, %v1926
  %v4736 = vmul.f32 %v1928, %v1928
  %v4737 = vmul.f32 %v2171, %v2171
  %v4738 = vmul.f32 %v2173, %v2173
  %v4739 = vmul.f32 %v2416, %v2416
  %v4740 = vmul.f32 %v2418, %v2418
  %v4741 = vmul.f32 %v2661, %v2661
  %v4742 = vmul.f32 %v2663, %v2663
  %v4743 = vmul.f32 %v2906, %v2906
  %v4744 = vmul.f32 %v2908, %v2908
  %v4745 = vmul.f32 %v3151, %v3151
  %v4746 = vmul.f32 %v3153, %v3153
  %v4747 = vmul.f32 %v3375, %v3375
  %v4748 = vmul.f32 %v462, %v462
  %v4749 = vmul.f32 %v464, %v464
  %v4750 = vmul.f32 %v707, %v707
  %v4751 = vmul.f32 %v709, %v709
  %v4752 = vmul.f32 %v952, %v952
  %v4753 = vmul.f32 %v954, %v954
  %v4754 = vmul.f32 %v1197, %v1197
  %v4755 = vmul.f32 %v1199, %v1199
  %v4756 = vmul.f32 %v1442, %v1442
  %v4757 = vmul.f32 %v1444, %v1444
  %v4758 = vmul.f32 %v1687, %v1687
  %v4759 = vmul.f32 %v1689, %v1689
  %v4760 = vmul.f32 %v1932, %v1932
  %v4761 = vmul.f32 %v1934, %v1934
  %v4762 = vmul.f32 %v2177, %v2177
  %v4763 = vmul.f32 %v2179, %v2179
  %v4764 = vmul.f32 %v2422, %v2422
  %v4765 = vmul.f32 %v2424, %v2424
  %v4766 = vmul.f32 %v2667, %v2667
  %v4767 = vmul.f32 %v2669, %v2669
  %v4768 = vmul.f32 %v2912, %v2912
  %v4769 = vmul.f32 %v2914, %v2914
  %v4770 = vmul.f32 %v3157, %v3157
  %v4771 = vmul.f32 %v3159, %v3159
  %v4772 = vmul.f32 %v3380, %v3380
  %v4773 = vmul.f32 %v468, %v468
  %v4774 = vmul.f32 %v470, %v470
  %v4775 = vmul.f32 %v713, %v713
  %v4776 = vmul.f32 %v715, %v715
  %v4777 = vmul.f32 %v958, %v958
  %v4778 = vmul.f32 %v960, %v960
  %v4779 = vmul.f32 %v1203, %v1203
  %v4780 = vmul.f32 %v1205, %v1205
  %v4781 = vmul.f32 %v1448, %v1448
  %v4782 = vmul.f32 %v1450, %v1450
  %v4783 = vmul.f32 %v1693, %v1693
  %v4784 = vmul.f32 %v1695, %v1695
  %v4785 = vmul.f32 %v1938, %v1938
  %v4786 = vmul.f32 %v1940, %v1940
  %v4787 = vmul.f32 %v2183, %v2183
  %v4788 = vmul.f32 %v2185, %v2185
  %v4789 = vmul.f32 %v2428, %v2428
  %v4790 = vmul.f32 %v2430, %v2430
  %v4791 = vmul.f32 %v2673, %v2673
  %v4792 = vmul.f32 %v2675, %v2675
  %v4793 = vmul.f32 %v2918, %v2918
  %v4794 = vmul.f32 %v2920, %v2920
  %v4795 = vmul.f32 %v3163, %v3163
  %v4796 = vmul.f32 %v3165, %v3165
  %v4797 = vmul.f32 %v3385, %v3385
  %v4798 = vmul.f32 %v474, %v474
  %v4799 = vmul.f32 %v476, %v476
  %v4800 = vmul.f32 %v719, %v719
  %v4801 = vmul.f32 %v721, %v721
  %v4802 = vmul.f32 %v964, %v964
  %v4803 = vmul.f32 %v966, %v966
  %v4804 = vmul.f32 %v1209, %v1209
  %v4805 = vmul.f32 %v1211, %v1211
  %v4806 = vmul.f32 %v1454, %v1454
  %v4807 = vmul.f32 %v1456, %v1456
  %v4808 = vmul.f32 %v1699, %v1699
  %v4809 = vmul.f32 %v1701, %v1701
  %v4810 = vmul.f32 %v1944, %v1944
  %v4811 = vmul.f32 %v1946, %v1946
  %v4812 = vmul.f32 %v2189, %v2189
  %v4813 = vmul.f32 %v2191, %v2191
  %v4814 = vmul.f32 %v2434, %v2434
  %v4815 = vmul.f32 %v2436, %v2436
  %v4816 = vmul.f32 %v2679, %v2679
  %v4817 = vmul.f32 %v2681, %v2681
  %v4818 = vmul.f32 %v2924, %v2924
  %v4819 = vmul.f32 %v2926, %v2926
  %v4820 = vmul.f32 %v3169, %v3169
  %v4821 = vmul.f32 %v3171, %v3171
  %v4822 = vmul.f32 %v3390, %v3390
  %v4823 = vmul.f32 %v480, %v480
  %v4824 = vmul.f32 %v482, %v482
  %v4825 = vmul.f32 %v725, %v725
  %v4826 = vmul.f32 %v727, %v727
  %v4827 = vmul.f32 %v970, %v970
  %v4828 = vmul.f32 %v972, %v972
  %v4829 = vmul.f32 %v1215, %v1215
  %v4830 = vmul.f32 %v1217, %v1217
  %v4831 = vmul.f32 %v1460, %v1460
  %v4832 = vmul.f32 %v1462, %v1462
  %v4833 = vmul.f32 %v1705, %v1705
  %v4834 = vmul.f32 %v1707, %v1707
  %v4835 = vmul.f32 %v1950, %v1950
  %v4836 = vmul.f32 %v1952, %v1952
  %v4837 = vmul.f32 %v2195, %v2195
  %v4838 = vmul.f32 %v2197, %v2197
  %v4839 = vmul.f32 %v2440, %v2440
  %v4840 = vmul.f32 %v2442, %v2442
  %v4841 = vmul.f32 %v2685, %v2685
  %v4842 = vmul.f32 %v2687, %v2687
  %v4843 = vmul.f32 %v2930, %v2930
  %v4844 = vmul.f32 %v2932, %v2932
  %v4845 = vmul.f32 %v3175, %v3175
  %v4846 = vmul.f32 %v3177, %v3177
  %v4847 = vmul.f32 %v3395, %v3395
  %v4848 = vmul.f32 %v486, %v486
  %v4849 = vmul.f32 %v488, %v488
  %v4850 = vmul.f32 %v731, %v731
  %v4851 = vmul.f32 %v733, %v733
  %v4852 = vmul.f32 %v976, %v976
  %v4853 = vmul.f32 %v978, %v978
  %v4854 = vmul.f32 %v1221, %v1221
  %v4855 = vmul.f32 %v1223, %v1223
  %v4856 = vmul.f32 %v1466, %v1466
  %v4857 = vmul.f32 %v1468, %v1468
  %v4858 = vmul.f32 %v1711, %v1711
  %v4859 = vmul.f32 %v1713, %v1713
  %v4860 = vmul.f32 %v1956, %v1956
  %v4861 = vmul.f32 %v1958, %v1958
  %v4862 = vmul.f32 %v2201, %v2201
  %v4863 = vmul.f32 %v2203, %v2203
  %v4864 = vmul.f32 %v2446, %v2446
  %v4865 = vmul.f32 %v2448, %v2448
  %v4866 = vmul.f32 %v2691, %v2691
  %v4867 = vmul.f32 %v2693, %v2693
  %v4868 = vmul.f32 %v2936, %v2936
  %v4869 = vmul.f32 %v2938, %v2938
  %v4870 = vmul.f32 %v3181, %v3181
  %v4871 = vmul.f32 %v3183, %v3183
  %v4872 = vmul.f32 %v3400, %v3400
  %v4873 = vmul.f32 %v492, %v492
  %v4874 = vmul.f32 %v494, %v494
  %v4875 = vmul.f32 %v737, %v737
  %v4876 = vmul.f32 %v739, %v739
  %v4877 = vmul.f32 %v982, %v982
  %v4878 = vmul.f32 %v984, %v984
  %v4879 = vmul.f32 %v1227, %v1227
  %v4880 = vmul.f32 %v1229, %v1229
  %v4881 = vmul.f32 %v1472, %v1472
  %v4882 = vmul.f32 %v1474, %v1474
  %v4883 = vmul.f32 %v1717, %v1717
  %v4884 = vmul.f32 %v1719, %v1719
  %v4885 = vmul.f32 %v1962, %v1962
  %v4886 = vmul.f32 %v1964, %v1964
  %v4887 = vmul.f32 %v2207, %v2207
  %v4888 = vmul.f32 %v2209, %v2209
  %v4889 = vmul.f32 %v2452, %v2452
  %v4890 = vmul.f32 %v2454, %v2454
  %v4891 = vmul.f32 %v2697, %v2697
  %v4892 = vmul.f32 %v2699, %v2699
  %v4893 = vmul.f32 %v2942, %v2942
  %v4894 = vmul.f32 %v2944, %v2944
  %v4895 = vmul.f32 %v3187, %v3187
  %v4896 = vmul.f32 %v3189, %v3189
  %v4897 = vmul.f32 %v3405, %v3405
  %v4898 = vmul.f32 %v498, %v498
  %v4899 = vmul.f32 %v500, %v500
  %v4900 = vmul.f32 %v743, %v743
  %v4901 = vmul.f32 %v745, %v745
  %v4902 = vmul.f32 %v988, %v988
  %v4903 = vmul.f32 %v990, %v990
  %v4904 = vmul.f32 %v1233, %v1233
  %v4905 = vmul.f32 %v1235, %v1235
  %v4906 = vmul.f32 %v1478, %v1478
  %v4907 = vmul.f32 %v1480, %v1480
  %v4908 = vmul.f32 %v1723, %v1723
  %v4909 = vmul.f32 %v1725, %v1725
  %v4910 = vmul.f32 %v1968, %v1968
  %v4911 = vmul.f32 %v1970, %v1970
  %v4912 = vmul.f32 %v2213, %v2213
  %v4913 = vmul.f32 %v2215, %v2215
  %v4914 = vmul.f32 %v2458, %v2458
  %v4915 = vmul.f32 %v2460, %v2460
  %v4916 = vmul.f32 %v2703, %v2703
  %v4917 = vmul.f32 %v2705, %v2705
  %v4918 = vmul.f32 %v2948, %v2948
  %v4919 = vmul.f32 %v2950, %v2950
  %v4920 = vmul.f32 %v3193, %v3193
  %v4921 = vmul.f32 %v3195, %v3195
  %v4922 = vmul.f32 %v3410, %v3410
  %v4923 = vmul.f32 %v504, %v504
  %v4924 = vmul.f32 %v506, %v506
  %v4925 = vmul.f32 %v749, %v749
  %v4926 = vmul.f32 %v751, %v751
  %v4927 = vmul.f32 %v994, %v994
  %v4928 = vmul.f32 %v996, %v996
  %v4929 = vmul.f32 %v1239, %v1239
  %v4930 = vmul.f32 %v1241, %v1241
  %v4931 = vmul.f32 %v1484, %v1484
  %v4932 = vmul.f32 %v1486, %v1486
  %v4933 = vmul.f32 %v1729, %v1729
  %v4934 = vmul.f32 %v1731, %v1731
  %v4935 = vmul.f32 %v1974, %v1974
  %v4936 = vmul.f32 %v1976, %v1976
  %v4937 = vmul.f32 %v2219, %v2219
  %v4938 = vmul.f32 %v2221, %v2221
  %v4939 = vmul.f32 %v2464, %v2464
  %v4940 = vmul.f32 %v2466, %v2466
  %v4941 = vmul.f32 %v2709, %v2709
  %v4942 = vmul.f32 %v2711, %v2711
  %v4943 = vmul.f32 %v2954, %v2954
  %v4944 = vmul.f32 %v2956, %v2956
  %v4945 = vmul.f32 %v3199, %v3199
  %v4946 = vmul.f32 %v3201, %v3201
  %v4947 = vmul.f32 %v3415, %v3415
  %v4948 = vadd.f32 %v4198, %v4199
  %v4949 = vadd.f32 %v4948, %v4200
  %v4950 = vadd.f32 %v4949, %v4201
  %v4951 = vadd.f32 %v4950, %v4202
  %v4952 = vadd.f32 %v4951, %v4203
  %v4953 = vadd.f32 %v4952, %v4204
  %v4954 = vadd.f32 %v4953, %v4205
  %v4955 = vadd.f32 %v4954, %v4206
  %v4956 = vadd.f32 %v4955, %v4207
  %v4957 = vadd.f32 %v4956, %v4208
  %v4958 = vadd.f32 %v4957, %v4209
  %v4959 = vadd.f32 %v4958, %v4210
  %v4960 = vadd.f32 %v4959, %v4211
  %v4961 = vadd.f32 %v4960, %v4212
  %v4962 = vadd.f32 %v4961, %v4213
  %v4963 = vadd.f32 %v4962, %v4214
  %v4964 = vadd.f32 %v4963, %v4215
  %v4965 = vadd.f32 %v4964, %v4216
  %v4966 = vadd.f32 %v4965, %v4217
  %v4967 = vadd.f32 %v4966, %v4218
  %v4968 = vadd.f32 %v4967, %v4219
  %v4969 = vadd.f32 %v4968, %v4220
  %v4970 = vadd.f32 %v4969, %v4221
  %v4971 = vadd.f32 %v4970, %v4222
  %4972 = vadd.xlane.f32.xlu0 %v4971
  %v4973 = vpop.xlane.xlu0 %4972
  %v4974 = vadd.f32 %v4223, %v4224
  %v4975 = vadd.f32 %v4974, %v4225
  %v4976 = vadd.f32 %v4975, %v4226
  %v4977 = vadd.f32 %v4976, %v4227
  %v4978 = vadd.f32 %v4977, %v4228
  %v4979 = vadd.f32 %v4978, %v4229
  %v4980 = vadd.f32 %v4979, %v4230
  %v4981 = vadd.f32 %v4980, %v4231
  %v4982 = vadd.f32 %v4981, %v4232
  %v4983 = vadd.f32 %v4982, %v4233
  %v4984 = vadd.f32 %v4983, %v4234
  %v4985 = vadd.f32 %v4984, %v4235
  %v4986 = vadd.f32 %v4985, %v4236
  %v4987 = vadd.f32 %v4986, %v4237
  %v4988 = vadd.f32 %v4987, %v4238
  %v4989 = vadd.f32 %v4988, %v4239
  %v4990 = vadd.f32 %v4989, %v4240
  %v4991 = vadd.f32 %v4990, %v4241
  %v4992 = vadd.f32 %v4991, %v4242
  %v4993 = vadd.f32 %v4992, %v4243
  %v4994 = vadd.f32 %v4993, %v4244
  %v4995 = vadd.f32 %v4994, %v4245
  %v4996 = vadd.f32 %v4995, %v4246
  %v4997 = vadd.f32 %v4996, %v4247
  %4998 = vadd.xlane.f32.xlu0 %v4997
  %v4999 = vpop.xlane.xlu0 %4998
  %v5000 = vadd.f32 %v4248, %v4249
  %v5001 = vadd.f32 %v5000, %v4250
  %v5002 = vadd.f32 %v5001, %v4251
  %v5003 = vadd.f32 %v5002, %v4252
  %v5004 = vadd.f32 %v5003, %v4253
  %v5005 = vadd.f32 %v5004, %v4254
  %v5006 = vadd.f32 %v5005, %v4255
  %v5007 = vadd.f32 %v5006, %v4256
  %v5008 = vadd.f32 %v5007, %v4257
  %v5009 = vadd.f32 %v5008, %v4258
  %v5010 = vadd.f32 %v5009, %v4259
  %v5011 = vadd.f32 %v5010, %v4260
  %v5012 = vadd.f32 %v5011, %v4261
  %v5013 = vadd.f32 %v5012, %v4262
  %v5014 = vadd.f32 %v5013, %v4263
  %v5015 = vadd.f32 %v5014, %v4264
  %v5016 = vadd.f32 %v5015, %v4265
  %v5017 = vadd.f32 %v5016, %v4266
  %v5018 = vadd.f32 %v5017, %v4267
  %v5019 = vadd.f32 %v5018, %v4268
  %v5020 = vadd.f32 %v5019, %v4269
  %v5021 = vadd.f32 %v5020, %v4270
  %v5022 = vadd.f32 %v5021, %v4271
  %v5023 = vadd.f32 %v5022, %v4272
  %5024 = vadd.xlane.f32.xlu0 %v5023
  %v5025 = vpop.xlane.xlu0 %5024
  %v5026 = vadd.f32 %v4273, %v4274
  %v5027 = vadd.f32 %v5026, %v4275
  %v5028 = vadd.f32 %v5027, %v4276
  %v5029 = vadd.f32 %v5028, %v4277
  %v5030 = vadd.f32 %v5029, %v4278
  %v5031 = vadd.f32 %v5030, %v4279
  %v5032 = vadd.f32 %v5031, %v4280
  %v5033 = vadd.f32 %v5032, %v4281
  %v5034 = vadd.f32 %v5033, %v4282
  %v5035 = vadd.f32 %v5034, %v4283
  %v5036 = vadd.f32 %v5035, %v4284
  %v5037 = vadd.f32 %v5036, %v4285
  %v5038 = vadd.f32 %v5037, %v4286
  %v5039 = vadd.f32 %v5038, %v4287
  %v5040 = vadd.f32 %v5039, %v4288
  %v5041 = vadd.f32 %v5040, %v4289
  %v5042 = vadd.f32 %v5041, %v4290
  %v5043 = vadd.f32 %v5042, %v4291
  %v5044 = vadd.f32 %v5043, %v4292
  %v5045 = vadd.f32 %v5044, %v4293
  %v5046 = vadd.f32 %v5045, %v4294
  %v5047 = vadd.f32 %v5046, %v4295
  %v5048 = vadd.f32 %v5047, %v4296
  %v5049 = vadd.f32 %v5048, %v4297
  %5050 = vadd.xlane.f32.xlu0 %v5049
  %v5051 = vpop.xlane.xlu0 %5050
  %v5052 = vadd.f32 %v4298, %v4299
  %v5053 = vadd.f32 %v5052, %v4300
  %v5054 = vadd.f32 %v5053, %v4301
  %v5055 = vadd.f32 %v5054, %v4302
  %v5056 = vadd.f32 %v5055, %v4303
  %v5057 = vadd.f32 %v5056, %v4304
  %v5058 = vadd.f32 %v5057, %v4305
  %v5059 = vadd.f32 %v5058, %v4306
  %v5060 = vadd.f32 %v5059, %v4307
  %v5061 = vadd.f32 %v5060, %v4308
  %v5062 = vadd.f32 %v5061, %v4309
  %v5063 = vadd.f32 %v5062, %v4310
  %v5064 = vadd.f32 %v5063, %v4311
  %v5065 = vadd.f32 %v5064, %v4312
  %v5066 = vadd.f32 %v5065, %v4313
  %v5067 = vadd.f32 %v5066, %v4314
  %v5068 = vadd.f32 %v5067, %v4315
  %v5069 = vadd.f32 %v5068, %v4316
  %v5070 = vadd.f32 %v5069, %v4317
  %v5071 = vadd.f32 %v5070, %v4318
  %v5072 = vadd.f32 %v5071, %v4319
  %v5073 = vadd.f32 %v5072, %v4320
  %v5074 = vadd.f32 %v5073, %v4321
  %v5075 = vadd.f32 %v5074, %v4322
  %5076 = vadd.xlane.f32.xlu0 %v5075
  %v5077 = vpop.xlane.xlu0 %5076
  %v5078 = vadd.f32 %v4323, %v4324
  %v5079 = vadd.f32 %v5078, %v4325
  %v5080 = vadd.f32 %v5079, %v4326
  %v5081 = vadd.f32 %v5080, %v4327
  %v5082 = vadd.f32 %v5081, %v4328
  %v5083 = vadd.f32 %v5082, %v4329
  %v5084 = vadd.f32 %v5083, %v4330
  %v5085 = vadd.f32 %v5084, %v4331
  %v5086 = vadd.f32 %v5085, %v4332
  %v5087 = vadd.f32 %v5086, %v4333
  %v5088 = vadd.f32 %v5087, %v4334
  %v5089 = vadd.f32 %v5088, %v4335
  %v5090 = vadd.f32 %v5089, %v4336
  %v5091 = vadd.f32 %v5090, %v4337
  %v5092 = vadd.f32 %v5091, %v4338
  %v5093 = vadd.f32 %v5092, %v4339
  %v5094 = vadd.f32 %v5093, %v4340
  %v5095 = vadd.f32 %v5094, %v4341
  %v5096 = vadd.f32 %v5095, %v4342
  %v5097 = vadd.f32 %v5096, %v4343
  %v5098 = vadd.f32 %v5097, %v4344
  %v5099 = vadd.f32 %v5098, %v4345
  %v5100 = vadd.f32 %v5099, %v4346
  %v5101 = vadd.f32 %v5100, %v4347
  %5102 = vadd.xlane.f32.xlu0 %v5101
  %v5103 = vpop.xlane.xlu0 %5102
  %v5104 = vadd.f32 %v4348, %v4349
  %v5105 = vadd.f32 %v5104, %v4350
  %v5106 = vadd.f32 %v5105, %v4351
  %v5107 = vadd.f32 %v5106, %v4352
  %v5108 = vadd.f32 %v5107, %v4353
  %v5109 = vadd.f32 %v5108, %v4354
  %v5110 = vadd.f32 %v5109, %v4355
  %v5111 = vadd.f32 %v5110, %v4356
  %v5112 = vadd.f32 %v5111, %v4357
  %v5113 = vadd.f32 %v5112, %v4358
  %v5114 = vadd.f32 %v5113, %v4359
  %v5115 = vadd.f32 %v5114, %v4360
  %v5116 = vadd.f32 %v5115, %v4361
  %v5117 = vadd.f32 %v5116, %v4362
  %v5118 = vadd.f32 %v5117, %v4363
  %v5119 = vadd.f32 %v5118, %v4364
  %v5120 = vadd.f32 %v5119, %v4365
  %v5121 = vadd.f32 %v5120, %v4366
  %v5122 = vadd.f32 %v5121, %v4367
  %v5123 = vadd.f32 %v5122, %v4368
  %v5124 = vadd.f32 %v5123, %v4369
  %v5125 = vadd.f32 %v5124, %v4370
  %v5126 = vadd.f32 %v5125, %v4371
  %v5127 = vadd.f32 %v5126, %v4372
  %5128 = vadd.xlane.f32.xlu0 %v5127
  %v5129 = vpop.xlane.xlu0 %5128
  %v5130 = vadd.f32 %v4373, %v4374
  %v5131 = vadd.f32 %v5130, %v4375
  %v5132 = vadd.f32 %v5131, %v4376
  %v5133 = vadd.f32 %v5132, %v4377
  %v5134 = vadd.f32 %v5133, %v4378
  %v5135 = vadd.f32 %v5134, %v4379
  %v5136 = vadd.f32 %v5135, %v4380
  %v5137 = vadd.f32 %v5136, %v4381
  %v5138 = vadd.f32 %v5137, %v4382
  %v5139 = vadd.f32 %v5138, %v4383
  %v5140 = vadd.f32 %v5139, %v4384
  %v5141 = vadd.f32 %v5140, %v4385
  %v5142 = vadd.f32 %v5141, %v4386
  %v5143 = vadd.f32 %v5142, %v4387
  %v5144 = vadd.f32 %v5143, %v4388
  %v5145 = vadd.f32 %v5144, %v4389
  %v5146 = vadd.f32 %v5145, %v4390
  %v5147 = vadd.f32 %v5146, %v4391
  %v5148 = vadd.f32 %v5147, %v4392
  %v5149 = vadd.f32 %v5148, %v4393
  %v5150 = vadd.f32 %v5149, %v4394
  %v5151 = vadd.f32 %v5150, %v4395
  %v5152 = vadd.f32 %v5151, %v4396
  %v5153 = vadd.f32 %v5152, %v4397
  %5154 = vadd.xlane.f32.xlu0 %v5153
  %v5155 = vpop.xlane.xlu0 %5154
  %v5156 = vadd.f32 %v4398, %v4399
  %v5157 = vadd.f32 %v5156, %v4400
  %v5158 = vadd.f32 %v5157, %v4401
  %v5159 = vadd.f32 %v5158, %v4402
  %v5160 = vadd.f32 %v5159, %v4403
  %v5161 = vadd.f32 %v5160, %v4404
  %v5162 = vadd.f32 %v5161, %v4405
  %v5163 = vadd.f32 %v5162, %v4406
  %v5164 = vadd.f32 %v5163, %v4407
  %v5165 = vadd.f32 %v5164, %v4408
  %v5166 = vadd.f32 %v5165, %v4409
  %v5167 = vadd.f32 %v5166, %v4410
  %v5168 = vadd.f32 %v5167, %v4411
  %v5169 = vadd.f32 %v5168, %v4412
  %v5170 = vadd.f32 %v5169, %v4413
  %v5171 = vadd.f32 %v5170, %v4414
  %v5172 = vadd.f32 %v5171, %v4415
  %v5173 = vadd.f32 %v5172, %v4416
  %v5174 = vadd.f32 %v5173, %v4417
  %v5175 = vadd.f32 %v5174, %v4418
  %v5176 = vadd.f32 %v5175, %v4419
  %v5177 = vadd.f32 %v5176, %v4420
  %v5178 = vadd.f32 %v5177, %v4421
  %v5179 = vadd.f32 %v5178, %v4422
  %5180 = vadd.xlane.f32.xlu0 %v5179
  %v5181 = vpop.xlane.xlu0 %5180
  %v5182 = vadd.f32 %v4423, %v4424
  %v5183 = vadd.f32 %v5182, %v4425
  %v5184 = vadd.f32 %v5183, %v4426
  %v5185 = vadd.f32 %v5184, %v4427
  %v5186 = vadd.f32 %v5185, %v4428
  %v5187 = vadd.f32 %v5186, %v4429
  %v5188 = vadd.f32 %v5187, %v4430
  %v5189 = vadd.f32 %v5188, %v4431
  %v5190 = vadd.f32 %v5189, %v4432
  %v5191 = vadd.f32 %v5190, %v4433
  %v5192 = vadd.f32 %v5191, %v4434
  %v5193 = vadd.f32 %v5192, %v4435
  %v5194 = vadd.f32 %v5193, %v4436
  %v5195 = vadd.f32 %v5194, %v4437
  %v5196 = vadd.f32 %v5195, %v4438
  %v5197 = vadd.f32 %v5196, %v4439
  %v5198 = vadd.f32 %v5197, %v4440
  %v5199 = vadd.f32 %v5198, %v4441
  %v5200 = vadd.f32 %v5199, %v4442
  %v5201 = vadd.f32 %v5200, %v4443
  %v5202 = vadd.f32 %v5201, %v4444
  %v5203 = vadd.f32 %v5202, %v4445
  %v5204 = vadd.f32 %v5203, %v4446
  %v5205 = vadd.f32 %v5204, %v4447
  %5206 = vadd.xlane.f32.xlu0 %v5205
  %v5207 = vpop.xlane.xlu0 %5206
  %v5208 = vadd.f32 %v4448, %v4449
  %v5209 = vadd.f32 %v5208, %v4450
  %v5210 = vadd.f32 %v5209, %v4451
  %v5211 = vadd.f32 %v5210, %v4452
  %v5212 = vadd.f32 %v5211, %v4453
  %v5213 = vadd.f32 %v5212, %v4454
  %v5214 = vadd.f32 %v5213, %v4455
  %v5215 = vadd.f32 %v5214, %v4456
  %v5216 = vadd.f32 %v5215, %v4457
  %v5217 = vadd.f32 %v5216, %v4458
  %v5218 = vadd.f32 %v5217, %v4459
  %v5219 = vadd.f32 %v5218, %v4460
  %v5220 = vadd.f32 %v5219, %v4461
  %v5221 = vadd.f32 %v5220, %v4462
  %v5222 = vadd.f32 %v5221, %v4463
  %v5223 = vadd.f32 %v5222, %v4464
  %v5224 = vadd.f32 %v5223, %v4465
  %v5225 = vadd.f32 %v5224, %v4466
  %v5226 = vadd.f32 %v5225, %v4467
  %v5227 = vadd.f32 %v5226, %v4468
  %v5228 = vadd.f32 %v5227, %v4469
  %v5229 = vadd.f32 %v5228, %v4470
  %v5230 = vadd.f32 %v5229, %v4471
  %v5231 = vadd.f32 %v5230, %v4472
  %5232 = vadd.xlane.f32.xlu0 %v5231
  %v5233 = vpop.xlane.xlu0 %5232
  %v5234 = vadd.f32 %v4473, %v4474
  %v5235 = vadd.f32 %v5234, %v4475
  %v5236 = vadd.f32 %v5235, %v4476
  %v5237 = vadd.f32 %v5236, %v4477
  %v5238 = vadd.f32 %v5237, %v4478
  %v5239 = vadd.f32 %v5238, %v4479
  %v5240 = vadd.f32 %v5239, %v4480
  %v5241 = vadd.f32 %v5240, %v4481
  %v5242 = vadd.f32 %v5241, %v4482
  %v5243 = vadd.f32 %v5242, %v4483
  %v5244 = vadd.f32 %v5243, %v4484
  %v5245 = vadd.f32 %v5244, %v4485
  %v5246 = vadd.f32 %v5245, %v4486
  %v5247 = vadd.f32 %v5246, %v4487
  %v5248 = vadd.f32 %v5247, %v4488
  %v5249 = vadd.f32 %v5248, %v4489
  %v5250 = vadd.f32 %v5249, %v4490
  %v5251 = vadd.f32 %v5250, %v4491
  %v5252 = vadd.f32 %v5251, %v4492
  %v5253 = vadd.f32 %v5252, %v4493
  %v5254 = vadd.f32 %v5253, %v4494
  %v5255 = vadd.f32 %v5254, %v4495
  %v5256 = vadd.f32 %v5255, %v4496
  %v5257 = vadd.f32 %v5256, %v4497
  %5258 = vadd.xlane.f32.xlu0 %v5257
  %v5259 = vpop.xlane.xlu0 %5258
  %v5260 = vadd.f32 %v4498, %v4499
  %v5261 = vadd.f32 %v5260, %v4500
  %v5262 = vadd.f32 %v5261, %v4501
  %v5263 = vadd.f32 %v5262, %v4502
  %v5264 = vadd.f32 %v5263, %v4503
  %v5265 = vadd.f32 %v5264, %v4504
  %v5266 = vadd.f32 %v5265, %v4505
  %v5267 = vadd.f32 %v5266, %v4506
  %v5268 = vadd.f32 %v5267, %v4507
  %v5269 = vadd.f32 %v5268, %v4508
  %v5270 = vadd.f32 %v5269, %v4509
  %v5271 = vadd.f32 %v5270, %v4510
  %v5272 = vadd.f32 %v5271, %v4511
  %v5273 = vadd.f32 %v5272, %v4512
  %v5274 = vadd.f32 %v5273, %v4513
  %v5275 = vadd.f32 %v5274, %v4514
  %v5276 = vadd.f32 %v5275, %v4515
  %v5277 = vadd.f32 %v5276, %v4516
  %v5278 = vadd.f32 %v5277, %v4517
  %v5279 = vadd.f32 %v5278, %v4518
  %v5280 = vadd.f32 %v5279, %v4519
  %v5281 = vadd.f32 %v5280, %v4520
  %v5282 = vadd.f32 %v5281, %v4521
  %v5283 = vadd.f32 %v5282, %v4522
  %5284 = vadd.xlane.f32.xlu0 %v5283
  %v5285 = vpop.xlane.xlu0 %5284
  %v5286 = vadd.f32 %v4523, %v4524
  %v5287 = vadd.f32 %v5286, %v4525
  %v5288 = vadd.f32 %v5287, %v4526
  %v5289 = vadd.f32 %v5288, %v4527
  %v5290 = vadd.f32 %v5289, %v4528
  %v5291 = vadd.f32 %v5290, %v4529
  %v5292 = vadd.f32 %v5291, %v4530
  %v5293 = vadd.f32 %v5292, %v4531
  %v5294 = vadd.f32 %v5293, %v4532
  %v5295 = vadd.f32 %v5294, %v4533
  %v5296 = vadd.f32 %v5295, %v4534
  %v5297 = vadd.f32 %v5296, %v4535
  %v5298 = vadd.f32 %v5297, %v4536
  %v5299 = vadd.f32 %v5298, %v4537
  %v5300 = vadd.f32 %v5299, %v4538
  %v5301 = vadd.f32 %v5300, %v4539
  %v5302 = vadd.f32 %v5301, %v4540
  %v5303 = vadd.f32 %v5302, %v4541
  %v5304 = vadd.f32 %v5303, %v4542
  %v5305 = vadd.f32 %v5304, %v4543
  %v5306 = vadd.f32 %v5305, %v4544
  %v5307 = vadd.f32 %v5306, %v4545
  %v5308 = vadd.f32 %v5307, %v4546
  %v5309 = vadd.f32 %v5308, %v4547
  %5310 = vadd.xlane.f32.xlu0 %v5309
  %v5311 = vpop.xlane.xlu0 %5310
  %v5312 = vadd.f32 %v4548, %v4549
  %v5313 = vadd.f32 %v5312, %v4550
  %v5314 = vadd.f32 %v5313, %v4551
  %v5315 = vadd.f32 %v5314, %v4552
  %v5316 = vadd.f32 %v5315, %v4553
  %v5317 = vadd.f32 %v5316, %v4554
  %v5318 = vadd.f32 %v5317, %v4555
  %v5319 = vadd.f32 %v5318, %v4556
  %v5320 = vadd.f32 %v5319, %v4557
  %v5321 = vadd.f32 %v5320, %v4558
  %v5322 = vadd.f32 %v5321, %v4559
  %v5323 = vadd.f32 %v5322, %v4560
  %v5324 = vadd.f32 %v5323, %v4561
  %v5325 = vadd.f32 %v5324, %v4562
  %v5326 = vadd.f32 %v5325, %v4563
  %v5327 = vadd.f32 %v5326, %v4564
  %v5328 = vadd.f32 %v5327, %v4565
  %v5329 = vadd.f32 %v5328, %v4566
  %v5330 = vadd.f32 %v5329, %v4567
  %v5331 = vadd.f32 %v5330, %v4568
  %v5332 = vadd.f32 %v5331, %v4569
  %v5333 = vadd.f32 %v5332, %v4570
  %v5334 = vadd.f32 %v5333, %v4571
  %v5335 = vadd.f32 %v5334, %v4572
  %5336 = vadd.xlane.f32.xlu0 %v5335
  %v5337 = vpop.xlane.xlu0 %5336
  %v5338 = vadd.f32 %v4573, %v4574
  %v5339 = vadd.f32 %v5338, %v4575
  %v5340 = vadd.f32 %v5339, %v4576
  %v5341 = vadd.f32 %v5340, %v4577
  %v5342 = vadd.f32 %v5341, %v4578
  %v5343 = vadd.f32 %v5342, %v4579
  %v5344 = vadd.f32 %v5343, %v4580
  %v5345 = vadd.f32 %v5344, %v4581
  %v5346 = vadd.f32 %v5345, %v4582
  %v5347 = vadd.f32 %v5346, %v4583
  %v5348 = vadd.f32 %v5347, %v4584
  %v5349 = vadd.f32 %v5348, %v4585
  %v5350 = vadd.f32 %v5349, %v4586
  %v5351 = vadd.f32 %v5350, %v4587
  %v5352 = vadd.f32 %v5351, %v4588
  %v5353 = vadd.f32 %v5352, %v4589
  %v5354 = vadd.f32 %v5353, %v4590
  %v5355 = vadd.f32 %v5354, %v4591
  %v5356 = vadd.f32 %v5355, %v4592
  %v5357 = vadd.f32 %v5356, %v4593
  %v5358 = vadd.f32 %v5357, %v4594
  %v5359 = vadd.f32 %v5358, %v4595
  %v5360 = vadd.f32 %v5359, %v4596
  %v5361 = vadd.f32 %v5360, %v4597
  %5362 = vadd.xlane.f32.xlu0 %v5361
  %v5363 = vpop.xlane.xlu0 %5362
  %v5364 = vadd.f32 %v4598, %v4599
  %v5365 = vadd.f32 %v5364, %v4600
  %v5366 = vadd.f32 %v5365, %v4601
  %v5367 = vadd.f32 %v5366, %v4602
  %v5368 = vadd.f32 %v5367, %v4603
  %v5369 = vadd.f32 %v5368, %v4604
  %v5370 = vadd.f32 %v5369, %v4605
  %v5371 = vadd.f32 %v5370, %v4606
  %v5372 = vadd.f32 %v5371, %v4607
  %v5373 = vadd.f32 %v5372, %v4608
  %v5374 = vadd.f32 %v5373, %v4609
  %v5375 = vadd.f32 %v5374, %v4610
  %v5376 = vadd.f32 %v5375, %v4611
  %v5377 = vadd.f32 %v5376, %v4612
  %v5378 = vadd.f32 %v5377, %v4613
  %v5379 = vadd.f32 %v5378, %v4614
  %v5380 = vadd.f32 %v5379, %v4615
  %v5381 = vadd.f32 %v5380, %v4616
  %v5382 = vadd.f32 %v5381, %v4617
  %v5383 = vadd.f32 %v5382, %v4618
  %v5384 = vadd.f32 %v5383, %v4619
  %v5385 = vadd.f32 %v5384, %v4620
  %v5386 = vadd.f32 %v5385, %v4621
  %v5387 = vadd.f32 %v5386, %v4622
  %5388 = vadd.xlane.f32.xlu0 %v5387
  %v5389 = vpop.xlane.xlu0 %5388
  %v5390 = vadd.f32 %v4623, %v4624
  %v5391 = vadd.f32 %v5390, %v4625
  %v5392 = vadd.f32 %v5391, %v4626
  %v5393 = vadd.f32 %v5392, %v4627
  %v5394 = vadd.f32 %v5393, %v4628
  %v5395 = vadd.f32 %v5394, %v4629
  %v5396 = vadd.f32 %v5395, %v4630
  %v5397 = vadd.f32 %v5396, %v4631
  %v5398 = vadd.f32 %v5397, %v4632
  %v5399 = vadd.f32 %v5398, %v4633
  %v5400 = vadd.f32 %v5399, %v4634
  %v5401 = vadd.f32 %v5400, %v4635
  %v5402 = vadd.f32 %v5401, %v4636
  %v5403 = vadd.f32 %v5402, %v4637
  %v5404 = vadd.f32 %v5403, %v4638
  %v5405 = vadd.f32 %v5404, %v4639
  %v5406 = vadd.f32 %v5405, %v4640
  %v5407 = vadd.f32 %v5406, %v4641
  %v5408 = vadd.f32 %v5407, %v4642
  %v5409 = vadd.f32 %v5408, %v4643
  %v5410 = vadd.f32 %v5409, %v4644
  %v5411 = vadd.f32 %v5410, %v4645
  %v5412 = vadd.f32 %v5411, %v4646
  %v5413 = vadd.f32 %v5412, %v4647
  %5414 = vadd.xlane.f32.xlu0 %v5413
  %v5415 = vpop.xlane.xlu0 %5414
  %v5416 = vadd.f32 %v4648, %v4649
  %v5417 = vadd.f32 %v5416, %v4650
  %v5418 = vadd.f32 %v5417, %v4651
  %v5419 = vadd.f32 %v5418, %v4652
  %v5420 = vadd.f32 %v5419, %v4653
  %v5421 = vadd.f32 %v5420, %v4654
  %v5422 = vadd.f32 %v5421, %v4655
  %v5423 = vadd.f32 %v5422, %v4656
  %v5424 = vadd.f32 %v5423, %v4657
  %v5425 = vadd.f32 %v5424, %v4658
  %v5426 = vadd.f32 %v5425, %v4659
  %v5427 = vadd.f32 %v5426, %v4660
  %v5428 = vadd.f32 %v5427, %v4661
  %v5429 = vadd.f32 %v5428, %v4662
  %v5430 = vadd.f32 %v5429, %v4663
  %v5431 = vadd.f32 %v5430, %v4664
  %v5432 = vadd.f32 %v5431, %v4665
  %v5433 = vadd.f32 %v5432, %v4666
  %v5434 = vadd.f32 %v5433, %v4667
  %v5435 = vadd.f32 %v5434, %v4668
  %v5436 = vadd.f32 %v5435, %v4669
  %v5437 = vadd.f32 %v5436, %v4670
  %v5438 = vadd.f32 %v5437, %v4671
  %v5439 = vadd.f32 %v5438, %v4672
  %5440 = vadd.xlane.f32.xlu0 %v5439
  %v5441 = vpop.xlane.xlu0 %5440
  %v5442 = vadd.f32 %v4673, %v4674
  %v5443 = vadd.f32 %v5442, %v4675
  %v5444 = vadd.f32 %v5443, %v4676
  %v5445 = vadd.f32 %v5444, %v4677
  %v5446 = vadd.f32 %v5445, %v4678
  %v5447 = vadd.f32 %v5446, %v4679
  %v5448 = vadd.f32 %v5447, %v4680
  %v5449 = vadd.f32 %v5448, %v4681
  %v5450 = vadd.f32 %v5449, %v4682
  %v5451 = vadd.f32 %v5450, %v4683
  %v5452 = vadd.f32 %v5451, %v4684
  %v5453 = vadd.f32 %v5452, %v4685
  %v5454 = vadd.f32 %v5453, %v4686
  %v5455 = vadd.f32 %v5454, %v4687
  %v5456 = vadd.f32 %v5455, %v4688
  %v5457 = vadd.f32 %v5456, %v4689
  %v5458 = vadd.f32 %v5457, %v4690
  %v5459 = vadd.f32 %v5458, %v4691
  %v5460 = vadd.f32 %v5459, %v4692
  %v5461 = vadd.f32 %v5460, %v4693
  %v5462 = vadd.f32 %v5461, %v4694
  %v5463 = vadd.f32 %v5462, %v4695
  %v5464 = vadd.f32 %v5463, %v4696
  %v5465 = vadd.f32 %v5464, %v4697
  %5466 = vadd.xlane.f32.xlu0 %v5465
  %v5467 = vpop.xlane.xlu0 %5466
  %v5468 = vadd.f32 %v4698, %v4699
  %v5469 = vadd.f32 %v5468, %v4700
  %v5470 = vadd.f32 %v5469, %v4701
  %v5471 = vadd.f32 %v5470, %v4702
  %v5472 = vadd.f32 %v5471, %v4703
  %v5473 = vadd.f32 %v5472, %v4704
  %v5474 = vadd.f32 %v5473, %v4705
  %v5475 = vadd.f32 %v5474, %v4706
  %v5476 = vadd.f32 %v5475, %v4707
  %v5477 = vadd.f32 %v5476, %v4708
  %v5478 = vadd.f32 %v5477, %v4709
  %v5479 = vadd.f32 %v5478, %v4710
  %v5480 = vadd.f32 %v5479, %v4711
  %v5481 = vadd.f32 %v5480, %v4712
  %v5482 = vadd.f32 %v5481, %v4713
  %v5483 = vadd.f32 %v5482, %v4714
  %v5484 = vadd.f32 %v5483, %v4715
  %v5485 = vadd.f32 %v5484, %v4716
  %v5486 = vadd.f32 %v5485, %v4717
  %v5487 = vadd.f32 %v5486, %v4718
  %v5488 = vadd.f32 %v5487, %v4719
  %v5489 = vadd.f32 %v5488, %v4720
  %v5490 = vadd.f32 %v5489, %v4721
  %v5491 = vadd.f32 %v5490, %v4722
  %5492 = vadd.xlane.f32.xlu0 %v5491
  %v5493 = vpop.xlane.xlu0 %5492
  %v5494 = vadd.f32 %v4723, %v4724
  %v5495 = vadd.f32 %v5494, %v4725
  %v5496 = vadd.f32 %v5495, %v4726
  %v5497 = vadd.f32 %v5496, %v4727
  %v5498 = vadd.f32 %v5497, %v4728
  %v5499 = vadd.f32 %v5498, %v4729
  %v5500 = vadd.f32 %v5499, %v4730
  %v5501 = vadd.f32 %v5500, %v4731
  %v5502 = vadd.f32 %v5501, %v4732
  %v5503 = vadd.f32 %v5502, %v4733
  %v5504 = vadd.f32 %v5503, %v4734
  %v5505 = vadd.f32 %v5504, %v4735
  %v5506 = vadd.f32 %v5505, %v4736
  %v5507 = vadd.f32 %v5506, %v4737
  %v5508 = vadd.f32 %v5507, %v4738
  %v5509 = vadd.f32 %v5508, %v4739
  %v5510 = vadd.f32 %v5509, %v4740
  %v5511 = vadd.f32 %v5510, %v4741
  %v5512 = vadd.f32 %v5511, %v4742
  %v5513 = vadd.f32 %v5512, %v4743
  %v5514 = vadd.f32 %v5513, %v4744
  %v5515 = vadd.f32 %v5514, %v4745
  %v5516 = vadd.f32 %v5515, %v4746
  %v5517 = vadd.f32 %v5516, %v4747
  %5518 = vadd.xlane.f32.xlu0 %v5517
  %v5519 = vpop.xlane.xlu0 %5518
  %v5520 = vadd.f32 %v4748, %v4749
  %v5521 = vadd.f32 %v5520, %v4750
  %v5522 = vadd.f32 %v5521, %v4751
  %v5523 = vadd.f32 %v5522, %v4752
  %v5524 = vadd.f32 %v5523, %v4753
  %v5525 = vadd.f32 %v5524, %v4754
  %v5526 = vadd.f32 %v5525, %v4755
  %v5527 = vadd.f32 %v5526, %v4756
  %v5528 = vadd.f32 %v5527, %v4757
  %v5529 = vadd.f32 %v5528, %v4758
  %v5530 = vadd.f32 %v5529, %v4759
  %v5531 = vadd.f32 %v5530, %v4760
  %v5532 = vadd.f32 %v5531, %v4761
  %v5533 = vadd.f32 %v5532, %v4762
  %v5534 = vadd.f32 %v5533, %v4763
  %v5535 = vadd.f32 %v5534, %v4764
  %v5536 = vadd.f32 %v5535, %v4765
  %v5537 = vadd.f32 %v5536, %v4766
  %v5538 = vadd.f32 %v5537, %v4767
  %v5539 = vadd.f32 %v5538, %v4768
  %v5540 = vadd.f32 %v5539, %v4769
  %v5541 = vadd.f32 %v5540, %v4770
  %v5542 = vadd.f32 %v5541, %v4771
  %v5543 = vadd.f32 %v5542, %v4772
  %5544 = vadd.xlane.f32.xlu0 %v5543
  %v5545 = vpop.xlane.xlu0 %5544
  %v5546 = vadd.f32 %v4773, %v4774
  %v5547 = vadd.f32 %v5546, %v4775
  %v5548 = vadd.f32 %v5547, %v4776
  %v5549 = vadd.f32 %v5548, %v4777
  %v5550 = vadd.f32 %v5549, %v4778
  %v5551 = vadd.f32 %v5550, %v4779
  %v5552 = vadd.f32 %v5551, %v4780
  %v5553 = vadd.f32 %v5552, %v4781
  %v5554 = vadd.f32 %v5553, %v4782
  %v5555 = vadd.f32 %v5554, %v4783
  %v5556 = vadd.f32 %v5555, %v4784
  %v5557 = vadd.f32 %v5556, %v4785
  %v5558 = vadd.f32 %v5557, %v4786
  %v5559 = vadd.f32 %v5558, %v4787
  %v5560 = vadd.f32 %v5559, %v4788
  %v5561 = vadd.f32 %v5560, %v4789
  %v5562 = vadd.f32 %v5561, %v4790
  %v5563 = vadd.f32 %v5562, %v4791
  %v5564 = vadd.f32 %v5563, %v4792
  %v5565 = vadd.f32 %v5564, %v4793
  %v5566 = vadd.f32 %v5565, %v4794
  %v5567 = vadd.f32 %v5566, %v4795
  %v5568 = vadd.f32 %v5567, %v4796
  %v5569 = vadd.f32 %v5568, %v4797
  %5570 = vadd.xlane.f32.xlu0 %v5569
  %v5571 = vpop.xlane.xlu0 %5570
  %v5572 = vadd.f32 %v4798, %v4799
  %v5573 = vadd.f32 %v5572, %v4800
  %v5574 = vadd.f32 %v5573, %v4801
  %v5575 = vadd.f32 %v5574, %v4802
  %v5576 = vadd.f32 %v5575, %v4803
  %v5577 = vadd.f32 %v5576, %v4804
  %v5578 = vadd.f32 %v5577, %v4805
  %v5579 = vadd.f32 %v5578, %v4806
  %v5580 = vadd.f32 %v5579, %v4807
  %v5581 = vadd.f32 %v5580, %v4808
  %v5582 = vadd.f32 %v5581, %v4809
  %v5583 = vadd.f32 %v5582, %v4810
  %v5584 = vadd.f32 %v5583, %v4811
  %v5585 = vadd.f32 %v5584, %v4812
  %v5586 = vadd.f32 %v5585, %v4813
  %v5587 = vadd.f32 %v5586, %v4814
  %v5588 = vadd.f32 %v5587, %v4815
  %v5589 = vadd.f32 %v5588, %v4816
  %v5590 = vadd.f32 %v5589, %v4817
  %v5591 = vadd.f32 %v5590, %v4818
  %v5592 = vadd.f32 %v5591, %v4819
  %v5593 = vadd.f32 %v5592, %v4820
  %v5594 = vadd.f32 %v5593, %v4821
  %v5595 = vadd.f32 %v5594, %v4822
  %5596 = vadd.xlane.f32.xlu0 %v5595
  %v5597 = vpop.xlane.xlu0 %5596
  %v5598 = vadd.f32 %v4823, %v4824
  %v5599 = vadd.f32 %v5598, %v4825
  %v5600 = vadd.f32 %v5599, %v4826
  %v5601 = vadd.f32 %v5600, %v4827
  %v5602 = vadd.f32 %v5601, %v4828
  %v5603 = vadd.f32 %v5602, %v4829
  %v5604 = vadd.f32 %v5603, %v4830
  %v5605 = vadd.f32 %v5604, %v4831
  %v5606 = vadd.f32 %v5605, %v4832
  %v5607 = vadd.f32 %v5606, %v4833
  %v5608 = vadd.f32 %v5607, %v4834
  %v5609 = vadd.f32 %v5608, %v4835
  %v5610 = vadd.f32 %v5609, %v4836
  %v5611 = vadd.f32 %v5610, %v4837
  %v5612 = vadd.f32 %v5611, %v4838
  %v5613 = vadd.f32 %v5612, %v4839
  %v5614 = vadd.f32 %v5613, %v4840
  %v5615 = vadd.f32 %v5614, %v4841
  %v5616 = vadd.f32 %v5615, %v4842
  %v5617 = vadd.f32 %v5616, %v4843
  %v5618 = vadd.f32 %v5617, %v4844
  %v5619 = vadd.f32 %v5618, %v4845
  %v5620 = vadd.f32 %v5619, %v4846
  %v5621 = vadd.f32 %v5620, %v4847
  %5622 = vadd.xlane.f32.xlu0 %v5621
  %v5623 = vpop.xlane.xlu0 %5622
  %v5624 = vadd.f32 %v4848, %v4849
  %v5625 = vadd.f32 %v5624, %v4850
  %v5626 = vadd.f32 %v5625, %v4851
  %v5627 = vadd.f32 %v5626, %v4852
  %v5628 = vadd.f32 %v5627, %v4853
  %v5629 = vadd.f32 %v5628, %v4854
  %v5630 = vadd.f32 %v5629, %v4855
  %v5631 = vadd.f32 %v5630, %v4856
  %v5632 = vadd.f32 %v5631, %v4857
  %v5633 = vadd.f32 %v5632, %v4858
  %v5634 = vadd.f32 %v5633, %v4859
  %v5635 = vadd.f32 %v5634, %v4860
  %v5636 = vadd.f32 %v5635, %v4861
  %v5637 = vadd.f32 %v5636, %v4862
  %v5638 = vadd.f32 %v5637, %v4863
  %v5639 = vadd.f32 %v5638, %v4864
  %v5640 = vadd.f32 %v5639, %v4865
  %v5641 = vadd.f32 %v5640, %v4866
  %v5642 = vadd.f32 %v5641, %v4867
  %v5643 = vadd.f32 %v5642, %v4868
  %v5644 = vadd.f32 %v5643, %v4869
  %v5645 = vadd.f32 %v5644, %v4870
  %v5646 = vadd.f32 %v5645, %v4871
  %v5647 = vadd.f32 %v5646, %v4872
  %5648 = vadd.xlane.f32.xlu0 %v5647
  %v5649 = vpop.xlane.xlu0 %5648
  %v5650 = vadd.f32 %v4873, %v4874
  %v5651 = vadd.f32 %v5650, %v4875
  %v5652 = vadd.f32 %v5651, %v4876
  %v5653 = vadd.f32 %v5652, %v4877
  %v5654 = vadd.f32 %v5653, %v4878
  %v5655 = vadd.f32 %v5654, %v4879
  %v5656 = vadd.f32 %v5655, %v4880
  %v5657 = vadd.f32 %v5656, %v4881
  %v5658 = vadd.f32 %v5657, %v4882
  %v5659 = vadd.f32 %v5658, %v4883
  %v5660 = vadd.f32 %v5659, %v4884
  %v5661 = vadd.f32 %v5660, %v4885
  %v5662 = vadd.f32 %v5661, %v4886
  %v5663 = vadd.f32 %v5662, %v4887
  %v5664 = vadd.f32 %v5663, %v4888
  %v5665 = vadd.f32 %v5664, %v4889
  %v5666 = vadd.f32 %v5665, %v4890
  %v5667 = vadd.f32 %v5666, %v4891
  %v5668 = vadd.f32 %v5667, %v4892
  %v5669 = vadd.f32 %v5668, %v4893
  %v5670 = vadd.f32 %v5669, %v4894
  %v5671 = vadd.f32 %v5670, %v4895
  %v5672 = vadd.f32 %v5671, %v4896
  %v5673 = vadd.f32 %v5672, %v4897
  %5674 = vadd.xlane.f32.xlu0 %v5673
  %v5675 = vpop.xlane.xlu0 %5674
  %v5676 = vadd.f32 %v4898, %v4899
  %v5677 = vadd.f32 %v5676, %v4900
  %v5678 = vadd.f32 %v5677, %v4901
  %v5679 = vadd.f32 %v5678, %v4902
  %v5680 = vadd.f32 %v5679, %v4903
  %v5681 = vadd.f32 %v5680, %v4904
  %v5682 = vadd.f32 %v5681, %v4905
  %v5683 = vadd.f32 %v5682, %v4906
  %v5684 = vadd.f32 %v5683, %v4907
  %v5685 = vadd.f32 %v5684, %v4908
  %v5686 = vadd.f32 %v5685, %v4909
  %v5687 = vadd.f32 %v5686, %v4910
  %v5688 = vadd.f32 %v5687, %v4911
  %v5689 = vadd.f32 %v5688, %v4912
  %v5690 = vadd.f32 %v5689, %v4913
  %v5691 = vadd.f32 %v5690, %v4914
  %v5692 = vadd.f32 %v5691, %v4915
  %v5693 = vadd.f32 %v5692, %v4916
  %v5694 = vadd.f32 %v5693, %v4917
  %v5695 = vadd.f32 %v5694, %v4918
  %v5696 = vadd.f32 %v5695, %v4919
  %v5697 = vadd.f32 %v5696, %v4920
  %v5698 = vadd.f32 %v5697, %v4921
  %v5699 = vadd.f32 %v5698, %v4922
  %5700 = vadd.xlane.f32.xlu0 %v5699
  %v5701 = vpop.xlane.xlu0 %5700
  %v5702 = vadd.f32 %v4923, %v4924
  %v5703 = vadd.f32 %v5702, %v4925
  %v5704 = vadd.f32 %v5703, %v4926
  %v5705 = vadd.f32 %v5704, %v4927
  %v5706 = vadd.f32 %v5705, %v4928
  %v5707 = vadd.f32 %v5706, %v4929
  %v5708 = vadd.f32 %v5707, %v4930
  %v5709 = vadd.f32 %v5708, %v4931
  %v5710 = vadd.f32 %v5709, %v4932
  %v5711 = vadd.f32 %v5710, %v4933
  %v5712 = vadd.f32 %v5711, %v4934
  %v5713 = vadd.f32 %v5712, %v4935
  %v5714 = vadd.f32 %v5713, %v4936
  %v5715 = vadd.f32 %v5714, %v4937
  %v5716 = vadd.f32 %v5715, %v4938
  %v5717 = vadd.f32 %v5716, %v4939
  %v5718 = vadd.f32 %v5717, %v4940
  %v5719 = vadd.f32 %v5718, %v4941
  %v5720 = vadd.f32 %v5719, %v4942
  %v5721 = vadd.f32 %v5720, %v4943
  %v5722 = vadd.f32 %v5721, %v4944
  %v5723 = vadd.f32 %v5722, %v4945
  %v5724 = vadd.f32 %v5723, %v4946
  %v5725 = vadd.f32 %v5724, %v4947
  %5726 = vadd.xlane.f32.xlu0 %v5725
  %v5727 = vpop.xlane.xlu0 %5726
  %v5728 = vmul.f32 %v3443, 0.00031887754
  %v5729 = vmul.f32 %v3469, 0.00031887754
  %v5730 = vmul.f32 %v3495, 0.00031887754
  %v5731 = vmul.f32 %v3521, 0.00031887754
  %v5732 = vmul.f32 %v3547, 0.00031887754
  %v5733 = vmul.f32 %v3573, 0.00031887754
  %v5734 = vmul.f32 %v3599, 0.00031887754
  %v5735 = vmul.f32 %v3625, 0.00031887754
  %v5736 = vmul.f32 %v3651, 0.00031887754
  %v5737 = vmul.f32 %v3677, 0.00031887754
  %v5738 = vmul.f32 %v3703, 0.00031887754
  %v5739 = vmul.f32 %v3729, 0.00031887754
  %v5740 = vmul.f32 %v3755, 0.00031887754
  %v5741 = vmul.f32 %v3781, 0.00031887754
  %v5742 = vmul.f32 %v3807, 0.00031887754
  %v5743 = vmul.f32 %v3833, 0.00031887754
  %v5744 = vmul.f32 %v3859, 0.00031887754
  %v5745 = vmul.f32 %v3885, 0.00031887754
  %v5746 = vmul.f32 %v3911, 0.00031887754
  %v5747 = vmul.f32 %v3937, 0.00031887754
  %v5748 = vmul.f32 %v3963, 0.00031887754
  %v5749 = vmul.f32 %v3989, 0.00031887754
  %v5750 = vmul.f32 %v4015, 0.00031887754
  %v5751 = vmul.f32 %v4041, 0.00031887754
  %v5752 = vmul.f32 %v4067, 0.00031887754
  %v5753 = vmul.f32 %v4093, 0.00031887754
  %v5754 = vmul.f32 %v4119, 0.00031887754
  %v5755 = vmul.f32 %v4145, 0.00031887754
  %v5756 = vmul.f32 %v4171, 0.00031887754
  %v5757 = vmul.f32 %v4197, 0.00031887754
  %v5758 = vmul.f32 %v4973, 0.00031887754
  %v5759 = vmul.f32 %v4999, 0.00031887754
  %v5760 = vmul.f32 %v5025, 0.00031887754
  %v5761 = vmul.f32 %v5051, 0.00031887754
  %v5762 = vmul.f32 %v5077, 0.00031887754
  %v5763 = vmul.f32 %v5103, 0.00031887754
  %v5764 = vmul.f32 %v5129, 0.00031887754
  %v5765 = vmul.f32 %v5155, 0.00031887754
  %v5766 = vmul.f32 %v5181, 0.00031887754
  %v5767 = vmul.f32 %v5207, 0.00031887754
  %v5768 = vmul.f32 %v5233, 0.00031887754
  %v5769 = vmul.f32 %v5259, 0.00031887754
  %v5770 = vmul.f32 %v5285, 0.00031887754
  %v5771 = vmul.f32 %v5311, 0.00031887754
  %v5772 = vmul.f32 %v5337, 0.00031887754
  %v5773 = vmul.f32 %v5363, 0.00031887754
  %v5774 = vmul.f32 %v5389, 0.00031887754
  %v5775 = vmul.f32 %v5415, 0.00031887754
  %v5776 = vmul.f32 %v5441, 0.00031887754
  %v5777 = vmul.f32 %v5467, 0.00031887754
  %v5778 = vmul.f32 %v5493, 0.00031887754
  %v5779 = vmul.f32 %v5519, 0.00031887754
  %v5780 = vmul.f32 %v5545, 0.00031887754
  %v5781 = vmul.f32 %v5571, 0.00031887754
  %v5782 = vmul.f32 %v5597, 0.00031887754
  %v5783 = vmul.f32 %v5623, 0.00031887754
  %v5784 = vmul.f32 %v5649, 0.00031887754
  %v5785 = vmul.f32 %v5675, 0.00031887754
  %v5786 = vmul.f32 %v5701, 0.00031887754
  %v5787 = vmul.f32 %v5727, 0.00031887754
  %v5788 = vmul.f32 %v5728, %v5728
  %v5789 = vmul.f32 %v5729, %v5729
  %v5790 = vmul.f32 %v5730, %v5730
  %v5791 = vmul.f32 %v5731, %v5731
  %v5792 = vmul.f32 %v5732, %v5732
  %v5793 = vmul.f32 %v5733, %v5733
  %v5794 = vmul.f32 %v5734, %v5734
  %v5795 = vmul.f32 %v5735, %v5735
  %v5796 = vmul.f32 %v5736, %v5736
  %v5797 = vmul.f32 %v5737, %v5737
  %v5798 = vmul.f32 %v5738, %v5738
  %v5799 = vmul.f32 %v5739, %v5739
  %v5800 = vmul.f32 %v5740, %v5740
  %v5801 = vmul.f32 %v5741, %v5741
  %v5802 = vmul.f32 %v5742, %v5742
  %v5803 = vmul.f32 %v5743, %v5743
  %v5804 = vmul.f32 %v5744, %v5744
  %v5805 = vmul.f32 %v5745, %v5745
  %v5806 = vmul.f32 %v5746, %v5746
  %v5807 = vmul.f32 %v5747, %v5747
  %v5808 = vmul.f32 %v5748, %v5748
  %v5809 = vmul.f32 %v5749, %v5749
  %v5810 = vmul.f32 %v5750, %v5750
  %v5811 = vmul.f32 %v5751, %v5751
  %v5812 = vmul.f32 %v5752, %v5752
  %v5813 = vmul.f32 %v5753, %v5753
  %v5814 = vmul.f32 %v5754, %v5754
  %v5815 = vmul.f32 %v5755, %v5755
  %v5816 = vmul.f32 %v5756, %v5756
  %v5817 = vmul.f32 %v5757, %v5757
  %v5818 = vsub.f32 %v5758, %v5788
  %v5819 = vsub.f32 %v5759, %v5789
  %v5820 = vsub.f32 %v5760, %v5790
  %v5821 = vsub.f32 %v5761, %v5791
  %v5822 = vsub.f32 %v5762, %v5792
  %v5823 = vsub.f32 %v5763, %v5793
  %v5824 = vsub.f32 %v5764, %v5794
  %v5825 = vsub.f32 %v5765, %v5795
  %v5826 = vsub.f32 %v5766, %v5796
  %v5827 = vsub.f32 %v5767, %v5797
  %v5828 = vsub.f32 %v5768, %v5798
  %v5829 = vsub.f32 %v5769, %v5799
  %v5830 = vsub.f32 %v5770, %v5800
  %v5831 = vsub.f32 %v5771, %v5801
  %v5832 = vsub.f32 %v5772, %v5802
  %v5833 = vsub.f32 %v5773, %v5803
  %v5834 = vsub.f32 %v5774, %v5804
  %v5835 = vsub.f32 %v5775, %v5805
  %v5836 = vsub.f32 %v5776, %v5806
  %v5837 = vsub.f32 %v5777, %v5807
  %v5838 = vsub.f32 %v5778, %v5808
  %v5839 = vsub.f32 %v5779, %v5809
  %v5840 = vsub.f32 %v5780, %v5810
  %v5841 = vsub.f32 %v5781, %v5811
  %v5842 = vsub.f32 %v5782, %v5812
  %v5843 = vsub.f32 %v5783, %v5813
  %v5844 = vsub.f32 %v5784, %v5814
  %v5845 = vsub.f32 %v5785, %v5815
  %v5846 = vsub.f32 %v5786, %v5816
  %v5847 = vsub.f32 %v5787, %v5817
  %v5848 = vmax.f32 %v5818, 0.0
  %v5849 = vmax.f32 %v5819, 0.0
  %v5850 = vmax.f32 %v5820, 0.0
  %v5851 = vmax.f32 %v5821, 0.0
  %v5852 = vmax.f32 %v5822, 0.0
  %v5853 = vmax.f32 %v5823, 0.0
  %v5854 = vmax.f32 %v5824, 0.0
  %v5855 = vmax.f32 %v5825, 0.0
  %v5856 = vmax.f32 %v5826, 0.0
  %v5857 = vmax.f32 %v5827, 0.0
  %v5858 = vmax.f32 %v5828, 0.0
  %v5859 = vmax.f32 %v5829, 0.0
  %v5860 = vmax.f32 %v5830, 0.0
  %v5861 = vmax.f32 %v5831, 0.0
  %v5862 = vmax.f32 %v5832, 0.0
  %v5863 = vmax.f32 %v5833, 0.0
  %v5864 = vmax.f32 %v5834, 0.0
  %v5865 = vmax.f32 %v5835, 0.0
  %v5866 = vmax.f32 %v5836, 0.0
  %v5867 = vmax.f32 %v5837, 0.0
  %v5868 = vmax.f32 %v5838, 0.0
  %v5869 = vmax.f32 %v5839, 0.0
  %v5870 = vmax.f32 %v5840, 0.0
  %v5871 = vmax.f32 %v5841, 0.0
  %v5872 = vmax.f32 %v5842, 0.0
  %v5873 = vmax.f32 %v5843, 0.0
  %v5874 = vmax.f32 %v5844, 0.0
  %v5875 = vmax.f32 %v5845, 0.0
  %v5876 = vmax.f32 %v5846, 0.0
  %v5877 = vmax.f32 %v5847, 0.0
  %v5878 = vadd.f32 %v5848, 0.001
  %v5879 = vadd.f32 %v5849, 0.001
  %v5880 = vadd.f32 %v5850, 0.001
  %v5881 = vadd.f32 %v5851, 0.001
  %v5882 = vadd.f32 %v5852, 0.001
  %v5883 = vadd.f32 %v5853, 0.001
  %v5884 = vadd.f32 %v5854, 0.001
  %v5885 = vadd.f32 %v5855, 0.001
  %v5886 = vadd.f32 %v5856, 0.001
  %v5887 = vadd.f32 %v5857, 0.001
  %v5888 = vadd.f32 %v5858, 0.001
  %v5889 = vadd.f32 %v5859, 0.001
  %v5890 = vadd.f32 %v5860, 0.001
  %v5891 = vadd.f32 %v5861, 0.001
  %v5892 = vadd.f32 %v5862, 0.001
  %v5893 = vadd.f32 %v5863, 0.001
  %v5894 = vadd.f32 %v5864, 0.001
  %v5895 = vadd.f32 %v5865, 0.001
  %v5896 = vadd.f32 %v5866, 0.001
  %v5897 = vadd.f32 %v5867, 0.001
  %v5898 = vadd.f32 %v5868, 0.001
  %v5899 = vadd.f32 %v5869, 0.001
  %v5900 = vadd.f32 %v5870, 0.001
  %v5901 = vadd.f32 %v5871, 0.001
  %v5902 = vadd.f32 %v5872, 0.001
  %v5903 = vadd.f32 %v5873, 0.001
  %v5904 = vadd.f32 %v5874, 0.001
  %v5905 = vadd.f32 %v5875, 0.001
  %v5906 = vadd.f32 %v5876, 0.001
  %v5907 = vadd.f32 %v5877, 0.001
  %v5908 = vrsqrt.pop %v5878
  %v5909 = vrsqrt.pop %v5879
  %v5910 = vrsqrt.pop %v5880
  %v5911 = vrsqrt.pop %v5881
  %v5912 = vrsqrt.pop %v5882
  %v5913 = vrsqrt.pop %v5883
  %v5914 = vrsqrt.pop %v5884
  %v5915 = vrsqrt.pop %v5885
  %v5916 = vrsqrt.pop %v5886
  %v5917 = vrsqrt.pop %v5887
  %v5918 = vrsqrt.pop %v5888
  %v5919 = vrsqrt.pop %v5889
  %v5920 = vrsqrt.pop %v5890
  %v5921 = vrsqrt.pop %v5891
  %v5922 = vrsqrt.pop %v5892
  %v5923 = vrsqrt.pop %v5893
  %v5924 = vrsqrt.pop %v5894
  %v5925 = vrsqrt.pop %v5895
  %v5926 = vrsqrt.pop %v5896
  %v5927 = vrsqrt.pop %v5897
  %v5928 = vrsqrt.pop %v5898
  %v5929 = vrsqrt.pop %v5899
  %v5930 = vrsqrt.pop %v5900
  %v5931 = vrsqrt.pop %v5901
  %v5932 = vrsqrt.pop %v5902
  %v5933 = vrsqrt.pop %v5903
  %v5934 = vrsqrt.pop %v5904
  %v5935 = vrsqrt.pop %v5905
  %v5936 = vrsqrt.pop %v5906
  %v5937 = vrsqrt.pop %v5907
  %v5938 = vld [vmem:[%s2] sm:$0xff]
  %v5939 = vld [vmem:[%s2 + $0x8] sm:$0xff]
  %v5940 = vld [vmem:[%s2 + $0x10] sm:$0xff]
  %v5941 = vld [vmem:[%s2 + $0x18] sm:$0xff]
  %v5942 = vld [vmem:[%s2 + $0x20] sm:$0xff]
  %v5943 = vld [vmem:[%s2 + $0x28] sm:$0xff]
  %v5944 = vld [vmem:[%s2 + $0x30] sm:$0xff]
  %v5945 = vld [vmem:[%s2 + $0x38] sm:$0xff]
  %v5946 = vld [vmem:[%s2 + $0x40] sm:$0xff]
  %v5947 = vld [vmem:[%s2 + $0x48] sm:$0xff]
  %v5948 = vld [vmem:[%s2 + $0x50] sm:$0xff]
  %v5949 = vld [vmem:[%s2 + $0x58] sm:$0xff]
  %v5950 = vld [vmem:[%s2 + $0x60] sm:$0xff]
  %v5951 = vld [vmem:[%s2 + $0x68] sm:$0xff]
  %v5952 = vld [vmem:[%s2 + $0x70] sm:$0xff]
  %v5953 = vld [vmem:[%s2 + $0x78] sm:$0xff]
  %v5954 = vld [vmem:[%s2 + $0x80] sm:$0xff]
  %v5955 = vld [vmem:[%s2 + $0x88] sm:$0xff]
  %v5956 = vld [vmem:[%s2 + $0x90] sm:$0xff]
  %v5957 = vld [vmem:[%s2 + $0x98] sm:$0xff]
  %v5958 = vld [vmem:[%s2 + $0xa0] sm:$0xff]
  %v5959 = vld [vmem:[%s2 + $0xa8] sm:$0xff]
  %v5960 = vld [vmem:[%s2 + $0xb0] sm:$0xff]
  %v5961 = vld [vmem:[%s2 + $0xb8] sm:$0xff]
  %v5962 = vld [vmem:[%s2 + $0xc0] sm:$0xff]
  %v5963 = vld [vmem:[%s2 + $0xc8] sm:$0xff]
  %v5964 = vld [vmem:[%s2 + $0xd0] sm:$0xff]
  %v5965 = vld [vmem:[%s2 + $0xd8] sm:$0xff]
  %v5966 = vld [vmem:[%s2 + $0xe0] sm:$0xff]
  %v5967 = vld [vmem:[%s2 + $0xe8] sm:$0xff]
  %v5968 = vmul.f32 %v5938, %v5908
  %v5969 = vmul.f32 %v5939, %v5909
  %v5970 = vmul.f32 %v5940, %v5910
  %v5971 = vmul.f32 %v5941, %v5911
  %v5972 = vmul.f32 %v5942, %v5912
  %v5973 = vmul.f32 %v5943, %v5913
  %v5974 = vmul.f32 %v5944, %v5914
  %v5975 = vmul.f32 %v5945, %v5915
  %v5976 = vmul.f32 %v5946, %v5916
  %v5977 = vmul.f32 %v5947, %v5917
  %v5978 = vmul.f32 %v5948, %v5918
  %v5979 = vmul.f32 %v5949, %v5919
  %v5980 = vmul.f32 %v5950, %v5920
  %v5981 = vmul.f32 %v5951, %v5921
  %v5982 = vmul.f32 %v5952, %v5922
  %v5983 = vmul.f32 %v5953, %v5923
  %v5984 = vmul.f32 %v5954, %v5924
  %v5985 = vmul.f32 %v5955, %v5925
  %v5986 = vmul.f32 %v5956, %v5926
  %v5987 = vmul.f32 %v5957, %v5927
  %v5988 = vmul.f32 %v5958, %v5928
  %v5989 = vmul.f32 %v5959, %v5929
  %v5990 = vmul.f32 %v5960, %v5930
  %v5991 = vmul.f32 %v5961, %v5931
  %v5992 = vmul.f32 %v5962, %v5932
  %v5993 = vmul.f32 %v5963, %v5933
  %v5994 = vmul.f32 %v5964, %v5934
  %v5995 = vmul.f32 %v5965, %v5935
  %v5996 = vmul.f32 %v5966, %v5936
  %v5997 = vmul.f32 %v5967, %v5937
  %v5998 = vld [vmem:[%s3] sm:$0xff]
  %v5999 = vld [vmem:[%s3 + $0x8] sm:$0xff]
  %v6000 = vld [vmem:[%s3 + $0x10] sm:$0xff]
  %v6001 = vld [vmem:[%s3 + $0x18] sm:$0xff]
  %v6002 = vld [vmem:[%s3 + $0x20] sm:$0xff]
  %v6003 = vld [vmem:[%s3 + $0x28] sm:$0xff]
  %v6004 = vld [vmem:[%s3 + $0x30] sm:$0xff]
  %v6005 = vld [vmem:[%s3 + $0x38] sm:$0xff]
  %v6006 = vld [vmem:[%s3 + $0x40] sm:$0xff]
  %v6007 = vld [vmem:[%s3 + $0x48] sm:$0xff]
  %v6008 = vld [vmem:[%s3 + $0x50] sm:$0xff]
  %v6009 = vld [vmem:[%s3 + $0x58] sm:$0xff]
  %v6010 = vld [vmem:[%s3 + $0x60] sm:$0xff]
  %v6011 = vld [vmem:[%s3 + $0x68] sm:$0xff]
  %v6012 = vld [vmem:[%s3 + $0x70] sm:$0xff]
  %v6013 = vld [vmem:[%s3 + $0x78] sm:$0xff]
  %v6014 = vld [vmem:[%s3 + $0x80] sm:$0xff]
  %v6015 = vld [vmem:[%s3 + $0x88] sm:$0xff]
  %v6016 = vld [vmem:[%s3 + $0x90] sm:$0xff]
  %v6017 = vld [vmem:[%s3 + $0x98] sm:$0xff]
  %v6018 = vld [vmem:[%s3 + $0xa0] sm:$0xff]
  %v6019 = vld [vmem:[%s3 + $0xa8] sm:$0xff]
  %v6020 = vld [vmem:[%s3 + $0xb0] sm:$0xff]
  %v6021 = vld [vmem:[%s3 + $0xb8] sm:$0xff]
  %v6022 = vld [vmem:[%s3 + $0xc0] sm:$0xff]
  %v6023 = vld [vmem:[%s3 + $0xc8] sm:$0xff]
  %v6024 = vld [vmem:[%s3 + $0xd0] sm:$0xff]
  %v6025 = vld [vmem:[%s3 + $0xd8] sm:$0xff]
  %v6026 = vld [vmem:[%s3 + $0xe0] sm:$0xff]
  %v6027 = vld [vmem:[%s3 + $0xe8] sm:$0xff]
  %v6028 = vmul.f32 %v5728, %v5968
  %v6029 = vmul.f32 %v5729, %v5969
  %v6030 = vmul.f32 %v5730, %v5970
  %v6031 = vmul.f32 %v5731, %v5971
  %v6032 = vmul.f32 %v5732, %v5972
  %v6033 = vmul.f32 %v5733, %v5973
  %v6034 = vmul.f32 %v5734, %v5974
  %v6035 = vmul.f32 %v5735, %v5975
  %v6036 = vmul.f32 %v5736, %v5976
  %v6037 = vmul.f32 %v5737, %v5977
  %v6038 = vmul.f32 %v5738, %v5978
  %v6039 = vmul.f32 %v5739, %v5979
  %v6040 = vmul.f32 %v5740, %v5980
  %v6041 = vmul.f32 %v5741, %v5981
  %v6042 = vmul.f32 %v5742, %v5982
  %v6043 = vmul.f32 %v5743, %v5983
  %v6044 = vmul.f32 %v5744, %v5984
  %v6045 = vmul.f32 %v5745, %v5985
  %v6046 = vmul.f32 %v5746, %v5986
  %v6047 = vmul.f32 %v5747, %v5987
  %v6048 = vmul.f32 %v5748, %v5988
  %v6049 = vmul.f32 %v5749, %v5989
  %v6050 = vmul.f32 %v5750, %v5990
  %v6051 = vmul.f32 %v5751, %v5991
  %v6052 = vmul.f32 %v5752, %v5992
  %v6053 = vmul.f32 %v5753, %v5993
  %v6054 = vmul.f32 %v5754, %v5994
  %v6055 = vmul.f32 %v5755, %v5995
  %v6056 = vmul.f32 %v5756, %v5996
  %v6057 = vmul.f32 %v5757, %v5997
  %v6058 = vsub.f32 %v5998, %v6028
  %v6059 = vsub.f32 %v5999, %v6029
  %v6060 = vsub.f32 %v6000, %v6030
  %v6061 = vsub.f32 %v6001, %v6031
  %v6062 = vsub.f32 %v6002, %v6032
  %v6063 = vsub.f32 %v6003, %v6033
  %v6064 = vsub.f32 %v6004, %v6034
  %v6065 = vsub.f32 %v6005, %v6035
  %v6066 = vsub.f32 %v6006, %v6036
  %v6067 = vsub.f32 %v6007, %v6037
  %v6068 = vsub.f32 %v6008, %v6038
  %v6069 = vsub.f32 %v6009, %v6039
  %v6070 = vsub.f32 %v6010, %v6040
  %v6071 = vsub.f32 %v6011, %v6041
  %v6072 = vsub.f32 %v6012, %v6042
  %v6073 = vsub.f32 %v6013, %v6043
  %v6074 = vsub.f32 %v6014, %v6044
  %v6075 = vsub.f32 %v6015, %v6045
  %v6076 = vsub.f32 %v6016, %v6046
  %v6077 = vsub.f32 %v6017, %v6047
  %v6078 = vsub.f32 %v6018, %v6048
  %v6079 = vsub.f32 %v6019, %v6049
  %v6080 = vsub.f32 %v6020, %v6050
  %v6081 = vsub.f32 %v6021, %v6051
  %v6082 = vsub.f32 %v6022, %v6052
  %v6083 = vsub.f32 %v6023, %v6053
  %v6084 = vsub.f32 %v6024, %v6054
  %v6085 = vsub.f32 %v6025, %v6055
  %v6086 = vsub.f32 %v6026, %v6056
  %v6087 = vsub.f32 %v6027, %v6057
  %6089 = vset.pattern.permute.xlu0 0
  %6090 = vperm.xlu0 %6089, %v5968
  %v6091 = vpop.permute.xlu0 %6090
  %6094 = vset.pattern.permute.xlu0 0
  %6095 = vperm.xlu0 %6094, %v5969
  %v6096 = vpop.permute.xlu0 %6095
  %6099 = vset.pattern.permute.xlu0 0
  %6100 = vperm.xlu0 %6099, %v5970
  %v6101 = vpop.permute.xlu0 %6100
  %6104 = vset.pattern.permute.xlu0 0
  %6105 = vperm.xlu0 %6104, %v5971
  %v6106 = vpop.permute.xlu0 %6105
  %6109 = vset.pattern.permute.xlu0 0
  %6110 = vperm.xlu0 %6109, %v5972
  %v6111 = vpop.permute.xlu0 %6110
  %6114 = vset.pattern.permute.xlu0 0
  %6115 = vperm.xlu0 %6114, %v5973
  %v6116 = vpop.permute.xlu0 %6115
  %6119 = vset.pattern.permute.xlu0 0
  %6120 = vperm.xlu0 %6119, %v5974
  %v6121 = vpop.permute.xlu0 %6120
  %6124 = vset.pattern.permute.xlu0 0
  %6125 = vperm.xlu0 %6124, %v5975
  %v6126 = vpop.permute.xlu0 %6125
  %6129 = vset.pattern.permute.xlu0 0
  %6130 = vperm.xlu0 %6129, %v5976
  %v6131 = vpop.permute.xlu0 %6130
  %6134 = vset.pattern.permute.xlu0 0
  %6135 = vperm.xlu0 %6134, %v5977
  %v6136 = vpop.permute.xlu0 %6135
  %6139 = vset.pattern.permute.xlu0 0
  %6140 = vperm.xlu0 %6139, %v5978
  %v6141 = vpop.permute.xlu0 %6140
  %6144 = vset.pattern.permute.xlu0 0
  %6145 = vperm.xlu0 %6144, %v5979
  %v6146 = vpop.permute.xlu0 %6145
  %6149 = vset.pattern.permute.xlu0 0
  %6150 = vperm.xlu0 %6149, %v5980
  %v6151 = vpop.permute.xlu0 %6150
  %6154 = vset.pattern.permute.xlu0 0
  %6155 = vperm.xlu0 %6154, %v5981
  %v6156 = vpop.permute.xlu0 %6155
  %6159 = vset.pattern.permute.xlu0 0
  %6160 = vperm.xlu0 %6159, %v5982
  %v6161 = vpop.permute.xlu0 %6160
  %6164 = vset.pattern.permute.xlu0 0
  %6165 = vperm.xlu0 %6164, %v5983
  %v6166 = vpop.permute.xlu0 %6165
  %6169 = vset.pattern.permute.xlu0 0
  %6170 = vperm.xlu0 %6169, %v5984
  %v6171 = vpop.permute.xlu0 %6170
  %6174 = vset.pattern.permute.xlu0 0
  %6175 = vperm.xlu0 %6174, %v5985
  %v6176 = vpop.permute.xlu0 %6175
  %6179 = vset.pattern.permute.xlu0 0
  %6180 = vperm.xlu0 %6179, %v5986
  %v6181 = vpop.permute.xlu0 %6180
  %6184 = vset.pattern.permute.xlu0 0
  %6185 = vperm.xlu0 %6184, %v5987
  %v6186 = vpop.permute.xlu0 %6185
  %6189 = vset.pattern.permute.xlu0 0
  %6190 = vperm.xlu0 %6189, %v5988
  %v6191 = vpop.permute.xlu0 %6190
  %6194 = vset.pattern.permute.xlu0 0
  %6195 = vperm.xlu0 %6194, %v5989
  %v6196 = vpop.permute.xlu0 %6195
  %6199 = vset.pattern.permute.xlu0 0
  %6200 = vperm.xlu0 %6199, %v5990
  %v6201 = vpop.permute.xlu0 %6200
  %6204 = vset.pattern.permute.xlu0 0
  %6205 = vperm.xlu0 %6204, %v5991
  %v6206 = vpop.permute.xlu0 %6205
  %6209 = vset.pattern.permute.xlu0 0
  %6210 = vperm.xlu0 %6209, %v5992
  %v6211 = vpop.permute.xlu0 %6210
  %6214 = vset.pattern.permute.xlu0 0
  %6215 = vperm.xlu0 %6214, %v5993
  %v6216 = vpop.permute.xlu0 %6215
  %6219 = vset.pattern.permute.xlu0 0
  %6220 = vperm.xlu0 %6219, %v5994
  %v6221 = vpop.permute.xlu0 %6220
  %6224 = vset.pattern.permute.xlu0 0
  %6225 = vperm.xlu0 %6224, %v5995
  %v6226 = vpop.permute.xlu0 %6225
  %6229 = vset.pattern.permute.xlu0 0
  %6230 = vperm.xlu0 %6229, %v5996
  %v6231 = vpop.permute.xlu0 %6230
  %6234 = vset.pattern.permute.xlu0 0
  %6235 = vperm.xlu0 %6234, %v5997
  %v6236 = vpop.permute.xlu0 %6235
  %v6238 = vmul.f32 %v330, %v6091
  %v6239 = vmul.f32 %v332, %v6091
  %v6240 = vmul.f32 %v575, %v6091
  %v6241 = vmul.f32 %v577, %v6091
  %v6242 = vmul.f32 %v820, %v6091
  %v6243 = vmul.f32 %v822, %v6091
  %v6244 = vmul.f32 %v1065, %v6091
  %v6245 = vmul.f32 %v1067, %v6091
  %v6246 = vmul.f32 %v1310, %v6091
  %v6247 = vmul.f32 %v1312, %v6091
  %v6248 = vmul.f32 %v1555, %v6091
  %v6249 = vmul.f32 %v1557, %v6091
  %v6250 = vmul.f32 %v1800, %v6091
  %v6251 = vmul.f32 %v1802, %v6091
  %v6252 = vmul.f32 %v2045, %v6091
  %v6253 = vmul.f32 %v2047, %v6091
  %v6254 = vmul.f32 %v2290, %v6091
  %v6255 = vmul.f32 %v2292, %v6091
  %v6256 = vmul.f32 %v2535, %v6091
  %v6257 = vmul.f32 %v2537, %v6091
  %v6258 = vmul.f32 %v2780, %v6091
  %v6259 = vmul.f32 %v2782, %v6091
  %v6260 = vmul.f32 %v3025, %v6091
  %v6261 = vmul.f32 %v3027, %v6091
  %v6262 = vmul.f32 %v3270, %v6091
  %v6263 = vmul.f32 %v336, %v6096
  %v6264 = vmul.f32 %v338, %v6096
  %v6265 = vmul.f32 %v581, %v6096
  %v6266 = vmul.f32 %v583, %v6096
  %v6267 = vmul.f32 %v826, %v6096
  %v6268 = vmul.f32 %v828, %v6096
  %v6269 = vmul.f32 %v1071, %v6096
  %v6270 = vmul.f32 %v1073, %v6096
  %v6271 = vmul.f32 %v1316, %v6096
  %v6272 = vmul.f32 %v1318, %v6096
  %v6273 = vmul.f32 %v1561, %v6096
  %v6274 = vmul.f32 %v1563, %v6096
  %v6275 = vmul.f32 %v1806, %v6096
  %v6276 = vmul.f32 %v1808, %v6096
  %v6277 = vmul.f32 %v2051, %v6096
  %v6278 = vmul.f32 %v2053, %v6096
  %v6279 = vmul.f32 %v2296, %v6096
  %v6280 = vmul.f32 %v2298, %v6096
  %v6281 = vmul.f32 %v2541, %v6096
  %v6282 = vmul.f32 %v2543, %v6096
  %v6283 = vmul.f32 %v2786, %v6096
  %v6284 = vmul.f32 %v2788, %v6096
  %v6285 = vmul.f32 %v3031, %v6096
  %v6286 = vmul.f32 %v3033, %v6096
  %v6287 = vmul.f32 %v3275, %v6096
  %v6288 = vmul.f32 %v342, %v6101
  %v6289 = vmul.f32 %v344, %v6101
  %v6290 = vmul.f32 %v587, %v6101
  %v6291 = vmul.f32 %v589, %v6101
  %v6292 = vmul.f32 %v832, %v6101
  %v6293 = vmul.f32 %v834, %v6101
  %v6294 = vmul.f32 %v1077, %v6101
  %v6295 = vmul.f32 %v1079, %v6101
  %v6296 = vmul.f32 %v1322, %v6101
  %v6297 = vmul.f32 %v1324, %v6101
  %v6298 = vmul.f32 %v1567, %v6101
  %v6299 = vmul.f32 %v1569, %v6101
  %v6300 = vmul.f32 %v1812, %v6101
  %v6301 = vmul.f32 %v1814, %v6101
  %v6302 = vmul.f32 %v2057, %v6101
  %v6303 = vmul.f32 %v2059, %v6101
  %v6304 = vmul.f32 %v2302, %v6101
  %v6305 = vmul.f32 %v2304, %v6101
  %v6306 = vmul.f32 %v2547, %v6101
  %v6307 = vmul.f32 %v2549, %v6101
  %v6308 = vmul.f32 %v2792, %v6101
  %v6309 = vmul.f32 %v2794, %v6101
  %v6310 = vmul.f32 %v3037, %v6101
  %v6311 = vmul.f32 %v3039, %v6101
  %v6312 = vmul.f32 %v3280, %v6101
  %v6313 = vmul.f32 %v348, %v6106
  %v6314 = vmul.f32 %v350, %v6106
  %v6315 = vmul.f32 %v593, %v6106
  %v6316 = vmul.f32 %v595, %v6106
  %v6317 = vmul.f32 %v838, %v6106
  %v6318 = vmul.f32 %v840, %v6106
  %v6319 = vmul.f32 %v1083, %v6106
  %v6320 = vmul.f32 %v1085, %v6106
  %v6321 = vmul.f32 %v1328, %v6106
  %v6322 = vmul.f32 %v1330, %v6106
  %v6323 = vmul.f32 %v1573, %v6106
  %v6324 = vmul.f32 %v1575, %v6106
  %v6325 = vmul.f32 %v1818, %v6106
  %v6326 = vmul.f32 %v1820, %v6106
  %v6327 = vmul.f32 %v2063, %v6106
  %v6328 = vmul.f32 %v2065, %v6106
  %v6329 = vmul.f32 %v2308, %v6106
  %v6330 = vmul.f32 %v2310, %v6106
  %v6331 = vmul.f32 %v2553, %v6106
  %v6332 = vmul.f32 %v2555, %v6106
  %v6333 = vmul.f32 %v2798, %v6106
  %v6334 = vmul.f32 %v2800, %v6106
  %v6335 = vmul.f32 %v3043, %v6106
  %v6336 = vmul.f32 %v3045, %v6106
  %v6337 = vmul.f32 %v3285, %v6106
  %v6338 = vmul.f32 %v354, %v6111
  %v6339 = vmul.f32 %v356, %v6111
  %v6340 = vmul.f32 %v599, %v6111
  %v6341 = vmul.f32 %v601, %v6111
  %v6342 = vmul.f32 %v844, %v6111
  %v6343 = vmul.f32 %v846, %v6111
  %v6344 = vmul.f32 %v1089, %v6111
  %v6345 = vmul.f32 %v1091, %v6111
  %v6346 = vmul.f32 %v1334, %v6111
  %v6347 = vmul.f32 %v1336, %v6111
  %v6348 = vmul.f32 %v1579, %v6111
  %v6349 = vmul.f32 %v1581, %v6111
  %v6350 = vmul.f32 %v1824, %v6111
  %v6351 = vmul.f32 %v1826, %v6111
  %v6352 = vmul.f32 %v2069, %v6111
  %v6353 = vmul.f32 %v2071, %v6111
  %v6354 = vmul.f32 %v2314, %v6111
  %v6355 = vmul.f32 %v2316, %v6111
  %v6356 = vmul.f32 %v2559, %v6111
  %v6357 = vmul.f32 %v2561, %v6111
  %v6358 = vmul.f32 %v2804, %v6111
  %v6359 = vmul.f32 %v2806, %v6111
  %v6360 = vmul.f32 %v3049, %v6111
  %v6361 = vmul.f32 %v3051, %v6111
  %v6362 = vmul.f32 %v3290, %v6111
  %v6363 = vmul.f32 %v360, %v6116
  %v6364 = vmul.f32 %v362, %v6116
  %v6365 = vmul.f32 %v605, %v6116
  %v6366 = vmul.f32 %v607, %v6116
  %v6367 = vmul.f32 %v850, %v6116
  %v6368 = vmul.f32 %v852, %v6116
  %v6369 = vmul.f32 %v1095, %v6116
  %v6370 = vmul.f32 %v1097, %v6116
  %v6371 = vmul.f32 %v1340, %v6116
  %v6372 = vmul.f32 %v1342, %v6116
  %v6373 = vmul.f32 %v1585, %v6116
  %v6374 = vmul.f32 %v1587, %v6116
  %v6375 = vmul.f32 %v1830, %v6116
  %v6376 = vmul.f32 %v1832, %v6116
  %v6377 = vmul.f32 %v2075, %v6116
  %v6378 = vmul.f32 %v2077, %v6116
  %v6379 = vmul.f32 %v2320, %v6116
  %v6380 = vmul.f32 %v2322, %v6116
  %v6381 = vmul.f32 %v2565, %v6116
  %v6382 = vmul.f32 %v2567, %v6116
  %v6383 = vmul.f32 %v2810, %v6116
  %v6384 = vmul.f32 %v2812, %v6116
  %v6385 = vmul.f32 %v3055, %v6116
  %v6386 = vmul.f32 %v3057, %v6116
  %v6387 = vmul.f32 %v3295, %v6116
  %v6388 = vmul.f32 %v366, %v6121
  %v6389 = vmul.f32 %v368, %v6121
  %v6390 = vmul.f32 %v611, %v6121
  %v6391 = vmul.f32 %v613, %v6121
  %v6392 = vmul.f32 %v856, %v6121
  %v6393 = vmul.f32 %v858, %v6121
  %v6394 = vmul.f32 %v1101, %v6121
  %v6395 = vmul.f32 %v1103, %v6121
  %v6396 = vmul.f32 %v1346, %v6121
  %v6397 = vmul.f32 %v1348, %v6121
  %v6398 = vmul.f32 %v1591, %v6121
  %v6399 = vmul.f32 %v1593, %v6121
  %v6400 = vmul.f32 %v1836, %v6121
  %v6401 = vmul.f32 %v1838, %v6121
  %v6402 = vmul.f32 %v2081, %v6121
  %v6403 = vmul.f32 %v2083, %v6121
  %v6404 = vmul.f32 %v2326, %v6121
  %v6405 = vmul.f32 %v2328, %v6121
  %v6406 = vmul.f32 %v2571, %v6121
  %v6407 = vmul.f32 %v2573, %v6121
  %v6408 = vmul.f32 %v2816, %v6121
  %v6409 = vmul.f32 %v2818, %v6121
  %v6410 = vmul.f32 %v3061, %v6121
  %v6411 = vmul.f32 %v3063, %v6121
  %v6412 = vmul.f32 %v3300, %v6121
  %v6413 = vmul.f32 %v372, %v6126
  %v6414 = vmul.f32 %v374, %v6126
  %v6415 = vmul.f32 %v617, %v6126
  %v6416 = vmul.f32 %v619, %v6126
  %v6417 = vmul.f32 %v862, %v6126
  %v6418 = vmul.f32 %v864, %v6126
  %v6419 = vmul.f32 %v1107, %v6126
  %v6420 = vmul.f32 %v1109, %v6126
  %v6421 = vmul.f32 %v1352, %v6126
  %v6422 = vmul.f32 %v1354, %v6126
  %v6423 = vmul.f32 %v1597, %v6126
  %v6424 = vmul.f32 %v1599, %v6126
  %v6425 = vmul.f32 %v1842, %v6126
  %v6426 = vmul.f32 %v1844, %v6126
  %v6427 = vmul.f32 %v2087, %v6126
  %v6428 = vmul.f32 %v2089, %v6126
  %v6429 = vmul.f32 %v2332, %v6126
  %v6430 = vmul.f32 %v2334, %v6126
  %v6431 = vmul.f32 %v2577, %v6126
  %v6432 = vmul.f32 %v2579, %v6126
  %v6433 = vmul.f32 %v2822, %v6126
  %v6434 = vmul.f32 %v2824, %v6126
  %v6435 = vmul.f32 %v3067, %v6126
  %v6436 = vmul.f32 %v3069, %v6126
  %v6437 = vmul.f32 %v3305, %v6126
  %v6438 = vmul.f32 %v378, %v6131
  %v6439 = vmul.f32 %v380, %v6131
  %v6440 = vmul.f32 %v623, %v6131
  %v6441 = vmul.f32 %v625, %v6131
  %v6442 = vmul.f32 %v868, %v6131
  %v6443 = vmul.f32 %v870, %v6131
  %v6444 = vmul.f32 %v1113, %v6131
  %v6445 = vmul.f32 %v1115, %v6131
  %v6446 = vmul.f32 %v1358, %v6131
  %v6447 = vmul.f32 %v1360, %v6131
  %v6448 = vmul.f32 %v1603, %v6131
  %v6449 = vmul.f32 %v1605, %v6131
  %v6450 = vmul.f32 %v1848, %v6131
  %v6451 = vmul.f32 %v1850, %v6131
  %v6452 = vmul.f32 %v2093, %v6131
  %v6453 = vmul.f32 %v2095, %v6131
  %v6454 = vmul.f32 %v2338, %v6131
  %v6455 = vmul.f32 %v2340, %v6131
  %v6456 = vmul.f32 %v2583, %v6131
  %v6457 = vmul.f32 %v2585, %v6131
  %v6458 = vmul.f32 %v2828, %v6131
  %v6459 = vmul.f32 %v2830, %v6131
  %v6460 = vmul.f32 %v3073, %v6131
  %v6461 = vmul.f32 %v3075, %v6131
  %v6462 = vmul.f32 %v3310, %v6131
  %v6463 = vmul.f32 %v384, %v6136
  %v6464 = vmul.f32 %v386, %v6136
  %v6465 = vmul.f32 %v629, %v6136
  %v6466 = vmul.f32 %v631, %v6136
  %v6467 = vmul.f32 %v874, %v6136
  %v6468 = vmul.f32 %v876, %v6136
  %v6469 = vmul.f32 %v1119, %v6136
  %v6470 = vmul.f32 %v1121, %v6136
  %v6471 = vmul.f32 %v1364, %v6136
  %v6472 = vmul.f32 %v1366, %v6136
  %v6473 = vmul.f32 %v1609, %v6136
  %v6474 = vmul.f32 %v1611, %v6136
  %v6475 = vmul.f32 %v1854, %v6136
  %v6476 = vmul.f32 %v1856, %v6136
  %v6477 = vmul.f32 %v2099, %v6136
  %v6478 = vmul.f32 %v2101, %v6136
  %v6479 = vmul.f32 %v2344, %v6136
  %v6480 = vmul.f32 %v2346, %v6136
  %v6481 = vmul.f32 %v2589, %v6136
  %v6482 = vmul.f32 %v2591, %v6136
  %v6483 = vmul.f32 %v2834, %v6136
  %v6484 = vmul.f32 %v2836, %v6136
  %v6485 = vmul.f32 %v3079, %v6136
  %v6486 = vmul.f32 %v3081, %v6136
  %v6487 = vmul.f32 %v3315, %v6136
  %v6488 = vmul.f32 %v390, %v6141
  %v6489 = vmul.f32 %v392, %v6141
  %v6490 = vmul.f32 %v635, %v6141
  %v6491 = vmul.f32 %v637, %v6141
  %v6492 = vmul.f32 %v880, %v6141
  %v6493 = vmul.f32 %v882, %v6141
  %v6494 = vmul.f32 %v1125, %v6141
  %v6495 = vmul.f32 %v1127, %v6141
  %v6496 = vmul.f32 %v1370, %v6141
  %v6497 = vmul.f32 %v1372, %v6141
  %v6498 = vmul.f32 %v1615, %v6141
  %v6499 = vmul.f32 %v1617, %v6141
  %v6500 = vmul.f32 %v1860, %v6141
  %v6501 = vmul.f32 %v1862, %v6141
  %v6502 = vmul.f32 %v2105, %v6141
  %v6503 = vmul.f32 %v2107, %v6141
  %v6504 = vmul.f32 %v2350, %v6141
  %v6505 = vmul.f32 %v2352, %v6141
  %v6506 = vmul.f32 %v2595, %v6141
  %v6507 = vmul.f32 %v2597, %v6141
  %v6508 = vmul.f32 %v2840, %v6141
  %v6509 = vmul.f32 %v2842, %v6141
  %v6510 = vmul.f32 %v3085, %v6141
  %v6511 = vmul.f32 %v3087, %v6141
  %v6512 = vmul.f32 %v3320, %v6141
  %v6513 = vmul.f32 %v396, %v6146
  %v6514 = vmul.f32 %v398, %v6146
  %v6515 = vmul.f32 %v641, %v6146
  %v6516 = vmul.f32 %v643, %v6146
  %v6517 = vmul.f32 %v886, %v6146
  %v6518 = vmul.f32 %v888, %v6146
  %v6519 = vmul.f32 %v1131, %v6146
  %v6520 = vmul.f32 %v1133, %v6146
  %v6521 = vmul.f32 %v1376, %v6146
  %v6522 = vmul.f32 %v1378, %v6146
  %v6523 = vmul.f32 %v1621, %v6146
  %v6524 = vmul.f32 %v1623, %v6146
  %v6525 = vmul.f32 %v1866, %v6146
  %v6526 = vmul.f32 %v1868, %v6146
  %v6527 = vmul.f32 %v2111, %v6146
  %v6528 = vmul.f32 %v2113, %v6146
  %v6529 = vmul.f32 %v2356, %v6146
  %v6530 = vmul.f32 %v2358, %v6146
  %v6531 = vmul.f32 %v2601, %v6146
  %v6532 = vmul.f32 %v2603, %v6146
  %v6533 = vmul.f32 %v2846, %v6146
  %v6534 = vmul.f32 %v2848, %v6146
  %v6535 = vmul.f32 %v3091, %v6146
  %v6536 = vmul.f32 %v3093, %v6146
  %v6537 = vmul.f32 %v3325, %v6146
  %v6538 = vmul.f32 %v402, %v6151
  %v6539 = vmul.f32 %v404, %v6151
  %v6540 = vmul.f32 %v647, %v6151
  %v6541 = vmul.f32 %v649, %v6151
  %v6542 = vmul.f32 %v892, %v6151
  %v6543 = vmul.f32 %v894, %v6151
  %v6544 = vmul.f32 %v1137, %v6151
  %v6545 = vmul.f32 %v1139, %v6151
  %v6546 = vmul.f32 %v1382, %v6151
  %v6547 = vmul.f32 %v1384, %v6151
  %v6548 = vmul.f32 %v1627, %v6151
  %v6549 = vmul.f32 %v1629, %v6151
  %v6550 = vmul.f32 %v1872, %v6151
  %v6551 = vmul.f32 %v1874, %v6151
  %v6552 = vmul.f32 %v2117, %v6151
  %v6553 = vmul.f32 %v2119, %v6151
  %v6554 = vmul.f32 %v2362, %v6151
  %v6555 = vmul.f32 %v2364, %v6151
  %v6556 = vmul.f32 %v2607, %v6151
  %v6557 = vmul.f32 %v2609, %v6151
  %v6558 = vmul.f32 %v2852, %v6151
  %v6559 = vmul.f32 %v2854, %v6151
  %v6560 = vmul.f32 %v3097, %v6151
  %v6561 = vmul.f32 %v3099, %v6151
  %v6562 = vmul.f32 %v3330, %v6151
  %v6563 = vmul.f32 %v408, %v6156
  %v6564 = vmul.f32 %v410, %v6156
  %v6565 = vmul.f32 %v653, %v6156
  %v6566 = vmul.f32 %v655, %v6156
  %v6567 = vmul.f32 %v898, %v6156
  %v6568 = vmul.f32 %v900, %v6156
  %v6569 = vmul.f32 %v1143, %v6156
  %v6570 = vmul.f32 %v1145, %v6156
  %v6571 = vmul.f32 %v1388, %v6156
  %v6572 = vmul.f32 %v1390, %v6156
  %v6573 = vmul.f32 %v1633, %v6156
  %v6574 = vmul.f32 %v1635, %v6156
  %v6575 = vmul.f32 %v1878, %v6156
  %v6576 = vmul.f32 %v1880, %v6156
  %v6577 = vmul.f32 %v2123, %v6156
  %v6578 = vmul.f32 %v2125, %v6156
  %v6579 = vmul.f32 %v2368, %v6156
  %v6580 = vmul.f32 %v2370, %v6156
  %v6581 = vmul.f32 %v2613, %v6156
  %v6582 = vmul.f32 %v2615, %v6156
  %v6583 = vmul.f32 %v2858, %v6156
  %v6584 = vmul.f32 %v2860, %v6156
  %v6585 = vmul.f32 %v3103, %v6156
  %v6586 = vmul.f32 %v3105, %v6156
  %v6587 = vmul.f32 %v3335, %v6156
  %v6588 = vmul.f32 %v414, %v6161
  %v6589 = vmul.f32 %v416, %v6161
  %v6590 = vmul.f32 %v659, %v6161
  %v6591 = vmul.f32 %v661, %v6161
  %v6592 = vmul.f32 %v904, %v6161
  %v6593 = vmul.f32 %v906, %v6161
  %v6594 = vmul.f32 %v1149, %v6161
  %v6595 = vmul.f32 %v1151, %v6161
  %v6596 = vmul.f32 %v1394, %v6161
  %v6597 = vmul.f32 %v1396, %v6161
  %v6598 = vmul.f32 %v1639, %v6161
  %v6599 = vmul.f32 %v1641, %v6161
  %v6600 = vmul.f32 %v1884, %v6161
  %v6601 = vmul.f32 %v1886, %v6161
  %v6602 = vmul.f32 %v2129, %v6161
  %v6603 = vmul.f32 %v2131, %v6161
  %v6604 = vmul.f32 %v2374, %v6161
  %v6605 = vmul.f32 %v2376, %v6161
  %v6606 = vmul.f32 %v2619, %v6161
  %v6607 = vmul.f32 %v2621, %v6161
  %v6608 = vmul.f32 %v2864, %v6161
  %v6609 = vmul.f32 %v2866, %v6161
  %v6610 = vmul.f32 %v3109, %v6161
  %v6611 = vmul.f32 %v3111, %v6161
  %v6612 = vmul.f32 %v3340, %v6161
  %v6613 = vmul.f32 %v420, %v6166
  %v6614 = vmul.f32 %v422, %v6166
  %v6615 = vmul.f32 %v665, %v6166
  %v6616 = vmul.f32 %v667, %v6166
  %v6617 = vmul.f32 %v910, %v6166
  %v6618 = vmul.f32 %v912, %v6166
  %v6619 = vmul.f32 %v1155, %v6166
  %v6620 = vmul.f32 %v1157, %v6166
  %v6621 = vmul.f32 %v1400, %v6166
  %v6622 = vmul.f32 %v1402, %v6166
  %v6623 = vmul.f32 %v1645, %v6166
  %v6624 = vmul.f32 %v1647, %v6166
  %v6625 = vmul.f32 %v1890, %v6166
  %v6626 = vmul.f32 %v1892, %v6166
  %v6627 = vmul.f32 %v2135, %v6166
  %v6628 = vmul.f32 %v2137, %v6166
  %v6629 = vmul.f32 %v2380, %v6166
  %v6630 = vmul.f32 %v2382, %v6166
  %v6631 = vmul.f32 %v2625, %v6166
  %v6632 = vmul.f32 %v2627, %v6166
  %v6633 = vmul.f32 %v2870, %v6166
  %v6634 = vmul.f32 %v2872, %v6166
  %v6635 = vmul.f32 %v3115, %v6166
  %v6636 = vmul.f32 %v3117, %v6166
  %v6637 = vmul.f32 %v3345, %v6166
  %v6638 = vmul.f32 %v426, %v6171
  %v6639 = vmul.f32 %v428, %v6171
  %v6640 = vmul.f32 %v671, %v6171
  %v6641 = vmul.f32 %v673, %v6171
  %v6642 = vmul.f32 %v916, %v6171
  %v6643 = vmul.f32 %v918, %v6171
  %v6644 = vmul.f32 %v1161, %v6171
  %v6645 = vmul.f32 %v1163, %v6171
  %v6646 = vmul.f32 %v1406, %v6171
  %v6647 = vmul.f32 %v1408, %v6171
  %v6648 = vmul.f32 %v1651, %v6171
  %v6649 = vmul.f32 %v1653, %v6171
  %v6650 = vmul.f32 %v1896, %v6171
  %v6651 = vmul.f32 %v1898, %v6171
  %v6652 = vmul.f32 %v2141, %v6171
  %v6653 = vmul.f32 %v2143, %v6171
  %v6654 = vmul.f32 %v2386, %v6171
  %v6655 = vmul.f32 %v2388, %v6171
  %v6656 = vmul.f32 %v2631, %v6171
  %v6657 = vmul.f32 %v2633, %v6171
  %v6658 = vmul.f32 %v2876, %v6171
  %v6659 = vmul.f32 %v2878, %v6171
  %v6660 = vmul.f32 %v3121, %v6171
  %v6661 = vmul.f32 %v3123, %v6171
  %v6662 = vmul.f32 %v3350, %v6171
  %v6663 = vmul.f32 %v432, %v6176
  %v6664 = vmul.f32 %v434, %v6176
  %v6665 = vmul.f32 %v677, %v6176
  %v6666 = vmul.f32 %v679, %v6176
  %v6667 = vmul.f32 %v922, %v6176
  %v6668 = vmul.f32 %v924, %v6176
  %v6669 = vmul.f32 %v1167, %v6176
  %v6670 = vmul.f32 %v1169, %v6176
  %v6671 = vmul.f32 %v1412, %v6176
  %v6672 = vmul.f32 %v1414, %v6176
  %v6673 = vmul.f32 %v1657, %v6176
  %v6674 = vmul.f32 %v1659, %v6176
  %v6675 = vmul.f32 %v1902, %v6176
  %v6676 = vmul.f32 %v1904, %v6176
  %v6677 = vmul.f32 %v2147, %v6176
  %v6678 = vmul.f32 %v2149, %v6176
  %v6679 = vmul.f32 %v2392, %v6176
  %v6680 = vmul.f32 %v2394, %v6176
  %v6681 = vmul.f32 %v2637, %v6176
  %v6682 = vmul.f32 %v2639, %v6176
  %v6683 = vmul.f32 %v2882, %v6176
  %v6684 = vmul.f32 %v2884, %v6176
  %v6685 = vmul.f32 %v3127, %v6176
  %v6686 = vmul.f32 %v3129, %v6176
  %v6687 = vmul.f32 %v3355, %v6176
  %v6688 = vmul.f32 %v438, %v6181
  %v6689 = vmul.f32 %v440, %v6181
  %v6690 = vmul.f32 %v683, %v6181
  %v6691 = vmul.f32 %v685, %v6181
  %v6692 = vmul.f32 %v928, %v6181
  %v6693 = vmul.f32 %v930, %v6181
  %v6694 = vmul.f32 %v1173, %v6181
  %v6695 = vmul.f32 %v1175, %v6181
  %v6696 = vmul.f32 %v1418, %v6181
  %v6697 = vmul.f32 %v1420, %v6181
  %v6698 = vmul.f32 %v1663, %v6181
  %v6699 = vmul.f32 %v1665, %v6181
  %v6700 = vmul.f32 %v1908, %v6181
  %v6701 = vmul.f32 %v1910, %v6181
  %v6702 = vmul.f32 %v2153, %v6181
  %v6703 = vmul.f32 %v2155, %v6181
  %v6704 = vmul.f32 %v2398, %v6181
  %v6705 = vmul.f32 %v2400, %v6181
  %v6706 = vmul.f32 %v2643, %v6181
  %v6707 = vmul.f32 %v2645, %v6181
  %v6708 = vmul.f32 %v2888, %v6181
  %v6709 = vmul.f32 %v2890, %v6181
  %v6710 = vmul.f32 %v3133, %v6181
  %v6711 = vmul.f32 %v3135, %v6181
  %v6712 = vmul.f32 %v3360, %v6181
  %v6713 = vmul.f32 %v444, %v6186
  %v6714 = vmul.f32 %v446, %v6186
  %v6715 = vmul.f32 %v689, %v6186
  %v6716 = vmul.f32 %v691, %v6186
  %v6717 = vmul.f32 %v934, %v6186
  %v6718 = vmul.f32 %v936, %v6186
  %v6719 = vmul.f32 %v1179, %v6186
  %v6720 = vmul.f32 %v1181, %v6186
  %v6721 = vmul.f32 %v1424, %v6186
  %v6722 = vmul.f32 %v1426, %v6186
  %v6723 = vmul.f32 %v1669, %v6186
  %v6724 = vmul.f32 %v1671, %v6186
  %v6725 = vmul.f32 %v1914, %v6186
  %v6726 = vmul.f32 %v1916, %v6186
  %v6727 = vmul.f32 %v2159, %v6186
  %v6728 = vmul.f32 %v2161, %v6186
  %v6729 = vmul.f32 %v2404, %v6186
  %v6730 = vmul.f32 %v2406, %v6186
  %v6731 = vmul.f32 %v2649, %v6186
  %v6732 = vmul.f32 %v2651, %v6186
  %v6733 = vmul.f32 %v2894, %v6186
  %v6734 = vmul.f32 %v2896, %v6186
  %v6735 = vmul.f32 %v3139, %v6186
  %v6736 = vmul.f32 %v3141, %v6186
  %v6737 = vmul.f32 %v3365, %v6186
  %v6738 = vmul.f32 %v450, %v6191
  %v6739 = vmul.f32 %v452, %v6191
  %v6740 = vmul.f32 %v695, %v6191
  %v6741 = vmul.f32 %v697, %v6191
  %v6742 = vmul.f32 %v940, %v6191
  %v6743 = vmul.f32 %v942, %v6191
  %v6744 = vmul.f32 %v1185, %v6191
  %v6745 = vmul.f32 %v1187, %v6191
  %v6746 = vmul.f32 %v1430, %v6191
  %v6747 = vmul.f32 %v1432, %v6191
  %v6748 = vmul.f32 %v1675, %v6191
  %v6749 = vmul.f32 %v1677, %v6191
  %v6750 = vmul.f32 %v1920, %v6191
  %v6751 = vmul.f32 %v1922, %v6191
  %v6752 = vmul.f32 %v2165, %v6191
  %v6753 = vmul.f32 %v2167, %v6191
  %v6754 = vmul.f32 %v2410, %v6191
  %v6755 = vmul.f32 %v2412, %v6191
  %v6756 = vmul.f32 %v2655, %v6191
  %v6757 = vmul.f32 %v2657, %v6191
  %v6758 = vmul.f32 %v2900, %v6191
  %v6759 = vmul.f32 %v2902, %v6191
  %v6760 = vmul.f32 %v3145, %v6191
  %v6761 = vmul.f32 %v3147, %v6191
  %v6762 = vmul.f32 %v3370, %v6191
  %v6763 = vmul.f32 %v456, %v6196
  %v6764 = vmul.f32 %v458, %v6196
  %v6765 = vmul.f32 %v701, %v6196
  %v6766 = vmul.f32 %v703, %v6196
  %v6767 = vmul.f32 %v946, %v6196
  %v6768 = vmul.f32 %v948, %v6196
  %v6769 = vmul.f32 %v1191, %v6196
  %v6770 = vmul.f32 %v1193, %v6196
  %v6771 = vmul.f32 %v1436, %v6196
  %v6772 = vmul.f32 %v1438, %v6196
  %v6773 = vmul.f32 %v1681, %v6196
  %v6774 = vmul.f32 %v1683, %v6196
  %v6775 = vmul.f32 %v1926, %v6196
  %v6776 = vmul.f32 %v1928, %v6196
  %v6777 = vmul.f32 %v2171, %v6196
  %v6778 = vmul.f32 %v2173, %v6196
  %v6779 = vmul.f32 %v2416, %v6196
  %v6780 = vmul.f32 %v2418, %v6196
  %v6781 = vmul.f32 %v2661, %v6196
  %v6782 = vmul.f32 %v2663, %v6196
  %v6783 = vmul.f32 %v2906, %v6196
  %v6784 = vmul.f32 %v2908, %v6196
  %v6785 = vmul.f32 %v3151, %v6196
  %v6786 = vmul.f32 %v3153, %v6196
  %v6787 = vmul.f32 %v3375, %v6196
  %v6788 = vmul.f32 %v462, %v6201
  %v6789 = vmul.f32 %v464, %v6201
  %v6790 = vmul.f32 %v707, %v6201
  %v6791 = vmul.f32 %v709, %v6201
  %v6792 = vmul.f32 %v952, %v6201
  %v6793 = vmul.f32 %v954, %v6201
  %v6794 = vmul.f32 %v1197, %v6201
  %v6795 = vmul.f32 %v1199, %v6201
  %v6796 = vmul.f32 %v1442, %v6201
  %v6797 = vmul.f32 %v1444, %v6201
  %v6798 = vmul.f32 %v1687, %v6201
  %v6799 = vmul.f32 %v1689, %v6201
  %v6800 = vmul.f32 %v1932, %v6201
  %v6801 = vmul.f32 %v1934, %v6201
  %v6802 = vmul.f32 %v2177, %v6201
  %v6803 = vmul.f32 %v2179, %v6201
  %v6804 = vmul.f32 %v2422, %v6201
  %v6805 = vmul.f32 %v2424, %v6201
  %v6806 = vmul.f32 %v2667, %v6201
  %v6807 = vmul.f32 %v2669, %v6201
  %v6808 = vmul.f32 %v2912, %v6201
  %v6809 = vmul.f32 %v2914, %v6201
  %v6810 = vmul.f32 %v3157, %v6201
  %v6811 = vmul.f32 %v3159, %v6201
  %v6812 = vmul.f32 %v3380, %v6201
  %v6813 = vmul.f32 %v468, %v6206
  %v6814 = vmul.f32 %v470, %v6206
  %v6815 = vmul.f32 %v713, %v6206
  %v6816 = vmul.f32 %v715, %v6206
  %v6817 = vmul.f32 %v958, %v6206
  %v6818 = vmul.f32 %v960, %v6206
  %v6819 = vmul.f32 %v1203, %v6206
  %v6820 = vmul.f32 %v1205, %v6206
  %v6821 = vmul.f32 %v1448, %v6206
  %v6822 = vmul.f32 %v1450, %v6206
  %v6823 = vmul.f32 %v1693, %v6206
  %v6824 = vmul.f32 %v1695, %v6206
  %v6825 = vmul.f32 %v1938, %v6206
  %v6826 = vmul.f32 %v1940, %v6206
  %v6827 = vmul.f32 %v2183, %v6206
  %v6828 = vmul.f32 %v2185, %v6206
  %v6829 = vmul.f32 %v2428, %v6206
  %v6830 = vmul.f32 %v2430, %v6206
  %v6831 = vmul.f32 %v2673, %v6206
  %v6832 = vmul.f32 %v2675, %v6206
  %v6833 = vmul.f32 %v2918, %v6206
  %v6834 = vmul.f32 %v2920, %v6206
  %v6835 = vmul.f32 %v3163, %v6206
  %v6836 = vmul.f32 %v3165, %v6206
  %v6837 = vmul.f32 %v3385, %v6206
  %v6838 = vmul.f32 %v474, %v6211
  %v6839 = vmul.f32 %v476, %v6211
  %v6840 = vmul.f32 %v719, %v6211
  %v6841 = vmul.f32 %v721, %v6211
  %v6842 = vmul.f32 %v964, %v6211
  %v6843 = vmul.f32 %v966, %v6211
  %v6844 = vmul.f32 %v1209, %v6211
  %v6845 = vmul.f32 %v1211, %v6211
  %v6846 = vmul.f32 %v1454, %v6211
  %v6847 = vmul.f32 %v1456, %v6211
  %v6848 = vmul.f32 %v1699, %v6211
  %v6849 = vmul.f32 %v1701, %v6211
  %v6850 = vmul.f32 %v1944, %v6211
  %v6851 = vmul.f32 %v1946, %v6211
  %v6852 = vmul.f32 %v2189, %v6211
  %v6853 = vmul.f32 %v2191, %v6211
  %v6854 = vmul.f32 %v2434, %v6211
  %v6855 = vmul.f32 %v2436, %v6211
  %v6856 = vmul.f32 %v2679, %v6211
  %v6857 = vmul.f32 %v2681, %v6211
  %v6858 = vmul.f32 %v2924, %v6211
  %v6859 = vmul.f32 %v2926, %v6211
  %v6860 = vmul.f32 %v3169, %v6211
  %v6861 = vmul.f32 %v3171, %v6211
  %v6862 = vmul.f32 %v3390, %v6211
  %v6863 = vmul.f32 %v480, %v6216
  %v6864 = vmul.f32 %v482, %v6216
  %v6865 = vmul.f32 %v725, %v6216
  %v6866 = vmul.f32 %v727, %v6216
  %v6867 = vmul.f32 %v970, %v6216
  %v6868 = vmul.f32 %v972, %v6216
  %v6869 = vmul.f32 %v1215, %v6216
  %v6870 = vmul.f32 %v1217, %v6216
  %v6871 = vmul.f32 %v1460, %v6216
  %v6872 = vmul.f32 %v1462, %v6216
  %v6873 = vmul.f32 %v1705, %v6216
  %v6874 = vmul.f32 %v1707, %v6216
  %v6875 = vmul.f32 %v1950, %v6216
  %v6876 = vmul.f32 %v1952, %v6216
  %v6877 = vmul.f32 %v2195, %v6216
  %v6878 = vmul.f32 %v2197, %v6216
  %v6879 = vmul.f32 %v2440, %v6216
  %v6880 = vmul.f32 %v2442, %v6216
  %v6881 = vmul.f32 %v2685, %v6216
  %v6882 = vmul.f32 %v2687, %v6216
  %v6883 = vmul.f32 %v2930, %v6216
  %v6884 = vmul.f32 %v2932, %v6216
  %v6885 = vmul.f32 %v3175, %v6216
  %v6886 = vmul.f32 %v3177, %v6216
  %v6887 = vmul.f32 %v3395, %v6216
  %v6888 = vmul.f32 %v486, %v6221
  %v6889 = vmul.f32 %v488, %v6221
  %v6890 = vmul.f32 %v731, %v6221
  %v6891 = vmul.f32 %v733, %v6221
  %v6892 = vmul.f32 %v976, %v6221
  %v6893 = vmul.f32 %v978, %v6221
  %v6894 = vmul.f32 %v1221, %v6221
  %v6895 = vmul.f32 %v1223, %v6221
  %v6896 = vmul.f32 %v1466, %v6221
  %v6897 = vmul.f32 %v1468, %v6221
  %v6898 = vmul.f32 %v1711, %v6221
  %v6899 = vmul.f32 %v1713, %v6221
  %v6900 = vmul.f32 %v1956, %v6221
  %v6901 = vmul.f32 %v1958, %v6221
  %v6902 = vmul.f32 %v2201, %v6221
  %v6903 = vmul.f32 %v2203, %v6221
  %v6904 = vmul.f32 %v2446, %v6221
  %v6905 = vmul.f32 %v2448, %v6221
  %v6906 = vmul.f32 %v2691, %v6221
  %v6907 = vmul.f32 %v2693, %v6221
  %v6908 = vmul.f32 %v2936, %v6221
  %v6909 = vmul.f32 %v2938, %v6221
  %v6910 = vmul.f32 %v3181, %v6221
  %v6911 = vmul.f32 %v3183, %v6221
  %v6912 = vmul.f32 %v3400, %v6221
  %v6913 = vmul.f32 %v492, %v6226
  %v6914 = vmul.f32 %v494, %v6226
  %v6915 = vmul.f32 %v737, %v6226
  %v6916 = vmul.f32 %v739, %v6226
  %v6917 = vmul.f32 %v982, %v6226
  %v6918 = vmul.f32 %v984, %v6226
  %v6919 = vmul.f32 %v1227, %v6226
  %v6920 = vmul.f32 %v1229, %v6226
  %v6921 = vmul.f32 %v1472, %v6226
  %v6922 = vmul.f32 %v1474, %v6226
  %v6923 = vmul.f32 %v1717, %v6226
  %v6924 = vmul.f32 %v1719, %v6226
  %v6925 = vmul.f32 %v1962, %v6226
  %v6926 = vmul.f32 %v1964, %v6226
  %v6927 = vmul.f32 %v2207, %v6226
  %v6928 = vmul.f32 %v2209, %v6226
  %v6929 = vmul.f32 %v2452, %v6226
  %v6930 = vmul.f32 %v2454, %v6226
  %v6931 = vmul.f32 %v2697, %v6226
  %v6932 = vmul.f32 %v2699, %v6226
  %v6933 = vmul.f32 %v2942, %v6226
  %v6934 = vmul.f32 %v2944, %v6226
  %v6935 = vmul.f32 %v3187, %v6226
  %v6936 = vmul.f32 %v3189, %v6226
  %v6937 = vmul.f32 %v3405, %v6226
  %v6938 = vmul.f32 %v498, %v6231
  %v6939 = vmul.f32 %v500, %v6231
  %v6940 = vmul.f32 %v743, %v6231
  %v6941 = vmul.f32 %v745, %v6231
  %v6942 = vmul.f32 %v988, %v6231
  %v6943 = vmul.f32 %v990, %v6231
  %v6944 = vmul.f32 %v1233, %v6231
  %v6945 = vmul.f32 %v1235, %v6231
  %v6946 = vmul.f32 %v1478, %v6231
  %v6947 = vmul.f32 %v1480, %v6231
  %v6948 = vmul.f32 %v1723, %v6231
  %v6949 = vmul.f32 %v1725, %v6231
  %v6950 = vmul.f32 %v1968, %v6231
  %v6951 = vmul.f32 %v1970, %v6231
  %v6952 = vmul.f32 %v2213, %v6231
  %v6953 = vmul.f32 %v2215, %v6231
  %v6954 = vmul.f32 %v2458, %v6231
  %v6955 = vmul.f32 %v2460, %v6231
  %v6956 = vmul.f32 %v2703, %v6231
  %v6957 = vmul.f32 %v2705, %v6231
  %v6958 = vmul.f32 %v2948, %v6231
  %v6959 = vmul.f32 %v2950, %v6231
  %v6960 = vmul.f32 %v3193, %v6231
  %v6961 = vmul.f32 %v3195, %v6231
  %v6962 = vmul.f32 %v3410, %v6231
  %v6963 = vmul.f32 %v504, %v6236
  %v6964 = vmul.f32 %v506, %v6236
  %v6965 = vmul.f32 %v749, %v6236
  %v6966 = vmul.f32 %v751, %v6236
  %v6967 = vmul.f32 %v994, %v6236
  %v6968 = vmul.f32 %v996, %v6236
  %v6969 = vmul.f32 %v1239, %v6236
  %v6970 = vmul.f32 %v1241, %v6236
  %v6971 = vmul.f32 %v1484, %v6236
  %v6972 = vmul.f32 %v1486, %v6236
  %v6973 = vmul.f32 %v1729, %v6236
  %v6974 = vmul.f32 %v1731, %v6236
  %v6975 = vmul.f32 %v1974, %v6236
  %v6976 = vmul.f32 %v1976, %v6236
  %v6977 = vmul.f32 %v2219, %v6236
  %v6978 = vmul.f32 %v2221, %v6236
  %v6979 = vmul.f32 %v2464, %v6236
  %v6980 = vmul.f32 %v2466, %v6236
  %v6981 = vmul.f32 %v2709, %v6236
  %v6982 = vmul.f32 %v2711, %v6236
  %v6983 = vmul.f32 %v2954, %v6236
  %v6984 = vmul.f32 %v2956, %v6236
  %v6985 = vmul.f32 %v3199, %v6236
  %v6986 = vmul.f32 %v3201, %v6236
  %v6987 = vmul.f32 %v3415, %v6236
  %6989 = vset.pattern.permute.xlu0 0
  %6990 = vperm.xlu0 %6989, %v6058
  %v6991 = vpop.permute.xlu0 %6990
  %6994 = vset.pattern.permute.xlu0 0
  %6995 = vperm.xlu0 %6994, %v6059
  %v6996 = vpop.permute.xlu0 %6995
  %6999 = vset.pattern.permute.xlu0 0
  %7000 = vperm.xlu0 %6999, %v6060
  %v7001 = vpop.permute.xlu0 %7000
  %7004 = vset.pattern.permute.xlu0 0
  %7005 = vperm.xlu0 %7004, %v6061
  %v7006 = vpop.permute.xlu0 %7005
  %7009 = vset.pattern.permute.xlu0 0
  %7010 = vperm.xlu0 %7009, %v6062
  %v7011 = vpop.permute.xlu0 %7010
  %7014 = vset.pattern.permute.xlu0 0
  %7015 = vperm.xlu0 %7014, %v6063
  %v7016 = vpop.permute.xlu0 %7015
  %7019 = vset.pattern.permute.xlu0 0
  %7020 = vperm.xlu0 %7019, %v6064
  %v7021 = vpop.permute.xlu0 %7020
  %7024 = vset.pattern.permute.xlu0 0
  %7025 = vperm.xlu0 %7024, %v6065
  %v7026 = vpop.permute.xlu0 %7025
  %7029 = vset.pattern.permute.xlu0 0
  %7030 = vperm.xlu0 %7029, %v6066
  %v7031 = vpop.permute.xlu0 %7030
  %7034 = vset.pattern.permute.xlu0 0
  %7035 = vperm.xlu0 %7034, %v6067
  %v7036 = vpop.permute.xlu0 %7035
  %7039 = vset.pattern.permute.xlu0 0
  %7040 = vperm.xlu0 %7039, %v6068
  %v7041 = vpop.permute.xlu0 %7040
  %7044 = vset.pattern.permute.xlu0 0
  %7045 = vperm.xlu0 %7044, %v6069
  %v7046 = vpop.permute.xlu0 %7045
  %7049 = vset.pattern.permute.xlu0 0
  %7050 = vperm.xlu0 %7049, %v6070
  %v7051 = vpop.permute.xlu0 %7050
  %7054 = vset.pattern.permute.xlu0 0
  %7055 = vperm.xlu0 %7054, %v6071
  %v7056 = vpop.permute.xlu0 %7055
  %7059 = vset.pattern.permute.xlu0 0
  %7060 = vperm.xlu0 %7059, %v6072
  %v7061 = vpop.permute.xlu0 %7060
  %7064 = vset.pattern.permute.xlu0 0
  %7065 = vperm.xlu0 %7064, %v6073
  %v7066 = vpop.permute.xlu0 %7065
  %7069 = vset.pattern.permute.xlu0 0
  %7070 = vperm.xlu0 %7069, %v6074
  %v7071 = vpop.permute.xlu0 %7070
  %7074 = vset.pattern.permute.xlu0 0
  %7075 = vperm.xlu0 %7074, %v6075
  %v7076 = vpop.permute.xlu0 %7075
  %7079 = vset.pattern.permute.xlu0 0
  %7080 = vperm.xlu0 %7079, %v6076
  %v7081 = vpop.permute.xlu0 %7080
  %7084 = vset.pattern.permute.xlu0 0
  %7085 = vperm.xlu0 %7084, %v6077
  %v7086 = vpop.permute.xlu0 %7085
  %7089 = vset.pattern.permute.xlu0 0
  %7090 = vperm.xlu0 %7089, %v6078
  %v7091 = vpop.permute.xlu0 %7090
  %7094 = vset.pattern.permute.xlu0 0
  %7095 = vperm.xlu0 %7094, %v6079
  %v7096 = vpop.permute.xlu0 %7095
  %7099 = vset.pattern.permute.xlu0 0
  %7100 = vperm.xlu0 %7099, %v6080
  %v7101 = vpop.permute.xlu0 %7100
  %7104 = vset.pattern.permute.xlu0 0
  %7105 = vperm.xlu0 %7104, %v6081
  %v7106 = vpop.permute.xlu0 %7105
  %7109 = vset.pattern.permute.xlu0 0
  %7110 = vperm.xlu0 %7109, %v6082
  %v7111 = vpop.permute.xlu0 %7110
  %7114 = vset.pattern.permute.xlu0 0
  %7115 = vperm.xlu0 %7114, %v6083
  %v7116 = vpop.permute.xlu0 %7115
  %7119 = vset.pattern.permute.xlu0 0
  %7120 = vperm.xlu0 %7119, %v6084
  %v7121 = vpop.permute.xlu0 %7120
  %7124 = vset.pattern.permute.xlu0 0
  %7125 = vperm.xlu0 %7124, %v6085
  %v7126 = vpop.permute.xlu0 %7125
  %7129 = vset.pattern.permute.xlu0 0
  %7130 = vperm.xlu0 %7129, %v6086
  %v7131 = vpop.permute.xlu0 %7130
  %7134 = vset.pattern.permute.xlu0 0
  %7135 = vperm.xlu0 %7134, %v6087
  %v7136 = vpop.permute.xlu0 %7135
  %v7138 = vadd.f32 %v6238, %v6991
  %v7139 = vadd.f32 %v6239, %v6991
  %v7140 = vadd.f32 %v6240, %v6991
  %v7141 = vadd.f32 %v6241, %v6991
  %v7142 = vadd.f32 %v6242, %v6991
  %v7143 = vadd.f32 %v6243, %v6991
  %v7144 = vadd.f32 %v6244, %v6991
  %v7145 = vadd.f32 %v6245, %v6991
  %v7146 = vadd.f32 %v6246, %v6991
  %v7147 = vadd.f32 %v6247, %v6991
  %v7148 = vadd.f32 %v6248, %v6991
  %v7149 = vadd.f32 %v6249, %v6991
  %v7150 = vadd.f32 %v6250, %v6991
  %v7151 = vadd.f32 %v6251, %v6991
  %v7152 = vadd.f32 %v6252, %v6991
  %v7153 = vadd.f32 %v6253, %v6991
  %v7154 = vadd.f32 %v6254, %v6991
  %v7155 = vadd.f32 %v6255, %v6991
  %v7156 = vadd.f32 %v6256, %v6991
  %v7157 = vadd.f32 %v6257, %v6991
  %v7158 = vadd.f32 %v6258, %v6991
  %v7159 = vadd.f32 %v6259, %v6991
  %v7160 = vadd.f32 %v6260, %v6991
  %v7161 = vadd.f32 %v6261, %v6991
  %v7162 = vadd.f32 %v6262, %v6991
  %v7163 = vadd.f32 %v6263, %v6996
  %v7164 = vadd.f32 %v6264, %v6996
  %v7165 = vadd.f32 %v6265, %v6996
  %v7166 = vadd.f32 %v6266, %v6996
  %v7167 = vadd.f32 %v6267, %v6996
  %v7168 = vadd.f32 %v6268, %v6996
  %v7169 = vadd.f32 %v6269, %v6996
  %v7170 = vadd.f32 %v6270, %v6996
  %v7171 = vadd.f32 %v6271, %v6996
  %v7172 = vadd.f32 %v6272, %v6996
  %v7173 = vadd.f32 %v6273, %v6996
  %v7174 = vadd.f32 %v6274, %v6996
  %v7175 = vadd.f32 %v6275, %v6996
  %v7176 = vadd.f32 %v6276, %v6996
  %v7177 = vadd.f32 %v6277, %v6996
  %v7178 = vadd.f32 %v6278, %v6996
  %v7179 = vadd.f32 %v6279, %v6996
  %v7180 = vadd.f32 %v6280, %v6996
  %v7181 = vadd.f32 %v6281, %v6996
  %v7182 = vadd.f32 %v6282, %v6996
  %v7183 = vadd.f32 %v6283, %v6996
  %v7184 = vadd.f32 %v6284, %v6996
  %v7185 = vadd.f32 %v6285, %v6996
  %v7186 = vadd.f32 %v6286, %v6996
  %v7187 = vadd.f32 %v6287, %v6996
  %v7188 = vadd.f32 %v6288, %v7001
  %v7189 = vadd.f32 %v6289, %v7001
  %v7190 = vadd.f32 %v6290, %v7001
  %v7191 = vadd.f32 %v6291, %v7001
  %v7192 = vadd.f32 %v6292, %v7001
  %v7193 = vadd.f32 %v6293, %v7001
  %v7194 = vadd.f32 %v6294, %v7001
  %v7195 = vadd.f32 %v6295, %v7001
  %v7196 = vadd.f32 %v6296, %v7001
  %v7197 = vadd.f32 %v6297, %v7001
  %v7198 = vadd.f32 %v6298, %v7001
  %v7199 = vadd.f32 %v6299, %v7001
  %v7200 = vadd.f32 %v6300, %v7001
  %v7201 = vadd.f32 %v6301, %v7001
  %v7202 = vadd.f32 %v6302, %v7001
  %v7203 = vadd.f32 %v6303, %v7001
  %v7204 = vadd.f32 %v6304, %v7001
  %v7205 = vadd.f32 %v6305, %v7001
  %v7206 = vadd.f32 %v6306, %v7001
  %v7207 = vadd.f32 %v6307, %v7001
  %v7208 = vadd.f32 %v6308, %v7001
  %v7209 = vadd.f32 %v6309, %v7001
  %v7210 = vadd.f32 %v6310, %v7001
  %v7211 = vadd.f32 %v6311, %v7001
  %v7212 = vadd.f32 %v6312, %v7001
  %v7213 = vadd.f32 %v6313, %v7006
  %v7214 = vadd.f32 %v6314, %v7006
  %v7215 = vadd.f32 %v6315, %v7006
  %v7216 = vadd.f32 %v6316, %v7006
  %v7217 = vadd.f32 %v6317, %v7006
  %v7218 = vadd.f32 %v6318, %v7006
  %v7219 = vadd.f32 %v6319, %v7006
  %v7220 = vadd.f32 %v6320, %v7006
  %v7221 = vadd.f32 %v6321, %v7006
  %v7222 = vadd.f32 %v6322, %v7006
  %v7223 = vadd.f32 %v6323, %v7006
  %v7224 = vadd.f32 %v6324, %v7006
  %v7225 = vadd.f32 %v6325, %v7006
  %v7226 = vadd.f32 %v6326, %v7006
  %v7227 = vadd.f32 %v6327, %v7006
  %v7228 = vadd.f32 %v6328, %v7006
  %v7229 = vadd.f32 %v6329, %v7006
  %v7230 = vadd.f32 %v6330, %v7006
  %v7231 = vadd.f32 %v6331, %v7006
  %v7232 = vadd.f32 %v6332, %v7006
  %v7233 = vadd.f32 %v6333, %v7006
  %v7234 = vadd.f32 %v6334, %v7006
  %v7235 = vadd.f32 %v6335, %v7006
  %v7236 = vadd.f32 %v6336, %v7006
  %v7237 = vadd.f32 %v6337, %v7006
  %v7238 = vadd.f32 %v6338, %v7011
  %v7239 = vadd.f32 %v6339, %v7011
  %v7240 = vadd.f32 %v6340, %v7011
  %v7241 = vadd.f32 %v6341, %v7011
  %v7242 = vadd.f32 %v6342, %v7011
  %v7243 = vadd.f32 %v6343, %v7011
  %v7244 = vadd.f32 %v6344, %v7011
  %v7245 = vadd.f32 %v6345, %v7011
  %v7246 = vadd.f32 %v6346, %v7011
  %v7247 = vadd.f32 %v6347, %v7011
  %v7248 = vadd.f32 %v6348, %v7011
  %v7249 = vadd.f32 %v6349, %v7011
  %v7250 = vadd.f32 %v6350, %v7011
  %v7251 = vadd.f32 %v6351, %v7011
  %v7252 = vadd.f32 %v6352, %v7011
  %v7253 = vadd.f32 %v6353, %v7011
  %v7254 = vadd.f32 %v6354, %v7011
  %v7255 = vadd.f32 %v6355, %v7011
  %v7256 = vadd.f32 %v6356, %v7011
  %v7257 = vadd.f32 %v6357, %v7011
  %v7258 = vadd.f32 %v6358, %v7011
  %v7259 = vadd.f32 %v6359, %v7011
  %v7260 = vadd.f32 %v6360, %v7011
  %v7261 = vadd.f32 %v6361, %v7011
  %v7262 = vadd.f32 %v6362, %v7011
  %v7263 = vadd.f32 %v6363, %v7016
  %v7264 = vadd.f32 %v6364, %v7016
  %v7265 = vadd.f32 %v6365, %v7016
  %v7266 = vadd.f32 %v6366, %v7016
  %v7267 = vadd.f32 %v6367, %v7016
  %v7268 = vadd.f32 %v6368, %v7016
  %v7269 = vadd.f32 %v6369, %v7016
  %v7270 = vadd.f32 %v6370, %v7016
  %v7271 = vadd.f32 %v6371, %v7016
  %v7272 = vadd.f32 %v6372, %v7016
  %v7273 = vadd.f32 %v6373, %v7016
  %v7274 = vadd.f32 %v6374, %v7016
  %v7275 = vadd.f32 %v6375, %v7016
  %v7276 = vadd.f32 %v6376, %v7016
  %v7277 = vadd.f32 %v6377, %v7016
  %v7278 = vadd.f32 %v6378, %v7016
  %v7279 = vadd.f32 %v6379, %v7016
  %v7280 = vadd.f32 %v6380, %v7016
  %v7281 = vadd.f32 %v6381, %v7016
  %v7282 = vadd.f32 %v6382, %v7016
  %v7283 = vadd.f32 %v6383, %v7016
  %v7284 = vadd.f32 %v6384, %v7016
  %v7285 = vadd.f32 %v6385, %v7016
  %v7286 = vadd.f32 %v6386, %v7016
  %v7287 = vadd.f32 %v6387, %v7016
  %v7288 = vadd.f32 %v6388, %v7021
  %v7289 = vadd.f32 %v6389, %v7021
  %v7290 = vadd.f32 %v6390, %v7021
  %v7291 = vadd.f32 %v6391, %v7021
  %v7292 = vadd.f32 %v6392, %v7021
  %v7293 = vadd.f32 %v6393, %v7021
  %v7294 = vadd.f32 %v6394, %v7021
  %v7295 = vadd.f32 %v6395, %v7021
  %v7296 = vadd.f32 %v6396, %v7021
  %v7297 = vadd.f32 %v6397, %v7021
  %v7298 = vadd.f32 %v6398, %v7021
  %v7299 = vadd.f32 %v6399, %v7021
  %v7300 = vadd.f32 %v6400, %v7021
  %v7301 = vadd.f32 %v6401, %v7021
  %v7302 = vadd.f32 %v6402, %v7021
  %v7303 = vadd.f32 %v6403, %v7021
  %v7304 = vadd.f32 %v6404, %v7021
  %v7305 = vadd.f32 %v6405, %v7021
  %v7306 = vadd.f32 %v6406, %v7021
  %v7307 = vadd.f32 %v6407, %v7021
  %v7308 = vadd.f32 %v6408, %v7021
  %v7309 = vadd.f32 %v6409, %v7021
  %v7310 = vadd.f32 %v6410, %v7021
  %v7311 = vadd.f32 %v6411, %v7021
  %v7312 = vadd.f32 %v6412, %v7021
  %v7313 = vadd.f32 %v6413, %v7026
  %v7314 = vadd.f32 %v6414, %v7026
  %v7315 = vadd.f32 %v6415, %v7026
  %v7316 = vadd.f32 %v6416, %v7026
  %v7317 = vadd.f32 %v6417, %v7026
  %v7318 = vadd.f32 %v6418, %v7026
  %v7319 = vadd.f32 %v6419, %v7026
  %v7320 = vadd.f32 %v6420, %v7026
  %v7321 = vadd.f32 %v6421, %v7026
  %v7322 = vadd.f32 %v6422, %v7026
  %v7323 = vadd.f32 %v6423, %v7026
  %v7324 = vadd.f32 %v6424, %v7026
  %v7325 = vadd.f32 %v6425, %v7026
  %v7326 = vadd.f32 %v6426, %v7026
  %v7327 = vadd.f32 %v6427, %v7026
  %v7328 = vadd.f32 %v6428, %v7026
  %v7329 = vadd.f32 %v6429, %v7026
  %v7330 = vadd.f32 %v6430, %v7026
  %v7331 = vadd.f32 %v6431, %v7026
  %v7332 = vadd.f32 %v6432, %v7026
  %v7333 = vadd.f32 %v6433, %v7026
  %v7334 = vadd.f32 %v6434, %v7026
  %v7335 = vadd.f32 %v6435, %v7026
  %v7336 = vadd.f32 %v6436, %v7026
  %v7337 = vadd.f32 %v6437, %v7026
  %v7338 = vadd.f32 %v6438, %v7031
  %v7339 = vadd.f32 %v6439, %v7031
  %v7340 = vadd.f32 %v6440, %v7031
  %v7341 = vadd.f32 %v6441, %v7031
  %v7342 = vadd.f32 %v6442, %v7031
  %v7343 = vadd.f32 %v6443, %v7031
  %v7344 = vadd.f32 %v6444, %v7031
  %v7345 = vadd.f32 %v6445, %v7031
  %v7346 = vadd.f32 %v6446, %v7031
  %v7347 = vadd.f32 %v6447, %v7031
  %v7348 = vadd.f32 %v6448, %v7031
  %v7349 = vadd.f32 %v6449, %v7031
  %v7350 = vadd.f32 %v6450, %v7031
  %v7351 = vadd.f32 %v6451, %v7031
  %v7352 = vadd.f32 %v6452, %v7031
  %v7353 = vadd.f32 %v6453, %v7031
  %v7354 = vadd.f32 %v6454, %v7031
  %v7355 = vadd.f32 %v6455, %v7031
  %v7356 = vadd.f32 %v6456, %v7031
  %v7357 = vadd.f32 %v6457, %v7031
  %v7358 = vadd.f32 %v6458, %v7031
  %v7359 = vadd.f32 %v6459, %v7031
  %v7360 = vadd.f32 %v6460, %v7031
  %v7361 = vadd.f32 %v6461, %v7031
  %v7362 = vadd.f32 %v6462, %v7031
  %v7363 = vadd.f32 %v6463, %v7036
  %v7364 = vadd.f32 %v6464, %v7036
  %v7365 = vadd.f32 %v6465, %v7036
  %v7366 = vadd.f32 %v6466, %v7036
  %v7367 = vadd.f32 %v6467, %v7036
  %v7368 = vadd.f32 %v6468, %v7036
  %v7369 = vadd.f32 %v6469, %v7036
  %v7370 = vadd.f32 %v6470, %v7036
  %v7371 = vadd.f32 %v6471, %v7036
  %v7372 = vadd.f32 %v6472, %v7036
  %v7373 = vadd.f32 %v6473, %v7036
  %v7374 = vadd.f32 %v6474, %v7036
  %v7375 = vadd.f32 %v6475, %v7036
  %v7376 = vadd.f32 %v6476, %v7036
  %v7377 = vadd.f32 %v6477, %v7036
  %v7378 = vadd.f32 %v6478, %v7036
  %v7379 = vadd.f32 %v6479, %v7036
  %v7380 = vadd.f32 %v6480, %v7036
  %v7381 = vadd.f32 %v6481, %v7036
  %v7382 = vadd.f32 %v6482, %v7036
  %v7383 = vadd.f32 %v6483, %v7036
  %v7384 = vadd.f32 %v6484, %v7036
  %v7385 = vadd.f32 %v6485, %v7036
  %v7386 = vadd.f32 %v6486, %v7036
  %v7387 = vadd.f32 %v6487, %v7036
  %v7388 = vadd.f32 %v6488, %v7041
  %v7389 = vadd.f32 %v6489, %v7041
  %v7390 = vadd.f32 %v6490, %v7041
  %v7391 = vadd.f32 %v6491, %v7041
  %v7392 = vadd.f32 %v6492, %v7041
  %v7393 = vadd.f32 %v6493, %v7041
  %v7394 = vadd.f32 %v6494, %v7041
  %v7395 = vadd.f32 %v6495, %v7041
  %v7396 = vadd.f32 %v6496, %v7041
  %v7397 = vadd.f32 %v6497, %v7041
  %v7398 = vadd.f32 %v6498, %v7041
  %v7399 = vadd.f32 %v6499, %v7041
  %v7400 = vadd.f32 %v6500, %v7041
  %v7401 = vadd.f32 %v6501, %v7041
  %v7402 = vadd.f32 %v6502, %v7041
  %v7403 = vadd.f32 %v6503, %v7041
  %v7404 = vadd.f32 %v6504, %v7041
  %v7405 = vadd.f32 %v6505, %v7041
  %v7406 = vadd.f32 %v6506, %v7041
  %v7407 = vadd.f32 %v6507, %v7041
  %v7408 = vadd.f32 %v6508, %v7041
  %v7409 = vadd.f32 %v6509, %v7041
  %v7410 = vadd.f32 %v6510, %v7041
  %v7411 = vadd.f32 %v6511, %v7041
  %v7412 = vadd.f32 %v6512, %v7041
  %v7413 = vadd.f32 %v6513, %v7046
  %v7414 = vadd.f32 %v6514, %v7046
  %v7415 = vadd.f32 %v6515, %v7046
  %v7416 = vadd.f32 %v6516, %v7046
  %v7417 = vadd.f32 %v6517, %v7046
  %v7418 = vadd.f32 %v6518, %v7046
  %v7419 = vadd.f32 %v6519, %v7046
  %v7420 = vadd.f32 %v6520, %v7046
  %v7421 = vadd.f32 %v6521, %v7046
  %v7422 = vadd.f32 %v6522, %v7046
  %v7423 = vadd.f32 %v6523, %v7046
  %v7424 = vadd.f32 %v6524, %v7046
  %v7425 = vadd.f32 %v6525, %v7046
  %v7426 = vadd.f32 %v6526, %v7046
  %v7427 = vadd.f32 %v6527, %v7046
  %v7428 = vadd.f32 %v6528, %v7046
  %v7429 = vadd.f32 %v6529, %v7046
  %v7430 = vadd.f32 %v6530, %v7046
  %v7431 = vadd.f32 %v6531, %v7046
  %v7432 = vadd.f32 %v6532, %v7046
  %v7433 = vadd.f32 %v6533, %v7046
  %v7434 = vadd.f32 %v6534, %v7046
  %v7435 = vadd.f32 %v6535, %v7046
  %v7436 = vadd.f32 %v6536, %v7046
  %v7437 = vadd.f32 %v6537, %v7046
  %v7438 = vadd.f32 %v6538, %v7051
  %v7439 = vadd.f32 %v6539, %v7051
  %v7440 = vadd.f32 %v6540, %v7051
  %v7441 = vadd.f32 %v6541, %v7051
  %v7442 = vadd.f32 %v6542, %v7051
  %v7443 = vadd.f32 %v6543, %v7051
  %v7444 = vadd.f32 %v6544, %v7051
  %v7445 = vadd.f32 %v6545, %v7051
  %v7446 = vadd.f32 %v6546, %v7051
  %v7447 = vadd.f32 %v6547, %v7051
  %v7448 = vadd.f32 %v6548, %v7051
  %v7449 = vadd.f32 %v6549, %v7051
  %v7450 = vadd.f32 %v6550, %v7051
  %v7451 = vadd.f32 %v6551, %v7051
  %v7452 = vadd.f32 %v6552, %v7051
  %v7453 = vadd.f32 %v6553, %v7051
  %v7454 = vadd.f32 %v6554, %v7051
  %v7455 = vadd.f32 %v6555, %v7051
  %v7456 = vadd.f32 %v6556, %v7051
  %v7457 = vadd.f32 %v6557, %v7051
  %v7458 = vadd.f32 %v6558, %v7051
  %v7459 = vadd.f32 %v6559, %v7051
  %v7460 = vadd.f32 %v6560, %v7051
  %v7461 = vadd.f32 %v6561, %v7051
  %v7462 = vadd.f32 %v6562, %v7051
  %v7463 = vadd.f32 %v6563, %v7056
  %v7464 = vadd.f32 %v6564, %v7056
  %v7465 = vadd.f32 %v6565, %v7056
  %v7466 = vadd.f32 %v6566, %v7056
  %v7467 = vadd.f32 %v6567, %v7056
  %v7468 = vadd.f32 %v6568, %v7056
  %v7469 = vadd.f32 %v6569, %v7056
  %v7470 = vadd.f32 %v6570, %v7056
  %v7471 = vadd.f32 %v6571, %v7056
  %v7472 = vadd.f32 %v6572, %v7056
  %v7473 = vadd.f32 %v6573, %v7056
  %v7474 = vadd.f32 %v6574, %v7056
  %v7475 = vadd.f32 %v6575, %v7056
  %v7476 = vadd.f32 %v6576, %v7056
  %v7477 = vadd.f32 %v6577, %v7056
  %v7478 = vadd.f32 %v6578, %v7056
  %v7479 = vadd.f32 %v6579, %v7056
  %v7480 = vadd.f32 %v6580, %v7056
  %v7481 = vadd.f32 %v6581, %v7056
  %v7482 = vadd.f32 %v6582, %v7056
  %v7483 = vadd.f32 %v6583, %v7056
  %v7484 = vadd.f32 %v6584, %v7056
  %v7485 = vadd.f32 %v6585, %v7056
  %v7486 = vadd.f32 %v6586, %v7056
  %v7487 = vadd.f32 %v6587, %v7056
  %v7488 = vadd.f32 %v6588, %v7061
  %v7489 = vadd.f32 %v6589, %v7061
  %v7490 = vadd.f32 %v6590, %v7061
  %v7491 = vadd.f32 %v6591, %v7061
  %v7492 = vadd.f32 %v6592, %v7061
  %v7493 = vadd.f32 %v6593, %v7061
  %v7494 = vadd.f32 %v6594, %v7061
  %v7495 = vadd.f32 %v6595, %v7061
  %v7496 = vadd.f32 %v6596, %v7061
  %v7497 = vadd.f32 %v6597, %v7061
  %v7498 = vadd.f32 %v6598, %v7061
  %v7499 = vadd.f32 %v6599, %v7061
  %v7500 = vadd.f32 %v6600, %v7061
  %v7501 = vadd.f32 %v6601, %v7061
  %v7502 = vadd.f32 %v6602, %v7061
  %v7503 = vadd.f32 %v6603, %v7061
  %v7504 = vadd.f32 %v6604, %v7061
  %v7505 = vadd.f32 %v6605, %v7061
  %v7506 = vadd.f32 %v6606, %v7061
  %v7507 = vadd.f32 %v6607, %v7061
  %v7508 = vadd.f32 %v6608, %v7061
  %v7509 = vadd.f32 %v6609, %v7061
  %v7510 = vadd.f32 %v6610, %v7061
  %v7511 = vadd.f32 %v6611, %v7061
  %v7512 = vadd.f32 %v6612, %v7061
  %v7513 = vadd.f32 %v6613, %v7066
  %v7514 = vadd.f32 %v6614, %v7066
  %v7515 = vadd.f32 %v6615, %v7066
  %v7516 = vadd.f32 %v6616, %v7066
  %v7517 = vadd.f32 %v6617, %v7066
  %v7518 = vadd.f32 %v6618, %v7066
  %v7519 = vadd.f32 %v6619, %v7066
  %v7520 = vadd.f32 %v6620, %v7066
  %v7521 = vadd.f32 %v6621, %v7066
  %v7522 = vadd.f32 %v6622, %v7066
  %v7523 = vadd.f32 %v6623, %v7066
  %v7524 = vadd.f32 %v6624, %v7066
  %v7525 = vadd.f32 %v6625, %v7066
  %v7526 = vadd.f32 %v6626, %v7066
  %v7527 = vadd.f32 %v6627, %v7066
  %v7528 = vadd.f32 %v6628, %v7066
  %v7529 = vadd.f32 %v6629, %v7066
  %v7530 = vadd.f32 %v6630, %v7066
  %v7531 = vadd.f32 %v6631, %v7066
  %v7532 = vadd.f32 %v6632, %v7066
  %v7533 = vadd.f32 %v6633, %v7066
  %v7534 = vadd.f32 %v6634, %v7066
  %v7535 = vadd.f32 %v6635, %v7066
  %v7536 = vadd.f32 %v6636, %v7066
  %v7537 = vadd.f32 %v6637, %v7066
  %v7538 = vadd.f32 %v6638, %v7071
  %v7539 = vadd.f32 %v6639, %v7071
  %v7540 = vadd.f32 %v6640, %v7071
  %v7541 = vadd.f32 %v6641, %v7071
  %v7542 = vadd.f32 %v6642, %v7071
  %v7543 = vadd.f32 %v6643, %v7071
  %v7544 = vadd.f32 %v6644, %v7071
  %v7545 = vadd.f32 %v6645, %v7071
  %v7546 = vadd.f32 %v6646, %v7071
  %v7547 = vadd.f32 %v6647, %v7071
  %v7548 = vadd.f32 %v6648, %v7071
  %v7549 = vadd.f32 %v6649, %v7071
  %v7550 = vadd.f32 %v6650, %v7071
  %v7551 = vadd.f32 %v6651, %v7071
  %v7552 = vadd.f32 %v6652, %v7071
  %v7553 = vadd.f32 %v6653, %v7071
  %v7554 = vadd.f32 %v6654, %v7071
  %v7555 = vadd.f32 %v6655, %v7071
  %v7556 = vadd.f32 %v6656, %v7071
  %v7557 = vadd.f32 %v6657, %v7071
  %v7558 = vadd.f32 %v6658, %v7071
  %v7559 = vadd.f32 %v6659, %v7071
  %v7560 = vadd.f32 %v6660, %v7071
  %v7561 = vadd.f32 %v6661, %v7071
  %v7562 = vadd.f32 %v6662, %v7071
  %v7563 = vadd.f32 %v6663, %v7076
  %v7564 = vadd.f32 %v6664, %v7076
  %v7565 = vadd.f32 %v6665, %v7076
  %v7566 = vadd.f32 %v6666, %v7076
  %v7567 = vadd.f32 %v6667, %v7076
  %v7568 = vadd.f32 %v6668, %v7076
  %v7569 = vadd.f32 %v6669, %v7076
  %v7570 = vadd.f32 %v6670, %v7076
  %v7571 = vadd.f32 %v6671, %v7076
  %v7572 = vadd.f32 %v6672, %v7076
  %v7573 = vadd.f32 %v6673, %v7076
  %v7574 = vadd.f32 %v6674, %v7076
  %v7575 = vadd.f32 %v6675, %v7076
  %v7576 = vadd.f32 %v6676, %v7076
  %v7577 = vadd.f32 %v6677, %v7076
  %v7578 = vadd.f32 %v6678, %v7076
  %v7579 = vadd.f32 %v6679, %v7076
  %v7580 = vadd.f32 %v6680, %v7076
  %v7581 = vadd.f32 %v6681, %v7076
  %v7582 = vadd.f32 %v6682, %v7076
  %v7583 = vadd.f32 %v6683, %v7076
  %v7584 = vadd.f32 %v6684, %v7076
  %v7585 = vadd.f32 %v6685, %v7076
  %v7586 = vadd.f32 %v6686, %v7076
  %v7587 = vadd.f32 %v6687, %v7076
  %v7588 = vadd.f32 %v6688, %v7081
  %v7589 = vadd.f32 %v6689, %v7081
  %v7590 = vadd.f32 %v6690, %v7081
  %v7591 = vadd.f32 %v6691, %v7081
  %v7592 = vadd.f32 %v6692, %v7081
  %v7593 = vadd.f32 %v6693, %v7081
  %v7594 = vadd.f32 %v6694, %v7081
  %v7595 = vadd.f32 %v6695, %v7081
  %v7596 = vadd.f32 %v6696, %v7081
  %v7597 = vadd.f32 %v6697, %v7081
  %v7598 = vadd.f32 %v6698, %v7081
  %v7599 = vadd.f32 %v6699, %v7081
  %v7600 = vadd.f32 %v6700, %v7081
  %v7601 = vadd.f32 %v6701, %v7081
  %v7602 = vadd.f32 %v6702, %v7081
  %v7603 = vadd.f32 %v6703, %v7081
  %v7604 = vadd.f32 %v6704, %v7081
  %v7605 = vadd.f32 %v6705, %v7081
  %v7606 = vadd.f32 %v6706, %v7081
  %v7607 = vadd.f32 %v6707, %v7081
  %v7608 = vadd.f32 %v6708, %v7081
  %v7609 = vadd.f32 %v6709, %v7081
  %v7610 = vadd.f32 %v6710, %v7081
  %v7611 = vadd.f32 %v6711, %v7081
  %v7612 = vadd.f32 %v6712, %v7081
  %v7613 = vadd.f32 %v6713, %v7086
  %v7614 = vadd.f32 %v6714, %v7086
  %v7615 = vadd.f32 %v6715, %v7086
  %v7616 = vadd.f32 %v6716, %v7086
  %v7617 = vadd.f32 %v6717, %v7086
  %v7618 = vadd.f32 %v6718, %v7086
  %v7619 = vadd.f32 %v6719, %v7086
  %v7620 = vadd.f32 %v6720, %v7086
  %v7621 = vadd.f32 %v6721, %v7086
  %v7622 = vadd.f32 %v6722, %v7086
  %v7623 = vadd.f32 %v6723, %v7086
  %v7624 = vadd.f32 %v6724, %v7086
  %v7625 = vadd.f32 %v6725, %v7086
  %v7626 = vadd.f32 %v6726, %v7086
  %v7627 = vadd.f32 %v6727, %v7086
  %v7628 = vadd.f32 %v6728, %v7086
  %v7629 = vadd.f32 %v6729, %v7086
  %v7630 = vadd.f32 %v6730, %v7086
  %v7631 = vadd.f32 %v6731, %v7086
  %v7632 = vadd.f32 %v6732, %v7086
  %v7633 = vadd.f32 %v6733, %v7086
  %v7634 = vadd.f32 %v6734, %v7086
  %v7635 = vadd.f32 %v6735, %v7086
  %v7636 = vadd.f32 %v6736, %v7086
  %v7637 = vadd.f32 %v6737, %v7086
  %v7638 = vadd.f32 %v6738, %v7091
  %v7639 = vadd.f32 %v6739, %v7091
  %v7640 = vadd.f32 %v6740, %v7091
  %v7641 = vadd.f32 %v6741, %v7091
  %v7642 = vadd.f32 %v6742, %v7091
  %v7643 = vadd.f32 %v6743, %v7091
  %v7644 = vadd.f32 %v6744, %v7091
  %v7645 = vadd.f32 %v6745, %v7091
  %v7646 = vadd.f32 %v6746, %v7091
  %v7647 = vadd.f32 %v6747, %v7091
  %v7648 = vadd.f32 %v6748, %v7091
  %v7649 = vadd.f32 %v6749, %v7091
  %v7650 = vadd.f32 %v6750, %v7091
  %v7651 = vadd.f32 %v6751, %v7091
  %v7652 = vadd.f32 %v6752, %v7091
  %v7653 = vadd.f32 %v6753, %v7091
  %v7654 = vadd.f32 %v6754, %v7091
  %v7655 = vadd.f32 %v6755, %v7091
  %v7656 = vadd.f32 %v6756, %v7091
  %v7657 = vadd.f32 %v6757, %v7091
  %v7658 = vadd.f32 %v6758, %v7091
  %v7659 = vadd.f32 %v6759, %v7091
  %v7660 = vadd.f32 %v6760, %v7091
  %v7661 = vadd.f32 %v6761, %v7091
  %v7662 = vadd.f32 %v6762, %v7091
  %v7663 = vadd.f32 %v6763, %v7096
  %v7664 = vadd.f32 %v6764, %v7096
  %v7665 = vadd.f32 %v6765, %v7096
  %v7666 = vadd.f32 %v6766, %v7096
  %v7667 = vadd.f32 %v6767, %v7096
  %v7668 = vadd.f32 %v6768, %v7096
  %v7669 = vadd.f32 %v6769, %v7096
  %v7670 = vadd.f32 %v6770, %v7096
  %v7671 = vadd.f32 %v6771, %v7096
  %v7672 = vadd.f32 %v6772, %v7096
  %v7673 = vadd.f32 %v6773, %v7096
  %v7674 = vadd.f32 %v6774, %v7096
  %v7675 = vadd.f32 %v6775, %v7096
  %v7676 = vadd.f32 %v6776, %v7096
  %v7677 = vadd.f32 %v6777, %v7096
  %v7678 = vadd.f32 %v6778, %v7096
  %v7679 = vadd.f32 %v6779, %v7096
  %v7680 = vadd.f32 %v6780, %v7096
  %v7681 = vadd.f32 %v6781, %v7096
  %v7682 = vadd.f32 %v6782, %v7096
  %v7683 = vadd.f32 %v6783, %v7096
  %v7684 = vadd.f32 %v6784, %v7096
  %v7685 = vadd.f32 %v6785, %v7096
  %v7686 = vadd.f32 %v6786, %v7096
  %v7687 = vadd.f32 %v6787, %v7096
  %v7688 = vadd.f32 %v6788, %v7101
  %v7689 = vadd.f32 %v6789, %v7101
  %v7690 = vadd.f32 %v6790, %v7101
  %v7691 = vadd.f32 %v6791, %v7101
  %v7692 = vadd.f32 %v6792, %v7101
  %v7693 = vadd.f32 %v6793, %v7101
  %v7694 = vadd.f32 %v6794, %v7101
  %v7695 = vadd.f32 %v6795, %v7101
  %v7696 = vadd.f32 %v6796, %v7101
  %v7697 = vadd.f32 %v6797, %v7101
  %v7698 = vadd.f32 %v6798, %v7101
  %v7699 = vadd.f32 %v6799, %v7101
  %v7700 = vadd.f32 %v6800, %v7101
  %v7701 = vadd.f32 %v6801, %v7101
  %v7702 = vadd.f32 %v6802, %v7101
  %v7703 = vadd.f32 %v6803, %v7101
  %v7704 = vadd.f32 %v6804, %v7101
  %v7705 = vadd.f32 %v6805, %v7101
  %v7706 = vadd.f32 %v6806, %v7101
  %v7707 = vadd.f32 %v6807, %v7101
  %v7708 = vadd.f32 %v6808, %v7101
  %v7709 = vadd.f32 %v6809, %v7101
  %v7710 = vadd.f32 %v6810, %v7101
  %v7711 = vadd.f32 %v6811, %v7101
  %v7712 = vadd.f32 %v6812, %v7101
  %v7713 = vadd.f32 %v6813, %v7106
  %v7714 = vadd.f32 %v6814, %v7106
  %v7715 = vadd.f32 %v6815, %v7106
  %v7716 = vadd.f32 %v6816, %v7106
  %v7717 = vadd.f32 %v6817, %v7106
  %v7718 = vadd.f32 %v6818, %v7106
  %v7719 = vadd.f32 %v6819, %v7106
  %v7720 = vadd.f32 %v6820, %v7106
  %v7721 = vadd.f32 %v6821, %v7106
  %v7722 = vadd.f32 %v6822, %v7106
  %v7723 = vadd.f32 %v6823, %v7106
  %v7724 = vadd.f32 %v6824, %v7106
  %v7725 = vadd.f32 %v6825, %v7106
  %v7726 = vadd.f32 %v6826, %v7106
  %v7727 = vadd.f32 %v6827, %v7106
  %v7728 = vadd.f32 %v6828, %v7106
  %v7729 = vadd.f32 %v6829, %v7106
  %v7730 = vadd.f32 %v6830, %v7106
  %v7731 = vadd.f32 %v6831, %v7106
  %v7732 = vadd.f32 %v6832, %v7106
  %v7733 = vadd.f32 %v6833, %v7106
  %v7734 = vadd.f32 %v6834, %v7106
  %v7735 = vadd.f32 %v6835, %v7106
  %v7736 = vadd.f32 %v6836, %v7106
  %v7737 = vadd.f32 %v6837, %v7106
  %v7738 = vadd.f32 %v6838, %v7111
  %v7739 = vadd.f32 %v6839, %v7111
  %v7740 = vadd.f32 %v6840, %v7111
  %v7741 = vadd.f32 %v6841, %v7111
  %v7742 = vadd.f32 %v6842, %v7111
  %v7743 = vadd.f32 %v6843, %v7111
  %v7744 = vadd.f32 %v6844, %v7111
  %v7745 = vadd.f32 %v6845, %v7111
  %v7746 = vadd.f32 %v6846, %v7111
  %v7747 = vadd.f32 %v6847, %v7111
  %v7748 = vadd.f32 %v6848, %v7111
  %v7749 = vadd.f32 %v6849, %v7111
  %v7750 = vadd.f32 %v6850, %v7111
  %v7751 = vadd.f32 %v6851, %v7111
  %v7752 = vadd.f32 %v6852, %v7111
  %v7753 = vadd.f32 %v6853, %v7111
  %v7754 = vadd.f32 %v6854, %v7111
  %v7755 = vadd.f32 %v6855, %v7111
  %v7756 = vadd.f32 %v6856, %v7111
  %v7757 = vadd.f32 %v6857, %v7111
  %v7758 = vadd.f32 %v6858, %v7111
  %v7759 = vadd.f32 %v6859, %v7111
  %v7760 = vadd.f32 %v6860, %v7111
  %v7761 = vadd.f32 %v6861, %v7111
  %v7762 = vadd.f32 %v6862, %v7111
  %v7763 = vadd.f32 %v6863, %v7116
  %v7764 = vadd.f32 %v6864, %v7116
  %v7765 = vadd.f32 %v6865, %v7116
  %v7766 = vadd.f32 %v6866, %v7116
  %v7767 = vadd.f32 %v6867, %v7116
  %v7768 = vadd.f32 %v6868, %v7116
  %v7769 = vadd.f32 %v6869, %v7116
  %v7770 = vadd.f32 %v6870, %v7116
  %v7771 = vadd.f32 %v6871, %v7116
  %v7772 = vadd.f32 %v6872, %v7116
  %v7773 = vadd.f32 %v6873, %v7116
  %v7774 = vadd.f32 %v6874, %v7116
  %v7775 = vadd.f32 %v6875, %v7116
  %v7776 = vadd.f32 %v6876, %v7116
  %v7777 = vadd.f32 %v6877, %v7116
  %v7778 = vadd.f32 %v6878, %v7116
  %v7779 = vadd.f32 %v6879, %v7116
  %v7780 = vadd.f32 %v6880, %v7116
  %v7781 = vadd.f32 %v6881, %v7116
  %v7782 = vadd.f32 %v6882, %v7116
  %v7783 = vadd.f32 %v6883, %v7116
  %v7784 = vadd.f32 %v6884, %v7116
  %v7785 = vadd.f32 %v6885, %v7116
  %v7786 = vadd.f32 %v6886, %v7116
  %v7787 = vadd.f32 %v6887, %v7116
  %v7788 = vadd.f32 %v6888, %v7121
  %v7789 = vadd.f32 %v6889, %v7121
  %v7790 = vadd.f32 %v6890, %v7121
  %v7791 = vadd.f32 %v6891, %v7121
  %v7792 = vadd.f32 %v6892, %v7121
  %v7793 = vadd.f32 %v6893, %v7121
  %v7794 = vadd.f32 %v6894, %v7121
  %v7795 = vadd.f32 %v6895, %v7121
  %v7796 = vadd.f32 %v6896, %v7121
  %v7797 = vadd.f32 %v6897, %v7121
  %v7798 = vadd.f32 %v6898, %v7121
  %v7799 = vadd.f32 %v6899, %v7121
  %v7800 = vadd.f32 %v6900, %v7121
  %v7801 = vadd.f32 %v6901, %v7121
  %v7802 = vadd.f32 %v6902, %v7121
  %v7803 = vadd.f32 %v6903, %v7121
  %v7804 = vadd.f32 %v6904, %v7121
  %v7805 = vadd.f32 %v6905, %v7121
  %v7806 = vadd.f32 %v6906, %v7121
  %v7807 = vadd.f32 %v6907, %v7121
  %v7808 = vadd.f32 %v6908, %v7121
  %v7809 = vadd.f32 %v6909, %v7121
  %v7810 = vadd.f32 %v6910, %v7121
  %v7811 = vadd.f32 %v6911, %v7121
  %v7812 = vadd.f32 %v6912, %v7121
  %v7813 = vadd.f32 %v6913, %v7126
  %v7814 = vadd.f32 %v6914, %v7126
  %v7815 = vadd.f32 %v6915, %v7126
  %v7816 = vadd.f32 %v6916, %v7126
  %v7817 = vadd.f32 %v6917, %v7126
  %v7818 = vadd.f32 %v6918, %v7126
  %v7819 = vadd.f32 %v6919, %v7126
  %v7820 = vadd.f32 %v6920, %v7126
  %v7821 = vadd.f32 %v6921, %v7126
  %v7822 = vadd.f32 %v6922, %v7126
  %v7823 = vadd.f32 %v6923, %v7126
  %v7824 = vadd.f32 %v6924, %v7126
  %v7825 = vadd.f32 %v6925, %v7126
  %v7826 = vadd.f32 %v6926, %v7126
  %v7827 = vadd.f32 %v6927, %v7126
  %v7828 = vadd.f32 %v6928, %v7126
  %v7829 = vadd.f32 %v6929, %v7126
  %v7830 = vadd.f32 %v6930, %v7126
  %v7831 = vadd.f32 %v6931, %v7126
  %v7832 = vadd.f32 %v6932, %v7126
  %v7833 = vadd.f32 %v6933, %v7126
  %v7834 = vadd.f32 %v6934, %v7126
  %v7835 = vadd.f32 %v6935, %v7126
  %v7836 = vadd.f32 %v6936, %v7126
  %v7837 = vadd.f32 %v6937, %v7126
  %v7838 = vadd.f32 %v6938, %v7131
  %v7839 = vadd.f32 %v6939, %v7131
  %v7840 = vadd.f32 %v6940, %v7131
  %v7841 = vadd.f32 %v6941, %v7131
  %v7842 = vadd.f32 %v6942, %v7131
  %v7843 = vadd.f32 %v6943, %v7131
  %v7844 = vadd.f32 %v6944, %v7131
  %v7845 = vadd.f32 %v6945, %v7131
  %v7846 = vadd.f32 %v6946, %v7131
  %v7847 = vadd.f32 %v6947, %v7131
  %v7848 = vadd.f32 %v6948, %v7131
  %v7849 = vadd.f32 %v6949, %v7131
  %v7850 = vadd.f32 %v6950, %v7131
  %v7851 = vadd.f32 %v6951, %v7131
  %v7852 = vadd.f32 %v6952, %v7131
  %v7853 = vadd.f32 %v6953, %v7131
  %v7854 = vadd.f32 %v6954, %v7131
  %v7855 = vadd.f32 %v6955, %v7131
  %v7856 = vadd.f32 %v6956, %v7131
  %v7857 = vadd.f32 %v6957, %v7131
  %v7858 = vadd.f32 %v6958, %v7131
  %v7859 = vadd.f32 %v6959, %v7131
  %v7860 = vadd.f32 %v6960, %v7131
  %v7861 = vadd.f32 %v6961, %v7131
  %v7862 = vadd.f32 %v6962, %v7131
  %v7863 = vadd.f32 %v6963, %v7136
  %v7864 = vadd.f32 %v6964, %v7136
  %v7865 = vadd.f32 %v6965, %v7136
  %v7866 = vadd.f32 %v6966, %v7136
  %v7867 = vadd.f32 %v6967, %v7136
  %v7868 = vadd.f32 %v6968, %v7136
  %v7869 = vadd.f32 %v6969, %v7136
  %v7870 = vadd.f32 %v6970, %v7136
  %v7871 = vadd.f32 %v6971, %v7136
  %v7872 = vadd.f32 %v6972, %v7136
  %v7873 = vadd.f32 %v6973, %v7136
  %v7874 = vadd.f32 %v6974, %v7136
  %v7875 = vadd.f32 %v6975, %v7136
  %v7876 = vadd.f32 %v6976, %v7136
  %v7877 = vadd.f32 %v6977, %v7136
  %v7878 = vadd.f32 %v6978, %v7136
  %v7879 = vadd.f32 %v6979, %v7136
  %v7880 = vadd.f32 %v6980, %v7136
  %v7881 = vadd.f32 %v6981, %v7136
  %v7882 = vadd.f32 %v6982, %v7136
  %v7883 = vadd.f32 %v6983, %v7136
  %v7884 = vadd.f32 %v6984, %v7136
  %v7885 = vadd.f32 %v6985, %v7136
  %v7886 = vadd.f32 %v6986, %v7136
  %v7887 = vadd.f32 %v6987, %v7136
  %7888 = vst [vmem:[%s4] sm:$0xff] %v7138
  %7889 = vst [vmem:[%s4 + $0x8] sm:$0xff] %v7139
  %7890 = vst [vmem:[%s4 + $0x10] sm:$0xff] %v7140
  %7891 = vst [vmem:[%s4 + $0x18] sm:$0xff] %v7141
  %7892 = vst [vmem:[%s4 + $0x20] sm:$0xff] %v7142
  %7893 = vst [vmem:[%s4 + $0x28] sm:$0xff] %v7143
  %7894 = vst [vmem:[%s4 + $0x30] sm:$0xff] %v7144
  %7895 = vst [vmem:[%s4 + $0x38] sm:$0xff] %v7145
  %7896 = vst [vmem:[%s4 + $0x40] sm:$0xff] %v7146
  %7897 = vst [vmem:[%s4 + $0x48] sm:$0xff] %v7147
  %7898 = vst [vmem:[%s4 + $0x50] sm:$0xff] %v7148
  %7899 = vst [vmem:[%s4 + $0x58] sm:$0xff] %v7149
  %7900 = vst [vmem:[%s4 + $0x60] sm:$0xff] %v7150
  %7901 = vst [vmem:[%s4 + $0x68] sm:$0xff] %v7151
  %7902 = vst [vmem:[%s4 + $0x70] sm:$0xff] %v7152
  %7903 = vst [vmem:[%s4 + $0x78] sm:$0xff] %v7153
  %7904 = vst [vmem:[%s4 + $0x80] sm:$0xff] %v7154
  %7905 = vst [vmem:[%s4 + $0x88] sm:$0xff] %v7155
  %7906 = vst [vmem:[%s4 + $0x90] sm:$0xff] %v7156
  %7907 = vst [vmem:[%s4 + $0x98] sm:$0xff] %v7157
  %7908 = vst [vmem:[%s4 + $0xa0] sm:$0xff] %v7158
  %7909 = vst [vmem:[%s4 + $0xa8] sm:$0xff] %v7159
  %7910 = vst [vmem:[%s4 + $0xb0] sm:$0xff] %v7160
  %7911 = vst [vmem:[%s4 + $0xb8] sm:$0xff] %v7161
  %vm7912 = vcmask 523264
  %7913 = vst.msk [vmem:[%s4 + $0xc0] sm:$0xff] %vm7912, %v7162
  %7914 = vst [vmem:[%s4 + $0xc8] sm:$0xff] %v7163
  %7915 = vst [vmem:[%s4 + $0xd0] sm:$0xff] %v7164
  %7916 = vst [vmem:[%s4 + $0xd8] sm:$0xff] %v7165
  %7917 = vst [vmem:[%s4 + $0xe0] sm:$0xff] %v7166
  %7918 = vst [vmem:[%s4 + $0xe8] sm:$0xff] %v7167
  %7919 = vst [vmem:[%s4 + $0xf0] sm:$0xff] %v7168
  %7920 = vst [vmem:[%s4 + $0xf8] sm:$0xff] %v7169
  %7921 = vst [vmem:[%s4 + $0x100] sm:$0xff] %v7170
  %7922 = vst [vmem:[%s4 + $0x108] sm:$0xff] %v7171
  %7923 = vst [vmem:[%s4 + $0x110] sm:$0xff] %v7172
  %7924 = vst [vmem:[%s4 + $0x118] sm:$0xff] %v7173
  %7925 = vst [vmem:[%s4 + $0x120] sm:$0xff] %v7174
  %7926 = vst [vmem:[%s4 + $0x128] sm:$0xff] %v7175
  %7927 = vst [vmem:[%s4 + $0x130] sm:$0xff] %v7176
  %7928 = vst [vmem:[%s4 + $0x138] sm:$0xff] %v7177
  %7929 = vst [vmem:[%s4 + $0x140] sm:$0xff] %v7178
  %7930 = vst [vmem:[%s4 + $0x148] sm:$0xff] %v7179
  %7931 = vst [vmem:[%s4 + $0x150] sm:$0xff] %v7180
  %7932 = vst [vmem:[%s4 + $0x158] sm:$0xff] %v7181
  %7933 = vst [vmem:[%s4 + $0x160] sm:$0xff] %v7182
  %7934 = vst [vmem:[%s4 + $0x168] sm:$0xff] %v7183
  %7935 = vst [vmem:[%s4 + $0x170] sm:$0xff] %v7184
  %7936 = vst [vmem:[%s4 + $0x178] sm:$0xff] %v7185
  %7937 = vst [vmem:[%s4 + $0x180] sm:$0xff] %v7186
  %7938 = vst.msk [vmem:[%s4 + $0x188] sm:$0xff] %vm7912, %v7187
  %7939 = vst [vmem:[%s4 + $0x190] sm:$0xff] %v7188
  %7940 = vst [vmem:[%s4 + $0x198] sm:$0xff] %v7189
  %7941 = vst [vmem:[%s4 + $0x1a0] sm:$0xff] %v7190
  %7942 = vst [vmem:[%s4 + $0x1a8] sm:$0xff] %v7191
  %7943 = vst [vmem:[%s4 + $0x1b0] sm:$0xff] %v7192
  %7944 = vst [vmem:[%s4 + $0x1b8] sm:$0xff] %v7193
  %7945 = vst [vmem:[%s4 + $0x1c0] sm:$0xff] %v7194
  %7946 = vst [vmem:[%s4 + $0x1c8] sm:$0xff] %v7195
  %7947 = vst [vmem:[%s4 + $0x1d0] sm:$0xff] %v7196
  %7948 = vst [vmem:[%s4 + $0x1d8] sm:$0xff] %v7197
  %7949 = vst [vmem:[%s4 + $0x1e0] sm:$0xff] %v7198
  %7950 = vst [vmem:[%s4 + $0x1e8] sm:$0xff] %v7199
  %7951 = vst [vmem:[%s4 + $0x1f0] sm:$0xff] %v7200
  %7952 = vst [vmem:[%s4 + $0x1f8] sm:$0xff] %v7201
  %7953 = vst [vmem:[%s4 + $0x200] sm:$0xff] %v7202
  %7954 = vst [vmem:[%s4 + $0x208] sm:$0xff] %v7203
  %7955 = vst [vmem:[%s4 + $0x210] sm:$0xff] %v7204
  %7956 = vst [vmem:[%s4 + $0x218] sm:$0xff] %v7205
  %7957 = vst [vmem:[%s4 + $0x220] sm:$0xff] %v7206
  %7958 = vst [vmem:[%s4 + $0x228] sm:$0xff] %v7207
  %7959 = vst [vmem:[%s4 + $0x230] sm:$0xff] %v7208
  %7960 = vst [vmem:[%s4 + $0x238] sm:$0xff] %v7209
  %7961 = vst [vmem:[%s4 + $0x240] sm:$0xff] %v7210
  %7962 = vst [vmem:[%s4 + $0x248] sm:$0xff] %v7211
  %7963 = vst.msk [vmem:[%s4 + $0x250] sm:$0xff] %vm7912, %v7212
  %7964 = vst [vmem:[%s4 + $0x258] sm:$0xff] %v7213
  %7965 = vst [vmem:[%s4 + $0x260] sm:$0xff] %v7214
  %7966 = vst [vmem:[%s4 + $0x268] sm:$0xff] %v7215
  %7967 = vst [vmem:[%s4 + $0x270] sm:$0xff] %v7216
  %7968 = vst [vmem:[%s4 + $0x278] sm:$0xff] %v7217
  %7969 = vst [vmem:[%s4 + $0x280] sm:$0xff] %v7218
  %7970 = vst [vmem:[%s4 + $0x288] sm:$0xff] %v7219
  %7971 = vst [vmem:[%s4 + $0x290] sm:$0xff] %v7220
  %7972 = vst [vmem:[%s4 + $0x298] sm:$0xff] %v7221
  %7973 = vst [vmem:[%s4 + $0x2a0] sm:$0xff] %v7222
  %7974 = vst [vmem:[%s4 + $0x2a8] sm:$0xff] %v7223
  %7975 = vst [vmem:[%s4 + $0x2b0] sm:$0xff] %v7224
  %7976 = vst [vmem:[%s4 + $0x2b8] sm:$0xff] %v7225
  %7977 = vst [vmem:[%s4 + $0x2c0] sm:$0xff] %v7226
  %7978 = vst [vmem:[%s4 + $0x2c8] sm:$0xff] %v7227
  %7979 = vst [vmem:[%s4 + $0x2d0] sm:$0xff] %v7228
  %7980 = vst [vmem:[%s4 + $0x2d8] sm:$0xff] %v7229
  %7981 = vst [vmem:[%s4 + $0x2e0] sm:$0xff] %v7230
  %7982 = vst [vmem:[%s4 + $0x2e8] sm:$0xff] %v7231
  %7983 = vst [vmem:[%s4 + $0x2f0] sm:$0xff] %v7232
  %7984 = vst [vmem:[%s4 + $0x2f8] sm:$0xff] %v7233
  %7985 = vst [vmem:[%s4 + $0x300] sm:$0xff] %v7234
  %7986 = vst [vmem:[%s4 + $0x308] sm:$0xff] %v7235
  %7987 = vst [vmem:[%s4 + $0x310] sm:$0xff] %v7236
  %7988 = vst.msk [vmem:[%s4 + $0x318] sm:$0xff] %vm7912, %v7237
  %7989 = vst [vmem:[%s4 + $0x320] sm:$0xff] %v7238
  %7990 = vst [vmem:[%s4 + $0x328] sm:$0xff] %v7239
  %7991 = vst [vmem:[%s4 + $0x330] sm:$0xff] %v7240
  %7992 = vst [vmem:[%s4 + $0x338] sm:$0xff] %v7241
  %7993 = vst [vmem:[%s4 + $0x340] sm:$0xff] %v7242
  %7994 = vst [vmem:[%s4 + $0x348] sm:$0xff] %v7243
  %7995 = vst [vmem:[%s4 + $0x350] sm:$0xff] %v7244
  %7996 = vst [vmem:[%s4 + $0x358] sm:$0xff] %v7245
  %7997 = vst [vmem:[%s4 + $0x360] sm:$0xff] %v7246
  %7998 = vst [vmem:[%s4 + $0x368] sm:$0xff] %v7247
  %7999 = vst [vmem:[%s4 + $0x370] sm:$0xff] %v7248
  %8000 = vst [vmem:[%s4 + $0x378] sm:$0xff] %v7249
  %8001 = vst [vmem:[%s4 + $0x380] sm:$0xff] %v7250
  %8002 = vst [vmem:[%s4 + $0x388] sm:$0xff] %v7251
  %8003 = vst [vmem:[%s4 + $0x390] sm:$0xff] %v7252
  %8004 = vst [vmem:[%s4 + $0x398] sm:$0xff] %v7253
  %8005 = vst [vmem:[%s4 + $0x3a0] sm:$0xff] %v7254
  %8006 = vst [vmem:[%s4 + $0x3a8] sm:$0xff] %v7255
  %8007 = vst [vmem:[%s4 + $0x3b0] sm:$0xff] %v7256
  %8008 = vst [vmem:[%s4 + $0x3b8] sm:$0xff] %v7257
  %8009 = vst [vmem:[%s4 + $0x3c0] sm:$0xff] %v7258
  %8010 = vst [vmem:[%s4 + $0x3c8] sm:$0xff] %v7259
  %8011 = vst [vmem:[%s4 + $0x3d0] sm:$0xff] %v7260
  %8012 = vst [vmem:[%s4 + $0x3d8] sm:$0xff] %v7261
  %8013 = vst.msk [vmem:[%s4 + $0x3e0] sm:$0xff] %vm7912, %v7262
  %8014 = vst [vmem:[%s4 + $0x3e8] sm:$0xff] %v7263
  %8015 = vst [vmem:[%s4 + $0x3f0] sm:$0xff] %v7264
  %8016 = vst [vmem:[%s4 + $0x3f8] sm:$0xff] %v7265
  %8017 = vst [vmem:[%s4 + $0x400] sm:$0xff] %v7266
  %8018 = vst [vmem:[%s4 + $0x408] sm:$0xff] %v7267
  %8019 = vst [vmem:[%s4 + $0x410] sm:$0xff] %v7268
  %8020 = vst [vmem:[%s4 + $0x418] sm:$0xff] %v7269
  %8021 = vst [vmem:[%s4 + $0x420] sm:$0xff] %v7270
  %8022 = vst [vmem:[%s4 + $0x428] sm:$0xff] %v7271
  %8023 = vst [vmem:[%s4 + $0x430] sm:$0xff] %v7272
  %8024 = vst [vmem:[%s4 + $0x438] sm:$0xff] %v7273
  %8025 = vst [vmem:[%s4 + $0x440] sm:$0xff] %v7274
  %8026 = vst [vmem:[%s4 + $0x448] sm:$0xff] %v7275
  %8027 = vst [vmem:[%s4 + $0x450] sm:$0xff] %v7276
  %8028 = vst [vmem:[%s4 + $0x458] sm:$0xff] %v7277
  %8029 = vst [vmem:[%s4 + $0x460] sm:$0xff] %v7278
  %8030 = vst [vmem:[%s4 + $0x468] sm:$0xff] %v7279
  %8031 = vst [vmem:[%s4 + $0x470] sm:$0xff] %v7280
  %8032 = vst [vmem:[%s4 + $0x478] sm:$0xff] %v7281
  %8033 = vst [vmem:[%s4 + $0x480] sm:$0xff] %v7282
  %8034 = vst [vmem:[%s4 + $0x488] sm:$0xff] %v7283
  %8035 = vst [vmem:[%s4 + $0x490] sm:$0xff] %v7284
  %8036 = vst [vmem:[%s4 + $0x498] sm:$0xff] %v7285
  %8037 = vst [vmem:[%s4 + $0x4a0] sm:$0xff] %v7286
  %8038 = vst.msk [vmem:[%s4 + $0x4a8] sm:$0xff] %vm7912, %v7287
  %8039 = vst [vmem:[%s4 + $0x4b0] sm:$0xff] %v7288
  %8040 = vst [vmem:[%s4 + $0x4b8] sm:$0xff] %v7289
  %8041 = vst [vmem:[%s4 + $0x4c0] sm:$0xff] %v7290
  %8042 = vst [vmem:[%s4 + $0x4c8] sm:$0xff] %v7291
  %8043 = vst [vmem:[%s4 + $0x4d0] sm:$0xff] %v7292
  %8044 = vst [vmem:[%s4 + $0x4d8] sm:$0xff] %v7293
  %8045 = vst [vmem:[%s4 + $0x4e0] sm:$0xff] %v7294
  %8046 = vst [vmem:[%s4 + $0x4e8] sm:$0xff] %v7295
  %8047 = vst [vmem:[%s4 + $0x4f0] sm:$0xff] %v7296
  %8048 = vst [vmem:[%s4 + $0x4f8] sm:$0xff] %v7297
  %8049 = vst [vmem:[%s4 + $0x500] sm:$0xff] %v7298
  %8050 = vst [vmem:[%s4 + $0x508] sm:$0xff] %v7299
  %8051 = vst [vmem:[%s4 + $0x510] sm:$0xff] %v7300
  %8052 = vst [vmem:[%s4 + $0x518] sm:$0xff] %v7301
  %8053 = vst [vmem:[%s4 + $0x520] sm:$0xff] %v7302
  %8054 = vst [vmem:[%s4 + $0x528] sm:$0xff] %v7303
  %8055 = vst [vmem:[%s4 + $0x530] sm:$0xff] %v7304
  %8056 = vst [vmem:[%s4 + $0x538] sm:$0xff] %v7305
  %8057 = vst [vmem:[%s4 + $0x540] sm:$0xff] %v7306
  %8058 = vst [vmem:[%s4 + $0x548] sm:$0xff] %v7307
  %8059 = vst [vmem:[%s4 + $0x550] sm:$0xff] %v7308
  %8060 = vst [vmem:[%s4 + $0x558] sm:$0xff] %v7309
  %8061 = vst [vmem:[%s4 + $0x560] sm:$0xff] %v7310
  %8062 = vst [vmem:[%s4 + $0x568] sm:$0xff] %v7311
  %8063 = vst.msk [vmem:[%s4 + $0x570] sm:$0xff] %vm7912, %v7312
  %8064 = vst [vmem:[%s4 + $0x578] sm:$0xff] %v7313
  %8065 = vst [vmem:[%s4 + $0x580] sm:$0xff] %v7314
  %8066 = vst [vmem:[%s4 + $0x588] sm:$0xff] %v7315
  %8067 = vst [vmem:[%s4 + $0x590] sm:$0xff] %v7316
  %8068 = vst [vmem:[%s4 + $0x598] sm:$0xff] %v7317
  %8069 = vst [vmem:[%s4 + $0x5a0] sm:$0xff] %v7318
  %8070 = vst [vmem:[%s4 + $0x5a8] sm:$0xff] %v7319
  %8071 = vst [vmem:[%s4 + $0x5b0] sm:$0xff] %v7320
  %8072 = vst [vmem:[%s4 + $0x5b8] sm:$0xff] %v7321
  %8073 = vst [vmem:[%s4 + $0x5c0] sm:$0xff] %v7322
  %8074 = vst [vmem:[%s4 + $0x5c8] sm:$0xff] %v7323
  %8075 = vst [vmem:[%s4 + $0x5d0] sm:$0xff] %v7324
  %8076 = vst [vmem:[%s4 + $0x5d8] sm:$0xff] %v7325
  %8077 = vst [vmem:[%s4 + $0x5e0] sm:$0xff] %v7326
  %8078 = vst [vmem:[%s4 + $0x5e8] sm:$0xff] %v7327
  %8079 = vst [vmem:[%s4 + $0x5f0] sm:$0xff] %v7328
  %8080 = vst [vmem:[%s4 + $0x5f8] sm:$0xff] %v7329
  %8081 = vst [vmem:[%s4 + $0x600] sm:$0xff] %v7330
  %8082 = vst [vmem:[%s4 + $0x608] sm:$0xff] %v7331
  %8083 = vst [vmem:[%s4 + $0x610] sm:$0xff] %v7332
  %8084 = vst [vmem:[%s4 + $0x618] sm:$0xff] %v7333
  %8085 = vst [vmem:[%s4 + $0x620] sm:$0xff] %v7334
  %8086 = vst [vmem:[%s4 + $0x628] sm:$0xff] %v7335
  %8087 = vst [vmem:[%s4 + $0x630] sm:$0xff] %v7336
  %8088 = vst.msk [vmem:[%s4 + $0x638] sm:$0xff] %vm7912, %v7337
  %8089 = vst [vmem:[%s4 + $0x640] sm:$0xff] %v7338
  %8090 = vst [vmem:[%s4 + $0x648] sm:$0xff] %v7339
  %8091 = vst [vmem:[%s4 + $0x650] sm:$0xff] %v7340
  %8092 = vst [vmem:[%s4 + $0x658] sm:$0xff] %v7341
  %8093 = vst [vmem:[%s4 + $0x660] sm:$0xff] %v7342
  %8094 = vst [vmem:[%s4 + $0x668] sm:$0xff] %v7343
  %8095 = vst [vmem:[%s4 + $0x670] sm:$0xff] %v7344
  %8096 = vst [vmem:[%s4 + $0x678] sm:$0xff] %v7345
  %8097 = vst [vmem:[%s4 + $0x680] sm:$0xff] %v7346
  %8098 = vst [vmem:[%s4 + $0x688] sm:$0xff] %v7347
  %8099 = vst [vmem:[%s4 + $0x690] sm:$0xff] %v7348
  %8100 = vst [vmem:[%s4 + $0x698] sm:$0xff] %v7349
  %8101 = vst [vmem:[%s4 + $0x6a0] sm:$0xff] %v7350
  %8102 = vst [vmem:[%s4 + $0x6a8] sm:$0xff] %v7351
  %8103 = vst [vmem:[%s4 + $0x6b0] sm:$0xff] %v7352
  %8104 = vst [vmem:[%s4 + $0x6b8] sm:$0xff] %v7353
  %8105 = vst [vmem:[%s4 + $0x6c0] sm:$0xff] %v7354
  %8106 = vst [vmem:[%s4 + $0x6c8] sm:$0xff] %v7355
  %8107 = vst [vmem:[%s4 + $0x6d0] sm:$0xff] %v7356
  %8108 = vst [vmem:[%s4 + $0x6d8] sm:$0xff] %v7357
  %8109 = vst [vmem:[%s4 + $0x6e0] sm:$0xff] %v7358
  %8110 = vst [vmem:[%s4 + $0x6e8] sm:$0xff] %v7359
  %8111 = vst [vmem:[%s4 + $0x6f0] sm:$0xff] %v7360
  %8112 = vst [vmem:[%s4 + $0x6f8] sm:$0xff] %v7361
  %8113 = vst.msk [vmem:[%s4 + $0x700] sm:$0xff] %vm7912, %v7362
  %8114 = vst [vmem:[%s4 + $0x708] sm:$0xff] %v7363
  %8115 = vst [vmem:[%s4 + $0x710] sm:$0xff] %v7364
  %8116 = vst [vmem:[%s4 + $0x718] sm:$0xff] %v7365
  %8117 = vst [vmem:[%s4 + $0x720] sm:$0xff] %v7366
  %8118 = vst [vmem:[%s4 + $0x728] sm:$0xff] %v7367
  %8119 = vst [vmem:[%s4 + $0x730] sm:$0xff] %v7368
  %8120 = vst [vmem:[%s4 + $0x738] sm:$0xff] %v7369
  %8121 = vst [vmem:[%s4 + $0x740] sm:$0xff] %v7370
  %8122 = vst [vmem:[%s4 + $0x748] sm:$0xff] %v7371
  %8123 = vst [vmem:[%s4 + $0x750] sm:$0xff] %v7372
  %8124 = vst [vmem:[%s4 + $0x758] sm:$0xff] %v7373
  %8125 = vst [vmem:[%s4 + $0x760] sm:$0xff] %v7374
  %8126 = vst [vmem:[%s4 + $0x768] sm:$0xff] %v7375
  %8127 = vst [vmem:[%s4 + $0x770] sm:$0xff] %v7376
  %8128 = vst [vmem:[%s4 + $0x778] sm:$0xff] %v7377
  %8129 = vst [vmem:[%s4 + $0x780] sm:$0xff] %v7378
  %8130 = vst [vmem:[%s4 + $0x788] sm:$0xff] %v7379
  %8131 = vst [vmem:[%s4 + $0x790] sm:$0xff] %v7380
  %8132 = vst [vmem:[%s4 + $0x798] sm:$0xff] %v7381
  %8133 = vst [vmem:[%s4 + $0x7a0] sm:$0xff] %v7382
  %8134 = vst [vmem:[%s4 + $0x7a8] sm:$0xff] %v7383
  %8135 = vst [vmem:[%s4 + $0x7b0] sm:$0xff] %v7384
  %8136 = vst [vmem:[%s4 + $0x7b8] sm:$0xff] %v7385
  %8137 = vst [vmem:[%s4 + $0x7c0] sm:$0xff] %v7386
  %8138 = vst.msk [vmem:[%s4 + $0x7c8] sm:$0xff] %vm7912, %v7387
  %8139 = vst [vmem:[%s4 + $0x7d0] sm:$0xff] %v7388
  %8140 = vst [vmem:[%s4 + $0x7d8] sm:$0xff] %v7389
  %8141 = vst [vmem:[%s4 + $0x7e0] sm:$0xff] %v7390
  %8142 = vst [vmem:[%s4 + $0x7e8] sm:$0xff] %v7391
  %8143 = vst [vmem:[%s4 + $0x7f0] sm:$0xff] %v7392
  %8144 = vst [vmem:[%s4 + $0x7f8] sm:$0xff] %v7393
  %8145 = vst [vmem:[%s4 + $0x800] sm:$0xff] %v7394
  %8146 = vst [vmem:[%s4 + $0x808] sm:$0xff] %v7395
  %8147 = vst [vmem:[%s4 + $0x810] sm:$0xff] %v7396
  %8148 = vst [vmem:[%s4 + $0x818] sm:$0xff] %v7397
  %8149 = vst [vmem:[%s4 + $0x820] sm:$0xff] %v7398
  %8150 = vst [vmem:[%s4 + $0x828] sm:$0xff] %v7399
  %8151 = vst [vmem:[%s4 + $0x830] sm:$0xff] %v7400
  %8152 = vst [vmem:[%s4 + $0x838] sm:$0xff] %v7401
  %8153 = vst [vmem:[%s4 + $0x840] sm:$0xff] %v7402
  %8154 = vst [vmem:[%s4 + $0x848] sm:$0xff] %v7403
  %8155 = vst [vmem:[%s4 + $0x850] sm:$0xff] %v7404
  %8156 = vst [vmem:[%s4 + $0x858] sm:$0xff] %v7405
  %8157 = vst [vmem:[%s4 + $0x860] sm:$0xff] %v7406
  %8158 = vst [vmem:[%s4 + $0x868] sm:$0xff] %v7407
  %8159 = vst [vmem:[%s4 + $0x870] sm:$0xff] %v7408
  %8160 = vst [vmem:[%s4 + $0x878] sm:$0xff] %v7409
  %8161 = vst [vmem:[%s4 + $0x880] sm:$0xff] %v7410
  %8162 = vst [vmem:[%s4 + $0x888] sm:$0xff] %v7411
  %8163 = vst.msk [vmem:[%s4 + $0x890] sm:$0xff] %vm7912, %v7412
  %8164 = vst [vmem:[%s4 + $0x898] sm:$0xff] %v7413
  %8165 = vst [vmem:[%s4 + $0x8a0] sm:$0xff] %v7414
  %8166 = vst [vmem:[%s4 + $0x8a8] sm:$0xff] %v7415
  %8167 = vst [vmem:[%s4 + $0x8b0] sm:$0xff] %v7416
  %8168 = vst [vmem:[%s4 + $0x8b8] sm:$0xff] %v7417
  %8169 = vst [vmem:[%s4 + $0x8c0] sm:$0xff] %v7418
  %8170 = vst [vmem:[%s4 + $0x8c8] sm:$0xff] %v7419
  %8171 = vst [vmem:[%s4 + $0x8d0] sm:$0xff] %v7420
  %8172 = vst [vmem:[%s4 + $0x8d8] sm:$0xff] %v7421
  %8173 = vst [vmem:[%s4 + $0x8e0] sm:$0xff] %v7422
  %8174 = vst [vmem:[%s4 + $0x8e8] sm:$0xff] %v7423
  %8175 = vst [vmem:[%s4 + $0x8f0] sm:$0xff] %v7424
  %8176 = vst [vmem:[%s4 + $0x8f8] sm:$0xff] %v7425
  %8177 = vst [vmem:[%s4 + $0x900] sm:$0xff] %v7426
  %8178 = vst [vmem:[%s4 + $0x908] sm:$0xff] %v7427
  %8179 = vst [vmem:[%s4 + $0x910] sm:$0xff] %v7428
  %8180 = vst [vmem:[%s4 + $0x918] sm:$0xff] %v7429
  %8181 = vst [vmem:[%s4 + $0x920] sm:$0xff] %v7430
  %8182 = vst [vmem:[%s4 + $0x928] sm:$0xff] %v7431
  %8183 = vst [vmem:[%s4 + $0x930] sm:$0xff] %v7432
  %8184 = vst [vmem:[%s4 + $0x938] sm:$0xff] %v7433
  %8185 = vst [vmem:[%s4 + $0x940] sm:$0xff] %v7434
  %8186 = vst [vmem:[%s4 + $0x948] sm:$0xff] %v7435
  %8187 = vst [vmem:[%s4 + $0x950] sm:$0xff] %v7436
  %8188 = vst.msk [vmem:[%s4 + $0x958] sm:$0xff] %vm7912, %v7437
  %8189 = vst [vmem:[%s4 + $0x960] sm:$0xff] %v7438
  %8190 = vst [vmem:[%s4 + $0x968] sm:$0xff] %v7439
  %8191 = vst [vmem:[%s4 + $0x970] sm:$0xff] %v7440
  %8192 = vst [vmem:[%s4 + $0x978] sm:$0xff] %v7441
  %8193 = vst [vmem:[%s4 + $0x980] sm:$0xff] %v7442
  %8194 = vst [vmem:[%s4 + $0x988] sm:$0xff] %v7443
  %8195 = vst [vmem:[%s4 + $0x990] sm:$0xff] %v7444
  %8196 = vst [vmem:[%s4 + $0x998] sm:$0xff] %v7445
  %8197 = vst [vmem:[%s4 + $0x9a0] sm:$0xff] %v7446
  %8198 = vst [vmem:[%s4 + $0x9a8] sm:$0xff] %v7447
  %8199 = vst [vmem:[%s4 + $0x9b0] sm:$0xff] %v7448
  %8200 = vst [vmem:[%s4 + $0x9b8] sm:$0xff] %v7449
  %8201 = vst [vmem:[%s4 + $0x9c0] sm:$0xff] %v7450
  %8202 = vst [vmem:[%s4 + $0x9c8] sm:$0xff] %v7451
  %8203 = vst [vmem:[%s4 + $0x9d0] sm:$0xff] %v7452
  %8204 = vst [vmem:[%s4 + $0x9d8] sm:$0xff] %v7453
  %8205 = vst [vmem:[%s4 + $0x9e0] sm:$0xff] %v7454
  %8206 = vst [vmem:[%s4 + $0x9e8] sm:$0xff] %v7455
  %8207 = vst [vmem:[%s4 + $0x9f0] sm:$0xff] %v7456
  %8208 = vst [vmem:[%s4 + $0x9f8] sm:$0xff] %v7457
  %8209 = vst [vmem:[%s4 + $0xa00] sm:$0xff] %v7458
  %8210 = vst [vmem:[%s4 + $0xa08] sm:$0xff] %v7459
  %8211 = vst [vmem:[%s4 + $0xa10] sm:$0xff] %v7460
  %8212 = vst [vmem:[%s4 + $0xa18] sm:$0xff] %v7461
  %8213 = vst.msk [vmem:[%s4 + $0xa20] sm:$0xff] %vm7912, %v7462
  %8214 = vst [vmem:[%s4 + $0xa28] sm:$0xff] %v7463
  %8215 = vst [vmem:[%s4 + $0xa30] sm:$0xff] %v7464
  %8216 = vst [vmem:[%s4 + $0xa38] sm:$0xff] %v7465
  %8217 = vst [vmem:[%s4 + $0xa40] sm:$0xff] %v7466
  %8218 = vst [vmem:[%s4 + $0xa48] sm:$0xff] %v7467
  %8219 = vst [vmem:[%s4 + $0xa50] sm:$0xff] %v7468
  %8220 = vst [vmem:[%s4 + $0xa58] sm:$0xff] %v7469
  %8221 = vst [vmem:[%s4 + $0xa60] sm:$0xff] %v7470
  %8222 = vst [vmem:[%s4 + $0xa68] sm:$0xff] %v7471
  %8223 = vst [vmem:[%s4 + $0xa70] sm:$0xff] %v7472
  %8224 = vst [vmem:[%s4 + $0xa78] sm:$0xff] %v7473
  %8225 = vst [vmem:[%s4 + $0xa80] sm:$0xff] %v7474
  %8226 = vst [vmem:[%s4 + $0xa88] sm:$0xff] %v7475
  %8227 = vst [vmem:[%s4 + $0xa90] sm:$0xff] %v7476
  %8228 = vst [vmem:[%s4 + $0xa98] sm:$0xff] %v7477
  %8229 = vst [vmem:[%s4 + $0xaa0] sm:$0xff] %v7478
  %8230 = vst [vmem:[%s4 + $0xaa8] sm:$0xff] %v7479
  %8231 = vst [vmem:[%s4 + $0xab0] sm:$0xff] %v7480
  %8232 = vst [vmem:[%s4 + $0xab8] sm:$0xff] %v7481
  %8233 = vst [vmem:[%s4 + $0xac0] sm:$0xff] %v7482
  %8234 = vst [vmem:[%s4 + $0xac8] sm:$0xff] %v7483
  %8235 = vst [vmem:[%s4 + $0xad0] sm:$0xff] %v7484
  %8236 = vst [vmem:[%s4 + $0xad8] sm:$0xff] %v7485
  %8237 = vst [vmem:[%s4 + $0xae0] sm:$0xff] %v7486
  %8238 = vst.msk [vmem:[%s4 + $0xae8] sm:$0xff] %vm7912, %v7487
  %8239 = vst [vmem:[%s4 + $0xaf0] sm:$0xff] %v7488
  %8240 = vst [vmem:[%s4 + $0xaf8] sm:$0xff] %v7489
  %8241 = vst [vmem:[%s4 + $0xb00] sm:$0xff] %v7490
  %8242 = vst [vmem:[%s4 + $0xb08] sm:$0xff] %v7491
  %8243 = vst [vmem:[%s4 + $0xb10] sm:$0xff] %v7492
  %8244 = vst [vmem:[%s4 + $0xb18] sm:$0xff] %v7493
  %8245 = vst [vmem:[%s4 + $0xb20] sm:$0xff] %v7494
  %8246 = vst [vmem:[%s4 + $0xb28] sm:$0xff] %v7495
  %8247 = vst [vmem:[%s4 + $0xb30] sm:$0xff] %v7496
  %8248 = vst [vmem:[%s4 + $0xb38] sm:$0xff] %v7497
  %8249 = vst [vmem:[%s4 + $0xb40] sm:$0xff] %v7498
  %8250 = vst [vmem:[%s4 + $0xb48] sm:$0xff] %v7499
  %8251 = vst [vmem:[%s4 + $0xb50] sm:$0xff] %v7500
  %8252 = vst [vmem:[%s4 + $0xb58] sm:$0xff] %v7501
  %8253 = vst [vmem:[%s4 + $0xb60] sm:$0xff] %v7502
  %8254 = vst [vmem:[%s4 + $0xb68] sm:$0xff] %v7503
  %8255 = vst [vmem:[%s4 + $0xb70] sm:$0xff] %v7504
  %8256 = vst [vmem:[%s4 + $0xb78] sm:$0xff] %v7505
  %8257 = vst [vmem:[%s4 + $0xb80] sm:$0xff] %v7506
  %8258 = vst [vmem:[%s4 + $0xb88] sm:$0xff] %v7507
  %8259 = vst [vmem:[%s4 + $0xb90] sm:$0xff] %v7508
  %8260 = vst [vmem:[%s4 + $0xb98] sm:$0xff] %v7509
  %8261 = vst [vmem:[%s4 + $0xba0] sm:$0xff] %v7510
  %8262 = vst [vmem:[%s4 + $0xba8] sm:$0xff] %v7511
  %8263 = vst.msk [vmem:[%s4 + $0xbb0] sm:$0xff] %vm7912, %v7512
  %8264 = vst [vmem:[%s4 + $0xbb8] sm:$0xff] %v7513
  %8265 = vst [vmem:[%s4 + $0xbc0] sm:$0xff] %v7514
  %8266 = vst [vmem:[%s4 + $0xbc8] sm:$0xff] %v7515
  %8267 = vst [vmem:[%s4 + $0xbd0] sm:$0xff] %v7516
  %8268 = vst [vmem:[%s4 + $0xbd8] sm:$0xff] %v7517
  %8269 = vst [vmem:[%s4 + $0xbe0] sm:$0xff] %v7518
  %8270 = vst [vmem:[%s4 + $0xbe8] sm:$0xff] %v7519
  %8271 = vst [vmem:[%s4 + $0xbf0] sm:$0xff] %v7520
  %8272 = vst [vmem:[%s4 + $0xbf8] sm:$0xff] %v7521
  %8273 = vst [vmem:[%s4 + $0xc00] sm:$0xff] %v7522
  %8274 = vst [vmem:[%s4 + $0xc08] sm:$0xff] %v7523
  %8275 = vst [vmem:[%s4 + $0xc10] sm:$0xff] %v7524
  %8276 = vst [vmem:[%s4 + $0xc18] sm:$0xff] %v7525
  %8277 = vst [vmem:[%s4 + $0xc20] sm:$0xff] %v7526
  %8278 = vst [vmem:[%s4 + $0xc28] sm:$0xff] %v7527
  %8279 = vst [vmem:[%s4 + $0xc30] sm:$0xff] %v7528
  %8280 = vst [vmem:[%s4 + $0xc38] sm:$0xff] %v7529
  %8281 = vst [vmem:[%s4 + $0xc40] sm:$0xff] %v7530
  %8282 = vst [vmem:[%s4 + $0xc48] sm:$0xff] %v7531
  %8283 = vst [vmem:[%s4 + $0xc50] sm:$0xff] %v7532
  %8284 = vst [vmem:[%s4 + $0xc58] sm:$0xff] %v7533
  %8285 = vst [vmem:[%s4 + $0xc60] sm:$0xff] %v7534
  %8286 = vst [vmem:[%s4 + $0xc68] sm:$0xff] %v7535
  %8287 = vst [vmem:[%s4 + $0xc70] sm:$0xff] %v7536
  %8288 = vst.msk [vmem:[%s4 + $0xc78] sm:$0xff] %vm7912, %v7537
  %8289 = vst [vmem:[%s4 + $0xc80] sm:$0xff] %v7538
  %8290 = vst [vmem:[%s4 + $0xc88] sm:$0xff] %v7539
  %8291 = vst [vmem:[%s4 + $0xc90] sm:$0xff] %v7540
  %8292 = vst [vmem:[%s4 + $0xc98] sm:$0xff] %v7541
  %8293 = vst [vmem:[%s4 + $0xca0] sm:$0xff] %v7542
  %8294 = vst [vmem:[%s4 + $0xca8] sm:$0xff] %v7543
  %8295 = vst [vmem:[%s4 + $0xcb0] sm:$0xff] %v7544
  %8296 = vst [vmem:[%s4 + $0xcb8] sm:$0xff] %v7545
  %8297 = vst [vmem:[%s4 + $0xcc0] sm:$0xff] %v7546
  %8298 = vst [vmem:[%s4 + $0xcc8] sm:$0xff] %v7547
  %8299 = vst [vmem:[%s4 + $0xcd0] sm:$0xff] %v7548
  %8300 = vst [vmem:[%s4 + $0xcd8] sm:$0xff] %v7549
  %8301 = vst [vmem:[%s4 + $0xce0] sm:$0xff] %v7550
  %8302 = vst [vmem:[%s4 + $0xce8] sm:$0xff] %v7551
  %8303 = vst [vmem:[%s4 + $0xcf0] sm:$0xff] %v7552
  %8304 = vst [vmem:[%s4 + $0xcf8] sm:$0xff] %v7553
  %8305 = vst [vmem:[%s4 + $0xd00] sm:$0xff] %v7554
  %8306 = vst [vmem:[%s4 + $0xd08] sm:$0xff] %v7555
  %8307 = vst [vmem:[%s4 + $0xd10] sm:$0xff] %v7556
  %8308 = vst [vmem:[%s4 + $0xd18] sm:$0xff] %v7557
  %8309 = vst [vmem:[%s4 + $0xd20] sm:$0xff] %v7558
  %8310 = vst [vmem:[%s4 + $0xd28] sm:$0xff] %v7559
  %8311 = vst [vmem:[%s4 + $0xd30] sm:$0xff] %v7560
  %8312 = vst [vmem:[%s4 + $0xd38] sm:$0xff] %v7561
  %8313 = vst.msk [vmem:[%s4 + $0xd40] sm:$0xff] %vm7912, %v7562
  %8314 = vst [vmem:[%s4 + $0xd48] sm:$0xff] %v7563
  %8315 = vst [vmem:[%s4 + $0xd50] sm:$0xff] %v7564
  %8316 = vst [vmem:[%s4 + $0xd58] sm:$0xff] %v7565
  %8317 = vst [vmem:[%s4 + $0xd60] sm:$0xff] %v7566
  %8318 = vst [vmem:[%s4 + $0xd68] sm:$0xff] %v7567
  %8319 = vst [vmem:[%s4 + $0xd70] sm:$0xff] %v7568
  %8320 = vst [vmem:[%s4 + $0xd78] sm:$0xff] %v7569
  %8321 = vst [vmem:[%s4 + $0xd80] sm:$0xff] %v7570
  %8322 = vst [vmem:[%s4 + $0xd88] sm:$0xff] %v7571
  %8323 = vst [vmem:[%s4 + $0xd90] sm:$0xff] %v7572
  %8324 = vst [vmem:[%s4 + $0xd98] sm:$0xff] %v7573
  %8325 = vst [vmem:[%s4 + $0xda0] sm:$0xff] %v7574
  %8326 = vst [vmem:[%s4 + $0xda8] sm:$0xff] %v7575
  %8327 = vst [vmem:[%s4 + $0xdb0] sm:$0xff] %v7576
  %8328 = vst [vmem:[%s4 + $0xdb8] sm:$0xff] %v7577
  %8329 = vst [vmem:[%s4 + $0xdc0] sm:$0xff] %v7578
  %8330 = vst [vmem:[%s4 + $0xdc8] sm:$0xff] %v7579
  %8331 = vst [vmem:[%s4 + $0xdd0] sm:$0xff] %v7580
  %8332 = vst [vmem:[%s4 + $0xdd8] sm:$0xff] %v7581
  %8333 = vst [vmem:[%s4 + $0xde0] sm:$0xff] %v7582
  %8334 = vst [vmem:[%s4 + $0xde8] sm:$0xff] %v7583
  %8335 = vst [vmem:[%s4 + $0xdf0] sm:$0xff] %v7584
  %8336 = vst [vmem:[%s4 + $0xdf8] sm:$0xff] %v7585
  %8337 = vst [vmem:[%s4 + $0xe00] sm:$0xff] %v7586
  %8338 = vst.msk [vmem:[%s4 + $0xe08] sm:$0xff] %vm7912, %v7587
  %8339 = vst [vmem:[%s4 + $0xe10] sm:$0xff] %v7588
  %8340 = vst [vmem:[%s4 + $0xe18] sm:$0xff] %v7589
  %8341 = vst [vmem:[%s4 + $0xe20] sm:$0xff] %v7590
  %8342 = vst [vmem:[%s4 + $0xe28] sm:$0xff] %v7591
  %8343 = vst [vmem:[%s4 + $0xe30] sm:$0xff] %v7592
  %8344 = vst [vmem:[%s4 + $0xe38] sm:$0xff] %v7593
  %8345 = vst [vmem:[%s4 + $0xe40] sm:$0xff] %v7594
  %8346 = vst [vmem:[%s4 + $0xe48] sm:$0xff] %v7595
  %8347 = vst [vmem:[%s4 + $0xe50] sm:$0xff] %v7596
  %8348 = vst [vmem:[%s4 + $0xe58] sm:$0xff] %v7597
  %8349 = vst [vmem:[%s4 + $0xe60] sm:$0xff] %v7598
  %8350 = vst [vmem:[%s4 + $0xe68] sm:$0xff] %v7599
  %8351 = vst [vmem:[%s4 + $0xe70] sm:$0xff] %v7600
  %8352 = vst [vmem:[%s4 + $0xe78] sm:$0xff] %v7601
  %8353 = vst [vmem:[%s4 + $0xe80] sm:$0xff] %v7602
  %8354 = vst [vmem:[%s4 + $0xe88] sm:$0xff] %v7603
  %8355 = vst [vmem:[%s4 + $0xe90] sm:$0xff] %v7604
  %8356 = vst [vmem:[%s4 + $0xe98] sm:$0xff] %v7605
  %8357 = vst [vmem:[%s4 + $0xea0] sm:$0xff] %v7606
  %8358 = vst [vmem:[%s4 + $0xea8] sm:$0xff] %v7607
  %8359 = vst [vmem:[%s4 + $0xeb0] sm:$0xff] %v7608
  %8360 = vst [vmem:[%s4 + $0xeb8] sm:$0xff] %v7609
  %8361 = vst [vmem:[%s4 + $0xec0] sm:$0xff] %v7610
  %8362 = vst [vmem:[%s4 + $0xec8] sm:$0xff] %v7611
  %8363 = vst.msk [vmem:[%s4 + $0xed0] sm:$0xff] %vm7912, %v7612
  %8364 = vst [vmem:[%s4 + $0xed8] sm:$0xff] %v7613
  %8365 = vst [vmem:[%s4 + $0xee0] sm:$0xff] %v7614
  %8366 = vst [vmem:[%s4 + $0xee8] sm:$0xff] %v7615
  %8367 = vst [vmem:[%s4 + $0xef0] sm:$0xff] %v7616
  %8368 = vst [vmem:[%s4 + $0xef8] sm:$0xff] %v7617
  %8369 = vst [vmem:[%s4 + $0xf00] sm:$0xff] %v7618
  %8370 = vst [vmem:[%s4 + $0xf08] sm:$0xff] %v7619
  %8371 = vst [vmem:[%s4 + $0xf10] sm:$0xff] %v7620
  %8372 = vst [vmem:[%s4 + $0xf18] sm:$0xff] %v7621
  %8373 = vst [vmem:[%s4 + $0xf20] sm:$0xff] %v7622
  %8374 = vst [vmem:[%s4 + $0xf28] sm:$0xff] %v7623
  %8375 = vst [vmem:[%s4 + $0xf30] sm:$0xff] %v7624
  %8376 = vst [vmem:[%s4 + $0xf38] sm:$0xff] %v7625
  %8377 = vst [vmem:[%s4 + $0xf40] sm:$0xff] %v7626
  %8378 = vst [vmem:[%s4 + $0xf48] sm:$0xff] %v7627
  %8379 = vst [vmem:[%s4 + $0xf50] sm:$0xff] %v7628
  %8380 = vst [vmem:[%s4 + $0xf58] sm:$0xff] %v7629
  %8381 = vst [vmem:[%s4 + $0xf60] sm:$0xff] %v7630
  %8382 = vst [vmem:[%s4 + $0xf68] sm:$0xff] %v7631
  %8383 = vst [vmem:[%s4 + $0xf70] sm:$0xff] %v7632
  %8384 = vst [vmem:[%s4 + $0xf78] sm:$0xff] %v7633
  %8385 = vst [vmem:[%s4 + $0xf80] sm:$0xff] %v7634
  %8386 = vst [vmem:[%s4 + $0xf88] sm:$0xff] %v7635
  %8387 = vst [vmem:[%s4 + $0xf90] sm:$0xff] %v7636
  %8388 = vst.msk [vmem:[%s4 + $0xf98] sm:$0xff] %vm7912, %v7637
  %8389 = vst [vmem:[%s4 + $0xfa0] sm:$0xff] %v7638
  %8390 = vst [vmem:[%s4 + $0xfa8] sm:$0xff] %v7639
  %8391 = vst [vmem:[%s4 + $0xfb0] sm:$0xff] %v7640
  %8392 = vst [vmem:[%s4 + $0xfb8] sm:$0xff] %v7641
  %8393 = vst [vmem:[%s4 + $0xfc0] sm:$0xff] %v7642
  %8394 = vst [vmem:[%s4 + $0xfc8] sm:$0xff] %v7643
  %8395 = vst [vmem:[%s4 + $0xfd0] sm:$0xff] %v7644
  %8396 = vst [vmem:[%s4 + $0xfd8] sm:$0xff] %v7645
  %8397 = vst [vmem:[%s4 + $0xfe0] sm:$0xff] %v7646
  %8398 = vst [vmem:[%s4 + $0xfe8] sm:$0xff] %v7647
  %8399 = vst [vmem:[%s4 + $0xff0] sm:$0xff] %v7648
  %8400 = vst [vmem:[%s4 + $0xff8] sm:$0xff] %v7649
  %8401 = vst [vmem:[%s4 + $0x1000] sm:$0xff] %v7650
  %8402 = vst [vmem:[%s4 + $0x1008] sm:$0xff] %v7651
  %8403 = vst [vmem:[%s4 + $0x1010] sm:$0xff] %v7652
  %8404 = vst [vmem:[%s4 + $0x1018] sm:$0xff] %v7653
  %8405 = vst [vmem:[%s4 + $0x1020] sm:$0xff] %v7654
  %8406 = vst [vmem:[%s4 + $0x1028] sm:$0xff] %v7655
  %8407 = vst [vmem:[%s4 + $0x1030] sm:$0xff] %v7656
  %8408 = vst [vmem:[%s4 + $0x1038] sm:$0xff] %v7657
  %8409 = vst [vmem:[%s4 + $0x1040] sm:$0xff] %v7658
  %8410 = vst [vmem:[%s4 + $0x1048] sm:$0xff] %v7659
  %8411 = vst [vmem:[%s4 + $0x1050] sm:$0xff] %v7660
  %8412 = vst [vmem:[%s4 + $0x1058] sm:$0xff] %v7661
  %8413 = vst.msk [vmem:[%s4 + $0x1060] sm:$0xff] %vm7912, %v7662
  %8414 = vst [vmem:[%s4 + $0x1068] sm:$0xff] %v7663
  %8415 = vst [vmem:[%s4 + $0x1070] sm:$0xff] %v7664
  %8416 = vst [vmem:[%s4 + $0x1078] sm:$0xff] %v7665
  %8417 = vst [vmem:[%s4 + $0x1080] sm:$0xff] %v7666
  %8418 = vst [vmem:[%s4 + $0x1088] sm:$0xff] %v7667
  %8419 = vst [vmem:[%s4 + $0x1090] sm:$0xff] %v7668
  %8420 = vst [vmem:[%s4 + $0x1098] sm:$0xff] %v7669
  %8421 = vst [vmem:[%s4 + $0x10a0] sm:$0xff] %v7670
  %8422 = vst [vmem:[%s4 + $0x10a8] sm:$0xff] %v7671
  %8423 = vst [vmem:[%s4 + $0x10b0] sm:$0xff] %v7672
  %8424 = vst [vmem:[%s4 + $0x10b8] sm:$0xff] %v7673
  %8425 = vst [vmem:[%s4 + $0x10c0] sm:$0xff] %v7674
  %8426 = vst [vmem:[%s4 + $0x10c8] sm:$0xff] %v7675
  %8427 = vst [vmem:[%s4 + $0x10d0] sm:$0xff] %v7676
  %8428 = vst [vmem:[%s4 + $0x10d8] sm:$0xff] %v7677
  %8429 = vst [vmem:[%s4 + $0x10e0] sm:$0xff] %v7678
  %8430 = vst [vmem:[%s4 + $0x10e8] sm:$0xff] %v7679
  %8431 = vst [vmem:[%s4 + $0x10f0] sm:$0xff] %v7680
  %8432 = vst [vmem:[%s4 + $0x10f8] sm:$0xff] %v7681
  %8433 = vst [vmem:[%s4 + $0x1100] sm:$0xff] %v7682
  %8434 = vst [vmem:[%s4 + $0x1108] sm:$0xff] %v7683
  %8435 = vst [vmem:[%s4 + $0x1110] sm:$0xff] %v7684
  %8436 = vst [vmem:[%s4 + $0x1118] sm:$0xff] %v7685
  %8437 = vst [vmem:[%s4 + $0x1120] sm:$0xff] %v7686
  %8438 = vst.msk [vmem:[%s4 + $0x1128] sm:$0xff] %vm7912, %v7687
  %8439 = vst [vmem:[%s4 + $0x1130] sm:$0xff] %v7688
  %8440 = vst [vmem:[%s4 + $0x1138] sm:$0xff] %v7689
  %8441 = vst [vmem:[%s4 + $0x1140] sm:$0xff] %v7690
  %8442 = vst [vmem:[%s4 + $0x1148] sm:$0xff] %v7691
  %8443 = vst [vmem:[%s4 + $0x1150] sm:$0xff] %v7692
  %8444 = vst [vmem:[%s4 + $0x1158] sm:$0xff] %v7693
  %8445 = vst [vmem:[%s4 + $0x1160] sm:$0xff] %v7694
  %8446 = vst [vmem:[%s4 + $0x1168] sm:$0xff] %v7695
  %8447 = vst [vmem:[%s4 + $0x1170] sm:$0xff] %v7696
  %8448 = vst [vmem:[%s4 + $0x1178] sm:$0xff] %v7697
  %8449 = vst [vmem:[%s4 + $0x1180] sm:$0xff] %v7698
  %8450 = vst [vmem:[%s4 + $0x1188] sm:$0xff] %v7699
  %8451 = vst [vmem:[%s4 + $0x1190] sm:$0xff] %v7700
  %8452 = vst [vmem:[%s4 + $0x1198] sm:$0xff] %v7701
  %8453 = vst [vmem:[%s4 + $0x11a0] sm:$0xff] %v7702
  %8454 = vst [vmem:[%s4 + $0x11a8] sm:$0xff] %v7703
  %8455 = vst [vmem:[%s4 + $0x11b0] sm:$0xff] %v7704
  %8456 = vst [vmem:[%s4 + $0x11b8] sm:$0xff] %v7705
  %8457 = vst [vmem:[%s4 + $0x11c0] sm:$0xff] %v7706
  %8458 = vst [vmem:[%s4 + $0x11c8] sm:$0xff] %v7707
  %8459 = vst [vmem:[%s4 + $0x11d0] sm:$0xff] %v7708
  %8460 = vst [vmem:[%s4 + $0x11d8] sm:$0xff] %v7709
  %8461 = vst [vmem:[%s4 + $0x11e0] sm:$0xff] %v7710
  %8462 = vst [vmem:[%s4 + $0x11e8] sm:$0xff] %v7711
  %8463 = vst.msk [vmem:[%s4 + $0x11f0] sm:$0xff] %vm7912, %v7712
  %8464 = vst [vmem:[%s4 + $0x11f8] sm:$0xff] %v7713
  %8465 = vst [vmem:[%s4 + $0x1200] sm:$0xff] %v7714
  %8466 = vst [vmem:[%s4 + $0x1208] sm:$0xff] %v7715
  %8467 = vst [vmem:[%s4 + $0x1210] sm:$0xff] %v7716
  %8468 = vst [vmem:[%s4 + $0x1218] sm:$0xff] %v7717
  %8469 = vst [vmem:[%s4 + $0x1220] sm:$0xff] %v7718
  %8470 = vst [vmem:[%s4 + $0x1228] sm:$0xff] %v7719
  %8471 = vst [vmem:[%s4 + $0x1230] sm:$0xff] %v7720
  %8472 = vst [vmem:[%s4 + $0x1238] sm:$0xff] %v7721
  %8473 = vst [vmem:[%s4 + $0x1240] sm:$0xff] %v7722
  %8474 = vst [vmem:[%s4 + $0x1248] sm:$0xff] %v7723
  %8475 = vst [vmem:[%s4 + $0x1250] sm:$0xff] %v7724
  %8476 = vst [vmem:[%s4 + $0x1258] sm:$0xff] %v7725
  %8477 = vst [vmem:[%s4 + $0x1260] sm:$0xff] %v7726
  %8478 = vst [vmem:[%s4 + $0x1268] sm:$0xff] %v7727
  %8479 = vst [vmem:[%s4 + $0x1270] sm:$0xff] %v7728
  %8480 = vst [vmem:[%s4 + $0x1278] sm:$0xff] %v7729
  %8481 = vst [vmem:[%s4 + $0x1280] sm:$0xff] %v7730
  %8482 = vst [vmem:[%s4 + $0x1288] sm:$0xff] %v7731
  %8483 = vst [vmem:[%s4 + $0x1290] sm:$0xff] %v7732
  %8484 = vst [vmem:[%s4 + $0x1298] sm:$0xff] %v7733
  %8485 = vst [vmem:[%s4 + $0x12a0] sm:$0xff] %v7734
  %8486 = vst [vmem:[%s4 + $0x12a8] sm:$0xff] %v7735
  %8487 = vst [vmem:[%s4 + $0x12b0] sm:$0xff] %v7736
  %8488 = vst.msk [vmem:[%s4 + $0x12b8] sm:$0xff] %vm7912, %v7737
  %8489 = vst [vmem:[%s4 + $0x12c0] sm:$0xff] %v7738
  %8490 = vst [vmem:[%s4 + $0x12c8] sm:$0xff] %v7739
  %8491 = vst [vmem:[%s4 + $0x12d0] sm:$0xff] %v7740
  %8492 = vst [vmem:[%s4 + $0x12d8] sm:$0xff] %v7741
  %8493 = vst [vmem:[%s4 + $0x12e0] sm:$0xff] %v7742
  %8494 = vst [vmem:[%s4 + $0x12e8] sm:$0xff] %v7743
  %8495 = vst [vmem:[%s4 + $0x12f0] sm:$0xff] %v7744
  %8496 = vst [vmem:[%s4 + $0x12f8] sm:$0xff] %v7745
  %8497 = vst [vmem:[%s4 + $0x1300] sm:$0xff] %v7746
  %8498 = vst [vmem:[%s4 + $0x1308] sm:$0xff] %v7747
  %8499 = vst [vmem:[%s4 + $0x1310] sm:$0xff] %v7748
  %8500 = vst [vmem:[%s4 + $0x1318] sm:$0xff] %v7749
  %8501 = vst [vmem:[%s4 + $0x1320] sm:$0xff] %v7750
  %8502 = vst [vmem:[%s4 + $0x1328] sm:$0xff] %v7751
  %8503 = vst [vmem:[%s4 + $0x1330] sm:$0xff] %v7752
  %8504 = vst [vmem:[%s4 + $0x1338] sm:$0xff] %v7753
  %8505 = vst [vmem:[%s4 + $0x1340] sm:$0xff] %v7754
  %8506 = vst [vmem:[%s4 + $0x1348] sm:$0xff] %v7755
  %8507 = vst [vmem:[%s4 + $0x1350] sm:$0xff] %v7756
  %8508 = vst [vmem:[%s4 + $0x1358] sm:$0xff] %v7757
  %8509 = vst [vmem:[%s4 + $0x1360] sm:$0xff] %v7758
  %8510 = vst [vmem:[%s4 + $0x1368] sm:$0xff] %v7759
  %8511 = vst [vmem:[%s4 + $0x1370] sm:$0xff] %v7760
  %8512 = vst [vmem:[%s4 + $0x1378] sm:$0xff] %v7761
  %8513 = vst.msk [vmem:[%s4 + $0x1380] sm:$0xff] %vm7912, %v7762
  %8514 = vst [vmem:[%s4 + $0x1388] sm:$0xff] %v7763
  %8515 = vst [vmem:[%s4 + $0x1390] sm:$0xff] %v7764
  %8516 = vst [vmem:[%s4 + $0x1398] sm:$0xff] %v7765
  %8517 = vst [vmem:[%s4 + $0x13a0] sm:$0xff] %v7766
  %8518 = vst [vmem:[%s4 + $0x13a8] sm:$0xff] %v7767
  %8519 = vst [vmem:[%s4 + $0x13b0] sm:$0xff] %v7768
  %8520 = vst [vmem:[%s4 + $0x13b8] sm:$0xff] %v7769
  %8521 = vst [vmem:[%s4 + $0x13c0] sm:$0xff] %v7770
  %8522 = vst [vmem:[%s4 + $0x13c8] sm:$0xff] %v7771
  %8523 = vst [vmem:[%s4 + $0x13d0] sm:$0xff] %v7772
  %8524 = vst [vmem:[%s4 + $0x13d8] sm:$0xff] %v7773
  %8525 = vst [vmem:[%s4 + $0x13e0] sm:$0xff] %v7774
  %8526 = vst [vmem:[%s4 + $0x13e8] sm:$0xff] %v7775
  %8527 = vst [vmem:[%s4 + $0x13f0] sm:$0xff] %v7776
  %8528 = vst [vmem:[%s4 + $0x13f8] sm:$0xff] %v7777
  %8529 = vst [vmem:[%s4 + $0x1400] sm:$0xff] %v7778
  %8530 = vst [vmem:[%s4 + $0x1408] sm:$0xff] %v7779
  %8531 = vst [vmem:[%s4 + $0x1410] sm:$0xff] %v7780
  %8532 = vst [vmem:[%s4 + $0x1418] sm:$0xff] %v7781
  %8533 = vst [vmem:[%s4 + $0x1420] sm:$0xff] %v7782
  %8534 = vst [vmem:[%s4 + $0x1428] sm:$0xff] %v7783
  %8535 = vst [vmem:[%s4 + $0x1430] sm:$0xff] %v7784
  %8536 = vst [vmem:[%s4 + $0x1438] sm:$0xff] %v7785
  %8537 = vst [vmem:[%s4 + $0x1440] sm:$0xff] %v7786
  %8538 = vst.msk [vmem:[%s4 + $0x1448] sm:$0xff] %vm7912, %v7787
  %8539 = vst [vmem:[%s4 + $0x1450] sm:$0xff] %v7788
  %8540 = vst [vmem:[%s4 + $0x1458] sm:$0xff] %v7789
  %8541 = vst [vmem:[%s4 + $0x1460] sm:$0xff] %v7790
  %8542 = vst [vmem:[%s4 + $0x1468] sm:$0xff] %v7791
  %8543 = vst [vmem:[%s4 + $0x1470] sm:$0xff] %v7792
  %8544 = vst [vmem:[%s4 + $0x1478] sm:$0xff] %v7793
  %8545 = vst [vmem:[%s4 + $0x1480] sm:$0xff] %v7794
  %8546 = vst [vmem:[%s4 + $0x1488] sm:$0xff] %v7795
  %8547 = vst [vmem:[%s4 + $0x1490] sm:$0xff] %v7796
  %8548 = vst [vmem:[%s4 + $0x1498] sm:$0xff] %v7797
  %8549 = vst [vmem:[%s4 + $0x14a0] sm:$0xff] %v7798
  %8550 = vst [vmem:[%s4 + $0x14a8] sm:$0xff] %v7799
  %8551 = vst [vmem:[%s4 + $0x14b0] sm:$0xff] %v7800
  %8552 = vst [vmem:[%s4 + $0x14b8] sm:$0xff] %v7801
  %8553 = vst [vmem:[%s4 + $0x14c0] sm:$0xff] %v7802
  %8554 = vst [vmem:[%s4 + $0x14c8] sm:$0xff] %v7803
  %8555 = vst [vmem:[%s4 + $0x14d0] sm:$0xff] %v7804
  %8556 = vst [vmem:[%s4 + $0x14d8] sm:$0xff] %v7805
  %8557 = vst [vmem:[%s4 + $0x14e0] sm:$0xff] %v7806
  %8558 = vst [vmem:[%s4 + $0x14e8] sm:$0xff] %v7807
  %8559 = vst [vmem:[%s4 + $0x14f0] sm:$0xff] %v7808
  %8560 = vst [vmem:[%s4 + $0x14f8] sm:$0xff] %v7809
  %8561 = vst [vmem:[%s4 + $0x1500] sm:$0xff] %v7810
  %8562 = vst [vmem:[%s4 + $0x1508] sm:$0xff] %v7811
  %8563 = vst.msk [vmem:[%s4 + $0x1510] sm:$0xff] %vm7912, %v7812
  %8564 = vst [vmem:[%s4 + $0x1518] sm:$0xff] %v7813
  %8565 = vst [vmem:[%s4 + $0x1520] sm:$0xff] %v7814
  %8566 = vst [vmem:[%s4 + $0x1528] sm:$0xff] %v7815
  %8567 = vst [vmem:[%s4 + $0x1530] sm:$0xff] %v7816
  %8568 = vst [vmem:[%s4 + $0x1538] sm:$0xff] %v7817
  %8569 = vst [vmem:[%s4 + $0x1540] sm:$0xff] %v7818
  %8570 = vst [vmem:[%s4 + $0x1548] sm:$0xff] %v7819
  %8571 = vst [vmem:[%s4 + $0x1550] sm:$0xff] %v7820
  %8572 = vst [vmem:[%s4 + $0x1558] sm:$0xff] %v7821
  %8573 = vst [vmem:[%s4 + $0x1560] sm:$0xff] %v7822
  %8574 = vst [vmem:[%s4 + $0x1568] sm:$0xff] %v7823
  %8575 = vst [vmem:[%s4 + $0x1570] sm:$0xff] %v7824
  %8576 = vst [vmem:[%s4 + $0x1578] sm:$0xff] %v7825
  %8577 = vst [vmem:[%s4 + $0x1580] sm:$0xff] %v7826
  %8578 = vst [vmem:[%s4 + $0x1588] sm:$0xff] %v7827
  %8579 = vst [vmem:[%s4 + $0x1590] sm:$0xff] %v7828
  %8580 = vst [vmem:[%s4 + $0x1598] sm:$0xff] %v7829
  %8581 = vst [vmem:[%s4 + $0x15a0] sm:$0xff] %v7830
  %8582 = vst [vmem:[%s4 + $0x15a8] sm:$0xff] %v7831
  %8583 = vst [vmem:[%s4 + $0x15b0] sm:$0xff] %v7832
  %8584 = vst [vmem:[%s4 + $0x15b8] sm:$0xff] %v7833
  %8585 = vst [vmem:[%s4 + $0x15c0] sm:$0xff] %v7834
  %8586 = vst [vmem:[%s4 + $0x15c8] sm:$0xff] %v7835
  %8587 = vst [vmem:[%s4 + $0x15d0] sm:$0xff] %v7836
  %8588 = vst.msk [vmem:[%s4 + $0x15d8] sm:$0xff] %vm7912, %v7837
  %8589 = vst [vmem:[%s4 + $0x15e0] sm:$0xff] %v7838
  %8590 = vst [vmem:[%s4 + $0x15e8] sm:$0xff] %v7839
  %8591 = vst [vmem:[%s4 + $0x15f0] sm:$0xff] %v7840
  %8592 = vst [vmem:[%s4 + $0x15f8] sm:$0xff] %v7841
  %8593 = vst [vmem:[%s4 + $0x1600] sm:$0xff] %v7842
  %8594 = vst [vmem:[%s4 + $0x1608] sm:$0xff] %v7843
  %8595 = vst [vmem:[%s4 + $0x1610] sm:$0xff] %v7844
  %8596 = vst [vmem:[%s4 + $0x1618] sm:$0xff] %v7845
  %8597 = vst [vmem:[%s4 + $0x1620] sm:$0xff] %v7846
  %8598 = vst [vmem:[%s4 + $0x1628] sm:$0xff] %v7847
  %8599 = vst [vmem:[%s4 + $0x1630] sm:$0xff] %v7848
  %8600 = vst [vmem:[%s4 + $0x1638] sm:$0xff] %v7849
  %8601 = vst [vmem:[%s4 + $0x1640] sm:$0xff] %v7850
  %8602 = vst [vmem:[%s4 + $0x1648] sm:$0xff] %v7851
  %8603 = vst [vmem:[%s4 + $0x1650] sm:$0xff] %v7852
  %8604 = vst [vmem:[%s4 + $0x1658] sm:$0xff] %v7853
  %8605 = vst [vmem:[%s4 + $0x1660] sm:$0xff] %v7854
  %8606 = vst [vmem:[%s4 + $0x1668] sm:$0xff] %v7855
  %8607 = vst [vmem:[%s4 + $0x1670] sm:$0xff] %v7856
  %8608 = vst [vmem:[%s4 + $0x1678] sm:$0xff] %v7857
  %8609 = vst [vmem:[%s4 + $0x1680] sm:$0xff] %v7858
  %8610 = vst [vmem:[%s4 + $0x1688] sm:$0xff] %v7859
  %8611 = vst [vmem:[%s4 + $0x1690] sm:$0xff] %v7860
  %8612 = vst [vmem:[%s4 + $0x1698] sm:$0xff] %v7861
  %8613 = vst.msk [vmem:[%s4 + $0x16a0] sm:$0xff] %vm7912, %v7862
  %8614 = vst [vmem:[%s4 + $0x16a8] sm:$0xff] %v7863
  %8615 = vst [vmem:[%s4 + $0x16b0] sm:$0xff] %v7864
  %8616 = vst [vmem:[%s4 + $0x16b8] sm:$0xff] %v7865
  %8617 = vst [vmem:[%s4 + $0x16c0] sm:$0xff] %v7866
  %8618 = vst [vmem:[%s4 + $0x16c8] sm:$0xff] %v7867
  %8619 = vst [vmem:[%s4 + $0x16d0] sm:$0xff] %v7868
  %8620 = vst [vmem:[%s4 + $0x16d8] sm:$0xff] %v7869
  %8621 = vst [vmem:[%s4 + $0x16e0] sm:$0xff] %v7870
  %8622 = vst [vmem:[%s4 + $0x16e8] sm:$0xff] %v7871
  %8623 = vst [vmem:[%s4 + $0x16f0] sm:$0xff] %v7872
  %8624 = vst [vmem:[%s4 + $0x16f8] sm:$0xff] %v7873
  %8625 = vst [vmem:[%s4 + $0x1700] sm:$0xff] %v7874
  %8626 = vst [vmem:[%s4 + $0x1708] sm:$0xff] %v7875
  %8627 = vst [vmem:[%s4 + $0x1710] sm:$0xff] %v7876
  %8628 = vst [vmem:[%s4 + $0x1718] sm:$0xff] %v7877
  %8629 = vst [vmem:[%s4 + $0x1720] sm:$0xff] %v7878
  %8630 = vst [vmem:[%s4 + $0x1728] sm:$0xff] %v7879
  %8631 = vst [vmem:[%s4 + $0x1730] sm:$0xff] %v7880
  %8632 = vst [vmem:[%s4 + $0x1738] sm:$0xff] %v7881
  %8633 = vst [vmem:[%s4 + $0x1740] sm:$0xff] %v7882
  %8634 = vst [vmem:[%s4 + $0x1748] sm:$0xff] %v7883
  %8635 = vst [vmem:[%s4 + $0x1750] sm:$0xff] %v7884
  %8636 = vst [vmem:[%s4 + $0x1758] sm:$0xff] %v7885
  %8637 = vst [vmem:[%s4 + $0x1760] sm:$0xff] %v7886
  %8638 = vst.msk [vmem:[%s4 + $0x1768] sm:$0xff] %vm7912, %v7887
  // Predicated region
  $region18: #{conv_bn_forward.1} parent=0 // pred_check
    _
  $region19: #{conv_bn_forward.1} parent=0 // pred_check_branch
    %8640 = sbr.rel (0) target = $region21
  $region20: #{conv_bn_forward.1} parent=0 // pred_region
    _
  $region21: #{conv_bn_forward.1} parent=0 // pred_fallthru
    _
  // Predicated region
  $region22: #{conv_bn_forward.1} parent=0 // pred_check
    _
  $region23: #{conv_bn_forward.1} parent=0 // pred_check_branch
    %8642 = sbr.rel (0) target = $region25
  $region24: #{conv_bn_forward.1} parent=0 // pred_region
    _
  $region25: #{conv_bn_forward.1} parent=0 // pred_fallthru
    _

</llo_original>
